<compile_context>
chip_gen: v7x
topology: tpu7x:2x2x1
jax: 0.10.0
libtpu: 0.0.40
codegen_flags: <defaults>
</compile_context>

<pallas_src>
import functools

import jax
import jax.numpy as jnp
from jax import lax
from jax.experimental import pallas as pl
from jax.experimental.pallas import tpu as pltpu


def _round_up(x, m):
    return ((x + m - 1) // m) * m


def _pick_tm(M, want):
    """Largest tile <= want that divides M and is a multiple of 8 (else M)."""
    for t in range(min(want, M), 7, -1):
        if M % t == 0 and t % 8 == 0:
            return t
    return M


# ----------------------------- Pallas kernels ------------------------------ #
def gemm_bias_act_kernel(x_ref, w_ref, b_ref, o_ref, *, relu):
    """Single-K-step GEMM + bias + optional ReLU.  No accumulator scratch."""
    y = jnp.dot(x_ref[...], w_ref[...], preferred_element_type=jnp.float32)
    y = y + b_ref[...]
    if relu:
        y = jnp.maximum(y, 0.0)
    o_ref[...] = y.astype(o_ref.dtype)


def conv_gemm(patches, w, b, *, tm):
    """ReLU(patches @ w + b), 1-D grid over M tiles, K/N in a single block."""
    M, K = patches.shape
    Kw, N = w.shape
    assert K == Kw and b.shape == (1, N), (patches.shape, w.shape, b.shape)
    assert M % tm == 0 and (tm % 8 == 0 or tm == M), (M, tm)
    return pl.pallas_call(
        functools.partial(gemm_bias_act_kernel, relu=True),
        out_shape=jax.ShapeDtypeStruct((M, N), jnp.float32),
        grid_spec=pltpu.PrefetchScalarGridSpec(
            num_scalar_prefetch=0,
            grid=(M // tm,),
            in_specs=[
                pl.BlockSpec((tm, K), lambda i: (i, 0)),
                pl.BlockSpec((K, N), lambda i: (0, 0)),
                pl.BlockSpec((1, N), lambda i: (0, 0)),
            ],
            out_specs=pl.BlockSpec((tm, N), lambda i: (i, 0)),
        ),
        compiler_params=pltpu.CompilerParams(
            dimension_semantics=("parallel",)),
    )(patches, w, b)


def dense_stack_kernel(h_ref, w1_ref, b1_ref, w2_ref, b2_ref, o_ref, acc_ref):
    """Fused dense1 (bf16 weight, K streamed over the grid) + ReLU + dense2."""
    k = pl.program_id(0)

    @pl.when(k == 0)
    def _():
        acc_ref[...] = jnp.zeros_like(acc_ref)

    acc_ref[...] += jnp.dot(h_ref[...].astype(jnp.bfloat16), w1_ref[...],
                            preferred_element_type=jnp.float32)

    @pl.when(k == pl.num_programs(0) - 1)
    def _():
        a = jnp.maximum(acc_ref[...] + b1_ref[...], 0.0)
        o_ref[...] = (jnp.dot(a, w2_ref[...], preferred_element_type=jnp.float32)
                      + b2_ref[...]).astype(o_ref.dtype)


def dense_stack(h, w1, b1, w2, b2, *, tk):
    """y = (relu(h @ w1 + b1)) @ w2 + b2, with w1 streamed along K (bf16)."""
    M, K1 = h.shape
    K1w, N1 = w1.shape
    N1w, N2 = w2.shape
    assert K1 == K1w and N1 == N1w and K1 % tk == 0 and tk % 128 == 0
    flops = 2 * M * K1 * N1 + 2 * M * N1 * N2
    bytes_accessed = (h.size * 4 + w1.size * 2 + b1.size * 4
                      + w2.size * 4 + b2.size * 4 + M * N2 * 4)
    return pl.pallas_call(
        dense_stack_kernel,
        out_shape=jax.ShapeDtypeStruct((M, N2), jnp.float32),
        grid_spec=pltpu.PrefetchScalarGridSpec(
            num_scalar_prefetch=0,
            grid=(K1 // tk,),
            in_specs=[
                pl.BlockSpec((M, tk), lambda k: (0, k)),
                pl.BlockSpec((tk, N1), lambda k: (k, 0)),
                pl.BlockSpec((1, N1), lambda k: (0, 0)),
                pl.BlockSpec((N1, N2), lambda k: (0, 0)),
                pl.BlockSpec((1, N2), lambda k: (0, 0)),
            ],
            out_specs=pl.BlockSpec((M, N2), lambda k: (0, 0)),
            scratch_shapes=[pltpu.VMEM((M, N1), jnp.float32)],
        ),
        compiler_params=pltpu.CompilerParams(
            dimension_semantics=("arbitrary",)),
        cost_estimate=pl.CostEstimate(flops=flops, transcendentals=0,
                                      bytes_accessed=bytes_accessed),
    )(h, w1, b1, w2, b2)


# --------------------------- one-time weight prep --------------------------- #
def prepare_params(p):
    """One-time (outside jit) conversion of PyTorch-layout params into
    GEMM-ready, TPU-lane-aligned matrices (dense1 weight in bf16)."""
    # conv1 (8x8, stride 4): GEMM rows ordered (p, q, c, r, s) to match the
    # space-to-depth-by-4 patch layout used in the forward (kh=4p+r, kw=4q+s).
    w1 = p["conv1_w"]                                   # (32, Cin, 8, 8)
    co1, cin1, _, _ = w1.shape
    w1 = w1.reshape(co1, cin1, 2, 4, 2, 4)              # (co, c, p, r, q, s)
    w1 = w1.transpose(2, 4, 1, 3, 5, 0).reshape(2 * 2 * cin1 * 16, co1)
    c1_w = jnp.pad(w1, ((0, 0), (0, 128 - co1)))        # N padded to 128
    c1_b = jnp.pad(p["conv1_b"], (0, 128 - co1)).reshape(1, 128)

    # conv2 (4x4, stride 2, pad 1): input channels kept 128-padded from conv1,
    # output padded to 128 as well.  Rows ordered (kh, kw, c128).
    w2 = p["conv2_w"].transpose(2, 3, 1, 0)             # (4, 4, 32, 32)
    w2 = jnp.pad(w2, ((0, 0), (0, 0), (0, 96), (0, 96)))
    c2_w = w2.reshape(4 * 4 * 128, 128)
    c2_b = jnp.pad(p["conv2_b"], (0, 96)).reshape(1, 128)

    # conv3 (3x3, stride 1, pad 1): 128-padded input channels, TRUE 64 output
    # channels (so the dense1 flatten / weight stays exactly 6400 wide).
    w3 = p["conv3_w"].transpose(2, 3, 1, 0)             # (3, 3, 32, 64)
    w3 = jnp.pad(w3, ((0, 0), (0, 0), (0, 96), (0, 0)))
    c3_w = w3.reshape(3 * 3 * 128, 64)
    c3_b = p["conv3_b"].reshape(1, 64)

    # dense1: permute its input rows once so it accepts our NHWC (H, W, C)
    # flatten instead of PyTorch's C-major flatten; store as bf16 (accumulation
    # stays f32 in-kernel).
    c3 = p["conv3_w"].shape[0]
    d_out, d_in = p["dense1_w"].shape
    hw = d_in // c3
    h3 = int(round(hw ** 0.5))
    assert h3 * h3 == hw and c3 * hw == d_in
    d1 = (p["dense1_w"].reshape(d_out, c3, h3, h3)
          .transpose(0, 2, 3, 1).reshape(d_out, d_in).T)          # (6400, 512)
    d1_w = d1.astype(jnp.bfloat16)
    d1_b = p["dense1_b"].reshape(1, -1).astype(jnp.float32)

    d2_w = p["dense2_w"].T.astype(jnp.float32)                    # (512, n_out)
    d2_b = p["dense2_b"].reshape(1, -1).astype(jnp.float32)

    return {"c1_w": c1_w, "c1_b": c1_b, "c2_w": c2_w, "c2_b": c2_b,
            "c3_w": c3_w, "c3_b": c3_b, "d1_w": d1_w, "d1_b": d1_b,
            "d2_w": d2_w, "d2_b": d2_b}


# ------------------------------ full forward -------------------------------- #
def encoder_like_dqn_forward(prep, x):
    """x: (B, num_channels, 84, 84) NCHW -> (B, 2 * latent_dim)."""
    B, C, H, W = x.shape
    assert H % 4 == 0 and W % 4 == 0

    # ---- conv1: 8x8 / stride 4 / valid.  Space-to-depth by 4 -> the im2col is
    # just 4 lane-dense (width-64) shifted slices.  Patch feature order
    # (p, q, c, r, s) matches c1_w's row order.
    hb, wb = H // 4, W // 4
    z1 = (x.reshape(B, C, hb, 4, wb, 4)
            .transpose(0, 2, 4, 1, 3, 5)
            .reshape(B, hb, wb, C * 16))
    oh1 = hb - 1                                                   # 20
    p1 = jnp.concatenate(
        [z1[:, p:p + oh1, q:q + oh1, :] for p in (0, 1) for q in (0, 1)],
        axis=-1)
    m1 = B * oh1 * oh1
    a1 = conv_gemm(p1.reshape(m1, 4 * 16 * C), prep["c1_w"], prep["c1_b"],
                   tm=_pick_tm(m1, m1 // 2))                       # (m1, 128)

    # ---- conv2: 4x4 / stride 2 / pad 1.  Channels stay 128-padded -> 16
    # lane-dense (width-128) im2col pieces.
    oh2 = oh1 // 2                                                 # 10
    x2 = jnp.pad(a1.reshape(B, oh1, oh1, 128), ((0, 0), (1, 1), (1, 1), (0, 0)))
    p2 = jnp.concatenate(
        [x2[:, i:i + 2 * oh2 - 1:2, j:j + 2 * oh2 - 1:2, :]
         for i in range(4) for j in range(4)], axis=-1)
    m2 = B * oh2 * oh2
    a2 = conv_gemm(p2.reshape(m2, 16 * 128), prep["c2_w"], prep["c2_b"],
                   tm=_pick_tm(m2, 40))                            # (m2, 128)

    # ---- conv3: 3x3 / stride 1 / pad 1.  9 width-128 pieces; true 64-channel
    # output so the dense1 flatten is exactly 6400 wide.
    x3 = jnp.pad(a2.reshape(B, oh2, oh2, 128), ((0, 0), (1, 1), (1, 1), (0, 0)))
    p3 = jnp.concatenate(
        [x3[:, i:i + oh2, j:j + oh2, :] for i in range(3) for j in range(3)],
        axis=-1)
    a3 = conv_gemm(p3.reshape(m2, 9 * 128), prep["c3_w"], prep["c3_b"],
                   tm=_pick_tm(m2, 40))                            # (m2, 64)

    # ---- fused dense1 (bf16 K-streamed weight) + ReLU + dense2.
    h = a3.reshape(B, oh2 * oh2 * 64)                              # free reshape
    return dense_stack(h, prep["d1_w"], prep["d1_b"],
                       prep["d2_w"], prep["d2_b"], tk=3200)


# -------------------------- reference / init / main -------------------------- #
def reference_forward(params, x):
    """Plain-XLA forward with PyTorch semantics (NCHW), for validation."""
    def conv(h, w, b, stride, pad):
        y = lax.conv_general_dilated(h, w, (stride, stride),
                                     [(pad, pad), (pad, pad)],
                                     dimension_numbers=("NCHW", "OIHW", "NCHW"))
        return jax.nn.relu(y + b[None, :, None, None])
    h = conv(x, params["conv1_w"], params["conv1_b"], 4, 0)
    h = conv(h, params["conv2_w"], params["conv2_b"], 2, 1)
    h = conv(h, params["conv3_w"], params["conv3_b"], 1, 1)
    h = h.reshape(h.shape[0], -1)
    h = jax.nn.relu(h @ params["dense1_w"].T + params["dense1_b"])
    return h @ params["dense2_w"].T + params["dense2_b"]


def init_params(key, num_channels, latent_dim):
    ks = jax.random.split(key, 10)
    s = 0.05
    return {
        "conv1_w": s * jax.random.normal(ks[0], (32, num_channels, 8, 8), jnp.float32),
        "conv1_b": s * jax.random.normal(ks[1], (32,), jnp.float32),
        "conv2_w": s * jax.random.normal(ks[2], (32, 32, 4, 4), jnp.float32),
        "conv2_b": s * jax.random.normal(ks[3], (32,), jnp.float32),
        "conv3_w": s * jax.random.normal(ks[4], (64, 32, 3, 3), jnp.float32),
        "conv3_b": s * jax.random.normal(ks[5], (64,), jnp.float32),
        "dense1_w": s * jax.random.normal(ks[6], (512, 6400), jnp.float32),   # (out, in)
        "dense1_b": s * jax.random.normal(ks[7], (512,), jnp.float32),
        "dense2_w": s * jax.random.normal(ks[8], (latent_dim * 2, 512), jnp.float32),
        "dense2_b": s * jax.random.normal(ks[9], (latent_dim * 2,), jnp.float32),
    }


if __name__ == "__main__":
    key = jax.random.PRNGKey(0)
    batch, num_channels, latent_dim = 2, 4, 32
    k_x, k_p = jax.random.split(key)
    # 84x84 spatial is implied by dense1 in_features == 6400 (= 64 * 10 * 10)
    x = jax.random.normal(k_x, (batch, num_channels, 84, 84), jnp.float32)
    params = init_params(k_p, num_channels, latent_dim)

    prep = prepare_params(params)                 # one-time, outside jit
    fwd = jax.jit(encoder_like_dqn_forward)
    out = fwd(prep, x)
    out = jax.block_until_ready(out)
    assert out.shape == (batch, 2 * latent_dim), out.shape

    # Validate against a high-precision plain-XLA reference with PyTorch
    # semantics (tolerance accounts for the bf16 dense1 weight / f32 accum).
    with jax.default_matmul_precision("highest"):
        ref = jax.jit(reference_forward)(params, x)
    ref = jax.block_until_ready(ref)
    err = float(jnp.max(jnp.abs(out - ref)))
    scale = float(jnp.max(jnp.abs(ref)))
    assert err <= 3e-2 + 2e-2 * scale, f"mismatch: max|err|={err}, max|ref|={scale}"
    print("KERNEL_OK")
</pallas_src>

<mosaic_0001>
module attributes {stable_mosaic.version = 11 : i64} {
  func.func @gemm_bias_act_kernel(%arg0: i32, %arg1: memref<400x256xf32, #tpu.memory_space<vmem>>, %arg2: memref<256x128xf32, #tpu.memory_space<vmem>>, %arg3: memref<1x128xf32, #tpu.memory_space<vmem>>, %arg4: memref<400x128xf32, #tpu.memory_space<vmem>>) attributes {dimension_semantics = [#tpu.dimension_semantics<parallel>], iteration_bounds = array<i64: 2>, scalar_prefetch = 0 : i64, scratch_operands = 0 : i64, tpu.core_type = #tpu.core_type<tc>, window_params = [{transform_indices = @transform_0, window_bounds = array<i64: 400, 256>}, {pipeline_mode = #tpu.pipeline_mode<synchronous>, transform_indices = @transform_1, window_bounds = array<i64: 256, 128>}, {pipeline_mode = #tpu.pipeline_mode<synchronous>, transform_indices = @transform_2, window_bounds = array<i64: 1, 128>}, {transform_indices = @transform_3, window_bounds = array<i64: 400, 128>}]} {
    %c0 = arith.constant 0 : index
    %c0_0 = arith.constant 0 : index
    %0 = vector.load %arg1[%c0, %c0_0] : memref<400x256xf32, #tpu.memory_space<vmem>>, vector<400x256xf32>
    %c0_1 = arith.constant 0 : index
    %c0_2 = arith.constant 0 : index
    %1 = vector.load %arg2[%c0_1, %c0_2] : memref<256x128xf32, #tpu.memory_space<vmem>>, vector<256x128xf32>
    %cst = arith.constant dense<0.000000e+00> : vector<400x128xf32>
    %2 = tpu.matmul %0, %1, %cst {dimension_numbers = #tpu.dot_dimension_numbers<[1], [0], [0], [1], [0, 0, 1, 1], [], []>} : vector<400x256xf32>, vector<256x128xf32>, vector<400x128xf32> -> vector<400x128xf32>
    %c0_3 = arith.constant 0 : index
    %c0_4 = arith.constant 0 : index
    %3 = vector.load %arg3[%c0_3, %c0_4] : memref<1x128xf32, #tpu.memory_space<vmem>>, vector<1x128xf32>
    %4 = vector.broadcast %3 : vector<1x128xf32> to vector<400x128xf32>
    %5 = arith.addf %2, %4 : vector<400x128xf32>
    %cst_5 = arith.constant 0.000000e+00 : f32
    %6 = vector.broadcast %cst_5 : f32 to vector<400x128xf32>
    %7 = arith.maximumf %5, %6 : vector<400x128xf32>
    %c0_6 = arith.constant 0 : index
    %c0_7 = arith.constant 0 : index
    %8 = vector.load %arg4[%c0_6, %c0_7] : memref<400x128xf32, #tpu.memory_space<vmem>>, vector<400x128xf32>
    tpu.vector_store %arg4[%c0_6, %c0_7], %7 {strides = array<i32>} : memref<400x128xf32, #tpu.memory_space<vmem>>, vector<400x128xf32>,
    return
  }
  func.func @transform_0(%arg0: i32) -> (i32, i32) {
    %c0_i32 = arith.constant 0 : i32
    %c0_i32_0 = arith.constant 0 : i32
    return %arg0, %c0_i32 : i32, i32
  }
  func.func @transform_1(%arg0: i32) -> (i32, i32) {
    %c0_i32 = arith.constant 0 : i32
    %c0_i32_0 = arith.constant 0 : i32
    %c0_i32_1 = arith.constant 0 : i32
    return %c0_i32, %c0_i32_0 : i32, i32
  }
  func.func @transform_2(%arg0: i32) -> (i32, i32) {
    %c0_i32 = arith.constant 0 : i32
    %c0_i32_0 = arith.constant 0 : i32
    %c0_i32_1 = arith.constant 0 : i32
    return %c0_i32, %c0_i32_0 : i32, i32
  }
  func.func @transform_3(%arg0: i32) -> (i32, i32) {
    %c0_i32 = arith.constant 0 : i32
    %c0_i32_0 = arith.constant 0 : i32
    return %arg0, %c0_i32 : i32, i32
  }
}

module attributes {stable_mosaic.version = 11 : i64} {
  func.func @gemm_bias_act_kernel(%arg0: i32, %arg1: memref<40x2048xf32, #tpu.memory_space<vmem>>, %arg2: memref<2048x128xf32, #tpu.memory_space<vmem>>, %arg3: memref<1x128xf32, #tpu.memory_space<vmem>>, %arg4: memref<40x128xf32, #tpu.memory_space<vmem>>) attributes {dimension_semantics = [#tpu.dimension_semantics<parallel>], iteration_bounds = array<i64: 5>, scalar_prefetch = 0 : i64, scratch_operands = 0 : i64, tpu.core_type = #tpu.core_type<tc>, window_params = [{transform_indices = @transform_0, window_bounds = array<i64: 40, 2048>}, {pipeline_mode = #tpu.pipeline_mode<synchronous>, transform_indices = @transform_1, window_bounds = array<i64: 2048, 128>}, {pipeline_mode = #tpu.pipeline_mode<synchronous>, transform_indices = @transform_2, window_bounds = array<i64: 1, 128>}, {transform_indices = @transform_3, window_bounds = array<i64: 40, 128>}]} {
    %c0 = arith.constant 0 : index
    %c0_0 = arith.constant 0 : index
    %0 = vector.load %arg1[%c0, %c0_0] : memref<40x2048xf32, #tpu.memory_space<vmem>>, vector<40x2048xf32>
    %c0_1 = arith.constant 0 : index
    %c0_2 = arith.constant 0 : index
    %1 = vector.load %arg2[%c0_1, %c0_2] : memref<2048x128xf32, #tpu.memory_space<vmem>>, vector<2048x128xf32>
    %cst = arith.constant dense<0.000000e+00> : vector<40x128xf32>
    %2 = tpu.matmul %0, %1, %cst {dimension_numbers = #tpu.dot_dimension_numbers<[1], [0], [0], [1], [0, 0, 1, 1], [], []>} : vector<40x2048xf32>, vector<2048x128xf32>, vector<40x128xf32> -> vector<40x128xf32>
    %c0_3 = arith.constant 0 : index
    %c0_4 = arith.constant 0 : index
    %3 = vector.load %arg3[%c0_3, %c0_4] : memref<1x128xf32, #tpu.memory_space<vmem>>, vector<1x128xf32>
    %4 = vector.broadcast %3 : vector<1x128xf32> to vector<40x128xf32>
    %5 = arith.addf %2, %4 : vector<40x128xf32>
    %cst_5 = arith.constant 0.000000e+00 : f32
    %6 = vector.broadcast %cst_5 : f32 to vector<40x128xf32>
    %7 = arith.maximumf %5, %6 : vector<40x128xf32>
    %c0_6 = arith.constant 0 : index
    %c0_7 = arith.constant 0 : index
    %8 = vector.load %arg4[%c0_6, %c0_7] : memref<40x128xf32, #tpu.memory_space<vmem>>, vector<40x128xf32>
    tpu.vector_store %arg4[%c0_6, %c0_7], %7 {strides = array<i32>} : memref<40x128xf32, #tpu.memory_space<vmem>>, vector<40x128xf32>,
    return
  }
  func.func @transform_0(%arg0: i32) -> (i32, i32) {
    %c0_i32 = arith.constant 0 : i32
    %c0_i32_0 = arith.constant 0 : i32
    return %arg0, %c0_i32 : i32, i32
  }
  func.func @transform_1(%arg0: i32) -> (i32, i32) {
    %c0_i32 = arith.constant 0 : i32
    %c0_i32_0 = arith.constant 0 : i32
    %c0_i32_1 = arith.constant 0 : i32
    return %c0_i32, %c0_i32_0 : i32, i32
  }
  func.func @transform_2(%arg0: i32) -> (i32, i32) {
    %c0_i32 = arith.constant 0 : i32
    %c0_i32_0 = arith.constant 0 : i32
    %c0_i32_1 = arith.constant 0 : i32
    return %c0_i32, %c0_i32_0 : i32, i32
  }
  func.func @transform_3(%arg0: i32) -> (i32, i32) {
    %c0_i32 = arith.constant 0 : i32
    %c0_i32_0 = arith.constant 0 : i32
    return %arg0, %c0_i32 : i32, i32
  }
}

module attributes {stable_mosaic.version = 11 : i64} {
  func.func @gemm_bias_act_kernel(%arg0: i32, %arg1: memref<40x1152xf32, #tpu.memory_space<vmem>>, %arg2: memref<1152x64xf32, #tpu.memory_space<vmem>>, %arg3: memref<1x64xf32, #tpu.memory_space<vmem>>, %arg4: memref<40x64xf32, #tpu.memory_space<vmem>>) attributes {dimension_semantics = [#tpu.dimension_semantics<parallel>], iteration_bounds = array<i64: 5>, scalar_prefetch = 0 : i64, scratch_operands = 0 : i64, tpu.core_type = #tpu.core_type<tc>, window_params = [{transform_indices = @transform_0, window_bounds = array<i64: 40, 1152>}, {pipeline_mode = #tpu.pipeline_mode<synchronous>, transform_indices = @transform_1, window_bounds = array<i64: 1152, 64>}, {pipeline_mode = #tpu.pipeline_mode<synchronous>, transform_indices = @transform_2, window_bounds = array<i64: 1, 64>}, {transform_indices = @transform_3, window_bounds = array<i64: 40, 64>}]} {
    %c0 = arith.constant 0 : index
    %c0_0 = arith.constant 0 : index
    %0 = vector.load %arg1[%c0, %c0_0] : memref<40x1152xf32, #tpu.memory_space<vmem>>, vector<40x1152xf32>
    %c0_1 = arith.constant 0 : index
    %c0_2 = arith.constant 0 : index
    %1 = vector.load %arg2[%c0_1, %c0_2] : memref<1152x64xf32, #tpu.memory_space<vmem>>, vector<1152x64xf32>
    %cst = arith.constant dense<0.000000e+00> : vector<40x64xf32>
    %2 = tpu.matmul %0, %1, %cst {dimension_numbers = #tpu.dot_dimension_numbers<[1], [0], [0], [1], [0, 0, 1, 1], [], []>} : vector<40x1152xf32>, vector<1152x64xf32>, vector<40x64xf32> -> vector<40x64xf32>
    %c0_3 = arith.constant 0 : index
    %c0_4 = arith.constant 0 : index
    %3 = vector.load %arg3[%c0_3, %c0_4] : memref<1x64xf32, #tpu.memory_space<vmem>>, vector<1x64xf32>
    %4 = vector.broadcast %3 : vector<1x64xf32> to vector<40x64xf32>
    %5 = arith.addf %2, %4 : vector<40x64xf32>
    %cst_5 = arith.constant 0.000000e+00 : f32
    %6 = vector.broadcast %cst_5 : f32 to vector<40x64xf32>
    %7 = arith.maximumf %5, %6 : vector<40x64xf32>
    %c0_6 = arith.constant 0 : index
    %c0_7 = arith.constant 0 : index
    %8 = vector.load %arg4[%c0_6, %c0_7] : memref<40x64xf32, #tpu.memory_space<vmem>>, vector<40x64xf32>
    tpu.vector_store %arg4[%c0_6, %c0_7], %7 {strides = array<i32>} : memref<40x64xf32, #tpu.memory_space<vmem>>, vector<40x64xf32>,
    return
  }
  func.func @transform_0(%arg0: i32) -> (i32, i32) {
    %c0_i32 = arith.constant 0 : i32
    %c0_i32_0 = arith.constant 0 : i32
    return %arg0, %c0_i32 : i32, i32
  }
  func.func @transform_1(%arg0: i32) -> (i32, i32) {
    %c0_i32 = arith.constant 0 : i32
    %c0_i32_0 = arith.constant 0 : i32
    %c0_i32_1 = arith.constant 0 : i32
    return %c0_i32, %c0_i32_0 : i32, i32
  }
  func.func @transform_2(%arg0: i32) -> (i32, i32) {
    %c0_i32 = arith.constant 0 : i32
    %c0_i32_0 = arith.constant 0 : i32
    %c0_i32_1 = arith.constant 0 : i32
    return %c0_i32, %c0_i32_0 : i32, i32
  }
  func.func @transform_3(%arg0: i32) -> (i32, i32) {
    %c0_i32 = arith.constant 0 : i32
    %c0_i32_0 = arith.constant 0 : i32
    return %arg0, %c0_i32 : i32, i32
  }
}

module attributes {stable_mosaic.version = 11 : i64} {
  func.func @dense_stack_kernel(%arg0: i32, %arg1: memref<2x3200xf32, #tpu.memory_space<vmem>>, %arg2: memref<3200x512xbf16, #tpu.memory_space<vmem>>, %arg3: memref<1x512xf32, #tpu.memory_space<vmem>>, %arg4: memref<512x64xf32, #tpu.memory_space<vmem>>, %arg5: memref<1x64xf32, #tpu.memory_space<vmem>>, %arg6: memref<2x64xf32, #tpu.memory_space<vmem>>, %arg7: memref<2x512xf32, #tpu.memory_space<vmem>>) attributes {dimension_semantics = [#tpu.dimension_semantics<arbitrary>], iteration_bounds = array<i64: 2>, scalar_prefetch = 0 : i64, scratch_operands = 1 : i64, tpu.core_type = #tpu.core_type<tc>, window_params = [{transform_indices = @transform_0, window_bounds = array<i64: 2, 3200>}, {transform_indices = @transform_1, window_bounds = array<i64: 3200, 512>}, {pipeline_mode = #tpu.pipeline_mode<synchronous>, transform_indices = @transform_2, window_bounds = array<i64: 1, 512>}, {pipeline_mode = #tpu.pipeline_mode<synchronous>, transform_indices = @transform_3, window_bounds = array<i64: 512, 64>}, {pipeline_mode = #tpu.pipeline_mode<synchronous>, transform_indices = @transform_4, window_bounds = array<i64: 1, 64>}, {pipeline_mode = #tpu.pipeline_mode<synchronous>, transform_indices = @transform_5, window_bounds = array<i64: 2, 64>}]} {
    %c0_i32 = arith.constant 0 : i32
    %0 = arith.cmpi eq, %arg0, %c0_i32 : i32
    %1 = arith.extui %0 : i1 to i32
    %c0_i32_0 = arith.constant 0 : i32
    %2 = arith.cmpi ne, %1, %c0_i32_0 : i32
    scf.if %2 {
      %cst_9 = arith.constant 0.000000e+00 : f32
      %13 = vector.broadcast %cst_9 : f32 to vector<2x512xf32>
      %c0_10 = arith.constant 0 : index
      %c0_11 = arith.constant 0 : index
      %14 = vector.load %arg7[%c0_10, %c0_11] : memref<2x512xf32, #tpu.memory_space<vmem>>, vector<2x512xf32>
      tpu.vector_store %arg7[%c0_10, %c0_11], %13 {strides = array<i32>} : memref<2x512xf32, #tpu.memory_space<vmem>>, vector<2x512xf32>,
    } else {
    }
    %c0 = arith.constant 0 : index
    %c0_1 = arith.constant 0 : index
    %3 = vector.load %arg7[%c0, %c0_1] : memref<2x512xf32, #tpu.memory_space<vmem>>, vector<2x512xf32>
    %c0_2 = arith.constant 0 : index
    %c0_3 = arith.constant 0 : index
    %4 = vector.load %arg1[%c0_2, %c0_3] : memref<2x3200xf32, #tpu.memory_space<vmem>>, vector<2x3200xf32>
    %5 = arith.truncf %4 : vector<2x3200xf32> to vector<2x3200xbf16>
    %c0_4 = arith.constant 0 : index
    %c0_5 = arith.constant 0 : index
    %6 = vector.load %arg2[%c0_4, %c0_5] : memref<3200x512xbf16, #tpu.memory_space<vmem>>, vector<3200x512xbf16>
    %cst = arith.constant dense<0.000000e+00> : vector<2x512xf32>
    %7 = tpu.matmul %5, %6, %cst {dimension_numbers = #tpu.dot_dimension_numbers<[1], [0], [0], [1], [0, 0, 1, 1], [], []>} : vector<2x3200xbf16>, vector<3200x512xbf16>, vector<2x512xf32> -> vector<2x512xf32>
    %8 = arith.addf %3, %7 : vector<2x512xf32>
    %c0_6 = arith.constant 0 : index
    %c0_7 = arith.constant 0 : index
    %9 = vector.load %arg7[%c0_6, %c0_7] : memref<2x512xf32, #tpu.memory_space<vmem>>, vector<2x512xf32>
    tpu.vector_store %arg7[%c0_6, %c0_7], %8 {strides = array<i32>} : memref<2x512xf32, #tpu.memory_space<vmem>>, vector<2x512xf32>,
    %c1_i32 = arith.constant 1 : i32
    %10 = arith.cmpi eq, %arg0, %c1_i32 : i32
    %11 = arith.extui %10 : i1 to i32
    %c0_i32_8 = arith.constant 0 : i32
    %12 = arith.cmpi ne, %11, %c0_i32_8 : i32
    scf.if %12 {
      %c0_9 = arith.constant 0 : index
      %c0_10 = arith.constant 0 : index
      %13 = vector.load %arg7[%c0_9, %c0_10] : memref<2x512xf32, #tpu.memory_space<vmem>>, vector<2x512xf32>
      %c0_11 = arith.constant 0 : index
      %c0_12 = arith.constant 0 : index
      %14 = vector.load %arg3[%c0_11, %c0_12] : memref<1x512xf32, #tpu.memory_space<vmem>>, vector<1x512xf32>
      %15 = vector.broadcast %14 : vector<1x512xf32> to vector<2x512xf32>
      %16 = arith.addf %13, %15 : vector<2x512xf32>
      %cst_13 = arith.constant 0.000000e+00 : f32
      %17 = vector.broadcast %cst_13 : f32 to vector<2x512xf32>
      %18 = arith.maximumf %16, %17 : vector<2x512xf32>
      %c0_14 = arith.constant 0 : index
      %c0_15 = arith.constant 0 : index
      %19 = vector.load %arg4[%c0_14, %c0_15] : memref<512x64xf32, #tpu.memory_space<vmem>>, vector<512x64xf32>
      %cst_16 = arith.constant dense<0.000000e+00> : vector<2x64xf32>
      %20 = tpu.matmul %18, %19, %cst_16 {dimension_numbers = #tpu.dot_dimension_numbers<[1], [0], [0], [1], [0, 0, 1, 1], [], []>} : vector<2x512xf32>, vector<512x64xf32>, vector<2x64xf32> -> vector<2x64xf32>
      %c0_17 = arith.constant 0 : index
      %c0_18 = arith.constant 0 : index
      %21 = vector.load %arg5[%c0_17, %c0_18] : memref<1x64xf32, #tpu.memory_space<vmem>>, vector<1x64xf32>
      %22 = vector.broadcast %21 : vector<1x64xf32> to vector<2x64xf32>
      %23 = arith.addf %20, %22 : vector<2x64xf32>
      %c0_19 = arith.constant 0 : index
      %c0_20 = arith.constant 0 : index
      %24 = vector.load %arg6[%c0_19, %c0_20] : memref<2x64xf32, #tpu.memory_space<vmem>>, vector<2x64xf32>
      tpu.vector_store %arg6[%c0_19, %c0_20], %23 {strides = array<i32>} : memref<2x64xf32, #tpu.memory_space<vmem>>, vector<2x64xf32>,
    } else {
    }
    return
  }
  func.func @transform_0(%arg0: i32) -> (i32, i32) {
    %c0_i32 = arith.constant 0 : i32
    %c0_i32_0 = arith.constant 0 : i32
    return %c0_i32, %arg0 : i32, i32
  }
  func.func @transform_1(%arg0: i32) -> (i32, i32) {
    %c0_i32 = arith.constant 0 : i32
    %c0_i32_0 = arith.constant 0 : i32
    return %arg0, %c0_i32 : i32, i32
  }
  func.func @transform_2(%arg0: i32) -> (i32, i32) {
    %c0_i32 = arith.constant 0 : i32
    %c0_i32_0 = arith.constant 0 : i32
    %c0_i32_1 = arith.constant 0 : i32
    return %c0_i32, %c0_i32_0 : i32, i32
  }
  func.func @transform_3(%arg0: i32) -> (i32, i32) {
    %c0_i32 = arith.constant 0 : i32
    %c0_i32_0 = arith.constant 0 : i32
    %c0_i32_1 = arith.constant 0 : i32
    return %c0_i32, %c0_i32_0 : i32, i32
  }
  func.func @transform_4(%arg0: i32) -> (i32, i32) {
    %c0_i32 = arith.constant 0 : i32
    %c0_i32_0 = arith.constant 0 : i32
    %c0_i32_1 = arith.constant 0 : i32
    return %c0_i32, %c0_i32_0 : i32, i32
  }
  func.func @transform_5(%arg0: i32) -> (i32, i32) {
    %c0_i32 = arith.constant 0 : i32
    %c0_i32_0 = arith.constant 0 : i32
    %c0_i32_1 = arith.constant 0 : i32
    return %c0_i32, %c0_i32_0 : i32, i32
  }
}

</mosaic_0001>

<llo_original>
// kernel: encoder_like_dqn_forward.4
$region0: #{encoder_like_dqn_forward.4}
  #allocation0 [shape = 'u32[]', space=smem, size = 0x4, offset = 0x4, fixed_abs, tag = 'smem constant byte address 0x4 - core index']
  #allocation1 [shape = 'u32[144,128]{1,0:T(1,128)}', space=vmem, size = 0x12000, scoped, tag = 'internal scratch']
  %s0 = inlined_call_operand.vmem [shape: f32[800,256], index: 0, kind: input, shape index: {}]
  %s1 = inlined_call_operand.vmem [shape: f32[256,128], index: 1, kind: input, shape index: {}]
  %s2 = inlined_call_operand.vmem [shape: f32[1,128], index: 2, kind: input, shape index: {}]
  %s3 = inlined_call_operand.vmem [shape: f32[800,128], index: 3, kind: output, shape index: {}]
  %s4 = sld [smem:[#allocation0]]
  $region45: #{encoder_like_dqn_forward.4} parent=0
    _
  %s6 = ssub.s32 1, %s4
  %s7 = scalar_select 0, %s6, %s4
  loop: start=0, step=1, limit=4
  $region2: #{encoder_like_dqn_forward.4} parent=0 // loop_pre_header
    _
  $region3: #{encoder_like_dqn_forward.4} parent=0 // loop_header
    %s9 = sphi 0, %s13
    %p10 = scmp.ge.s32.totalorder %s9, 4
    %s19 = sphi 0, %s21
    %s22 = sphi 0, %s19
    %s23 = sphi 0, %s22
    %s39 = sphi 0, %s23
    %s43 = sphi 0, %s43
    %s45 = sphi 0, %s43
    %s46 = sphi 0, %s45
    %s60 = sphi 0, %s46
    %s64 = sphi 0, %s64
    %s66 = sphi 0, %s64
    %s67 = sphi 0, %s66
    %s81 = sphi 0, %s67
    %s87 = sphi 0, %s89
    %s90 = sphi 0, %s87
    %s91 = sphi 0, %s90
    %s107 = sphi 0, %s91
  $region4: #{encoder_like_dqn_forward.4} parent=0 // loop_header_branch
    %12 = sbr.rel (%p10) target = $region8
  $region5: #{encoder_like_dqn_forward.4} parent=0 // loop_body
    %s14 = ssub.s32 %s9, 1
    %s15 = ssub.s32 %s9, 2
    %s16 = sadd.s32 %s9, 1
    %s17 = ssub.s32 %s9, %s16
    %p18 = scmp.eq.s32.totalorder %s17, 0
    %s20 = sadd.s32 %s19, 1
    %s21 = scalar_select %p18, %s19, %s20
    %p24 = pneg %p18
    %p25 = scmp.eq.s32.totalorder %s9, 1
    %p26 = por %p24, %p25
    %p27 = scmp.ne.s32.totalorder %s19, %s22
    %p28 = scmp.eq.s32.totalorder %s9, 0
    %p29 = por %p27, %p28
    %p30 = scmp.ne.s32.totalorder %s19, %s22
    %p31 = scmp.eq.s32.totalorder %s14, 1
    %p32 = por %p30, %p31
    %p33 = scmp.ne.s32.totalorder %s22, %s23
    %p34 = scmp.eq.s32.totalorder %s14, 0
    %p35 = por %p33, %p34
    %p36 = scmp.ne.s32.totalorder %s22, %s23
    %p37 = scmp.eq.s32.totalorder %s15, 1
    %p38 = por %p36, %p37
    %p40 = scmp.ne.s32.totalorder %s23, %s39
    %p41 = scmp.eq.s32.totalorder %s15, 0
    %p42 = por %p40, %p41
    %s44 = sadd.s32 %s43, 1
    %p47 = scmp.eq.s32.totalorder %s9, 1
    %p48 = scmp.ne.s32.totalorder %s43, %s45
    %p49 = scmp.eq.s32.totalorder %s9, 0
    %p50 = por %p48, %p49
    %p51 = scmp.ne.s32.totalorder %s43, %s45
    %p52 = scmp.eq.s32.totalorder %s14, 1
    %p53 = por %p51, %p52
    %p54 = scmp.ne.s32.totalorder %s45, %s46
    %p55 = scmp.eq.s32.totalorder %s14, 0
    %p56 = por %p54, %p55
    %p57 = scmp.ne.s32.totalorder %s45, %s46
    %p58 = scmp.eq.s32.totalorder %s15, 1
    %p59 = por %p57, %p58
    %p61 = scmp.ne.s32.totalorder %s46, %s60
    %p62 = scmp.eq.s32.totalorder %s15, 0
    %p63 = por %p61, %p62
    %s65 = sadd.s32 %s64, 1
    %p68 = scmp.eq.s32.totalorder %s9, 1
    %p69 = scmp.ne.s32.totalorder %s64, %s66
    %p70 = scmp.eq.s32.totalorder %s9, 0
    %p71 = por %p69, %p70
    %p72 = scmp.ne.s32.totalorder %s64, %s66
    %p73 = scmp.eq.s32.totalorder %s14, 1
    %p74 = por %p72, %p73
    %p75 = scmp.ne.s32.totalorder %s66, %s67
    %p76 = scmp.eq.s32.totalorder %s14, 0
    %p77 = por %p75, %p76
    %p78 = scmp.ne.s32.totalorder %s66, %s67
    %p79 = scmp.eq.s32.totalorder %s15, 1
    %p80 = por %p78, %p79
    %p82 = scmp.ne.s32.totalorder %s67, %s81
    %p83 = scmp.eq.s32.totalorder %s15, 0
    %p84 = por %p82, %p83
    %s85 = ssub.s32 %s9, %s16
    %p86 = scmp.eq.s32.totalorder %s85, 0
    %s88 = sadd.s32 %s87, 1
    %s89 = scalar_select %p86, %s87, %s88
    %p92 = pneg %p86
    %p93 = scmp.eq.s32.totalorder %s9, 1
    %p94 = por %p92, %p93
    %p95 = scmp.ne.s32.totalorder %s87, %s90
    %p96 = scmp.eq.s32.totalorder %s9, 0
    %p97 = por %p95, %p96
    %p98 = scmp.ne.s32.totalorder %s87, %s90
    %p99 = scmp.eq.s32.totalorder %s14, 1
    %p100 = por %p98, %p99
    %p101 = scmp.ne.s32.totalorder %s90, %s91
    %p102 = scmp.eq.s32.totalorder %s14, 0
    %p103 = por %p101, %p102
    %p104 = scmp.ne.s32.totalorder %s90, %s91
    %p105 = scmp.eq.s32.totalorder %s15, 1
    %p106 = por %p104, %p105
    %p108 = scmp.ne.s32.totalorder %s91, %s107
    %p109 = scmp.eq.s32.totalorder %s15, 0
    %p110 = por %p108, %p109
    %p111 = scmp.le.s32.totalorder 1, %s9
    %p112 = scmp.lt.s32.totalorder %s9, 3
    %p113 = pnand %p111, %p112
    %p114 = pneg %p113
    // Predicated region
    $region9: #{encoder_like_dqn_forward.4} parent=5 // pred_check
      _
    $region10: #{encoder_like_dqn_forward.4} parent=5 // pred_check_branch
      %116 = sbr.rel (%p113) target = $region12
    $region11: #{encoder_like_dqn_forward.4} parent=5 // pred_region
      %s117 = ssub.s32 %s9, 1
      // Predicated region
      $region13: #{encoder_like_dqn_forward.4} parent=11 // pred_check
        %p118 = pneg %p56
      $region14: #{encoder_like_dqn_forward.4} parent=11 // pred_check_branch
        %120 = sbr.rel (%p118) target = $region16
      $region15: #{encoder_like_dqn_forward.4} parent=11 // pred_region
        _
      $region16: #{encoder_like_dqn_forward.4} parent=11 // pred_fallthru
        _
      // Predicated region
      $region17: #{encoder_like_dqn_forward.4} parent=11 // pred_check
        %p121 = pneg %p77
      $region18: #{encoder_like_dqn_forward.4} parent=11 // pred_check_branch
        %123 = sbr.rel (%p121) target = $region20
      $region19: #{encoder_like_dqn_forward.4} parent=11 // pred_region
        _
      $region20: #{encoder_like_dqn_forward.4} parent=11 // pred_fallthru
        _
    $region12: #{encoder_like_dqn_forward.4} parent=5 // pred_fallthru
      _
    %p124 = scmp.lt.s32.totalorder %s9, 2
    // Predicated region
    $region21: #{encoder_like_dqn_forward.4} parent=5 // pred_check
      %p125 = pneg %p124
    $region22: #{encoder_like_dqn_forward.4} parent=5 // pred_check_branch
      %127 = sbr.rel (%p125) target = $region24
    $region23: #{encoder_like_dqn_forward.4} parent=5 // pred_region
      // Predicated region
      $region25: #{encoder_like_dqn_forward.4} parent=23 // pred_check
        %p128 = pneg %p29
      $region26: #{encoder_like_dqn_forward.4} parent=23 // pred_check_branch
        %130 = sbr.rel (%p128) target = $region28
      $region27: #{encoder_like_dqn_forward.4} parent=23 // pred_region
        %s131 = smul.u32 50, %s9
        %p132 = scmp.lt.s32.totalorder %s131, 99
        %s133 = scalar_select %p132, %s131, 99
        %s134 = smul.addr %s133, 2
        %s135 = smul.addr %s134, 8
        %s136 = scalar_lea.vmem %s0, %s135
        %s137 = smul.u32 50, %s9
      $region28: #{encoder_like_dqn_forward.4} parent=23 // pred_fallthru
        _
    $region24: #{encoder_like_dqn_forward.4} parent=5 // pred_fallthru
      _
    %p138 = scmp.le.s32.totalorder 1, %s9
    %p139 = scmp.lt.s32.totalorder %s9, 3
    %p140 = pnand %p138, %p139
    %p141 = pneg %p140
    // Predicated region
    $region29: #{encoder_like_dqn_forward.4} parent=5 // pred_check
      _
    $region30: #{encoder_like_dqn_forward.4} parent=5 // pred_check_branch
      %143 = sbr.rel (%p140) target = $region32
    $region31: #{encoder_like_dqn_forward.4} parent=5 // pred_region
      %s144 = ssub.s32 %s9, 1
      %s145 = smul.u32 50, %s14
      %p146 = scmp.lt.s32.totalorder %s145, 99
      %s147 = scalar_select %p146, %s145, 99
      %s148 = smul.addr %s147, 2
      %s149 = smul.addr %s148, 8
      %s150 = scalar_lea.vmem %s0, %s149
      %p151 = pneg %p35
      %p152 = pneg %p32
      %p153 = pneg %p56
      %p154 = pneg %p53
      %p155 = pneg %p77
      %p156 = pneg %p74
      %p157 = pneg %p103
      %p158 = pneg %p100
      %s159 = smul.u32 50, %s14
      %p160 = scmp.lt.s32.totalorder %s159, 99
      %s161 = scalar_select %p160, %s159, 99
      %s162 = smul.addr %s161, 8
      %s163 = scalar_lea.vmem %s3, %s162
      %s164 = smul.u32 50, %s14
      %p165 = scmp.lt.s32.totalorder %s164, 99
      %s166 = scalar_select %p165, %s164, 99
      %s167 = smul.addr %s166, 2
      %s168 = smul.addr %s167, 8
      %s169 = scalar_lea.vmem %s0, %s168
      %s170 = smul.u32 50, %s14
      %s171 = smul.u32 50, %s14
      %p172 = scmp.lt.s32.totalorder %s171, 99
      %s173 = scalar_select %p172, %s171, 99
      %s174 = smul.addr %s173, 8
      %s175 = scalar_lea.vmem %s3, %s174
      %s176 = smul.u32 50, %s14
      %v177 = vld [vmem:[%s169] sm:$0xff]
      %v178 = vld [vmem:[%s169 + $0x8] sm:$0xff]
      %v179 = vld [vmem:[%s169 + $0x10] sm:$0xff]
      %v180 = vld [vmem:[%s169 + $0x18] sm:$0xff]
      %v181 = vld [vmem:[%s169 + $0x20] sm:$0xff]
      %v182 = vld [vmem:[%s169 + $0x28] sm:$0xff]
      %v183 = vld [vmem:[%s169 + $0x30] sm:$0xff]
      %v184 = vld [vmem:[%s169 + $0x38] sm:$0xff]
      %v185 = vld [vmem:[%s169 + $0x40] sm:$0xff]
      %v186 = vld [vmem:[%s169 + $0x48] sm:$0xff]
      %v187 = vld [vmem:[%s169 + $0x50] sm:$0xff]
      %v188 = vld [vmem:[%s169 + $0x58] sm:$0xff]
      %v189 = vld [vmem:[%s169 + $0x60] sm:$0xff]
      %v190 = vld [vmem:[%s169 + $0x68] sm:$0xff]
      %v191 = vld [vmem:[%s169 + $0x70] sm:$0xff]
      %v192 = vld [vmem:[%s169 + $0x78] sm:$0xff]
      %v193 = vld [vmem:[%s169 + $0x80] sm:$0xff]
      %v194 = vld [vmem:[%s169 + $0x88] sm:$0xff]
      %v195 = vld [vmem:[%s169 + $0x90] sm:$0xff]
      %v196 = vld [vmem:[%s169 + $0x98] sm:$0xff]
      %v197 = vld [vmem:[%s169 + $0xa0] sm:$0xff]
      %v198 = vld [vmem:[%s169 + $0xa8] sm:$0xff]
      %v199 = vld [vmem:[%s169 + $0xb0] sm:$0xff]
      %v200 = vld [vmem:[%s169 + $0xb8] sm:$0xff]
      %v201 = vld [vmem:[%s169 + $0xc0] sm:$0xff]
      %v202 = vld [vmem:[%s169 + $0xc8] sm:$0xff]
      %v203 = vld [vmem:[%s169 + $0xd0] sm:$0xff]
      %v204 = vld [vmem:[%s169 + $0xd8] sm:$0xff]
      %v205 = vld [vmem:[%s169 + $0xe0] sm:$0xff]
      %v206 = vld [vmem:[%s169 + $0xe8] sm:$0xff]
      %v207 = vld [vmem:[%s169 + $0xf0] sm:$0xff]
      %v208 = vld [vmem:[%s169 + $0xf8] sm:$0xff]
      %v209 = vld [vmem:[%s169 + $0x100] sm:$0xff]
      %v210 = vld [vmem:[%s169 + $0x108] sm:$0xff]
      %v211 = vld [vmem:[%s169 + $0x110] sm:$0xff]
      %v212 = vld [vmem:[%s169 + $0x118] sm:$0xff]
      %v213 = vld [vmem:[%s169 + $0x120] sm:$0xff]
      %v214 = vld [vmem:[%s169 + $0x128] sm:$0xff]
      %v215 = vld [vmem:[%s169 + $0x130] sm:$0xff]
      %v216 = vld [vmem:[%s169 + $0x138] sm:$0xff]
      %v217 = vld [vmem:[%s169 + $0x140] sm:$0xff]
      %v218 = vld [vmem:[%s169 + $0x148] sm:$0xff]
      %v219 = vld [vmem:[%s169 + $0x150] sm:$0xff]
      %v220 = vld [vmem:[%s169 + $0x158] sm:$0xff]
      %v221 = vld [vmem:[%s169 + $0x160] sm:$0xff]
      %v222 = vld [vmem:[%s169 + $0x168] sm:$0xff]
      %v223 = vld [vmem:[%s169 + $0x170] sm:$0xff]
      %v224 = vld [vmem:[%s169 + $0x178] sm:$0xff]
      %v225 = vld [vmem:[%s169 + $0x180] sm:$0xff]
      %v226 = vld [vmem:[%s169 + $0x188] sm:$0xff]
      %v227 = vld [vmem:[%s169 + $0x190] sm:$0xff]
      %v228 = vld [vmem:[%s169 + $0x198] sm:$0xff]
      %v229 = vld [vmem:[%s169 + $0x1a0] sm:$0xff]
      %v230 = vld [vmem:[%s169 + $0x1a8] sm:$0xff]
      %v231 = vld [vmem:[%s169 + $0x1b0] sm:$0xff]
      %v232 = vld [vmem:[%s169 + $0x1b8] sm:$0xff]
      %v233 = vld [vmem:[%s169 + $0x1c0] sm:$0xff]
      %v234 = vld [vmem:[%s169 + $0x1c8] sm:$0xff]
      %v235 = vld [vmem:[%s169 + $0x1d0] sm:$0xff]
      %v236 = vld [vmem:[%s169 + $0x1d8] sm:$0xff]
      %v237 = vld [vmem:[%s169 + $0x1e0] sm:$0xff]
      %v238 = vld [vmem:[%s169 + $0x1e8] sm:$0xff]
      %v239 = vld [vmem:[%s169 + $0x1f0] sm:$0xff]
      %v240 = vld [vmem:[%s169 + $0x1f8] sm:$0xff]
      %v241 = vld [vmem:[%s169 + $0x200] sm:$0xff]
      %v242 = vld [vmem:[%s169 + $0x208] sm:$0xff]
      %v243 = vld [vmem:[%s169 + $0x210] sm:$0xff]
      %v244 = vld [vmem:[%s169 + $0x218] sm:$0xff]
      %v245 = vld [vmem:[%s169 + $0x220] sm:$0xff]
      %v246 = vld [vmem:[%s169 + $0x228] sm:$0xff]
      %v247 = vld [vmem:[%s169 + $0x230] sm:$0xff]
      %v248 = vld [vmem:[%s169 + $0x238] sm:$0xff]
      %v249 = vld [vmem:[%s169 + $0x240] sm:$0xff]
      %v250 = vld [vmem:[%s169 + $0x248] sm:$0xff]
      %v251 = vld [vmem:[%s169 + $0x250] sm:$0xff]
      %v252 = vld [vmem:[%s169 + $0x258] sm:$0xff]
      %v253 = vld [vmem:[%s169 + $0x260] sm:$0xff]
      %v254 = vld [vmem:[%s169 + $0x268] sm:$0xff]
      %v255 = vld [vmem:[%s169 + $0x270] sm:$0xff]
      %v256 = vld [vmem:[%s169 + $0x278] sm:$0xff]
      %v257 = vld [vmem:[%s169 + $0x280] sm:$0xff]
      %v258 = vld [vmem:[%s169 + $0x288] sm:$0xff]
      %v259 = vld [vmem:[%s169 + $0x290] sm:$0xff]
      %v260 = vld [vmem:[%s169 + $0x298] sm:$0xff]
      %v261 = vld [vmem:[%s169 + $0x2a0] sm:$0xff]
      %v262 = vld [vmem:[%s169 + $0x2a8] sm:$0xff]
      %v263 = vld [vmem:[%s169 + $0x2b0] sm:$0xff]
      %v264 = vld [vmem:[%s169 + $0x2b8] sm:$0xff]
      %v265 = vld [vmem:[%s169 + $0x2c0] sm:$0xff]
      %v266 = vld [vmem:[%s169 + $0x2c8] sm:$0xff]
      %v267 = vld [vmem:[%s169 + $0x2d0] sm:$0xff]
      %v268 = vld [vmem:[%s169 + $0x2d8] sm:$0xff]
      %v269 = vld [vmem:[%s169 + $0x2e0] sm:$0xff]
      %v270 = vld [vmem:[%s169 + $0x2e8] sm:$0xff]
      %v271 = vld [vmem:[%s169 + $0x2f0] sm:$0xff]
      %v272 = vld [vmem:[%s169 + $0x2f8] sm:$0xff]
      %v273 = vld [vmem:[%s169 + $0x300] sm:$0xff]
      %v274 = vld [vmem:[%s169 + $0x308] sm:$0xff]
      %v275 = vld [vmem:[%s169 + $0x310] sm:$0xff]
      %v276 = vld [vmem:[%s169 + $0x318] sm:$0xff]
      %v277 = vld [vmem:[%s1] sm:$0xff]
      %v278 = vld [vmem:[%s1 + $0x8] sm:$0xff]
      %v279 = vld [vmem:[%s1 + $0x10] sm:$0xff]
      %v280 = vld [vmem:[%s1 + $0x18] sm:$0xff]
      %v281 = vld [vmem:[%s1 + $0x20] sm:$0xff]
      %v282 = vld [vmem:[%s1 + $0x28] sm:$0xff]
      %v283 = vld [vmem:[%s1 + $0x30] sm:$0xff]
      %v284 = vld [vmem:[%s1 + $0x38] sm:$0xff]
      %v285 = vld [vmem:[%s1 + $0x40] sm:$0xff]
      %v286 = vld [vmem:[%s1 + $0x48] sm:$0xff]
      %v287 = vld [vmem:[%s1 + $0x50] sm:$0xff]
      %v288 = vld [vmem:[%s1 + $0x58] sm:$0xff]
      %v289 = vld [vmem:[%s1 + $0x60] sm:$0xff]
      %v290 = vld [vmem:[%s1 + $0x68] sm:$0xff]
      %v291 = vld [vmem:[%s1 + $0x70] sm:$0xff]
      %v292 = vld [vmem:[%s1 + $0x78] sm:$0xff]
      %v293 = vld [vmem:[%s1 + $0x80] sm:$0xff]
      %v294 = vld [vmem:[%s1 + $0x88] sm:$0xff]
      %v295 = vld [vmem:[%s1 + $0x90] sm:$0xff]
      %v296 = vld [vmem:[%s1 + $0x98] sm:$0xff]
      %v297 = vld [vmem:[%s1 + $0xa0] sm:$0xff]
      %v298 = vld [vmem:[%s1 + $0xa8] sm:$0xff]
      %v299 = vld [vmem:[%s1 + $0xb0] sm:$0xff]
      %v300 = vld [vmem:[%s1 + $0xb8] sm:$0xff]
      %v301 = vld [vmem:[%s1 + $0xc0] sm:$0xff]
      %v302 = vld [vmem:[%s1 + $0xc8] sm:$0xff]
      %v303 = vld [vmem:[%s1 + $0xd0] sm:$0xff]
      %v304 = vld [vmem:[%s1 + $0xd8] sm:$0xff]
      %v305 = vld [vmem:[%s1 + $0xe0] sm:$0xff]
      %v306 = vld [vmem:[%s1 + $0xe8] sm:$0xff]
      %v307 = vld [vmem:[%s1 + $0xf0] sm:$0xff]
      %v308 = vld [vmem:[%s1 + $0xf8] sm:$0xff]
      %v309 = vld [vmem:[%s2] sm:$0x1]
      %v311 = vlaneseq
      %v312 = vshrl.u32 %v311, 7
      %v313 = vsub.s32 0, %v312
      %v314 = vrot.slane %v309, %v313
      %316 = vmatprep.subr.mxu0 0.0
      %317 = vmatpush1.msra.mxu0 %v277
      %318 = vmatprep.subr.mxu0 0.0
      %319 = vmatpush1.msra.mxu0 %v278
      %320 = vmatprep.subr.mxu0 0.0
      %321 = vmatpush1.msra.mxu0 %v279
      %322 = vmatprep.subr.mxu0 0.0
      %323 = vmatpush1.msra.mxu0 %v280
      %324 = vmatprep.subr.mxu0 0.0
      %325 = vmatpush1.msra.mxu0 %v281
      %326 = vmatprep.subr.mxu0 0.0
      %327 = vmatpush1.msra.mxu0 %v282
      %328 = vmatprep.subr.mxu0 0.0
      %329 = vmatpush1.msra.mxu0 %v283
      %330 = vmatprep.subr.mxu0 0.0
      %331 = vmatpush1.msra.mxu0 %v284
      %332 = vmatprep.subr.mxu0 0.0
      %333 = vmatpush1.msra.mxu0 %v285
      %334 = vmatprep.subr.mxu0 0.0
      %335 = vmatpush1.msra.mxu0 %v286
      %336 = vmatprep.subr.mxu0 0.0
      %337 = vmatpush1.msra.mxu0 %v287
      %338 = vmatprep.subr.mxu0 0.0
      %339 = vmatpush1.msra.mxu0 %v288
      %340 = vmatprep.subr.mxu0 0.0
      %341 = vmatpush1.msra.mxu0 %v289
      %342 = vmatprep.subr.mxu0 0.0
      %343 = vmatpush1.msra.mxu0 %v290
      %344 = vmatprep.subr.mxu0 0.0
      %345 = vmatpush1.msra.mxu0 %v291
      %346 = vmatprep.subr.mxu0 0.0
      %347 = vmatpush1.msra.mxu0 %v292
      %348 = vmatprep.subr.mxu0 0.0
      %349 = vmatpush1.msra.mxu0 %v293
      %350 = vmatprep.subr.mxu0 0.0
      %351 = vmatpush1.msra.mxu0 %v294
      %352 = vmatprep.subr.mxu0 0.0
      %353 = vmatpush1.msra.mxu0 %v295
      %354 = vmatprep.subr.mxu0 0.0
      %355 = vmatpush1.msra.mxu0 %v296
      %356 = vmatprep.subr.mxu0 0.0
      %357 = vmatpush1.msra.mxu0 %v297
      %358 = vmatprep.subr.mxu0 0.0
      %359 = vmatpush1.msra.mxu0 %v298
      %360 = vmatprep.subr.mxu0 0.0
      %361 = vmatpush1.msra.mxu0 %v299
      %362 = vmatprep.subr.mxu0 0.0
      %363 = vmatpush1.msra.mxu0 %v300
      %364 = vmatprep.subr.mxu0 0.0
      %365 = vmatpush1.msra.mxu0 %v301
      %366 = vmatprep.subr.mxu0 0.0
      %367 = vmatpush1.msra.mxu0 %v302
      %368 = vmatprep.subr.mxu0 0.0
      %369 = vmatpush1.msra.mxu0 %v303
      %370 = vmatprep.subr.mxu0 0.0
      %371 = vmatpush1.msra.mxu0 %v304
      %372 = vmatprep.subr.mxu0 0.0
      %373 = vmatpush1.msra.mxu0 %v305
      %374 = vmatprep.subr.mxu0 0.0
      %375 = vmatpush1.msra.mxu0 %v306
      %376 = vmatprep.subr.mxu0 0.0
      %377 = vmatpush1.msra.mxu0 %v307
      %378 = vmatprep.subr.mxu0 0.0
      %379 = vmatpush1.msra.mxu0 %v308
      %380 = vmatprep.mubr.f32.mxu0 %v178
      %381 = vmatmul.mubr.f32.gmra.mrb[0].mxu0 %v177
      %v382 = vpop.f32.mrb[0].mxu0
      %v383 = vadd.f32 %v314, %v382
      %v384 = vpop.f32.mrb[0].mxu0
      %385 = vmatprep.mubr.f32.mxu0 %v180
      %386 = vmatmul.mubr.f32.gmra.mrb[0].mxu0 %v179
      %v387 = vpop.f32.mrb[0].mxu0
      %v388 = vadd.f32 %v314, %v387
      %v389 = vpop.f32.mrb[0].mxu0
      %390 = vmatprep.mubr.f32.mxu0 %v182
      %391 = vmatmul.mubr.f32.gmra.mrb[0].mxu0 %v181
      %v392 = vpop.f32.mrb[0].mxu0
      %v393 = vadd.f32 %v314, %v392
      %v394 = vpop.f32.mrb[0].mxu0
      %395 = vmatprep.mubr.f32.mxu0 %v184
      %396 = vmatmul.mubr.f32.gmra.mrb[0].mxu0 %v183
      %v397 = vpop.f32.mrb[0].mxu0
      %v398 = vadd.f32 %v314, %v397
      %v399 = vpop.f32.mrb[0].mxu0
      %400 = vmatprep.mubr.f32.mxu0 %v186
      %401 = vmatmul.mubr.f32.gmra.mrb[0].mxu0 %v185
      %v402 = vpop.f32.mrb[0].mxu0
      %v403 = vadd.f32 %v314, %v402
      %v404 = vpop.f32.mrb[0].mxu0
      %405 = vmatprep.mubr.f32.mxu0 %v188
      %406 = vmatmul.mubr.f32.gmra.mrb[0].mxu0 %v187
      %v407 = vpop.f32.mrb[0].mxu0
      %v408 = vadd.f32 %v314, %v407
      %v409 = vpop.f32.mrb[0].mxu0
      %410 = vmatprep.mubr.f32.mxu0 %v190
      %411 = vmatmul.mubr.f32.gmra.mrb[0].mxu0 %v189
      %v412 = vpop.f32.mrb[0].mxu0
      %v413 = vadd.f32 %v314, %v412
      %v414 = vpop.f32.mrb[0].mxu0
      %415 = vmatprep.mubr.f32.mxu0 %v192
      %416 = vmatmul.mubr.f32.gmra.mrb[0].mxu0 %v191
      %v417 = vpop.f32.mrb[0].mxu0
      %v418 = vadd.f32 %v314, %v417
      %v419 = vpop.f32.mrb[0].mxu0
      %420 = vmatprep.mubr.f32.mxu0 %v194
      %421 = vmatmul.mubr.f32.gmra.mrb[0].mxu0 %v193
      %v422 = vpop.f32.mrb[0].mxu0
      %v423 = vadd.f32 %v314, %v422
      %v424 = vpop.f32.mrb[0].mxu0
      %425 = vmatprep.mubr.f32.mxu0 %v196
      %426 = vmatmul.mubr.f32.gmra.mrb[0].mxu0 %v195
      %v427 = vpop.f32.mrb[0].mxu0
      %v428 = vadd.f32 %v314, %v427
      %v429 = vpop.f32.mrb[0].mxu0
      %430 = vmatprep.mubr.f32.mxu0 %v198
      %431 = vmatmul.mubr.f32.gmra.mrb[0].mxu0 %v197
      %v432 = vpop.f32.mrb[0].mxu0
      %v433 = vadd.f32 %v314, %v432
      %v434 = vpop.f32.mrb[0].mxu0
      %435 = vmatprep.mubr.f32.mxu0 %v200
      %436 = vmatmul.mubr.f32.gmra.mrb[0].mxu0 %v199
      %v437 = vpop.f32.mrb[0].mxu0
      %v438 = vadd.f32 %v314, %v437
      %v439 = vpop.f32.mrb[0].mxu0
      %440 = vmatprep.mubr.f32.mxu0 %v202
      %441 = vmatmul.mubr.f32.gmra.mrb[0].mxu0 %v201
      %v442 = vpop.f32.mrb[0].mxu0
      %v443 = vadd.f32 %v314, %v442
      %v444 = vpop.f32.mrb[0].mxu0
      %445 = vmatprep.mubr.f32.mxu0 %v204
      %446 = vmatmul.mubr.f32.gmra.mrb[0].mxu0 %v203
      %v447 = vpop.f32.mrb[0].mxu0
      %v448 = vadd.f32 %v314, %v447
      %v449 = vpop.f32.mrb[0].mxu0
      %450 = vmatprep.mubr.f32.mxu0 %v206
      %451 = vmatmul.mubr.f32.gmra.mrb[0].mxu0 %v205
      %v452 = vpop.f32.mrb[0].mxu0
      %v453 = vadd.f32 %v314, %v452
      %v454 = vpop.f32.mrb[0].mxu0
      %455 = vmatprep.mubr.f32.mxu0 %v208
      %456 = vmatmul.mubr.f32.gmra.mrb[0].mxu0 %v207
      %v457 = vpop.f32.mrb[0].mxu0
      %v458 = vadd.f32 %v314, %v457
      %v459 = vpop.f32.mrb[0].mxu0
      %460 = vmatprep.mubr.f32.mxu0 %v210
      %461 = vmatmul.mubr.f32.gmra.mrb[0].mxu0 %v209
      %v462 = vpop.f32.mrb[0].mxu0
      %v463 = vadd.f32 %v314, %v462
      %v464 = vpop.f32.mrb[0].mxu0
      %465 = vmatprep.mubr.f32.mxu0 %v212
      %466 = vmatmul.mubr.f32.gmra.mrb[0].mxu0 %v211
      %v467 = vpop.f32.mrb[0].mxu0
      %v468 = vadd.f32 %v314, %v467
      %v469 = vpop.f32.mrb[0].mxu0
      %470 = vmatprep.mubr.f32.mxu0 %v214
      %471 = vmatmul.mubr.f32.gmra.mrb[0].mxu0 %v213
      %v472 = vpop.f32.mrb[0].mxu0
      %v473 = vadd.f32 %v314, %v472
      %v474 = vpop.f32.mrb[0].mxu0
      %475 = vmatprep.mubr.f32.mxu0 %v216
      %476 = vmatmul.mubr.f32.gmra.mrb[0].mxu0 %v215
      %v477 = vpop.f32.mrb[0].mxu0
      %v478 = vadd.f32 %v314, %v477
      %v479 = vpop.f32.mrb[0].mxu0
      %480 = vmatprep.mubr.f32.mxu0 %v218
      %481 = vmatmul.mubr.f32.gmra.mrb[0].mxu0 %v217
      %v482 = vpop.f32.mrb[0].mxu0
      %v483 = vadd.f32 %v314, %v482
      %v484 = vpop.f32.mrb[0].mxu0
      %485 = vmatprep.mubr.f32.mxu0 %v220
      %486 = vmatmul.mubr.f32.gmra.mrb[0].mxu0 %v219
      %v487 = vpop.f32.mrb[0].mxu0
      %v488 = vadd.f32 %v314, %v487
      %v489 = vpop.f32.mrb[0].mxu0
      %490 = vmatprep.mubr.f32.mxu0 %v222
      %491 = vmatmul.mubr.f32.gmra.mrb[0].mxu0 %v221
      %v492 = vpop.f32.mrb[0].mxu0
      %v493 = vadd.f32 %v314, %v492
      %v494 = vpop.f32.mrb[0].mxu0
      %495 = vmatprep.mubr.f32.mxu0 %v224
      %496 = vmatmul.mubr.f32.gmra.mrb[0].mxu0 %v223
      %v497 = vpop.f32.mrb[0].mxu0
      %v498 = vadd.f32 %v314, %v497
      %v499 = vpop.f32.mrb[0].mxu0
      %500 = vmatprep.mubr.f32.mxu0 %v226
      %501 = vmatmul.mubr.f32.gmra.mrb[0].mxu0 %v225
      %v502 = vpop.f32.mrb[0].mxu0
      %v503 = vadd.f32 %v314, %v502
      %v504 = vpop.f32.mrb[0].mxu0
      %505 = vmatprep.mubr.f32.mxu0 %v228
      %506 = vmatmul.mubr.f32.gmra.mrb[0].mxu0 %v227
      %v507 = vpop.f32.mrb[0].mxu0
      %v508 = vadd.f32 %v314, %v507
      %v509 = vpop.f32.mrb[0].mxu0
      %510 = vmatprep.mubr.f32.mxu0 %v230
      %511 = vmatmul.mubr.f32.gmra.mrb[0].mxu0 %v229
      %v512 = vpop.f32.mrb[0].mxu0
      %v513 = vadd.f32 %v314, %v512
      %v514 = vpop.f32.mrb[0].mxu0
      %515 = vmatprep.mubr.f32.mxu0 %v232
      %516 = vmatmul.mubr.f32.gmra.mrb[0].mxu0 %v231
      %v517 = vpop.f32.mrb[0].mxu0
      %v518 = vadd.f32 %v314, %v517
      %v519 = vpop.f32.mrb[0].mxu0
      %520 = vmatprep.mubr.f32.mxu0 %v234
      %521 = vmatmul.mubr.f32.gmra.mrb[0].mxu0 %v233
      %v522 = vpop.f32.mrb[0].mxu0
      %v523 = vadd.f32 %v314, %v522
      %v524 = vpop.f32.mrb[0].mxu0
      %525 = vmatprep.mubr.f32.mxu0 %v236
      %526 = vmatmul.mubr.f32.gmra.mrb[0].mxu0 %v235
      %v527 = vpop.f32.mrb[0].mxu0
      %v528 = vadd.f32 %v314, %v527
      %v529 = vpop.f32.mrb[0].mxu0
      %530 = vmatprep.mubr.f32.mxu0 %v238
      %531 = vmatmul.mubr.f32.gmra.mrb[0].mxu0 %v237
      %v532 = vpop.f32.mrb[0].mxu0
      %v533 = vadd.f32 %v314, %v532
      %v534 = vpop.f32.mrb[0].mxu0
      %535 = vmatprep.mubr.f32.mxu0 %v240
      %536 = vmatmul.mubr.f32.gmra.mrb[0].mxu0 %v239
      %v537 = vpop.f32.mrb[0].mxu0
      %v538 = vadd.f32 %v314, %v537
      %v539 = vpop.f32.mrb[0].mxu0
      %540 = vmatprep.mubr.f32.mxu0 %v242
      %541 = vmatmul.mubr.f32.gmra.mrb[0].mxu0 %v241
      %v542 = vpop.f32.mrb[0].mxu0
      %v543 = vadd.f32 %v314, %v542
      %v544 = vpop.f32.mrb[0].mxu0
      %545 = vmatprep.mubr.f32.mxu0 %v244
      %546 = vmatmul.mubr.f32.gmra.mrb[0].mxu0 %v243
      %v547 = vpop.f32.mrb[0].mxu0
      %v548 = vadd.f32 %v314, %v547
      %v549 = vpop.f32.mrb[0].mxu0
      %550 = vmatprep.mubr.f32.mxu0 %v246
      %551 = vmatmul.mubr.f32.gmra.mrb[0].mxu0 %v245
      %v552 = vpop.f32.mrb[0].mxu0
      %v553 = vadd.f32 %v314, %v552
      %v554 = vpop.f32.mrb[0].mxu0
      %555 = vmatprep.mubr.f32.mxu0 %v248
      %556 = vmatmul.mubr.f32.gmra.mrb[0].mxu0 %v247
      %v557 = vpop.f32.mrb[0].mxu0
      %v558 = vadd.f32 %v314, %v557
      %v559 = vpop.f32.mrb[0].mxu0
      %560 = vmatprep.mubr.f32.mxu0 %v250
      %561 = vmatmul.mubr.f32.gmra.mrb[0].mxu0 %v249
      %v562 = vpop.f32.mrb[0].mxu0
      %v563 = vadd.f32 %v314, %v562
      %v564 = vpop.f32.mrb[0].mxu0
      %565 = vmatprep.mubr.f32.mxu0 %v252
      %566 = vmatmul.mubr.f32.gmra.mrb[0].mxu0 %v251
      %v567 = vpop.f32.mrb[0].mxu0
      %v568 = vadd.f32 %v314, %v567
      %v569 = vpop.f32.mrb[0].mxu0
      %570 = vmatprep.mubr.f32.mxu0 %v254
      %571 = vmatmul.mubr.f32.gmra.mrb[0].mxu0 %v253
      %v572 = vpop.f32.mrb[0].mxu0
      %v573 = vadd.f32 %v314, %v572
      %v574 = vpop.f32.mrb[0].mxu0
      %575 = vmatprep.mubr.f32.mxu0 %v256
      %576 = vmatmul.mubr.f32.gmra.mrb[0].mxu0 %v255
      %v577 = vpop.f32.mrb[0].mxu0
      %v578 = vadd.f32 %v314, %v577
      %v579 = vpop.f32.mrb[0].mxu0
      %580 = vmatprep.mubr.f32.mxu0 %v258
      %581 = vmatmul.mubr.f32.gmra.mrb[0].mxu0 %v257
      %v582 = vpop.f32.mrb[0].mxu0
      %v583 = vadd.f32 %v314, %v582
      %v584 = vpop.f32.mrb[0].mxu0
      %585 = vmatprep.mubr.f32.mxu0 %v260
      %586 = vmatmul.mubr.f32.gmra.mrb[0].mxu0 %v259
      %v587 = vpop.f32.mrb[0].mxu0
      %v588 = vadd.f32 %v314, %v587
      %v589 = vpop.f32.mrb[0].mxu0
      %590 = vmatprep.mubr.f32.mxu0 %v262
      %591 = vmatmul.mubr.f32.gmra.mrb[0].mxu0 %v261
      %v592 = vpop.f32.mrb[0].mxu0
      %v593 = vadd.f32 %v314, %v592
      %v594 = vpop.f32.mrb[0].mxu0
      %595 = vmatprep.mubr.f32.mxu0 %v264
      %596 = vmatmul.mubr.f32.gmra.mrb[0].mxu0 %v263
      %v597 = vpop.f32.mrb[0].mxu0
      %v598 = vadd.f32 %v314, %v597
      %v599 = vpop.f32.mrb[0].mxu0
      %600 = vmatprep.mubr.f32.mxu0 %v266
      %601 = vmatmul.mubr.f32.gmra.mrb[0].mxu0 %v265
      %v602 = vpop.f32.mrb[0].mxu0
      %v603 = vadd.f32 %v314, %v602
      %v604 = vpop.f32.mrb[0].mxu0
      %605 = vmatprep.mubr.f32.mxu0 %v268
      %606 = vmatmul.mubr.f32.gmra.mrb[0].mxu0 %v267
      %v607 = vpop.f32.mrb[0].mxu0
      %v608 = vadd.f32 %v314, %v607
      %v609 = vpop.f32.mrb[0].mxu0
      %610 = vmatprep.mubr.f32.mxu0 %v270
      %611 = vmatmul.mubr.f32.gmra.mrb[0].mxu0 %v269
      %v612 = vpop.f32.mrb[0].mxu0
      %v613 = vadd.f32 %v314, %v612
      %v614 = vpop.f32.mrb[0].mxu0
      %615 = vmatprep.mubr.f32.mxu0 %v272
      %616 = vmatmul.mubr.f32.gmra.mrb[0].mxu0 %v271
      %v617 = vpop.f32.mrb[0].mxu0
      %v618 = vadd.f32 %v314, %v617
      %v619 = vpop.f32.mrb[0].mxu0
      %620 = vmatprep.mubr.f32.mxu0 %v274
      %621 = vmatmul.mubr.f32.gmra.mrb[0].mxu0 %v273
      %v622 = vpop.f32.mrb[0].mxu0
      %v623 = vadd.f32 %v314, %v622
      %v624 = vpop.f32.mrb[0].mxu0
      %625 = vmatprep.mubr.f32.mxu0 %v276
      %626 = vmatmul.mubr.f32.gmra.mrb[0].mxu0 %v275
      %v627 = vpop.f32.mrb[0].mxu0
      %v628 = vadd.f32 %v314, %v627
      %v629 = vpop.f32.mrb[0].mxu0
      %630 = vdwg.mxu0
      %v631 = vmax.f32 %v383, 0.0
      %v632 = vmax.f32 %v388, 0.0
      %v633 = vmax.f32 %v393, 0.0
      %v634 = vmax.f32 %v398, 0.0
      %v635 = vmax.f32 %v403, 0.0
      %v636 = vmax.f32 %v408, 0.0
      %v637 = vmax.f32 %v413, 0.0
      %v638 = vmax.f32 %v418, 0.0
      %v639 = vmax.f32 %v423, 0.0
      %v640 = vmax.f32 %v428, 0.0
      %v641 = vmax.f32 %v433, 0.0
      %v642 = vmax.f32 %v438, 0.0
      %v643 = vmax.f32 %v443, 0.0
      %v644 = vmax.f32 %v448, 0.0
      %v645 = vmax.f32 %v453, 0.0
      %v646 = vmax.f32 %v458, 0.0
      %v647 = vmax.f32 %v463, 0.0
      %v648 = vmax.f32 %v468, 0.0
      %v649 = vmax.f32 %v473, 0.0
      %v650 = vmax.f32 %v478, 0.0
      %v651 = vmax.f32 %v483, 0.0
      %v652 = vmax.f32 %v488, 0.0
      %v653 = vmax.f32 %v493, 0.0
      %v654 = vmax.f32 %v498, 0.0
      %v655 = vmax.f32 %v503, 0.0
      %v656 = vmax.f32 %v508, 0.0
      %v657 = vmax.f32 %v513, 0.0
      %v658 = vmax.f32 %v518, 0.0
      %v659 = vmax.f32 %v523, 0.0
      %v660 = vmax.f32 %v528, 0.0
      %v661 = vmax.f32 %v533, 0.0
      %v662 = vmax.f32 %v538, 0.0
      %v663 = vmax.f32 %v543, 0.0
      %v664 = vmax.f32 %v548, 0.0
      %v665 = vmax.f32 %v553, 0.0
      %v666 = vmax.f32 %v558, 0.0
      %v667 = vmax.f32 %v563, 0.0
      %v668 = vmax.f32 %v568, 0.0
      %v669 = vmax.f32 %v573, 0.0
      %v670 = vmax.f32 %v578, 0.0
      %v671 = vmax.f32 %v583, 0.0
      %v672 = vmax.f32 %v588, 0.0
      %v673 = vmax.f32 %v593, 0.0
      %v674 = vmax.f32 %v598, 0.0
      %v675 = vmax.f32 %v603, 0.0
      %v676 = vmax.f32 %v608, 0.0
      %v677 = vmax.f32 %v613, 0.0
      %v678 = vmax.f32 %v618, 0.0
      %v679 = vmax.f32 %v623, 0.0
      %v680 = vmax.f32 %v628, 0.0
      %681 = vst [vmem:[%s175] sm:$0xff] %v631
      %682 = vst [vmem:[%s175 + $0x8] sm:$0xff] %v632
      %683 = vst [vmem:[%s175 + $0x10] sm:$0xff] %v633
      %684 = vst [vmem:[%s175 + $0x18] sm:$0xff] %v634
      %685 = vst [vmem:[%s175 + $0x20] sm:$0xff] %v635
      %686 = vst [vmem:[%s175 + $0x28] sm:$0xff] %v636
      %687 = vst [vmem:[%s175 + $0x30] sm:$0xff] %v637
      %688 = vst [vmem:[%s175 + $0x38] sm:$0xff] %v638
      %689 = vst [vmem:[%s175 + $0x40] sm:$0xff] %v639
      %690 = vst [vmem:[%s175 + $0x48] sm:$0xff] %v640
      %691 = vst [vmem:[%s175 + $0x50] sm:$0xff] %v641
      %692 = vst [vmem:[%s175 + $0x58] sm:$0xff] %v642
      %693 = vst [vmem:[%s175 + $0x60] sm:$0xff] %v643
      %694 = vst [vmem:[%s175 + $0x68] sm:$0xff] %v644
      %695 = vst [vmem:[%s175 + $0x70] sm:$0xff] %v645
      %696 = vst [vmem:[%s175 + $0x78] sm:$0xff] %v646
      %697 = vst [vmem:[%s175 + $0x80] sm:$0xff] %v647
      %698 = vst [vmem:[%s175 + $0x88] sm:$0xff] %v648
      %699 = vst [vmem:[%s175 + $0x90] sm:$0xff] %v649
      %700 = vst [vmem:[%s175 + $0x98] sm:$0xff] %v650
      %701 = vst [vmem:[%s175 + $0xa0] sm:$0xff] %v651
      %702 = vst [vmem:[%s175 + $0xa8] sm:$0xff] %v652
      %703 = vst [vmem:[%s175 + $0xb0] sm:$0xff] %v653
      %704 = vst [vmem:[%s175 + $0xb8] sm:$0xff] %v654
      %705 = vst [vmem:[%s175 + $0xc0] sm:$0xff] %v655
      %706 = vst [vmem:[%s175 + $0xc8] sm:$0xff] %v656
      %707 = vst [vmem:[%s175 + $0xd0] sm:$0xff] %v657
      %708 = vst [vmem:[%s175 + $0xd8] sm:$0xff] %v658
      %709 = vst [vmem:[%s175 + $0xe0] sm:$0xff] %v659
      %710 = vst [vmem:[%s175 + $0xe8] sm:$0xff] %v660
      %711 = vst [vmem:[%s175 + $0xf0] sm:$0xff] %v661
      %712 = vst [vmem:[%s175 + $0xf8] sm:$0xff] %v662
      %713 = vst [vmem:[%s175 + $0x100] sm:$0xff] %v663
      %714 = vst [vmem:[%s175 + $0x108] sm:$0xff] %v664
      %715 = vst [vmem:[%s175 + $0x110] sm:$0xff] %v665
      %716 = vst [vmem:[%s175 + $0x118] sm:$0xff] %v666
      %717 = vst [vmem:[%s175 + $0x120] sm:$0xff] %v667
      %718 = vst [vmem:[%s175 + $0x128] sm:$0xff] %v668
      %719 = vst [vmem:[%s175 + $0x130] sm:$0xff] %v669
      %720 = vst [vmem:[%s175 + $0x138] sm:$0xff] %v670
      %721 = vst [vmem:[%s175 + $0x140] sm:$0xff] %v671
      %722 = vst [vmem:[%s175 + $0x148] sm:$0xff] %v672
      %723 = vst [vmem:[%s175 + $0x150] sm:$0xff] %v673
      %724 = vst [vmem:[%s175 + $0x158] sm:$0xff] %v674
      %725 = vst [vmem:[%s175 + $0x160] sm:$0xff] %v675
      %726 = vst [vmem:[%s175 + $0x168] sm:$0xff] %v676
      %727 = vst [vmem:[%s175 + $0x170] sm:$0xff] %v677
      %728 = vst [vmem:[%s175 + $0x178] sm:$0xff] %v678
      %729 = vst [vmem:[%s175 + $0x180] sm:$0xff] %v679
      %730 = vst [vmem:[%s175 + $0x188] sm:$0xff] %v680
      %s731 = smul.u32 50, %s14
      %p732 = scmp.lt.s32.totalorder %s731, 99
      %s733 = scalar_select %p732, %s731, 99
      %s734 = smul.addr %s733, 8
      %s735 = scalar_lea.vmem %s3, %s734
      // Predicated region
      $region33: #{encoder_like_dqn_forward.4} parent=31 // pred_check
        %p736 = pneg %p100
      $region34: #{encoder_like_dqn_forward.4} parent=31 // pred_check_branch
        %738 = sbr.rel (%p736) target = $region36
      $region35: #{encoder_like_dqn_forward.4} parent=31 // pred_region
        %s739 = smul.u32 50, %s14
      $region36: #{encoder_like_dqn_forward.4} parent=31 // pred_fallthru
        _
    $region32: #{encoder_like_dqn_forward.4} parent=5 // pred_fallthru
      _
    %p740 = scmp.le.s32.totalorder 2, %s9
    // Predicated region
    $region37: #{encoder_like_dqn_forward.4} parent=5 // pred_check
      %p741 = pneg %p740
    $region38: #{encoder_like_dqn_forward.4} parent=5 // pred_check_branch
      %743 = sbr.rel (%p741) target = $region40
    $region39: #{encoder_like_dqn_forward.4} parent=5 // pred_region
      %s744 = ssub.s32 %s9, 2
      // Predicated region
      $region41: #{encoder_like_dqn_forward.4} parent=39 // pred_check
        %p745 = pneg %p106
      $region42: #{encoder_like_dqn_forward.4} parent=39 // pred_check_branch
        %747 = sbr.rel (%p745) target = $region44
      $region43: #{encoder_like_dqn_forward.4} parent=39 // pred_region
        %s748 = smul.u32 50, %s15
        %p749 = scmp.lt.s32.totalorder %s748, 99
        %s750 = scalar_select %p749, %s748, 99
        %s751 = smul.addr %s750, 8
        %s752 = scalar_lea.vmem %s3, %s751
      $region44: #{encoder_like_dqn_forward.4} parent=39 // pred_fallthru
        _
    $region40: #{encoder_like_dqn_forward.4} parent=5 // pred_fallthru
      _
  $region6: #{encoder_like_dqn_forward.4} parent=0 // loop_footer
    %s13 = sadd.s32 1, %s9
  $region7: #{encoder_like_dqn_forward.4} parent=0 // loop_footer_branch
    %8 = sbr.rel target = $region3
  $region8: #{encoder_like_dqn_forward.4} parent=0 // loop_exit
    _

// kernel: encoder_like_dqn_forward.5
$region0: #{encoder_like_dqn_forward.5}
  #allocation0 [shape = 'u32[]', space=smem, size = 0x4, offset = 0x4, fixed_abs, tag = 'smem constant byte address 0x4 - core index']
  #allocation1 [shape = 'u32[144,128]{1,0:T(1,128)}', space=vmem, size = 0x12000, scoped, tag = 'internal scratch']
  %s0 = inlined_call_operand.vmem [shape: f32[200,2048], index: 0, kind: input, shape index: {}]
  %s1 = inlined_call_operand.vmem [shape: f32[2048,128], index: 1, kind: input, shape index: {}]
  %s2 = inlined_call_operand.vmem [shape: f32[1,128], index: 2, kind: input, shape index: {}]
  %s3 = inlined_call_operand.vmem [shape: f32[200,128], index: 3, kind: output, shape index: {}]
  %s4 = sld [smem:[#allocation0]]
  $region45: #{encoder_like_dqn_forward.5} parent=0
    _
  %s6 = ssub.s32 1, %s4
  %s7 = scalar_select 0, %s6, %s4
  loop: start=0, step=1, limit=7
  $region2: #{encoder_like_dqn_forward.5} parent=0 // loop_pre_header
    _
  $region3: #{encoder_like_dqn_forward.5} parent=0 // loop_header
    %s9 = sphi 0, %s13
    %p10 = scmp.ge.s32.totalorder %s9, 7
    %s19 = sphi 0, %s21
    %s22 = sphi 0, %s19
    %s23 = sphi 0, %s22
    %s39 = sphi 0, %s23
    %s43 = sphi 0, %s43
    %s45 = sphi 0, %s43
    %s46 = sphi 0, %s45
    %s60 = sphi 0, %s46
    %s64 = sphi 0, %s64
    %s66 = sphi 0, %s64
    %s67 = sphi 0, %s66
    %s81 = sphi 0, %s67
    %s87 = sphi 0, %s89
    %s90 = sphi 0, %s87
    %s91 = sphi 0, %s90
    %s107 = sphi 0, %s91
  $region4: #{encoder_like_dqn_forward.5} parent=0 // loop_header_branch
    %12 = sbr.rel (%p10) target = $region8
  $region5: #{encoder_like_dqn_forward.5} parent=0 // loop_body
    %s14 = ssub.s32 %s9, 1
    %s15 = ssub.s32 %s9, 2
    %s16 = sadd.s32 %s9, 1
    %s17 = ssub.s32 %s9, %s16
    %p18 = scmp.eq.s32.totalorder %s17, 0
    %s20 = sadd.s32 %s19, 1
    %s21 = scalar_select %p18, %s19, %s20
    %p24 = pneg %p18
    %p25 = scmp.eq.s32.totalorder %s9, 4
    %p26 = por %p24, %p25
    %p27 = scmp.ne.s32.totalorder %s19, %s22
    %p28 = scmp.eq.s32.totalorder %s9, 0
    %p29 = por %p27, %p28
    %p30 = scmp.ne.s32.totalorder %s19, %s22
    %p31 = scmp.eq.s32.totalorder %s14, 4
    %p32 = por %p30, %p31
    %p33 = scmp.ne.s32.totalorder %s22, %s23
    %p34 = scmp.eq.s32.totalorder %s14, 0
    %p35 = por %p33, %p34
    %p36 = scmp.ne.s32.totalorder %s22, %s23
    %p37 = scmp.eq.s32.totalorder %s15, 4
    %p38 = por %p36, %p37
    %p40 = scmp.ne.s32.totalorder %s23, %s39
    %p41 = scmp.eq.s32.totalorder %s15, 0
    %p42 = por %p40, %p41
    %s44 = sadd.s32 %s43, 1
    %p47 = scmp.eq.s32.totalorder %s9, 4
    %p48 = scmp.ne.s32.totalorder %s43, %s45
    %p49 = scmp.eq.s32.totalorder %s9, 0
    %p50 = por %p48, %p49
    %p51 = scmp.ne.s32.totalorder %s43, %s45
    %p52 = scmp.eq.s32.totalorder %s14, 4
    %p53 = por %p51, %p52
    %p54 = scmp.ne.s32.totalorder %s45, %s46
    %p55 = scmp.eq.s32.totalorder %s14, 0
    %p56 = por %p54, %p55
    %p57 = scmp.ne.s32.totalorder %s45, %s46
    %p58 = scmp.eq.s32.totalorder %s15, 4
    %p59 = por %p57, %p58
    %p61 = scmp.ne.s32.totalorder %s46, %s60
    %p62 = scmp.eq.s32.totalorder %s15, 0
    %p63 = por %p61, %p62
    %s65 = sadd.s32 %s64, 1
    %p68 = scmp.eq.s32.totalorder %s9, 4
    %p69 = scmp.ne.s32.totalorder %s64, %s66
    %p70 = scmp.eq.s32.totalorder %s9, 0
    %p71 = por %p69, %p70
    %p72 = scmp.ne.s32.totalorder %s64, %s66
    %p73 = scmp.eq.s32.totalorder %s14, 4
    %p74 = por %p72, %p73
    %p75 = scmp.ne.s32.totalorder %s66, %s67
    %p76 = scmp.eq.s32.totalorder %s14, 0
    %p77 = por %p75, %p76
    %p78 = scmp.ne.s32.totalorder %s66, %s67
    %p79 = scmp.eq.s32.totalorder %s15, 4
    %p80 = por %p78, %p79
    %p82 = scmp.ne.s32.totalorder %s67, %s81
    %p83 = scmp.eq.s32.totalorder %s15, 0
    %p84 = por %p82, %p83
    %s85 = ssub.s32 %s9, %s16
    %p86 = scmp.eq.s32.totalorder %s85, 0
    %s88 = sadd.s32 %s87, 1
    %s89 = scalar_select %p86, %s87, %s88
    %p92 = pneg %p86
    %p93 = scmp.eq.s32.totalorder %s9, 4
    %p94 = por %p92, %p93
    %p95 = scmp.ne.s32.totalorder %s87, %s90
    %p96 = scmp.eq.s32.totalorder %s9, 0
    %p97 = por %p95, %p96
    %p98 = scmp.ne.s32.totalorder %s87, %s90
    %p99 = scmp.eq.s32.totalorder %s14, 4
    %p100 = por %p98, %p99
    %p101 = scmp.ne.s32.totalorder %s90, %s91
    %p102 = scmp.eq.s32.totalorder %s14, 0
    %p103 = por %p101, %p102
    %p104 = scmp.ne.s32.totalorder %s90, %s91
    %p105 = scmp.eq.s32.totalorder %s15, 4
    %p106 = por %p104, %p105
    %p108 = scmp.ne.s32.totalorder %s91, %s107
    %p109 = scmp.eq.s32.totalorder %s15, 0
    %p110 = por %p108, %p109
    %p111 = scmp.le.s32.totalorder 1, %s9
    %p112 = scmp.lt.s32.totalorder %s9, 6
    %p113 = pnand %p111, %p112
    %p114 = pneg %p113
    // Predicated region
    $region9: #{encoder_like_dqn_forward.5} parent=5 // pred_check
      _
    $region10: #{encoder_like_dqn_forward.5} parent=5 // pred_check_branch
      %116 = sbr.rel (%p113) target = $region12
    $region11: #{encoder_like_dqn_forward.5} parent=5 // pred_region
      %s117 = ssub.s32 %s9, 1
      // Predicated region
      $region13: #{encoder_like_dqn_forward.5} parent=11 // pred_check
        %p118 = pneg %p56
      $region14: #{encoder_like_dqn_forward.5} parent=11 // pred_check_branch
        %120 = sbr.rel (%p118) target = $region16
      $region15: #{encoder_like_dqn_forward.5} parent=11 // pred_region
        _
      $region16: #{encoder_like_dqn_forward.5} parent=11 // pred_fallthru
        _
      // Predicated region
      $region17: #{encoder_like_dqn_forward.5} parent=11 // pred_check
        %p121 = pneg %p77
      $region18: #{encoder_like_dqn_forward.5} parent=11 // pred_check_branch
        %123 = sbr.rel (%p121) target = $region20
      $region19: #{encoder_like_dqn_forward.5} parent=11 // pred_region
        _
      $region20: #{encoder_like_dqn_forward.5} parent=11 // pred_fallthru
        _
    $region12: #{encoder_like_dqn_forward.5} parent=5 // pred_fallthru
      _
    %p124 = scmp.lt.s32.totalorder %s9, 5
    // Predicated region
    $region21: #{encoder_like_dqn_forward.5} parent=5 // pred_check
      %p125 = pneg %p124
    $region22: #{encoder_like_dqn_forward.5} parent=5 // pred_check_branch
      %127 = sbr.rel (%p125) target = $region24
    $region23: #{encoder_like_dqn_forward.5} parent=5 // pred_region
      // Predicated region
      $region25: #{encoder_like_dqn_forward.5} parent=23 // pred_check
        %p128 = pneg %p29
      $region26: #{encoder_like_dqn_forward.5} parent=23 // pred_check_branch
        %130 = sbr.rel (%p128) target = $region28
      $region27: #{encoder_like_dqn_forward.5} parent=23 // pred_region
        %s131 = smul.u32 5, %s9
        %p132 = scmp.lt.s32.totalorder %s131, 24
        %s133 = scalar_select %p132, %s131, 24
        %s134 = smul.addr %s133, 16
        %s135 = smul.addr %s134, 8
        %s136 = scalar_lea.vmem %s0, %s135
        %s137 = smul.u32 5, %s9
      $region28: #{encoder_like_dqn_forward.5} parent=23 // pred_fallthru
        _
    $region24: #{encoder_like_dqn_forward.5} parent=5 // pred_fallthru
      _
    %p138 = scmp.le.s32.totalorder 1, %s9
    %p139 = scmp.lt.s32.totalorder %s9, 6
    %p140 = pnand %p138, %p139
    %p141 = pneg %p140
    // Predicated region
    $region29: #{encoder_like_dqn_forward.5} parent=5 // pred_check
      _
    $region30: #{encoder_like_dqn_forward.5} parent=5 // pred_check_branch
      %143 = sbr.rel (%p140) target = $region32
    $region31: #{encoder_like_dqn_forward.5} parent=5 // pred_region
      %s144 = ssub.s32 %s9, 1
      %s145 = smul.u32 5, %s14
      %p146 = scmp.lt.s32.totalorder %s145, 24
      %s147 = scalar_select %p146, %s145, 24
      %s148 = smul.addr %s147, 16
      %s149 = smul.addr %s148, 8
      %s150 = scalar_lea.vmem %s0, %s149
      %p151 = pneg %p35
      %p152 = pneg %p32
      %p153 = pneg %p56
      %p154 = pneg %p53
      %p155 = pneg %p77
      %p156 = pneg %p74
      %p157 = pneg %p103
      %p158 = pneg %p100
      %s159 = smul.u32 5, %s14
      %p160 = scmp.lt.s32.totalorder %s159, 24
      %s161 = scalar_select %p160, %s159, 24
      %s162 = smul.addr %s161, 8
      %s163 = scalar_lea.vmem %s3, %s162
      %s164 = smul.u32 5, %s14
      %p165 = scmp.lt.s32.totalorder %s164, 24
      %s166 = scalar_select %p165, %s164, 24
      %s167 = smul.addr %s166, 16
      %s168 = smul.addr %s167, 8
      %s169 = scalar_lea.vmem %s0, %s168
      %s170 = smul.u32 5, %s14
      %s171 = smul.u32 5, %s14
      %p172 = scmp.lt.s32.totalorder %s171, 24
      %s173 = scalar_select %p172, %s171, 24
      %s174 = smul.addr %s173, 8
      %s175 = scalar_lea.vmem %s3, %s174
      %s176 = smul.u32 5, %s14
      %v177 = vld [vmem:[%s169] sm:$0xff]
      %v178 = vld [vmem:[%s169 + $0x8] sm:$0xff]
      %v179 = vld [vmem:[%s169 + $0x10] sm:$0xff]
      %v180 = vld [vmem:[%s169 + $0x18] sm:$0xff]
      %v181 = vld [vmem:[%s169 + $0x20] sm:$0xff]
      %v182 = vld [vmem:[%s169 + $0x28] sm:$0xff]
      %v183 = vld [vmem:[%s169 + $0x30] sm:$0xff]
      %v184 = vld [vmem:[%s169 + $0x38] sm:$0xff]
      %v185 = vld [vmem:[%s169 + $0x40] sm:$0xff]
      %v186 = vld [vmem:[%s169 + $0x48] sm:$0xff]
      %v187 = vld [vmem:[%s169 + $0x50] sm:$0xff]
      %v188 = vld [vmem:[%s169 + $0x58] sm:$0xff]
      %v189 = vld [vmem:[%s169 + $0x60] sm:$0xff]
      %v190 = vld [vmem:[%s169 + $0x68] sm:$0xff]
      %v191 = vld [vmem:[%s169 + $0x70] sm:$0xff]
      %v192 = vld [vmem:[%s169 + $0x78] sm:$0xff]
      %v193 = vld [vmem:[%s169 + $0x80] sm:$0xff]
      %v194 = vld [vmem:[%s169 + $0x88] sm:$0xff]
      %v195 = vld [vmem:[%s169 + $0x90] sm:$0xff]
      %v196 = vld [vmem:[%s169 + $0x98] sm:$0xff]
      %v197 = vld [vmem:[%s169 + $0xa0] sm:$0xff]
      %v198 = vld [vmem:[%s169 + $0xa8] sm:$0xff]
      %v199 = vld [vmem:[%s169 + $0xb0] sm:$0xff]
      %v200 = vld [vmem:[%s169 + $0xb8] sm:$0xff]
      %v201 = vld [vmem:[%s169 + $0xc0] sm:$0xff]
      %v202 = vld [vmem:[%s169 + $0xc8] sm:$0xff]
      %v203 = vld [vmem:[%s169 + $0xd0] sm:$0xff]
      %v204 = vld [vmem:[%s169 + $0xd8] sm:$0xff]
      %v205 = vld [vmem:[%s169 + $0xe0] sm:$0xff]
      %v206 = vld [vmem:[%s169 + $0xe8] sm:$0xff]
      %v207 = vld [vmem:[%s169 + $0xf0] sm:$0xff]
      %v208 = vld [vmem:[%s169 + $0xf8] sm:$0xff]
      %v209 = vld [vmem:[%s169 + $0x100] sm:$0xff]
      %v210 = vld [vmem:[%s169 + $0x108] sm:$0xff]
      %v211 = vld [vmem:[%s169 + $0x110] sm:$0xff]
      %v212 = vld [vmem:[%s169 + $0x118] sm:$0xff]
      %v213 = vld [vmem:[%s169 + $0x120] sm:$0xff]
      %v214 = vld [vmem:[%s169 + $0x128] sm:$0xff]
      %v215 = vld [vmem:[%s169 + $0x130] sm:$0xff]
      %v216 = vld [vmem:[%s169 + $0x138] sm:$0xff]
      %v217 = vld [vmem:[%s169 + $0x140] sm:$0xff]
      %v218 = vld [vmem:[%s169 + $0x148] sm:$0xff]
      %v219 = vld [vmem:[%s169 + $0x150] sm:$0xff]
      %v220 = vld [vmem:[%s169 + $0x158] sm:$0xff]
      %v221 = vld [vmem:[%s169 + $0x160] sm:$0xff]
      %v222 = vld [vmem:[%s169 + $0x168] sm:$0xff]
      %v223 = vld [vmem:[%s169 + $0x170] sm:$0xff]
      %v224 = vld [vmem:[%s169 + $0x178] sm:$0xff]
      %v225 = vld [vmem:[%s169 + $0x180] sm:$0xff]
      %v226 = vld [vmem:[%s169 + $0x188] sm:$0xff]
      %v227 = vld [vmem:[%s169 + $0x190] sm:$0xff]
      %v228 = vld [vmem:[%s169 + $0x198] sm:$0xff]
      %v229 = vld [vmem:[%s169 + $0x1a0] sm:$0xff]
      %v230 = vld [vmem:[%s169 + $0x1a8] sm:$0xff]
      %v231 = vld [vmem:[%s169 + $0x1b0] sm:$0xff]
      %v232 = vld [vmem:[%s169 + $0x1b8] sm:$0xff]
      %v233 = vld [vmem:[%s169 + $0x1c0] sm:$0xff]
      %v234 = vld [vmem:[%s169 + $0x1c8] sm:$0xff]
      %v235 = vld [vmem:[%s169 + $0x1d0] sm:$0xff]
      %v236 = vld [vmem:[%s169 + $0x1d8] sm:$0xff]
      %v237 = vld [vmem:[%s169 + $0x1e0] sm:$0xff]
      %v238 = vld [vmem:[%s169 + $0x1e8] sm:$0xff]
      %v239 = vld [vmem:[%s169 + $0x1f0] sm:$0xff]
      %v240 = vld [vmem:[%s169 + $0x1f8] sm:$0xff]
      %v241 = vld [vmem:[%s169 + $0x200] sm:$0xff]
      %v242 = vld [vmem:[%s169 + $0x208] sm:$0xff]
      %v243 = vld [vmem:[%s169 + $0x210] sm:$0xff]
      %v244 = vld [vmem:[%s169 + $0x218] sm:$0xff]
      %v245 = vld [vmem:[%s169 + $0x220] sm:$0xff]
      %v246 = vld [vmem:[%s169 + $0x228] sm:$0xff]
      %v247 = vld [vmem:[%s169 + $0x230] sm:$0xff]
      %v248 = vld [vmem:[%s169 + $0x238] sm:$0xff]
      %v249 = vld [vmem:[%s169 + $0x240] sm:$0xff]
      %v250 = vld [vmem:[%s169 + $0x248] sm:$0xff]
      %v251 = vld [vmem:[%s169 + $0x250] sm:$0xff]
      %v252 = vld [vmem:[%s169 + $0x258] sm:$0xff]
      %v253 = vld [vmem:[%s169 + $0x260] sm:$0xff]
      %v254 = vld [vmem:[%s169 + $0x268] sm:$0xff]
      %v255 = vld [vmem:[%s169 + $0x270] sm:$0xff]
      %v256 = vld [vmem:[%s169 + $0x278] sm:$0xff]
      %v257 = vld [vmem:[%s1] sm:$0xff]
      %v258 = vld [vmem:[%s1 + $0x8] sm:$0xff]
      %v259 = vld [vmem:[%s1 + $0x10] sm:$0xff]
      %v260 = vld [vmem:[%s1 + $0x18] sm:$0xff]
      %v261 = vld [vmem:[%s1 + $0x20] sm:$0xff]
      %v262 = vld [vmem:[%s1 + $0x28] sm:$0xff]
      %v263 = vld [vmem:[%s1 + $0x30] sm:$0xff]
      %v264 = vld [vmem:[%s1 + $0x38] sm:$0xff]
      %v265 = vld [vmem:[%s1 + $0x40] sm:$0xff]
      %v266 = vld [vmem:[%s1 + $0x48] sm:$0xff]
      %v267 = vld [vmem:[%s1 + $0x50] sm:$0xff]
      %v268 = vld [vmem:[%s1 + $0x58] sm:$0xff]
      %v269 = vld [vmem:[%s1 + $0x60] sm:$0xff]
      %v270 = vld [vmem:[%s1 + $0x68] sm:$0xff]
      %v271 = vld [vmem:[%s1 + $0x70] sm:$0xff]
      %v272 = vld [vmem:[%s1 + $0x78] sm:$0xff]
      %v273 = vld [vmem:[%s1 + $0x80] sm:$0xff]
      %v274 = vld [vmem:[%s1 + $0x88] sm:$0xff]
      %v275 = vld [vmem:[%s1 + $0x90] sm:$0xff]
      %v276 = vld [vmem:[%s1 + $0x98] sm:$0xff]
      %v277 = vld [vmem:[%s1 + $0xa0] sm:$0xff]
      %v278 = vld [vmem:[%s1 + $0xa8] sm:$0xff]
      %v279 = vld [vmem:[%s1 + $0xb0] sm:$0xff]
      %v280 = vld [vmem:[%s1 + $0xb8] sm:$0xff]
      %v281 = vld [vmem:[%s1 + $0xc0] sm:$0xff]
      %v282 = vld [vmem:[%s1 + $0xc8] sm:$0xff]
      %v283 = vld [vmem:[%s1 + $0xd0] sm:$0xff]
      %v284 = vld [vmem:[%s1 + $0xd8] sm:$0xff]
      %v285 = vld [vmem:[%s1 + $0xe0] sm:$0xff]
      %v286 = vld [vmem:[%s1 + $0xe8] sm:$0xff]
      %v287 = vld [vmem:[%s1 + $0xf0] sm:$0xff]
      %v288 = vld [vmem:[%s1 + $0xf8] sm:$0xff]
      %v289 = vld [vmem:[%s1 + $0x100] sm:$0xff]
      %v290 = vld [vmem:[%s1 + $0x108] sm:$0xff]
      %v291 = vld [vmem:[%s1 + $0x110] sm:$0xff]
      %v292 = vld [vmem:[%s1 + $0x118] sm:$0xff]
      %v293 = vld [vmem:[%s1 + $0x120] sm:$0xff]
      %v294 = vld [vmem:[%s1 + $0x128] sm:$0xff]
      %v295 = vld [vmem:[%s1 + $0x130] sm:$0xff]
      %v296 = vld [vmem:[%s1 + $0x138] sm:$0xff]
      %v297 = vld [vmem:[%s1 + $0x140] sm:$0xff]
      %v298 = vld [vmem:[%s1 + $0x148] sm:$0xff]
      %v299 = vld [vmem:[%s1 + $0x150] sm:$0xff]
      %v300 = vld [vmem:[%s1 + $0x158] sm:$0xff]
      %v301 = vld [vmem:[%s1 + $0x160] sm:$0xff]
      %v302 = vld [vmem:[%s1 + $0x168] sm:$0xff]
      %v303 = vld [vmem:[%s1 + $0x170] sm:$0xff]
      %v304 = vld [vmem:[%s1 + $0x178] sm:$0xff]
      %v305 = vld [vmem:[%s1 + $0x180] sm:$0xff]
      %v306 = vld [vmem:[%s1 + $0x188] sm:$0xff]
      %v307 = vld [vmem:[%s1 + $0x190] sm:$0xff]
      %v308 = vld [vmem:[%s1 + $0x198] sm:$0xff]
      %v309 = vld [vmem:[%s1 + $0x1a0] sm:$0xff]
      %v310 = vld [vmem:[%s1 + $0x1a8] sm:$0xff]
      %v311 = vld [vmem:[%s1 + $0x1b0] sm:$0xff]
      %v312 = vld [vmem:[%s1 + $0x1b8] sm:$0xff]
      %v313 = vld [vmem:[%s1 + $0x1c0] sm:$0xff]
      %v314 = vld [vmem:[%s1 + $0x1c8] sm:$0xff]
      %v315 = vld [vmem:[%s1 + $0x1d0] sm:$0xff]
      %v316 = vld [vmem:[%s1 + $0x1d8] sm:$0xff]
      %v317 = vld [vmem:[%s1 + $0x1e0] sm:$0xff]
      %v318 = vld [vmem:[%s1 + $0x1e8] sm:$0xff]
      %v319 = vld [vmem:[%s1 + $0x1f0] sm:$0xff]
      %v320 = vld [vmem:[%s1 + $0x1f8] sm:$0xff]
      %v321 = vld [vmem:[%s1 + $0x200] sm:$0xff]
      %v322 = vld [vmem:[%s1 + $0x208] sm:$0xff]
      %v323 = vld [vmem:[%s1 + $0x210] sm:$0xff]
      %v324 = vld [vmem:[%s1 + $0x218] sm:$0xff]
      %v325 = vld [vmem:[%s1 + $0x220] sm:$0xff]
      %v326 = vld [vmem:[%s1 + $0x228] sm:$0xff]
      %v327 = vld [vmem:[%s1 + $0x230] sm:$0xff]
      %v328 = vld [vmem:[%s1 + $0x238] sm:$0xff]
      %v329 = vld [vmem:[%s1 + $0x240] sm:$0xff]
      %v330 = vld [vmem:[%s1 + $0x248] sm:$0xff]
      %v331 = vld [vmem:[%s1 + $0x250] sm:$0xff]
      %v332 = vld [vmem:[%s1 + $0x258] sm:$0xff]
      %v333 = vld [vmem:[%s1 + $0x260] sm:$0xff]
      %v334 = vld [vmem:[%s1 + $0x268] sm:$0xff]
      %v335 = vld [vmem:[%s1 + $0x270] sm:$0xff]
      %v336 = vld [vmem:[%s1 + $0x278] sm:$0xff]
      %v337 = vld [vmem:[%s1 + $0x280] sm:$0xff]
      %v338 = vld [vmem:[%s1 + $0x288] sm:$0xff]
      %v339 = vld [vmem:[%s1 + $0x290] sm:$0xff]
      %v340 = vld [vmem:[%s1 + $0x298] sm:$0xff]
      %v341 = vld [vmem:[%s1 + $0x2a0] sm:$0xff]
      %v342 = vld [vmem:[%s1 + $0x2a8] sm:$0xff]
      %v343 = vld [vmem:[%s1 + $0x2b0] sm:$0xff]
      %v344 = vld [vmem:[%s1 + $0x2b8] sm:$0xff]
      %v345 = vld [vmem:[%s1 + $0x2c0] sm:$0xff]
      %v346 = vld [vmem:[%s1 + $0x2c8] sm:$0xff]
      %v347 = vld [vmem:[%s1 + $0x2d0] sm:$0xff]
      %v348 = vld [vmem:[%s1 + $0x2d8] sm:$0xff]
      %v349 = vld [vmem:[%s1 + $0x2e0] sm:$0xff]
      %v350 = vld [vmem:[%s1 + $0x2e8] sm:$0xff]
      %v351 = vld [vmem:[%s1 + $0x2f0] sm:$0xff]
      %v352 = vld [vmem:[%s1 + $0x2f8] sm:$0xff]
      %v353 = vld [vmem:[%s1 + $0x300] sm:$0xff]
      %v354 = vld [vmem:[%s1 + $0x308] sm:$0xff]
      %v355 = vld [vmem:[%s1 + $0x310] sm:$0xff]
      %v356 = vld [vmem:[%s1 + $0x318] sm:$0xff]
      %v357 = vld [vmem:[%s1 + $0x320] sm:$0xff]
      %v358 = vld [vmem:[%s1 + $0x328] sm:$0xff]
      %v359 = vld [vmem:[%s1 + $0x330] sm:$0xff]
      %v360 = vld [vmem:[%s1 + $0x338] sm:$0xff]
      %v361 = vld [vmem:[%s1 + $0x340] sm:$0xff]
      %v362 = vld [vmem:[%s1 + $0x348] sm:$0xff]
      %v363 = vld [vmem:[%s1 + $0x350] sm:$0xff]
      %v364 = vld [vmem:[%s1 + $0x358] sm:$0xff]
      %v365 = vld [vmem:[%s1 + $0x360] sm:$0xff]
      %v366 = vld [vmem:[%s1 + $0x368] sm:$0xff]
      %v367 = vld [vmem:[%s1 + $0x370] sm:$0xff]
      %v368 = vld [vmem:[%s1 + $0x378] sm:$0xff]
      %v369 = vld [vmem:[%s1 + $0x380] sm:$0xff]
      %v370 = vld [vmem:[%s1 + $0x388] sm:$0xff]
      %v371 = vld [vmem:[%s1 + $0x390] sm:$0xff]
      %v372 = vld [vmem:[%s1 + $0x398] sm:$0xff]
      %v373 = vld [vmem:[%s1 + $0x3a0] sm:$0xff]
      %v374 = vld [vmem:[%s1 + $0x3a8] sm:$0xff]
      %v375 = vld [vmem:[%s1 + $0x3b0] sm:$0xff]
      %v376 = vld [vmem:[%s1 + $0x3b8] sm:$0xff]
      %v377 = vld [vmem:[%s1 + $0x3c0] sm:$0xff]
      %v378 = vld [vmem:[%s1 + $0x3c8] sm:$0xff]
      %v379 = vld [vmem:[%s1 + $0x3d0] sm:$0xff]
      %v380 = vld [vmem:[%s1 + $0x3d8] sm:$0xff]
      %v381 = vld [vmem:[%s1 + $0x3e0] sm:$0xff]
      %v382 = vld [vmem:[%s1 + $0x3e8] sm:$0xff]
      %v383 = vld [vmem:[%s1 + $0x3f0] sm:$0xff]
      %v384 = vld [vmem:[%s1 + $0x3f8] sm:$0xff]
      %v385 = vld [vmem:[%s1 + $0x400] sm:$0xff]
      %v386 = vld [vmem:[%s1 + $0x408] sm:$0xff]
      %v387 = vld [vmem:[%s1 + $0x410] sm:$0xff]
      %v388 = vld [vmem:[%s1 + $0x418] sm:$0xff]
      %v389 = vld [vmem:[%s1 + $0x420] sm:$0xff]
      %v390 = vld [vmem:[%s1 + $0x428] sm:$0xff]
      %v391 = vld [vmem:[%s1 + $0x430] sm:$0xff]
      %v392 = vld [vmem:[%s1 + $0x438] sm:$0xff]
      %v393 = vld [vmem:[%s1 + $0x440] sm:$0xff]
      %v394 = vld [vmem:[%s1 + $0x448] sm:$0xff]
      %v395 = vld [vmem:[%s1 + $0x450] sm:$0xff]
      %v396 = vld [vmem:[%s1 + $0x458] sm:$0xff]
      %v397 = vld [vmem:[%s1 + $0x460] sm:$0xff]
      %v398 = vld [vmem:[%s1 + $0x468] sm:$0xff]
      %v399 = vld [vmem:[%s1 + $0x470] sm:$0xff]
      %v400 = vld [vmem:[%s1 + $0x478] sm:$0xff]
      %v401 = vld [vmem:[%s1 + $0x480] sm:$0xff]
      %v402 = vld [vmem:[%s1 + $0x488] sm:$0xff]
      %v403 = vld [vmem:[%s1 + $0x490] sm:$0xff]
      %v404 = vld [vmem:[%s1 + $0x498] sm:$0xff]
      %v405 = vld [vmem:[%s1 + $0x4a0] sm:$0xff]
      %v406 = vld [vmem:[%s1 + $0x4a8] sm:$0xff]
      %v407 = vld [vmem:[%s1 + $0x4b0] sm:$0xff]
      %v408 = vld [vmem:[%s1 + $0x4b8] sm:$0xff]
      %v409 = vld [vmem:[%s1 + $0x4c0] sm:$0xff]
      %v410 = vld [vmem:[%s1 + $0x4c8] sm:$0xff]
      %v411 = vld [vmem:[%s1 + $0x4d0] sm:$0xff]
      %v412 = vld [vmem:[%s1 + $0x4d8] sm:$0xff]
      %v413 = vld [vmem:[%s1 + $0x4e0] sm:$0xff]
      %v414 = vld [vmem:[%s1 + $0x4e8] sm:$0xff]
      %v415 = vld [vmem:[%s1 + $0x4f0] sm:$0xff]
      %v416 = vld [vmem:[%s1 + $0x4f8] sm:$0xff]
      %v417 = vld [vmem:[%s1 + $0x500] sm:$0xff]
      %v418 = vld [vmem:[%s1 + $0x508] sm:$0xff]
      %v419 = vld [vmem:[%s1 + $0x510] sm:$0xff]
      %v420 = vld [vmem:[%s1 + $0x518] sm:$0xff]
      %v421 = vld [vmem:[%s1 + $0x520] sm:$0xff]
      %v422 = vld [vmem:[%s1 + $0x528] sm:$0xff]
      %v423 = vld [vmem:[%s1 + $0x530] sm:$0xff]
      %v424 = vld [vmem:[%s1 + $0x538] sm:$0xff]
      %v425 = vld [vmem:[%s1 + $0x540] sm:$0xff]
      %v426 = vld [vmem:[%s1 + $0x548] sm:$0xff]
      %v427 = vld [vmem:[%s1 + $0x550] sm:$0xff]
      %v428 = vld [vmem:[%s1 + $0x558] sm:$0xff]
      %v429 = vld [vmem:[%s1 + $0x560] sm:$0xff]
      %v430 = vld [vmem:[%s1 + $0x568] sm:$0xff]
      %v431 = vld [vmem:[%s1 + $0x570] sm:$0xff]
      %v432 = vld [vmem:[%s1 + $0x578] sm:$0xff]
      %v433 = vld [vmem:[%s1 + $0x580] sm:$0xff]
      %v434 = vld [vmem:[%s1 + $0x588] sm:$0xff]
      %v435 = vld [vmem:[%s1 + $0x590] sm:$0xff]
      %v436 = vld [vmem:[%s1 + $0x598] sm:$0xff]
      %v437 = vld [vmem:[%s1 + $0x5a0] sm:$0xff]
      %v438 = vld [vmem:[%s1 + $0x5a8] sm:$0xff]
      %v439 = vld [vmem:[%s1 + $0x5b0] sm:$0xff]
      %v440 = vld [vmem:[%s1 + $0x5b8] sm:$0xff]
      %v441 = vld [vmem:[%s1 + $0x5c0] sm:$0xff]
      %v442 = vld [vmem:[%s1 + $0x5c8] sm:$0xff]
      %v443 = vld [vmem:[%s1 + $0x5d0] sm:$0xff]
      %v444 = vld [vmem:[%s1 + $0x5d8] sm:$0xff]
      %v445 = vld [vmem:[%s1 + $0x5e0] sm:$0xff]
      %v446 = vld [vmem:[%s1 + $0x5e8] sm:$0xff]
      %v447 = vld [vmem:[%s1 + $0x5f0] sm:$0xff]
      %v448 = vld [vmem:[%s1 + $0x5f8] sm:$0xff]
      %v449 = vld [vmem:[%s1 + $0x600] sm:$0xff]
      %v450 = vld [vmem:[%s1 + $0x608] sm:$0xff]
      %v451 = vld [vmem:[%s1 + $0x610] sm:$0xff]
      %v452 = vld [vmem:[%s1 + $0x618] sm:$0xff]
      %v453 = vld [vmem:[%s1 + $0x620] sm:$0xff]
      %v454 = vld [vmem:[%s1 + $0x628] sm:$0xff]
      %v455 = vld [vmem:[%s1 + $0x630] sm:$0xff]
      %v456 = vld [vmem:[%s1 + $0x638] sm:$0xff]
      %v457 = vld [vmem:[%s1 + $0x640] sm:$0xff]
      %v458 = vld [vmem:[%s1 + $0x648] sm:$0xff]
      %v459 = vld [vmem:[%s1 + $0x650] sm:$0xff]
      %v460 = vld [vmem:[%s1 + $0x658] sm:$0xff]
      %v461 = vld [vmem:[%s1 + $0x660] sm:$0xff]
      %v462 = vld [vmem:[%s1 + $0x668] sm:$0xff]
      %v463 = vld [vmem:[%s1 + $0x670] sm:$0xff]
      %v464 = vld [vmem:[%s1 + $0x678] sm:$0xff]
      %v465 = vld [vmem:[%s1 + $0x680] sm:$0xff]
      %v466 = vld [vmem:[%s1 + $0x688] sm:$0xff]
      %v467 = vld [vmem:[%s1 + $0x690] sm:$0xff]
      %v468 = vld [vmem:[%s1 + $0x698] sm:$0xff]
      %v469 = vld [vmem:[%s1 + $0x6a0] sm:$0xff]
      %v470 = vld [vmem:[%s1 + $0x6a8] sm:$0xff]
      %v471 = vld [vmem:[%s1 + $0x6b0] sm:$0xff]
      %v472 = vld [vmem:[%s1 + $0x6b8] sm:$0xff]
      %v473 = vld [vmem:[%s1 + $0x6c0] sm:$0xff]
      %v474 = vld [vmem:[%s1 + $0x6c8] sm:$0xff]
      %v475 = vld [vmem:[%s1 + $0x6d0] sm:$0xff]
      %v476 = vld [vmem:[%s1 + $0x6d8] sm:$0xff]
      %v477 = vld [vmem:[%s1 + $0x6e0] sm:$0xff]
      %v478 = vld [vmem:[%s1 + $0x6e8] sm:$0xff]
      %v479 = vld [vmem:[%s1 + $0x6f0] sm:$0xff]
      %v480 = vld [vmem:[%s1 + $0x6f8] sm:$0xff]
      %v481 = vld [vmem:[%s1 + $0x700] sm:$0xff]
      %v482 = vld [vmem:[%s1 + $0x708] sm:$0xff]
      %v483 = vld [vmem:[%s1 + $0x710] sm:$0xff]
      %v484 = vld [vmem:[%s1 + $0x718] sm:$0xff]
      %v485 = vld [vmem:[%s1 + $0x720] sm:$0xff]
      %v486 = vld [vmem:[%s1 + $0x728] sm:$0xff]
      %v487 = vld [vmem:[%s1 + $0x730] sm:$0xff]
      %v488 = vld [vmem:[%s1 + $0x738] sm:$0xff]
      %v489 = vld [vmem:[%s1 + $0x740] sm:$0xff]
      %v490 = vld [vmem:[%s1 + $0x748] sm:$0xff]
      %v491 = vld [vmem:[%s1 + $0x750] sm:$0xff]
      %v492 = vld [vmem:[%s1 + $0x758] sm:$0xff]
      %v493 = vld [vmem:[%s1 + $0x760] sm:$0xff]
      %v494 = vld [vmem:[%s1 + $0x768] sm:$0xff]
      %v495 = vld [vmem:[%s1 + $0x770] sm:$0xff]
      %v496 = vld [vmem:[%s1 + $0x778] sm:$0xff]
      %v497 = vld [vmem:[%s1 + $0x780] sm:$0xff]
      %v498 = vld [vmem:[%s1 + $0x788] sm:$0xff]
      %v499 = vld [vmem:[%s1 + $0x790] sm:$0xff]
      %v500 = vld [vmem:[%s1 + $0x798] sm:$0xff]
      %v501 = vld [vmem:[%s1 + $0x7a0] sm:$0xff]
      %v502 = vld [vmem:[%s1 + $0x7a8] sm:$0xff]
      %v503 = vld [vmem:[%s1 + $0x7b0] sm:$0xff]
      %v504 = vld [vmem:[%s1 + $0x7b8] sm:$0xff]
      %v505 = vld [vmem:[%s1 + $0x7c0] sm:$0xff]
      %v506 = vld [vmem:[%s1 + $0x7c8] sm:$0xff]
      %v507 = vld [vmem:[%s1 + $0x7d0] sm:$0xff]
      %v508 = vld [vmem:[%s1 + $0x7d8] sm:$0xff]
      %v509 = vld [vmem:[%s1 + $0x7e0] sm:$0xff]
      %v510 = vld [vmem:[%s1 + $0x7e8] sm:$0xff]
      %v511 = vld [vmem:[%s1 + $0x7f0] sm:$0xff]
      %v512 = vld [vmem:[%s1 + $0x7f8] sm:$0xff]
      %v513 = vld [vmem:[%s2] sm:$0x1]
      %v515 = vlaneseq
      %v516 = vshrl.u32 %v515, 7
      %v517 = vsub.s32 0, %v516
      %v518 = vrot.slane %v513, %v517
      %520 = vmatprep.subr.mxu0 0.0
      %521 = vmatpush1.msra.mxu0 %v257
      %522 = vmatprep.subr.mxu0 0.0
      %523 = vmatpush1.msra.mxu0 %v258
      %524 = vmatprep.subr.mxu0 0.0
      %525 = vmatpush1.msra.mxu0 %v259
      %526 = vmatprep.subr.mxu0 0.0
      %527 = vmatpush1.msra.mxu0 %v260
      %528 = vmatprep.subr.mxu0 0.0
      %529 = vmatpush1.msra.mxu0 %v261
      %530 = vmatprep.subr.mxu0 0.0
      %531 = vmatpush1.msra.mxu0 %v262
      %532 = vmatprep.subr.mxu0 0.0
      %533 = vmatpush1.msra.mxu0 %v263
      %534 = vmatprep.subr.mxu0 0.0
      %535 = vmatpush1.msra.mxu0 %v264
      %536 = vmatprep.subr.mxu0 0.0
      %537 = vmatpush1.msra.mxu0 %v265
      %538 = vmatprep.subr.mxu0 0.0
      %539 = vmatpush1.msra.mxu0 %v266
      %540 = vmatprep.subr.mxu0 0.0
      %541 = vmatpush1.msra.mxu0 %v267
      %542 = vmatprep.subr.mxu0 0.0
      %543 = vmatpush1.msra.mxu0 %v268
      %544 = vmatprep.subr.mxu0 0.0
      %545 = vmatpush1.msra.mxu0 %v269
      %546 = vmatprep.subr.mxu0 0.0
      %547 = vmatpush1.msra.mxu0 %v270
      %548 = vmatprep.subr.mxu0 0.0
      %549 = vmatpush1.msra.mxu0 %v271
      %550 = vmatprep.subr.mxu0 0.0
      %551 = vmatpush1.msra.mxu0 %v272
      %552 = vmatprep.subr.mxu0 0.0
      %553 = vmatpush1.msra.mxu0 %v273
      %554 = vmatprep.subr.mxu0 0.0
      %555 = vmatpush1.msra.mxu0 %v274
      %556 = vmatprep.subr.mxu0 0.0
      %557 = vmatpush1.msra.mxu0 %v275
      %558 = vmatprep.subr.mxu0 0.0
      %559 = vmatpush1.msra.mxu0 %v276
      %560 = vmatprep.subr.mxu0 0.0
      %561 = vmatpush1.msra.mxu0 %v277
      %562 = vmatprep.subr.mxu0 0.0
      %563 = vmatpush1.msra.mxu0 %v278
      %564 = vmatprep.subr.mxu0 0.0
      %565 = vmatpush1.msra.mxu0 %v279
      %566 = vmatprep.subr.mxu0 0.0
      %567 = vmatpush1.msra.mxu0 %v280
      %568 = vmatprep.subr.mxu0 0.0
      %569 = vmatpush1.msra.mxu0 %v281
      %570 = vmatprep.subr.mxu0 0.0
      %571 = vmatpush1.msra.mxu0 %v282
      %572 = vmatprep.subr.mxu0 0.0
      %573 = vmatpush1.msra.mxu0 %v283
      %574 = vmatprep.subr.mxu0 0.0
      %575 = vmatpush1.msra.mxu0 %v284
      %576 = vmatprep.subr.mxu0 0.0
      %577 = vmatpush1.msra.mxu0 %v285
      %578 = vmatprep.subr.mxu0 0.0
      %579 = vmatpush1.msra.mxu0 %v286
      %580 = vmatprep.subr.mxu0 0.0
      %581 = vmatpush1.msra.mxu0 %v287
      %582 = vmatprep.subr.mxu0 0.0
      %583 = vmatpush1.msra.mxu0 %v288
      %584 = vmatprep.mubr.f32.mxu0 %v178
      %585 = vmatmul.mubr.f32.gmra.mrb[0].mxu0 %v177
      %v586 = vpop.f32.mrb[0].mxu0
      %v587 = vadd.f32 %v518, %v586
      %v588 = vpop.f32.mrb[0].mxu0
      %589 = vmatprep.mubr.f32.mxu0 %v194
      %590 = vmatmul.mubr.f32.gmra.mrb[0].mxu0 %v193
      %v591 = vpop.f32.mrb[0].mxu0
      %v592 = vadd.f32 %v518, %v591
      %v593 = vpop.f32.mrb[0].mxu0
      %594 = vmatprep.mubr.f32.mxu0 %v210
      %595 = vmatmul.mubr.f32.gmra.mrb[0].mxu0 %v209
      %v596 = vpop.f32.mrb[0].mxu0
      %v597 = vadd.f32 %v518, %v596
      %v598 = vpop.f32.mrb[0].mxu0
      %599 = vmatprep.mubr.f32.mxu0 %v226
      %600 = vmatmul.mubr.f32.gmra.mrb[0].mxu0 %v225
      %v601 = vpop.f32.mrb[0].mxu0
      %v602 = vadd.f32 %v518, %v601
      %v603 = vpop.f32.mrb[0].mxu0
      %604 = vmatprep.mubr.f32.mxu0 %v242
      %605 = vmatmul.mubr.f32.gmra.mrb[0].mxu0 %v241
      %v606 = vpop.f32.mrb[0].mxu0
      %v607 = vadd.f32 %v518, %v606
      %v608 = vpop.f32.mrb[0].mxu0
      %609 = vdwg.mxu0
      %610 = vmatprep.subr.mxu0 0.0
      %611 = vmatpush1.msra.mxu0 %v289
      %612 = vmatprep.subr.mxu0 0.0
      %613 = vmatpush1.msra.mxu0 %v290
      %614 = vmatprep.subr.mxu0 0.0
      %615 = vmatpush1.msra.mxu0 %v291
      %616 = vmatprep.subr.mxu0 0.0
      %617 = vmatpush1.msra.mxu0 %v292
      %618 = vmatprep.subr.mxu0 0.0
      %619 = vmatpush1.msra.mxu0 %v293
      %620 = vmatprep.subr.mxu0 0.0
      %621 = vmatpush1.msra.mxu0 %v294
      %622 = vmatprep.subr.mxu0 0.0
      %623 = vmatpush1.msra.mxu0 %v295
      %624 = vmatprep.subr.mxu0 0.0
      %625 = vmatpush1.msra.mxu0 %v296
      %626 = vmatprep.subr.mxu0 0.0
      %627 = vmatpush1.msra.mxu0 %v297
      %628 = vmatprep.subr.mxu0 0.0
      %629 = vmatpush1.msra.mxu0 %v298
      %630 = vmatprep.subr.mxu0 0.0
      %631 = vmatpush1.msra.mxu0 %v299
      %632 = vmatprep.subr.mxu0 0.0
      %633 = vmatpush1.msra.mxu0 %v300
      %634 = vmatprep.subr.mxu0 0.0
      %635 = vmatpush1.msra.mxu0 %v301
      %636 = vmatprep.subr.mxu0 0.0
      %637 = vmatpush1.msra.mxu0 %v302
      %638 = vmatprep.subr.mxu0 0.0
      %639 = vmatpush1.msra.mxu0 %v303
      %640 = vmatprep.subr.mxu0 0.0
      %641 = vmatpush1.msra.mxu0 %v304
      %642 = vmatprep.subr.mxu0 0.0
      %643 = vmatpush1.msra.mxu0 %v305
      %644 = vmatprep.subr.mxu0 0.0
      %645 = vmatpush1.msra.mxu0 %v306
      %646 = vmatprep.subr.mxu0 0.0
      %647 = vmatpush1.msra.mxu0 %v307
      %648 = vmatprep.subr.mxu0 0.0
      %649 = vmatpush1.msra.mxu0 %v308
      %650 = vmatprep.subr.mxu0 0.0
      %651 = vmatpush1.msra.mxu0 %v309
      %652 = vmatprep.subr.mxu0 0.0
      %653 = vmatpush1.msra.mxu0 %v310
      %654 = vmatprep.subr.mxu0 0.0
      %655 = vmatpush1.msra.mxu0 %v311
      %656 = vmatprep.subr.mxu0 0.0
      %657 = vmatpush1.msra.mxu0 %v312
      %658 = vmatprep.subr.mxu0 0.0
      %659 = vmatpush1.msra.mxu0 %v313
      %660 = vmatprep.subr.mxu0 0.0
      %661 = vmatpush1.msra.mxu0 %v314
      %662 = vmatprep.subr.mxu0 0.0
      %663 = vmatpush1.msra.mxu0 %v315
      %664 = vmatprep.subr.mxu0 0.0
      %665 = vmatpush1.msra.mxu0 %v316
      %666 = vmatprep.subr.mxu0 0.0
      %667 = vmatpush1.msra.mxu0 %v317
      %668 = vmatprep.subr.mxu0 0.0
      %669 = vmatpush1.msra.mxu0 %v318
      %670 = vmatprep.subr.mxu0 0.0
      %671 = vmatpush1.msra.mxu0 %v319
      %672 = vmatprep.subr.mxu0 0.0
      %673 = vmatpush1.msra.mxu0 %v320
      %674 = vmatprep.mubr.f32.mxu0 %v180
      %675 = vmatmul.mubr.f32.gmra.mrb[0].mxu0 %v179
      %v676 = vpop.f32.mrb[0].mxu0
      %v677 = vadd.f32 %v587, %v676
      %v678 = vpop.f32.mrb[0].mxu0
      %679 = vmatprep.mubr.f32.mxu0 %v196
      %680 = vmatmul.mubr.f32.gmra.mrb[0].mxu0 %v195
      %v681 = vpop.f32.mrb[0].mxu0
      %v682 = vadd.f32 %v592, %v681
      %v683 = vpop.f32.mrb[0].mxu0
      %684 = vmatprep.mubr.f32.mxu0 %v212
      %685 = vmatmul.mubr.f32.gmra.mrb[0].mxu0 %v211
      %v686 = vpop.f32.mrb[0].mxu0
      %v687 = vadd.f32 %v597, %v686
      %v688 = vpop.f32.mrb[0].mxu0
      %689 = vmatprep.mubr.f32.mxu0 %v228
      %690 = vmatmul.mubr.f32.gmra.mrb[0].mxu0 %v227
      %v691 = vpop.f32.mrb[0].mxu0
      %v692 = vadd.f32 %v602, %v691
      %v693 = vpop.f32.mrb[0].mxu0
      %694 = vmatprep.mubr.f32.mxu0 %v244
      %695 = vmatmul.mubr.f32.gmra.mrb[0].mxu0 %v243
      %v696 = vpop.f32.mrb[0].mxu0
      %v697 = vadd.f32 %v607, %v696
      %v698 = vpop.f32.mrb[0].mxu0
      %699 = vdwg.mxu0
      %700 = vmatprep.subr.mxu0 0.0
      %701 = vmatpush1.msra.mxu0 %v321
      %702 = vmatprep.subr.mxu0 0.0
      %703 = vmatpush1.msra.mxu0 %v322
      %704 = vmatprep.subr.mxu0 0.0
      %705 = vmatpush1.msra.mxu0 %v323
      %706 = vmatprep.subr.mxu0 0.0
      %707 = vmatpush1.msra.mxu0 %v324
      %708 = vmatprep.subr.mxu0 0.0
      %709 = vmatpush1.msra.mxu0 %v325
      %710 = vmatprep.subr.mxu0 0.0
      %711 = vmatpush1.msra.mxu0 %v326
      %712 = vmatprep.subr.mxu0 0.0
      %713 = vmatpush1.msra.mxu0 %v327
      %714 = vmatprep.subr.mxu0 0.0
      %715 = vmatpush1.msra.mxu0 %v328
      %716 = vmatprep.subr.mxu0 0.0
      %717 = vmatpush1.msra.mxu0 %v329
      %718 = vmatprep.subr.mxu0 0.0
      %719 = vmatpush1.msra.mxu0 %v330
      %720 = vmatprep.subr.mxu0 0.0
      %721 = vmatpush1.msra.mxu0 %v331
      %722 = vmatprep.subr.mxu0 0.0
      %723 = vmatpush1.msra.mxu0 %v332
      %724 = vmatprep.subr.mxu0 0.0
      %725 = vmatpush1.msra.mxu0 %v333
      %726 = vmatprep.subr.mxu0 0.0
      %727 = vmatpush1.msra.mxu0 %v334
      %728 = vmatprep.subr.mxu0 0.0
      %729 = vmatpush1.msra.mxu0 %v335
      %730 = vmatprep.subr.mxu0 0.0
      %731 = vmatpush1.msra.mxu0 %v336
      %732 = vmatprep.subr.mxu0 0.0
      %733 = vmatpush1.msra.mxu0 %v337
      %734 = vmatprep.subr.mxu0 0.0
      %735 = vmatpush1.msra.mxu0 %v338
      %736 = vmatprep.subr.mxu0 0.0
      %737 = vmatpush1.msra.mxu0 %v339
      %738 = vmatprep.subr.mxu0 0.0
      %739 = vmatpush1.msra.mxu0 %v340
      %740 = vmatprep.subr.mxu0 0.0
      %741 = vmatpush1.msra.mxu0 %v341
      %742 = vmatprep.subr.mxu0 0.0
      %743 = vmatpush1.msra.mxu0 %v342
      %744 = vmatprep.subr.mxu0 0.0
      %745 = vmatpush1.msra.mxu0 %v343
      %746 = vmatprep.subr.mxu0 0.0
      %747 = vmatpush1.msra.mxu0 %v344
      %748 = vmatprep.subr.mxu0 0.0
      %749 = vmatpush1.msra.mxu0 %v345
      %750 = vmatprep.subr.mxu0 0.0
      %751 = vmatpush1.msra.mxu0 %v346
      %752 = vmatprep.subr.mxu0 0.0
      %753 = vmatpush1.msra.mxu0 %v347
      %754 = vmatprep.subr.mxu0 0.0
      %755 = vmatpush1.msra.mxu0 %v348
      %756 = vmatprep.subr.mxu0 0.0
      %757 = vmatpush1.msra.mxu0 %v349
      %758 = vmatprep.subr.mxu0 0.0
      %759 = vmatpush1.msra.mxu0 %v350
      %760 = vmatprep.subr.mxu0 0.0
      %761 = vmatpush1.msra.mxu0 %v351
      %762 = vmatprep.subr.mxu0 0.0
      %763 = vmatpush1.msra.mxu0 %v352
      %764 = vmatprep.mubr.f32.mxu0 %v182
      %765 = vmatmul.mubr.f32.gmra.mrb[0].mxu0 %v181
      %v766 = vpop.f32.mrb[0].mxu0
      %v767 = vadd.f32 %v677, %v766
      %v768 = vpop.f32.mrb[0].mxu0
      %769 = vmatprep.mubr.f32.mxu0 %v198
      %770 = vmatmul.mubr.f32.gmra.mrb[0].mxu0 %v197
      %v771 = vpop.f32.mrb[0].mxu0
      %v772 = vadd.f32 %v682, %v771
      %v773 = vpop.f32.mrb[0].mxu0
      %774 = vmatprep.mubr.f32.mxu0 %v214
      %775 = vmatmul.mubr.f32.gmra.mrb[0].mxu0 %v213
      %v776 = vpop.f32.mrb[0].mxu0
      %v777 = vadd.f32 %v687, %v776
      %v778 = vpop.f32.mrb[0].mxu0
      %779 = vmatprep.mubr.f32.mxu0 %v230
      %780 = vmatmul.mubr.f32.gmra.mrb[0].mxu0 %v229
      %v781 = vpop.f32.mrb[0].mxu0
      %v782 = vadd.f32 %v692, %v781
      %v783 = vpop.f32.mrb[0].mxu0
      %784 = vmatprep.mubr.f32.mxu0 %v246
      %785 = vmatmul.mubr.f32.gmra.mrb[0].mxu0 %v245
      %v786 = vpop.f32.mrb[0].mxu0
      %v787 = vadd.f32 %v697, %v786
      %v788 = vpop.f32.mrb[0].mxu0
      %789 = vdwg.mxu0
      %790 = vmatprep.subr.mxu0 0.0
      %791 = vmatpush1.msra.mxu0 %v353
      %792 = vmatprep.subr.mxu0 0.0
      %793 = vmatpush1.msra.mxu0 %v354
      %794 = vmatprep.subr.mxu0 0.0
      %795 = vmatpush1.msra.mxu0 %v355
      %796 = vmatprep.subr.mxu0 0.0
      %797 = vmatpush1.msra.mxu0 %v356
      %798 = vmatprep.subr.mxu0 0.0
      %799 = vmatpush1.msra.mxu0 %v357
      %800 = vmatprep.subr.mxu0 0.0
      %801 = vmatpush1.msra.mxu0 %v358
      %802 = vmatprep.subr.mxu0 0.0
      %803 = vmatpush1.msra.mxu0 %v359
      %804 = vmatprep.subr.mxu0 0.0
      %805 = vmatpush1.msra.mxu0 %v360
      %806 = vmatprep.subr.mxu0 0.0
      %807 = vmatpush1.msra.mxu0 %v361
      %808 = vmatprep.subr.mxu0 0.0
      %809 = vmatpush1.msra.mxu0 %v362
      %810 = vmatprep.subr.mxu0 0.0
      %811 = vmatpush1.msra.mxu0 %v363
      %812 = vmatprep.subr.mxu0 0.0
      %813 = vmatpush1.msra.mxu0 %v364
      %814 = vmatprep.subr.mxu0 0.0
      %815 = vmatpush1.msra.mxu0 %v365
      %816 = vmatprep.subr.mxu0 0.0
      %817 = vmatpush1.msra.mxu0 %v366
      %818 = vmatprep.subr.mxu0 0.0
      %819 = vmatpush1.msra.mxu0 %v367
      %820 = vmatprep.subr.mxu0 0.0
      %821 = vmatpush1.msra.mxu0 %v368
      %822 = vmatprep.subr.mxu0 0.0
      %823 = vmatpush1.msra.mxu0 %v369
      %824 = vmatprep.subr.mxu0 0.0
      %825 = vmatpush1.msra.mxu0 %v370
      %826 = vmatprep.subr.mxu0 0.0
      %827 = vmatpush1.msra.mxu0 %v371
      %828 = vmatprep.subr.mxu0 0.0
      %829 = vmatpush1.msra.mxu0 %v372
      %830 = vmatprep.subr.mxu0 0.0
      %831 = vmatpush1.msra.mxu0 %v373
      %832 = vmatprep.subr.mxu0 0.0
      %833 = vmatpush1.msra.mxu0 %v374
      %834 = vmatprep.subr.mxu0 0.0
      %835 = vmatpush1.msra.mxu0 %v375
      %836 = vmatprep.subr.mxu0 0.0
      %837 = vmatpush1.msra.mxu0 %v376
      %838 = vmatprep.subr.mxu0 0.0
      %839 = vmatpush1.msra.mxu0 %v377
      %840 = vmatprep.subr.mxu0 0.0
      %841 = vmatpush1.msra.mxu0 %v378
      %842 = vmatprep.subr.mxu0 0.0
      %843 = vmatpush1.msra.mxu0 %v379
      %844 = vmatprep.subr.mxu0 0.0
      %845 = vmatpush1.msra.mxu0 %v380
      %846 = vmatprep.subr.mxu0 0.0
      %847 = vmatpush1.msra.mxu0 %v381
      %848 = vmatprep.subr.mxu0 0.0
      %849 = vmatpush1.msra.mxu0 %v382
      %850 = vmatprep.subr.mxu0 0.0
      %851 = vmatpush1.msra.mxu0 %v383
      %852 = vmatprep.subr.mxu0 0.0
      %853 = vmatpush1.msra.mxu0 %v384
      %854 = vmatprep.mubr.f32.mxu0 %v184
      %855 = vmatmul.mubr.f32.gmra.mrb[0].mxu0 %v183
      %v856 = vpop.f32.mrb[0].mxu0
      %v857 = vadd.f32 %v767, %v856
      %v858 = vpop.f32.mrb[0].mxu0
      %859 = vmatprep.mubr.f32.mxu0 %v200
      %860 = vmatmul.mubr.f32.gmra.mrb[0].mxu0 %v199
      %v861 = vpop.f32.mrb[0].mxu0
      %v862 = vadd.f32 %v772, %v861
      %v863 = vpop.f32.mrb[0].mxu0
      %864 = vmatprep.mubr.f32.mxu0 %v216
      %865 = vmatmul.mubr.f32.gmra.mrb[0].mxu0 %v215
      %v866 = vpop.f32.mrb[0].mxu0
      %v867 = vadd.f32 %v777, %v866
      %v868 = vpop.f32.mrb[0].mxu0
      %869 = vmatprep.mubr.f32.mxu0 %v232
      %870 = vmatmul.mubr.f32.gmra.mrb[0].mxu0 %v231
      %v871 = vpop.f32.mrb[0].mxu0
      %v872 = vadd.f32 %v782, %v871
      %v873 = vpop.f32.mrb[0].mxu0
      %874 = vmatprep.mubr.f32.mxu0 %v248
      %875 = vmatmul.mubr.f32.gmra.mrb[0].mxu0 %v247
      %v876 = vpop.f32.mrb[0].mxu0
      %v877 = vadd.f32 %v787, %v876
      %v878 = vpop.f32.mrb[0].mxu0
      %879 = vdwg.mxu0
      %880 = vmatprep.subr.mxu0 0.0
      %881 = vmatpush1.msra.mxu0 %v385
      %882 = vmatprep.subr.mxu0 0.0
      %883 = vmatpush1.msra.mxu0 %v386
      %884 = vmatprep.subr.mxu0 0.0
      %885 = vmatpush1.msra.mxu0 %v387
      %886 = vmatprep.subr.mxu0 0.0
      %887 = vmatpush1.msra.mxu0 %v388
      %888 = vmatprep.subr.mxu0 0.0
      %889 = vmatpush1.msra.mxu0 %v389
      %890 = vmatprep.subr.mxu0 0.0
      %891 = vmatpush1.msra.mxu0 %v390
      %892 = vmatprep.subr.mxu0 0.0
      %893 = vmatpush1.msra.mxu0 %v391
      %894 = vmatprep.subr.mxu0 0.0
      %895 = vmatpush1.msra.mxu0 %v392
      %896 = vmatprep.subr.mxu0 0.0
      %897 = vmatpush1.msra.mxu0 %v393
      %898 = vmatprep.subr.mxu0 0.0
      %899 = vmatpush1.msra.mxu0 %v394
      %900 = vmatprep.subr.mxu0 0.0
      %901 = vmatpush1.msra.mxu0 %v395
      %902 = vmatprep.subr.mxu0 0.0
      %903 = vmatpush1.msra.mxu0 %v396
      %904 = vmatprep.subr.mxu0 0.0
      %905 = vmatpush1.msra.mxu0 %v397
      %906 = vmatprep.subr.mxu0 0.0
      %907 = vmatpush1.msra.mxu0 %v398
      %908 = vmatprep.subr.mxu0 0.0
      %909 = vmatpush1.msra.mxu0 %v399
      %910 = vmatprep.subr.mxu0 0.0
      %911 = vmatpush1.msra.mxu0 %v400
      %912 = vmatprep.subr.mxu0 0.0
      %913 = vmatpush1.msra.mxu0 %v401
      %914 = vmatprep.subr.mxu0 0.0
      %915 = vmatpush1.msra.mxu0 %v402
      %916 = vmatprep.subr.mxu0 0.0
      %917 = vmatpush1.msra.mxu0 %v403
      %918 = vmatprep.subr.mxu0 0.0
      %919 = vmatpush1.msra.mxu0 %v404
      %920 = vmatprep.subr.mxu0 0.0
      %921 = vmatpush1.msra.mxu0 %v405
      %922 = vmatprep.subr.mxu0 0.0
      %923 = vmatpush1.msra.mxu0 %v406
      %924 = vmatprep.subr.mxu0 0.0
      %925 = vmatpush1.msra.mxu0 %v407
      %926 = vmatprep.subr.mxu0 0.0
      %927 = vmatpush1.msra.mxu0 %v408
      %928 = vmatprep.subr.mxu0 0.0
      %929 = vmatpush1.msra.mxu0 %v409
      %930 = vmatprep.subr.mxu0 0.0
      %931 = vmatpush1.msra.mxu0 %v410
      %932 = vmatprep.subr.mxu0 0.0
      %933 = vmatpush1.msra.mxu0 %v411
      %934 = vmatprep.subr.mxu0 0.0
      %935 = vmatpush1.msra.mxu0 %v412
      %936 = vmatprep.subr.mxu0 0.0
      %937 = vmatpush1.msra.mxu0 %v413
      %938 = vmatprep.subr.mxu0 0.0
      %939 = vmatpush1.msra.mxu0 %v414
      %940 = vmatprep.subr.mxu0 0.0
      %941 = vmatpush1.msra.mxu0 %v415
      %942 = vmatprep.subr.mxu0 0.0
      %943 = vmatpush1.msra.mxu0 %v416
      %944 = vmatprep.mubr.f32.mxu0 %v186
      %945 = vmatmul.mubr.f32.gmra.mrb[0].mxu0 %v185
      %v946 = vpop.f32.mrb[0].mxu0
      %v947 = vadd.f32 %v857, %v946
      %v948 = vpop.f32.mrb[0].mxu0
      %949 = vmatprep.mubr.f32.mxu0 %v202
      %950 = vmatmul.mubr.f32.gmra.mrb[0].mxu0 %v201
      %v951 = vpop.f32.mrb[0].mxu0
      %v952 = vadd.f32 %v862, %v951
      %v953 = vpop.f32.mrb[0].mxu0
      %954 = vmatprep.mubr.f32.mxu0 %v218
      %955 = vmatmul.mubr.f32.gmra.mrb[0].mxu0 %v217
      %v956 = vpop.f32.mrb[0].mxu0
      %v957 = vadd.f32 %v867, %v956
      %v958 = vpop.f32.mrb[0].mxu0
      %959 = vmatprep.mubr.f32.mxu0 %v234
      %960 = vmatmul.mubr.f32.gmra.mrb[0].mxu0 %v233
      %v961 = vpop.f32.mrb[0].mxu0
      %v962 = vadd.f32 %v872, %v961
      %v963 = vpop.f32.mrb[0].mxu0
      %964 = vmatprep.mubr.f32.mxu0 %v250
      %965 = vmatmul.mubr.f32.gmra.mrb[0].mxu0 %v249
      %v966 = vpop.f32.mrb[0].mxu0
      %v967 = vadd.f32 %v877, %v966
      %v968 = vpop.f32.mrb[0].mxu0
      %969 = vdwg.mxu0
      %970 = vmatprep.subr.mxu0 0.0
      %971 = vmatpush1.msra.mxu0 %v417
      %972 = vmatprep.subr.mxu0 0.0
      %973 = vmatpush1.msra.mxu0 %v418
      %974 = vmatprep.subr.mxu0 0.0
      %975 = vmatpush1.msra.mxu0 %v419
      %976 = vmatprep.subr.mxu0 0.0
      %977 = vmatpush1.msra.mxu0 %v420
      %978 = vmatprep.subr.mxu0 0.0
      %979 = vmatpush1.msra.mxu0 %v421
      %980 = vmatprep.subr.mxu0 0.0
      %981 = vmatpush1.msra.mxu0 %v422
      %982 = vmatprep.subr.mxu0 0.0
      %983 = vmatpush1.msra.mxu0 %v423
      %984 = vmatprep.subr.mxu0 0.0
      %985 = vmatpush1.msra.mxu0 %v424
      %986 = vmatprep.subr.mxu0 0.0
      %987 = vmatpush1.msra.mxu0 %v425
      %988 = vmatprep.subr.mxu0 0.0
      %989 = vmatpush1.msra.mxu0 %v426
      %990 = vmatprep.subr.mxu0 0.0
      %991 = vmatpush1.msra.mxu0 %v427
      %992 = vmatprep.subr.mxu0 0.0
      %993 = vmatpush1.msra.mxu0 %v428
      %994 = vmatprep.subr.mxu0 0.0
      %995 = vmatpush1.msra.mxu0 %v429
      %996 = vmatprep.subr.mxu0 0.0
      %997 = vmatpush1.msra.mxu0 %v430
      %998 = vmatprep.subr.mxu0 0.0
      %999 = vmatpush1.msra.mxu0 %v431
      %1000 = vmatprep.subr.mxu0 0.0
      %1001 = vmatpush1.msra.mxu0 %v432
      %1002 = vmatprep.subr.mxu0 0.0
      %1003 = vmatpush1.msra.mxu0 %v433
      %1004 = vmatprep.subr.mxu0 0.0
      %1005 = vmatpush1.msra.mxu0 %v434
      %1006 = vmatprep.subr.mxu0 0.0
      %1007 = vmatpush1.msra.mxu0 %v435
      %1008 = vmatprep.subr.mxu0 0.0
      %1009 = vmatpush1.msra.mxu0 %v436
      %1010 = vmatprep.subr.mxu0 0.0
      %1011 = vmatpush1.msra.mxu0 %v437
      %1012 = vmatprep.subr.mxu0 0.0
      %1013 = vmatpush1.msra.mxu0 %v438
      %1014 = vmatprep.subr.mxu0 0.0
      %1015 = vmatpush1.msra.mxu0 %v439
      %1016 = vmatprep.subr.mxu0 0.0
      %1017 = vmatpush1.msra.mxu0 %v440
      %1018 = vmatprep.subr.mxu0 0.0
      %1019 = vmatpush1.msra.mxu0 %v441
      %1020 = vmatprep.subr.mxu0 0.0
      %1021 = vmatpush1.msra.mxu0 %v442
      %1022 = vmatprep.subr.mxu0 0.0
      %1023 = vmatpush1.msra.mxu0 %v443
      %1024 = vmatprep.subr.mxu0 0.0
      %1025 = vmatpush1.msra.mxu0 %v444
      %1026 = vmatprep.subr.mxu0 0.0
      %1027 = vmatpush1.msra.mxu0 %v445
      %1028 = vmatprep.subr.mxu0 0.0
      %1029 = vmatpush1.msra.mxu0 %v446
      %1030 = vmatprep.subr.mxu0 0.0
      %1031 = vmatpush1.msra.mxu0 %v447
      %1032 = vmatprep.subr.mxu0 0.0
      %1033 = vmatpush1.msra.mxu0 %v448
      %1034 = vmatprep.mubr.f32.mxu0 %v188
      %1035 = vmatmul.mubr.f32.gmra.mrb[0].mxu0 %v187
      %v1036 = vpop.f32.mrb[0].mxu0
      %v1037 = vadd.f32 %v947, %v1036
      %v1038 = vpop.f32.mrb[0].mxu0
      %1039 = vmatprep.mubr.f32.mxu0 %v204
      %1040 = vmatmul.mubr.f32.gmra.mrb[0].mxu0 %v203
      %v1041 = vpop.f32.mrb[0].mxu0
      %v1042 = vadd.f32 %v952, %v1041
      %v1043 = vpop.f32.mrb[0].mxu0
      %1044 = vmatprep.mubr.f32.mxu0 %v220
      %1045 = vmatmul.mubr.f32.gmra.mrb[0].mxu0 %v219
      %v1046 = vpop.f32.mrb[0].mxu0
      %v1047 = vadd.f32 %v957, %v1046
      %v1048 = vpop.f32.mrb[0].mxu0
      %1049 = vmatprep.mubr.f32.mxu0 %v236
      %1050 = vmatmul.mubr.f32.gmra.mrb[0].mxu0 %v235
      %v1051 = vpop.f32.mrb[0].mxu0
      %v1052 = vadd.f32 %v962, %v1051
      %v1053 = vpop.f32.mrb[0].mxu0
      %1054 = vmatprep.mubr.f32.mxu0 %v252
      %1055 = vmatmul.mubr.f32.gmra.mrb[0].mxu0 %v251
      %v1056 = vpop.f32.mrb[0].mxu0
      %v1057 = vadd.f32 %v967, %v1056
      %v1058 = vpop.f32.mrb[0].mxu0
      %1059 = vdwg.mxu0
      %1060 = vmatprep.subr.mxu0 0.0
      %1061 = vmatpush1.msra.mxu0 %v449
      %1062 = vmatprep.subr.mxu0 0.0
      %1063 = vmatpush1.msra.mxu0 %v450
      %1064 = vmatprep.subr.mxu0 0.0
      %1065 = vmatpush1.msra.mxu0 %v451
      %1066 = vmatprep.subr.mxu0 0.0
      %1067 = vmatpush1.msra.mxu0 %v452
      %1068 = vmatprep.subr.mxu0 0.0
      %1069 = vmatpush1.msra.mxu0 %v453
      %1070 = vmatprep.subr.mxu0 0.0
      %1071 = vmatpush1.msra.mxu0 %v454
      %1072 = vmatprep.subr.mxu0 0.0
      %1073 = vmatpush1.msra.mxu0 %v455
      %1074 = vmatprep.subr.mxu0 0.0
      %1075 = vmatpush1.msra.mxu0 %v456
      %1076 = vmatprep.subr.mxu0 0.0
      %1077 = vmatpush1.msra.mxu0 %v457
      %1078 = vmatprep.subr.mxu0 0.0
      %1079 = vmatpush1.msra.mxu0 %v458
      %1080 = vmatprep.subr.mxu0 0.0
      %1081 = vmatpush1.msra.mxu0 %v459
      %1082 = vmatprep.subr.mxu0 0.0
      %1083 = vmatpush1.msra.mxu0 %v460
      %1084 = vmatprep.subr.mxu0 0.0
      %1085 = vmatpush1.msra.mxu0 %v461
      %1086 = vmatprep.subr.mxu0 0.0
      %1087 = vmatpush1.msra.mxu0 %v462
      %1088 = vmatprep.subr.mxu0 0.0
      %1089 = vmatpush1.msra.mxu0 %v463
      %1090 = vmatprep.subr.mxu0 0.0
      %1091 = vmatpush1.msra.mxu0 %v464
      %1092 = vmatprep.subr.mxu0 0.0
      %1093 = vmatpush1.msra.mxu0 %v465
      %1094 = vmatprep.subr.mxu0 0.0
      %1095 = vmatpush1.msra.mxu0 %v466
      %1096 = vmatprep.subr.mxu0 0.0
      %1097 = vmatpush1.msra.mxu0 %v467
      %1098 = vmatprep.subr.mxu0 0.0
      %1099 = vmatpush1.msra.mxu0 %v468
      %1100 = vmatprep.subr.mxu0 0.0
      %1101 = vmatpush1.msra.mxu0 %v469
      %1102 = vmatprep.subr.mxu0 0.0
      %1103 = vmatpush1.msra.mxu0 %v470
      %1104 = vmatprep.subr.mxu0 0.0
      %1105 = vmatpush1.msra.mxu0 %v471
      %1106 = vmatprep.subr.mxu0 0.0
      %1107 = vmatpush1.msra.mxu0 %v472
      %1108 = vmatprep.subr.mxu0 0.0
      %1109 = vmatpush1.msra.mxu0 %v473
      %1110 = vmatprep.subr.mxu0 0.0
      %1111 = vmatpush1.msra.mxu0 %v474
      %1112 = vmatprep.subr.mxu0 0.0
      %1113 = vmatpush1.msra.mxu0 %v475
      %1114 = vmatprep.subr.mxu0 0.0
      %1115 = vmatpush1.msra.mxu0 %v476
      %1116 = vmatprep.subr.mxu0 0.0
      %1117 = vmatpush1.msra.mxu0 %v477
      %1118 = vmatprep.subr.mxu0 0.0
      %1119 = vmatpush1.msra.mxu0 %v478
      %1120 = vmatprep.subr.mxu0 0.0
      %1121 = vmatpush1.msra.mxu0 %v479
      %1122 = vmatprep.subr.mxu0 0.0
      %1123 = vmatpush1.msra.mxu0 %v480
      %1124 = vmatprep.mubr.f32.mxu0 %v190
      %1125 = vmatmul.mubr.f32.gmra.mrb[0].mxu0 %v189
      %v1126 = vpop.f32.mrb[0].mxu0
      %v1127 = vadd.f32 %v1037, %v1126
      %v1128 = vpop.f32.mrb[0].mxu0
      %1129 = vmatprep.mubr.f32.mxu0 %v206
      %1130 = vmatmul.mubr.f32.gmra.mrb[0].mxu0 %v205
      %v1131 = vpop.f32.mrb[0].mxu0
      %v1132 = vadd.f32 %v1042, %v1131
      %v1133 = vpop.f32.mrb[0].mxu0
      %1134 = vmatprep.mubr.f32.mxu0 %v222
      %1135 = vmatmul.mubr.f32.gmra.mrb[0].mxu0 %v221
      %v1136 = vpop.f32.mrb[0].mxu0
      %v1137 = vadd.f32 %v1047, %v1136
      %v1138 = vpop.f32.mrb[0].mxu0
      %1139 = vmatprep.mubr.f32.mxu0 %v238
      %1140 = vmatmul.mubr.f32.gmra.mrb[0].mxu0 %v237
      %v1141 = vpop.f32.mrb[0].mxu0
      %v1142 = vadd.f32 %v1052, %v1141
      %v1143 = vpop.f32.mrb[0].mxu0
      %1144 = vmatprep.mubr.f32.mxu0 %v254
      %1145 = vmatmul.mubr.f32.gmra.mrb[0].mxu0 %v253
      %v1146 = vpop.f32.mrb[0].mxu0
      %v1147 = vadd.f32 %v1057, %v1146
      %v1148 = vpop.f32.mrb[0].mxu0
      %1149 = vdwg.mxu0
      %1150 = vmatprep.subr.mxu0 0.0
      %1151 = vmatpush1.msra.mxu0 %v481
      %1152 = vmatprep.subr.mxu0 0.0
      %1153 = vmatpush1.msra.mxu0 %v482
      %1154 = vmatprep.subr.mxu0 0.0
      %1155 = vmatpush1.msra.mxu0 %v483
      %1156 = vmatprep.subr.mxu0 0.0
      %1157 = vmatpush1.msra.mxu0 %v484
      %1158 = vmatprep.subr.mxu0 0.0
      %1159 = vmatpush1.msra.mxu0 %v485
      %1160 = vmatprep.subr.mxu0 0.0
      %1161 = vmatpush1.msra.mxu0 %v486
      %1162 = vmatprep.subr.mxu0 0.0
      %1163 = vmatpush1.msra.mxu0 %v487
      %1164 = vmatprep.subr.mxu0 0.0
      %1165 = vmatpush1.msra.mxu0 %v488
      %1166 = vmatprep.subr.mxu0 0.0
      %1167 = vmatpush1.msra.mxu0 %v489
      %1168 = vmatprep.subr.mxu0 0.0
      %1169 = vmatpush1.msra.mxu0 %v490
      %1170 = vmatprep.subr.mxu0 0.0
      %1171 = vmatpush1.msra.mxu0 %v491
      %1172 = vmatprep.subr.mxu0 0.0
      %1173 = vmatpush1.msra.mxu0 %v492
      %1174 = vmatprep.subr.mxu0 0.0
      %1175 = vmatpush1.msra.mxu0 %v493
      %1176 = vmatprep.subr.mxu0 0.0
      %1177 = vmatpush1.msra.mxu0 %v494
      %1178 = vmatprep.subr.mxu0 0.0
      %1179 = vmatpush1.msra.mxu0 %v495
      %1180 = vmatprep.subr.mxu0 0.0
      %1181 = vmatpush1.msra.mxu0 %v496
      %1182 = vmatprep.subr.mxu0 0.0
      %1183 = vmatpush1.msra.mxu0 %v497
      %1184 = vmatprep.subr.mxu0 0.0
      %1185 = vmatpush1.msra.mxu0 %v498
      %1186 = vmatprep.subr.mxu0 0.0
      %1187 = vmatpush1.msra.mxu0 %v499
      %1188 = vmatprep.subr.mxu0 0.0
      %1189 = vmatpush1.msra.mxu0 %v500
      %1190 = vmatprep.subr.mxu0 0.0
      %1191 = vmatpush1.msra.mxu0 %v501
      %1192 = vmatprep.subr.mxu0 0.0
      %1193 = vmatpush1.msra.mxu0 %v502
      %1194 = vmatprep.subr.mxu0 0.0
      %1195 = vmatpush1.msra.mxu0 %v503
      %1196 = vmatprep.subr.mxu0 0.0
      %1197 = vmatpush1.msra.mxu0 %v504
      %1198 = vmatprep.subr.mxu0 0.0
      %1199 = vmatpush1.msra.mxu0 %v505
      %1200 = vmatprep.subr.mxu0 0.0
      %1201 = vmatpush1.msra.mxu0 %v506
      %1202 = vmatprep.subr.mxu0 0.0
      %1203 = vmatpush1.msra.mxu0 %v507
      %1204 = vmatprep.subr.mxu0 0.0
      %1205 = vmatpush1.msra.mxu0 %v508
      %1206 = vmatprep.subr.mxu0 0.0
      %1207 = vmatpush1.msra.mxu0 %v509
      %1208 = vmatprep.subr.mxu0 0.0
      %1209 = vmatpush1.msra.mxu0 %v510
      %1210 = vmatprep.subr.mxu0 0.0
      %1211 = vmatpush1.msra.mxu0 %v511
      %1212 = vmatprep.subr.mxu0 0.0
      %1213 = vmatpush1.msra.mxu0 %v512
      %1214 = vmatprep.mubr.f32.mxu0 %v192
      %1215 = vmatmul.mubr.f32.gmra.mrb[0].mxu0 %v191
      %v1216 = vpop.f32.mrb[0].mxu0
      %v1217 = vadd.f32 %v1127, %v1216
      %v1218 = vpop.f32.mrb[0].mxu0
      %1219 = vmatprep.mubr.f32.mxu0 %v208
      %1220 = vmatmul.mubr.f32.gmra.mrb[0].mxu0 %v207
      %v1221 = vpop.f32.mrb[0].mxu0
      %v1222 = vadd.f32 %v1132, %v1221
      %v1223 = vpop.f32.mrb[0].mxu0
      %1224 = vmatprep.mubr.f32.mxu0 %v224
      %1225 = vmatmul.mubr.f32.gmra.mrb[0].mxu0 %v223
      %v1226 = vpop.f32.mrb[0].mxu0
      %v1227 = vadd.f32 %v1137, %v1226
      %v1228 = vpop.f32.mrb[0].mxu0
      %1229 = vmatprep.mubr.f32.mxu0 %v240
      %1230 = vmatmul.mubr.f32.gmra.mrb[0].mxu0 %v239
      %v1231 = vpop.f32.mrb[0].mxu0
      %v1232 = vadd.f32 %v1142, %v1231
      %v1233 = vpop.f32.mrb[0].mxu0
      %1234 = vmatprep.mubr.f32.mxu0 %v256
      %1235 = vmatmul.mubr.f32.gmra.mrb[0].mxu0 %v255
      %v1236 = vpop.f32.mrb[0].mxu0
      %v1237 = vadd.f32 %v1147, %v1236
      %v1238 = vpop.f32.mrb[0].mxu0
      %1239 = vdwg.mxu0
      %v1240 = vmax.f32 %v1217, 0.0
      %v1241 = vmax.f32 %v1222, 0.0
      %v1242 = vmax.f32 %v1227, 0.0
      %v1243 = vmax.f32 %v1232, 0.0
      %v1244 = vmax.f32 %v1237, 0.0
      %1245 = vst [vmem:[%s175] sm:$0xff] %v1240
      %1246 = vst [vmem:[%s175 + $0x8] sm:$0xff] %v1241
      %1247 = vst [vmem:[%s175 + $0x10] sm:$0xff] %v1242
      %1248 = vst [vmem:[%s175 + $0x18] sm:$0xff] %v1243
      %1249 = vst [vmem:[%s175 + $0x20] sm:$0xff] %v1244
      %s1250 = smul.u32 5, %s14
      %p1251 = scmp.lt.s32.totalorder %s1250, 24
      %s1252 = scalar_select %p1251, %s1250, 24
      %s1253 = smul.addr %s1252, 8
      %s1254 = scalar_lea.vmem %s3, %s1253
      // Predicated region
      $region33: #{encoder_like_dqn_forward.5} parent=31 // pred_check
        %p1255 = pneg %p100
      $region34: #{encoder_like_dqn_forward.5} parent=31 // pred_check_branch
        %1257 = sbr.rel (%p1255) target = $region36
      $region35: #{encoder_like_dqn_forward.5} parent=31 // pred_region
        %s1258 = smul.u32 5, %s14
      $region36: #{encoder_like_dqn_forward.5} parent=31 // pred_fallthru
        _
    $region32: #{encoder_like_dqn_forward.5} parent=5 // pred_fallthru
      _
    %p1259 = scmp.le.s32.totalorder 2, %s9
    // Predicated region
    $region37: #{encoder_like_dqn_forward.5} parent=5 // pred_check
      %p1260 = pneg %p1259
    $region38: #{encoder_like_dqn_forward.5} parent=5 // pred_check_branch
      %1262 = sbr.rel (%p1260) target = $region40
    $region39: #{encoder_like_dqn_forward.5} parent=5 // pred_region
      %s1263 = ssub.s32 %s9, 2
      // Predicated region
      $region41: #{encoder_like_dqn_forward.5} parent=39 // pred_check
        %p1264 = pneg %p106
      $region42: #{encoder_like_dqn_forward.5} parent=39 // pred_check_branch
        %1266 = sbr.rel (%p1264) target = $region44
      $region43: #{encoder_like_dqn_forward.5} parent=39 // pred_region
        %s1267 = smul.u32 5, %s15
        %p1268 = scmp.lt.s32.totalorder %s1267, 24
        %s1269 = scalar_select %p1268, %s1267, 24
        %s1270 = smul.addr %s1269, 8
        %s1271 = scalar_lea.vmem %s3, %s1270
      $region44: #{encoder_like_dqn_forward.5} parent=39 // pred_fallthru
        _
    $region40: #{encoder_like_dqn_forward.5} parent=5 // pred_fallthru
      _
  $region6: #{encoder_like_dqn_forward.5} parent=0 // loop_footer
    %s13 = sadd.s32 1, %s9
  $region7: #{encoder_like_dqn_forward.5} parent=0 // loop_footer_branch
    %8 = sbr.rel target = $region3
  $region8: #{encoder_like_dqn_forward.5} parent=0 // loop_exit
    _

// kernel: encoder_like_dqn_forward.6
$region0: #{encoder_like_dqn_forward.6}
  #allocation0 [shape = 'u32[]', space=smem, size = 0x4, offset = 0x4, fixed_abs, tag = 'smem constant byte address 0x4 - core index']
  #allocation1 [shape = 'u32[144,128]{1,0:T(1,128)}', space=vmem, size = 0x12000, scoped, tag = 'internal scratch']
  %s0 = inlined_call_operand.vmem [shape: f32[200,1152], index: 0, kind: input, shape index: {}]
  %s1 = inlined_call_operand.vmem [shape: f32[1152,64], index: 1, kind: input, shape index: {}]
  %s2 = inlined_call_operand.vmem [shape: f32[1,64], index: 2, kind: input, shape index: {}]
  %s3 = inlined_call_operand.vmem [shape: f32[200,64], index: 3, kind: output, shape index: {}]
  %s4 = sld [smem:[#allocation0]]
  $region45: #{encoder_like_dqn_forward.6} parent=0
    _
  %s6 = ssub.s32 1, %s4
  %s7 = scalar_select 0, %s6, %s4
  loop: start=0, step=1, limit=7
  $region2: #{encoder_like_dqn_forward.6} parent=0 // loop_pre_header
    _
  $region3: #{encoder_like_dqn_forward.6} parent=0 // loop_header
    %s9 = sphi 0, %s13
    %p10 = scmp.ge.s32.totalorder %s9, 7
    %s19 = sphi 0, %s21
    %s22 = sphi 0, %s19
    %s23 = sphi 0, %s22
    %s39 = sphi 0, %s23
    %s43 = sphi 0, %s43
    %s45 = sphi 0, %s43
    %s46 = sphi 0, %s45
    %s60 = sphi 0, %s46
    %s64 = sphi 0, %s64
    %s66 = sphi 0, %s64
    %s67 = sphi 0, %s66
    %s81 = sphi 0, %s67
    %s87 = sphi 0, %s89
    %s90 = sphi 0, %s87
    %s91 = sphi 0, %s90
    %s107 = sphi 0, %s91
  $region4: #{encoder_like_dqn_forward.6} parent=0 // loop_header_branch
    %12 = sbr.rel (%p10) target = $region8
  $region5: #{encoder_like_dqn_forward.6} parent=0 // loop_body
    %s14 = ssub.s32 %s9, 1
    %s15 = ssub.s32 %s9, 2
    %s16 = sadd.s32 %s9, 1
    %s17 = ssub.s32 %s9, %s16
    %p18 = scmp.eq.s32.totalorder %s17, 0
    %s20 = sadd.s32 %s19, 1
    %s21 = scalar_select %p18, %s19, %s20
    %p24 = pneg %p18
    %p25 = scmp.eq.s32.totalorder %s9, 4
    %p26 = por %p24, %p25
    %p27 = scmp.ne.s32.totalorder %s19, %s22
    %p28 = scmp.eq.s32.totalorder %s9, 0
    %p29 = por %p27, %p28
    %p30 = scmp.ne.s32.totalorder %s19, %s22
    %p31 = scmp.eq.s32.totalorder %s14, 4
    %p32 = por %p30, %p31
    %p33 = scmp.ne.s32.totalorder %s22, %s23
    %p34 = scmp.eq.s32.totalorder %s14, 0
    %p35 = por %p33, %p34
    %p36 = scmp.ne.s32.totalorder %s22, %s23
    %p37 = scmp.eq.s32.totalorder %s15, 4
    %p38 = por %p36, %p37
    %p40 = scmp.ne.s32.totalorder %s23, %s39
    %p41 = scmp.eq.s32.totalorder %s15, 0
    %p42 = por %p40, %p41
    %s44 = sadd.s32 %s43, 1
    %p47 = scmp.eq.s32.totalorder %s9, 4
    %p48 = scmp.ne.s32.totalorder %s43, %s45
    %p49 = scmp.eq.s32.totalorder %s9, 0
    %p50 = por %p48, %p49
    %p51 = scmp.ne.s32.totalorder %s43, %s45
    %p52 = scmp.eq.s32.totalorder %s14, 4
    %p53 = por %p51, %p52
    %p54 = scmp.ne.s32.totalorder %s45, %s46
    %p55 = scmp.eq.s32.totalorder %s14, 0
    %p56 = por %p54, %p55
    %p57 = scmp.ne.s32.totalorder %s45, %s46
    %p58 = scmp.eq.s32.totalorder %s15, 4
    %p59 = por %p57, %p58
    %p61 = scmp.ne.s32.totalorder %s46, %s60
    %p62 = scmp.eq.s32.totalorder %s15, 0
    %p63 = por %p61, %p62
    %s65 = sadd.s32 %s64, 1
    %p68 = scmp.eq.s32.totalorder %s9, 4
    %p69 = scmp.ne.s32.totalorder %s64, %s66
    %p70 = scmp.eq.s32.totalorder %s9, 0
    %p71 = por %p69, %p70
    %p72 = scmp.ne.s32.totalorder %s64, %s66
    %p73 = scmp.eq.s32.totalorder %s14, 4
    %p74 = por %p72, %p73
    %p75 = scmp.ne.s32.totalorder %s66, %s67
    %p76 = scmp.eq.s32.totalorder %s14, 0
    %p77 = por %p75, %p76
    %p78 = scmp.ne.s32.totalorder %s66, %s67
    %p79 = scmp.eq.s32.totalorder %s15, 4
    %p80 = por %p78, %p79
    %p82 = scmp.ne.s32.totalorder %s67, %s81
    %p83 = scmp.eq.s32.totalorder %s15, 0
    %p84 = por %p82, %p83
    %s85 = ssub.s32 %s9, %s16
    %p86 = scmp.eq.s32.totalorder %s85, 0
    %s88 = sadd.s32 %s87, 1
    %s89 = scalar_select %p86, %s87, %s88
    %p92 = pneg %p86
    %p93 = scmp.eq.s32.totalorder %s9, 4
    %p94 = por %p92, %p93
    %p95 = scmp.ne.s32.totalorder %s87, %s90
    %p96 = scmp.eq.s32.totalorder %s9, 0
    %p97 = por %p95, %p96
    %p98 = scmp.ne.s32.totalorder %s87, %s90
    %p99 = scmp.eq.s32.totalorder %s14, 4
    %p100 = por %p98, %p99
    %p101 = scmp.ne.s32.totalorder %s90, %s91
    %p102 = scmp.eq.s32.totalorder %s14, 0
    %p103 = por %p101, %p102
    %p104 = scmp.ne.s32.totalorder %s90, %s91
    %p105 = scmp.eq.s32.totalorder %s15, 4
    %p106 = por %p104, %p105
    %p108 = scmp.ne.s32.totalorder %s91, %s107
    %p109 = scmp.eq.s32.totalorder %s15, 0
    %p110 = por %p108, %p109
    %p111 = scmp.le.s32.totalorder 1, %s9
    %p112 = scmp.lt.s32.totalorder %s9, 6
    %p113 = pnand %p111, %p112
    %p114 = pneg %p113
    // Predicated region
    $region9: #{encoder_like_dqn_forward.6} parent=5 // pred_check
      _
    $region10: #{encoder_like_dqn_forward.6} parent=5 // pred_check_branch
      %116 = sbr.rel (%p113) target = $region12
    $region11: #{encoder_like_dqn_forward.6} parent=5 // pred_region
      %s117 = ssub.s32 %s9, 1
      // Predicated region
      $region13: #{encoder_like_dqn_forward.6} parent=11 // pred_check
        %p118 = pneg %p56
      $region14: #{encoder_like_dqn_forward.6} parent=11 // pred_check_branch
        %120 = sbr.rel (%p118) target = $region16
      $region15: #{encoder_like_dqn_forward.6} parent=11 // pred_region
        _
      $region16: #{encoder_like_dqn_forward.6} parent=11 // pred_fallthru
        _
      // Predicated region
      $region17: #{encoder_like_dqn_forward.6} parent=11 // pred_check
        %p121 = pneg %p77
      $region18: #{encoder_like_dqn_forward.6} parent=11 // pred_check_branch
        %123 = sbr.rel (%p121) target = $region20
      $region19: #{encoder_like_dqn_forward.6} parent=11 // pred_region
        _
      $region20: #{encoder_like_dqn_forward.6} parent=11 // pred_fallthru
        _
    $region12: #{encoder_like_dqn_forward.6} parent=5 // pred_fallthru
      _
    %p124 = scmp.lt.s32.totalorder %s9, 5
    // Predicated region
    $region21: #{encoder_like_dqn_forward.6} parent=5 // pred_check
      %p125 = pneg %p124
    $region22: #{encoder_like_dqn_forward.6} parent=5 // pred_check_branch
      %127 = sbr.rel (%p125) target = $region24
    $region23: #{encoder_like_dqn_forward.6} parent=5 // pred_region
      // Predicated region
      $region25: #{encoder_like_dqn_forward.6} parent=23 // pred_check
        %p128 = pneg %p29
      $region26: #{encoder_like_dqn_forward.6} parent=23 // pred_check_branch
        %130 = sbr.rel (%p128) target = $region28
      $region27: #{encoder_like_dqn_forward.6} parent=23 // pred_region
        %s131 = smul.u32 5, %s9
        %p132 = scmp.lt.s32.totalorder %s131, 24
        %s133 = scalar_select %p132, %s131, 24
        %s134 = smul.addr %s133, 9
        %s135 = smul.addr %s134, 8
        %s136 = scalar_lea.vmem %s0, %s135
        %s137 = smul.u32 5, %s9
      $region28: #{encoder_like_dqn_forward.6} parent=23 // pred_fallthru
        _
    $region24: #{encoder_like_dqn_forward.6} parent=5 // pred_fallthru
      _
    %p138 = scmp.le.s32.totalorder 1, %s9
    %p139 = scmp.lt.s32.totalorder %s9, 6
    %p140 = pnand %p138, %p139
    %p141 = pneg %p140
    // Predicated region
    $region29: #{encoder_like_dqn_forward.6} parent=5 // pred_check
      _
    $region30: #{encoder_like_dqn_forward.6} parent=5 // pred_check_branch
      %143 = sbr.rel (%p140) target = $region32
    $region31: #{encoder_like_dqn_forward.6} parent=5 // pred_region
      %s144 = ssub.s32 %s9, 1
      %s145 = smul.u32 5, %s14
      %p146 = scmp.lt.s32.totalorder %s145, 24
      %s147 = scalar_select %p146, %s145, 24
      %s148 = smul.addr %s147, 9
      %s149 = smul.addr %s148, 8
      %s150 = scalar_lea.vmem %s0, %s149
      %p151 = pneg %p35
      %p152 = pneg %p32
      %p153 = pneg %p56
      %p154 = pneg %p53
      %p155 = pneg %p77
      %p156 = pneg %p74
      %p157 = pneg %p103
      %p158 = pneg %p100
      %s159 = smul.u32 5, %s14
      %p160 = scmp.lt.s32.totalorder %s159, 24
      %s161 = scalar_select %p160, %s159, 24
      %s162 = smul.addr %s161, 8
      %s163 = scalar_lea.vmem %s3, %s162
      %s164 = smul.u32 5, %s14
      %p165 = scmp.lt.s32.totalorder %s164, 24
      %s166 = scalar_select %p165, %s164, 24
      %s167 = smul.addr %s166, 9
      %s168 = smul.addr %s167, 8
      %s169 = scalar_lea.vmem %s0, %s168
      %s170 = smul.u32 5, %s14
      %s171 = smul.u32 5, %s14
      %p172 = scmp.lt.s32.totalorder %s171, 24
      %s173 = scalar_select %p172, %s171, 24
      %s174 = smul.addr %s173, 8
      %s175 = scalar_lea.vmem %s3, %s174
      %s176 = smul.u32 5, %s14
      %v177 = vld [vmem:[%s169] sm:$0xff]
      %v178 = vld [vmem:[%s169 + $0x8] sm:$0xff]
      %v179 = vld [vmem:[%s169 + $0x10] sm:$0xff]
      %v180 = vld [vmem:[%s169 + $0x18] sm:$0xff]
      %v181 = vld [vmem:[%s169 + $0x20] sm:$0xff]
      %v182 = vld [vmem:[%s169 + $0x28] sm:$0xff]
      %v183 = vld [vmem:[%s169 + $0x30] sm:$0xff]
      %v184 = vld [vmem:[%s169 + $0x38] sm:$0xff]
      %v185 = vld [vmem:[%s169 + $0x40] sm:$0xff]
      %v186 = vld [vmem:[%s169 + $0x48] sm:$0xff]
      %v187 = vld [vmem:[%s169 + $0x50] sm:$0xff]
      %v188 = vld [vmem:[%s169 + $0x58] sm:$0xff]
      %v189 = vld [vmem:[%s169 + $0x60] sm:$0xff]
      %v190 = vld [vmem:[%s169 + $0x68] sm:$0xff]
      %v191 = vld [vmem:[%s169 + $0x70] sm:$0xff]
      %v192 = vld [vmem:[%s169 + $0x78] sm:$0xff]
      %v193 = vld [vmem:[%s169 + $0x80] sm:$0xff]
      %v194 = vld [vmem:[%s169 + $0x88] sm:$0xff]
      %v195 = vld [vmem:[%s169 + $0x90] sm:$0xff]
      %v196 = vld [vmem:[%s169 + $0x98] sm:$0xff]
      %v197 = vld [vmem:[%s169 + $0xa0] sm:$0xff]
      %v198 = vld [vmem:[%s169 + $0xa8] sm:$0xff]
      %v199 = vld [vmem:[%s169 + $0xb0] sm:$0xff]
      %v200 = vld [vmem:[%s169 + $0xb8] sm:$0xff]
      %v201 = vld [vmem:[%s169 + $0xc0] sm:$0xff]
      %v202 = vld [vmem:[%s169 + $0xc8] sm:$0xff]
      %v203 = vld [vmem:[%s169 + $0xd0] sm:$0xff]
      %v204 = vld [vmem:[%s169 + $0xd8] sm:$0xff]
      %v205 = vld [vmem:[%s169 + $0xe0] sm:$0xff]
      %v206 = vld [vmem:[%s169 + $0xe8] sm:$0xff]
      %v207 = vld [vmem:[%s169 + $0xf0] sm:$0xff]
      %v208 = vld [vmem:[%s169 + $0xf8] sm:$0xff]
      %v209 = vld [vmem:[%s169 + $0x100] sm:$0xff]
      %v210 = vld [vmem:[%s169 + $0x108] sm:$0xff]
      %v211 = vld [vmem:[%s169 + $0x110] sm:$0xff]
      %v212 = vld [vmem:[%s169 + $0x118] sm:$0xff]
      %v213 = vld [vmem:[%s169 + $0x120] sm:$0xff]
      %v214 = vld [vmem:[%s169 + $0x128] sm:$0xff]
      %v215 = vld [vmem:[%s169 + $0x130] sm:$0xff]
      %v216 = vld [vmem:[%s169 + $0x138] sm:$0xff]
      %v217 = vld [vmem:[%s169 + $0x140] sm:$0xff]
      %v218 = vld [vmem:[%s169 + $0x148] sm:$0xff]
      %v219 = vld [vmem:[%s169 + $0x150] sm:$0xff]
      %v220 = vld [vmem:[%s169 + $0x158] sm:$0xff]
      %v221 = vld [vmem:[%s169 + $0x160] sm:$0xff]
      %v222 = vld [vmem:[%s1] sm:$0xff]
      %v223 = vld [vmem:[%s1 + $0x8] sm:$0xff]
      %v224 = vld [vmem:[%s1 + $0x10] sm:$0xff]
      %v225 = vld [vmem:[%s1 + $0x18] sm:$0xff]
      %v226 = vld [vmem:[%s1 + $0x20] sm:$0xff]
      %v227 = vld [vmem:[%s1 + $0x28] sm:$0xff]
      %v228 = vld [vmem:[%s1 + $0x30] sm:$0xff]
      %v229 = vld [vmem:[%s1 + $0x38] sm:$0xff]
      %v230 = vld [vmem:[%s1 + $0x40] sm:$0xff]
      %v231 = vld [vmem:[%s1 + $0x48] sm:$0xff]
      %v232 = vld [vmem:[%s1 + $0x50] sm:$0xff]
      %v233 = vld [vmem:[%s1 + $0x58] sm:$0xff]
      %v234 = vld [vmem:[%s1 + $0x60] sm:$0xff]
      %v235 = vld [vmem:[%s1 + $0x68] sm:$0xff]
      %v236 = vld [vmem:[%s1 + $0x70] sm:$0xff]
      %v237 = vld [vmem:[%s1 + $0x78] sm:$0xff]
      %v238 = vld [vmem:[%s1 + $0x80] sm:$0xff]
      %v239 = vld [vmem:[%s1 + $0x88] sm:$0xff]
      %v240 = vld [vmem:[%s1 + $0x90] sm:$0xff]
      %v241 = vld [vmem:[%s1 + $0x98] sm:$0xff]
      %v242 = vld [vmem:[%s1 + $0xa0] sm:$0xff]
      %v243 = vld [vmem:[%s1 + $0xa8] sm:$0xff]
      %v244 = vld [vmem:[%s1 + $0xb0] sm:$0xff]
      %v245 = vld [vmem:[%s1 + $0xb8] sm:$0xff]
      %v246 = vld [vmem:[%s1 + $0xc0] sm:$0xff]
      %v247 = vld [vmem:[%s1 + $0xc8] sm:$0xff]
      %v248 = vld [vmem:[%s1 + $0xd0] sm:$0xff]
      %v249 = vld [vmem:[%s1 + $0xd8] sm:$0xff]
      %v250 = vld [vmem:[%s1 + $0xe0] sm:$0xff]
      %v251 = vld [vmem:[%s1 + $0xe8] sm:$0xff]
      %v252 = vld [vmem:[%s1 + $0xf0] sm:$0xff]
      %v253 = vld [vmem:[%s1 + $0xf8] sm:$0xff]
      %v254 = vld [vmem:[%s1 + $0x100] sm:$0xff]
      %v255 = vld [vmem:[%s1 + $0x108] sm:$0xff]
      %v256 = vld [vmem:[%s1 + $0x110] sm:$0xff]
      %v257 = vld [vmem:[%s1 + $0x118] sm:$0xff]
      %v258 = vld [vmem:[%s1 + $0x120] sm:$0xff]
      %v259 = vld [vmem:[%s1 + $0x128] sm:$0xff]
      %v260 = vld [vmem:[%s1 + $0x130] sm:$0xff]
      %v261 = vld [vmem:[%s1 + $0x138] sm:$0xff]
      %v262 = vld [vmem:[%s1 + $0x140] sm:$0xff]
      %v263 = vld [vmem:[%s1 + $0x148] sm:$0xff]
      %v264 = vld [vmem:[%s1 + $0x150] sm:$0xff]
      %v265 = vld [vmem:[%s1 + $0x158] sm:$0xff]
      %v266 = vld [vmem:[%s1 + $0x160] sm:$0xff]
      %v267 = vld [vmem:[%s1 + $0x168] sm:$0xff]
      %v268 = vld [vmem:[%s1 + $0x170] sm:$0xff]
      %v269 = vld [vmem:[%s1 + $0x178] sm:$0xff]
      %v270 = vld [vmem:[%s1 + $0x180] sm:$0xff]
      %v271 = vld [vmem:[%s1 + $0x188] sm:$0xff]
      %v272 = vld [vmem:[%s1 + $0x190] sm:$0xff]
      %v273 = vld [vmem:[%s1 + $0x198] sm:$0xff]
      %v274 = vld [vmem:[%s1 + $0x1a0] sm:$0xff]
      %v275 = vld [vmem:[%s1 + $0x1a8] sm:$0xff]
      %v276 = vld [vmem:[%s1 + $0x1b0] sm:$0xff]
      %v277 = vld [vmem:[%s1 + $0x1b8] sm:$0xff]
      %v278 = vld [vmem:[%s1 + $0x1c0] sm:$0xff]
      %v279 = vld [vmem:[%s1 + $0x1c8] sm:$0xff]
      %v280 = vld [vmem:[%s1 + $0x1d0] sm:$0xff]
      %v281 = vld [vmem:[%s1 + $0x1d8] sm:$0xff]
      %v282 = vld [vmem:[%s1 + $0x1e0] sm:$0xff]
      %v283 = vld [vmem:[%s1 + $0x1e8] sm:$0xff]
      %v284 = vld [vmem:[%s1 + $0x1f0] sm:$0xff]
      %v285 = vld [vmem:[%s1 + $0x1f8] sm:$0xff]
      %v286 = vld [vmem:[%s1 + $0x200] sm:$0xff]
      %v287 = vld [vmem:[%s1 + $0x208] sm:$0xff]
      %v288 = vld [vmem:[%s1 + $0x210] sm:$0xff]
      %v289 = vld [vmem:[%s1 + $0x218] sm:$0xff]
      %v290 = vld [vmem:[%s1 + $0x220] sm:$0xff]
      %v291 = vld [vmem:[%s1 + $0x228] sm:$0xff]
      %v292 = vld [vmem:[%s1 + $0x230] sm:$0xff]
      %v293 = vld [vmem:[%s1 + $0x238] sm:$0xff]
      %v294 = vld [vmem:[%s1 + $0x240] sm:$0xff]
      %v295 = vld [vmem:[%s1 + $0x248] sm:$0xff]
      %v296 = vld [vmem:[%s1 + $0x250] sm:$0xff]
      %v297 = vld [vmem:[%s1 + $0x258] sm:$0xff]
      %v298 = vld [vmem:[%s1 + $0x260] sm:$0xff]
      %v299 = vld [vmem:[%s1 + $0x268] sm:$0xff]
      %v300 = vld [vmem:[%s1 + $0x270] sm:$0xff]
      %v301 = vld [vmem:[%s1 + $0x278] sm:$0xff]
      %v302 = vld [vmem:[%s1 + $0x280] sm:$0xff]
      %v303 = vld [vmem:[%s1 + $0x288] sm:$0xff]
      %v304 = vld [vmem:[%s1 + $0x290] sm:$0xff]
      %v305 = vld [vmem:[%s1 + $0x298] sm:$0xff]
      %v306 = vld [vmem:[%s1 + $0x2a0] sm:$0xff]
      %v307 = vld [vmem:[%s1 + $0x2a8] sm:$0xff]
      %v308 = vld [vmem:[%s1 + $0x2b0] sm:$0xff]
      %v309 = vld [vmem:[%s1 + $0x2b8] sm:$0xff]
      %v310 = vld [vmem:[%s1 + $0x2c0] sm:$0xff]
      %v311 = vld [vmem:[%s1 + $0x2c8] sm:$0xff]
      %v312 = vld [vmem:[%s1 + $0x2d0] sm:$0xff]
      %v313 = vld [vmem:[%s1 + $0x2d8] sm:$0xff]
      %v314 = vld [vmem:[%s1 + $0x2e0] sm:$0xff]
      %v315 = vld [vmem:[%s1 + $0x2e8] sm:$0xff]
      %v316 = vld [vmem:[%s1 + $0x2f0] sm:$0xff]
      %v317 = vld [vmem:[%s1 + $0x2f8] sm:$0xff]
      %v318 = vld [vmem:[%s1 + $0x300] sm:$0xff]
      %v319 = vld [vmem:[%s1 + $0x308] sm:$0xff]
      %v320 = vld [vmem:[%s1 + $0x310] sm:$0xff]
      %v321 = vld [vmem:[%s1 + $0x318] sm:$0xff]
      %v322 = vld [vmem:[%s1 + $0x320] sm:$0xff]
      %v323 = vld [vmem:[%s1 + $0x328] sm:$0xff]
      %v324 = vld [vmem:[%s1 + $0x330] sm:$0xff]
      %v325 = vld [vmem:[%s1 + $0x338] sm:$0xff]
      %v326 = vld [vmem:[%s1 + $0x340] sm:$0xff]
      %v327 = vld [vmem:[%s1 + $0x348] sm:$0xff]
      %v328 = vld [vmem:[%s1 + $0x350] sm:$0xff]
      %v329 = vld [vmem:[%s1 + $0x358] sm:$0xff]
      %v330 = vld [vmem:[%s1 + $0x360] sm:$0xff]
      %v331 = vld [vmem:[%s1 + $0x368] sm:$0xff]
      %v332 = vld [vmem:[%s1 + $0x370] sm:$0xff]
      %v333 = vld [vmem:[%s1 + $0x378] sm:$0xff]
      %v334 = vld [vmem:[%s1 + $0x380] sm:$0xff]
      %v335 = vld [vmem:[%s1 + $0x388] sm:$0xff]
      %v336 = vld [vmem:[%s1 + $0x390] sm:$0xff]
      %v337 = vld [vmem:[%s1 + $0x398] sm:$0xff]
      %v338 = vld [vmem:[%s1 + $0x3a0] sm:$0xff]
      %v339 = vld [vmem:[%s1 + $0x3a8] sm:$0xff]
      %v340 = vld [vmem:[%s1 + $0x3b0] sm:$0xff]
      %v341 = vld [vmem:[%s1 + $0x3b8] sm:$0xff]
      %v342 = vld [vmem:[%s1 + $0x3c0] sm:$0xff]
      %v343 = vld [vmem:[%s1 + $0x3c8] sm:$0xff]
      %v344 = vld [vmem:[%s1 + $0x3d0] sm:$0xff]
      %v345 = vld [vmem:[%s1 + $0x3d8] sm:$0xff]
      %v346 = vld [vmem:[%s1 + $0x3e0] sm:$0xff]
      %v347 = vld [vmem:[%s1 + $0x3e8] sm:$0xff]
      %v348 = vld [vmem:[%s1 + $0x3f0] sm:$0xff]
      %v349 = vld [vmem:[%s1 + $0x3f8] sm:$0xff]
      %v350 = vld [vmem:[%s1 + $0x400] sm:$0xff]
      %v351 = vld [vmem:[%s1 + $0x408] sm:$0xff]
      %v352 = vld [vmem:[%s1 + $0x410] sm:$0xff]
      %v353 = vld [vmem:[%s1 + $0x418] sm:$0xff]
      %v354 = vld [vmem:[%s1 + $0x420] sm:$0xff]
      %v355 = vld [vmem:[%s1 + $0x428] sm:$0xff]
      %v356 = vld [vmem:[%s1 + $0x430] sm:$0xff]
      %v357 = vld [vmem:[%s1 + $0x438] sm:$0xff]
      %v358 = vld [vmem:[%s1 + $0x440] sm:$0xff]
      %v359 = vld [vmem:[%s1 + $0x448] sm:$0xff]
      %v360 = vld [vmem:[%s1 + $0x450] sm:$0xff]
      %v361 = vld [vmem:[%s1 + $0x458] sm:$0xff]
      %v362 = vld [vmem:[%s1 + $0x460] sm:$0xff]
      %v363 = vld [vmem:[%s1 + $0x468] sm:$0xff]
      %v364 = vld [vmem:[%s1 + $0x470] sm:$0xff]
      %v365 = vld [vmem:[%s1 + $0x478] sm:$0xff]
      %v366 = vld [vmem:[%s2] sm:$0x1]
      %v368 = vlaneseq
      %v369 = vshrl.u32 %v368, 7
      %v370 = vsub.s32 0, %v369
      %v371 = vrot.slane %v366, %v370
      %373 = vmatprep.subr.mxu0 0.0
      %374 = vmatpush1.msra.mxu0 %v222
      %375 = vmatprep.subr.mxu0 0.0
      %376 = vmatpush1.msra.mxu0 %v223
      %377 = vmatprep.subr.mxu0 0.0
      %378 = vmatpush1.msra.mxu0 %v224
      %379 = vmatprep.subr.mxu0 0.0
      %380 = vmatpush1.msra.mxu0 %v225
      %381 = vmatprep.subr.mxu0 0.0
      %382 = vmatpush1.msra.mxu0 %v226
      %383 = vmatprep.subr.mxu0 0.0
      %384 = vmatpush1.msra.mxu0 %v227
      %385 = vmatprep.subr.mxu0 0.0
      %386 = vmatpush1.msra.mxu0 %v228
      %387 = vmatprep.subr.mxu0 0.0
      %388 = vmatpush1.msra.mxu0 %v229
      %389 = vmatprep.subr.mxu0 0.0
      %390 = vmatpush1.msra.mxu0 %v230
      %391 = vmatprep.subr.mxu0 0.0
      %392 = vmatpush1.msra.mxu0 %v231
      %393 = vmatprep.subr.mxu0 0.0
      %394 = vmatpush1.msra.mxu0 %v232
      %395 = vmatprep.subr.mxu0 0.0
      %396 = vmatpush1.msra.mxu0 %v233
      %397 = vmatprep.subr.mxu0 0.0
      %398 = vmatpush1.msra.mxu0 %v234
      %399 = vmatprep.subr.mxu0 0.0
      %400 = vmatpush1.msra.mxu0 %v235
      %401 = vmatprep.subr.mxu0 0.0
      %402 = vmatpush1.msra.mxu0 %v236
      %403 = vmatprep.subr.mxu0 0.0
      %404 = vmatpush1.msra.mxu0 %v237
      %405 = vmatprep.subr.mxu0 0.0
      %406 = vmatpush1.msra.mxu0 %v238
      %407 = vmatprep.subr.mxu0 0.0
      %408 = vmatpush1.msra.mxu0 %v239
      %409 = vmatprep.subr.mxu0 0.0
      %410 = vmatpush1.msra.mxu0 %v240
      %411 = vmatprep.subr.mxu0 0.0
      %412 = vmatpush1.msra.mxu0 %v241
      %413 = vmatprep.subr.mxu0 0.0
      %414 = vmatpush1.msra.mxu0 %v242
      %415 = vmatprep.subr.mxu0 0.0
      %416 = vmatpush1.msra.mxu0 %v243
      %417 = vmatprep.subr.mxu0 0.0
      %418 = vmatpush1.msra.mxu0 %v244
      %419 = vmatprep.subr.mxu0 0.0
      %420 = vmatpush1.msra.mxu0 %v245
      %421 = vmatprep.subr.mxu0 0.0
      %422 = vmatpush1.msra.mxu0 %v246
      %423 = vmatprep.subr.mxu0 0.0
      %424 = vmatpush1.msra.mxu0 %v247
      %425 = vmatprep.subr.mxu0 0.0
      %426 = vmatpush1.msra.mxu0 %v248
      %427 = vmatprep.subr.mxu0 0.0
      %428 = vmatpush1.msra.mxu0 %v249
      %429 = vmatprep.subr.mxu0 0.0
      %430 = vmatpush1.msra.mxu0 %v250
      %431 = vmatprep.subr.mxu0 0.0
      %432 = vmatpush1.msra.mxu0 %v251
      %433 = vmatprep.subr.mxu0 0.0
      %434 = vmatpush1.msra.mxu0 %v252
      %435 = vmatprep.subr.mxu0 0.0
      %436 = vmatpush1.msra.mxu0 %v253
      %437 = vmatprep.mubr.f32.mxu0 %v178
      %438 = vmatmul.mubr.f32.gmra.mrb[0].mxu0 %v177
      %v439 = vpop.f32.mrb[0].mxu0
      %v440 = vadd.f32 %v371, %v439
      %v441 = vpop.f32.mrb[0].mxu0
      %442 = vmatprep.mubr.f32.mxu0 %v187
      %443 = vmatmul.mubr.f32.gmra.mrb[0].mxu0 %v186
      %v444 = vpop.f32.mrb[0].mxu0
      %v445 = vadd.f32 %v371, %v444
      %v446 = vpop.f32.mrb[0].mxu0
      %447 = vmatprep.mubr.f32.mxu0 %v196
      %448 = vmatmul.mubr.f32.gmra.mrb[0].mxu0 %v195
      %v449 = vpop.f32.mrb[0].mxu0
      %v450 = vadd.f32 %v371, %v449
      %v451 = vpop.f32.mrb[0].mxu0
      %452 = vmatprep.mubr.f32.mxu0 %v205
      %453 = vmatmul.mubr.f32.gmra.mrb[0].mxu0 %v204
      %v454 = vpop.f32.mrb[0].mxu0
      %v455 = vadd.f32 %v371, %v454
      %v456 = vpop.f32.mrb[0].mxu0
      %457 = vmatprep.mubr.f32.mxu0 %v214
      %458 = vmatmul.mubr.f32.gmra.mrb[0].mxu0 %v213
      %v459 = vpop.f32.mrb[0].mxu0
      %v460 = vadd.f32 %v371, %v459
      %v461 = vpop.f32.mrb[0].mxu0
      %462 = vdwg.mxu0
      %463 = vmatprep.subr.mxu0 0.0
      %464 = vmatpush1.msra.mxu0 %v254
      %465 = vmatprep.subr.mxu0 0.0
      %466 = vmatpush1.msra.mxu0 %v255
      %467 = vmatprep.subr.mxu0 0.0
      %468 = vmatpush1.msra.mxu0 %v256
      %469 = vmatprep.subr.mxu0 0.0
      %470 = vmatpush1.msra.mxu0 %v257
      %471 = vmatprep.subr.mxu0 0.0
      %472 = vmatpush1.msra.mxu0 %v258
      %473 = vmatprep.subr.mxu0 0.0
      %474 = vmatpush1.msra.mxu0 %v259
      %475 = vmatprep.subr.mxu0 0.0
      %476 = vmatpush1.msra.mxu0 %v260
      %477 = vmatprep.subr.mxu0 0.0
      %478 = vmatpush1.msra.mxu0 %v261
      %479 = vmatprep.subr.mxu0 0.0
      %480 = vmatpush1.msra.mxu0 %v262
      %481 = vmatprep.subr.mxu0 0.0
      %482 = vmatpush1.msra.mxu0 %v263
      %483 = vmatprep.subr.mxu0 0.0
      %484 = vmatpush1.msra.mxu0 %v264
      %485 = vmatprep.subr.mxu0 0.0
      %486 = vmatpush1.msra.mxu0 %v265
      %487 = vmatprep.subr.mxu0 0.0
      %488 = vmatpush1.msra.mxu0 %v266
      %489 = vmatprep.subr.mxu0 0.0
      %490 = vmatpush1.msra.mxu0 %v267
      %491 = vmatprep.subr.mxu0 0.0
      %492 = vmatpush1.msra.mxu0 %v268
      %493 = vmatprep.subr.mxu0 0.0
      %494 = vmatpush1.msra.mxu0 %v269
      %495 = vmatprep.subr.mxu0 0.0
      %496 = vmatpush1.msra.mxu0 %v270
      %497 = vmatprep.subr.mxu0 0.0
      %498 = vmatpush1.msra.mxu0 %v271
      %499 = vmatprep.subr.mxu0 0.0
      %500 = vmatpush1.msra.mxu0 %v272
      %501 = vmatprep.subr.mxu0 0.0
      %502 = vmatpush1.msra.mxu0 %v273
      %503 = vmatprep.subr.mxu0 0.0
      %504 = vmatpush1.msra.mxu0 %v274
      %505 = vmatprep.subr.mxu0 0.0
      %506 = vmatpush1.msra.mxu0 %v275
      %507 = vmatprep.subr.mxu0 0.0
      %508 = vmatpush1.msra.mxu0 %v276
      %509 = vmatprep.subr.mxu0 0.0
      %510 = vmatpush1.msra.mxu0 %v277
      %511 = vmatprep.subr.mxu0 0.0
      %512 = vmatpush1.msra.mxu0 %v278
      %513 = vmatprep.subr.mxu0 0.0
      %514 = vmatpush1.msra.mxu0 %v279
      %515 = vmatprep.subr.mxu0 0.0
      %516 = vmatpush1.msra.mxu0 %v280
      %517 = vmatprep.subr.mxu0 0.0
      %518 = vmatpush1.msra.mxu0 %v281
      %519 = vmatprep.subr.mxu0 0.0
      %520 = vmatpush1.msra.mxu0 %v282
      %521 = vmatprep.subr.mxu0 0.0
      %522 = vmatpush1.msra.mxu0 %v283
      %523 = vmatprep.subr.mxu0 0.0
      %524 = vmatpush1.msra.mxu0 %v284
      %525 = vmatprep.subr.mxu0 0.0
      %526 = vmatpush1.msra.mxu0 %v285
      %527 = vmatprep.mubr.f32.mxu0 %v180
      %528 = vmatmul.mubr.f32.gmra.mrb[0].mxu0 %v179
      %v529 = vpop.f32.mrb[0].mxu0
      %v530 = vadd.f32 %v440, %v529
      %v531 = vpop.f32.mrb[0].mxu0
      %532 = vmatprep.mubr.f32.mxu0 %v189
      %533 = vmatmul.mubr.f32.gmra.mrb[0].mxu0 %v188
      %v534 = vpop.f32.mrb[0].mxu0
      %v535 = vadd.f32 %v445, %v534
      %v536 = vpop.f32.mrb[0].mxu0
      %537 = vmatprep.mubr.f32.mxu0 %v198
      %538 = vmatmul.mubr.f32.gmra.mrb[0].mxu0 %v197
      %v539 = vpop.f32.mrb[0].mxu0
      %v540 = vadd.f32 %v450, %v539
      %v541 = vpop.f32.mrb[0].mxu0
      %542 = vmatprep.mubr.f32.mxu0 %v207
      %543 = vmatmul.mubr.f32.gmra.mrb[0].mxu0 %v206
      %v544 = vpop.f32.mrb[0].mxu0
      %v545 = vadd.f32 %v455, %v544
      %v546 = vpop.f32.mrb[0].mxu0
      %547 = vmatprep.mubr.f32.mxu0 %v216
      %548 = vmatmul.mubr.f32.gmra.mrb[0].mxu0 %v215
      %v549 = vpop.f32.mrb[0].mxu0
      %v550 = vadd.f32 %v460, %v549
      %v551 = vpop.f32.mrb[0].mxu0
      %552 = vdwg.mxu0
      %553 = vmatprep.subr.mxu0 0.0
      %554 = vmatpush1.msra.mxu0 %v286
      %555 = vmatprep.subr.mxu0 0.0
      %556 = vmatpush1.msra.mxu0 %v287
      %557 = vmatprep.subr.mxu0 0.0
      %558 = vmatpush1.msra.mxu0 %v288
      %559 = vmatprep.subr.mxu0 0.0
      %560 = vmatpush1.msra.mxu0 %v289
      %561 = vmatprep.subr.mxu0 0.0
      %562 = vmatpush1.msra.mxu0 %v290
      %563 = vmatprep.subr.mxu0 0.0
      %564 = vmatpush1.msra.mxu0 %v291
      %565 = vmatprep.subr.mxu0 0.0
      %566 = vmatpush1.msra.mxu0 %v292
      %567 = vmatprep.subr.mxu0 0.0
      %568 = vmatpush1.msra.mxu0 %v293
      %569 = vmatprep.subr.mxu0 0.0
      %570 = vmatpush1.msra.mxu0 %v294
      %571 = vmatprep.subr.mxu0 0.0
      %572 = vmatpush1.msra.mxu0 %v295
      %573 = vmatprep.subr.mxu0 0.0
      %574 = vmatpush1.msra.mxu0 %v296
      %575 = vmatprep.subr.mxu0 0.0
      %576 = vmatpush1.msra.mxu0 %v297
      %577 = vmatprep.subr.mxu0 0.0
      %578 = vmatpush1.msra.mxu0 %v298
      %579 = vmatprep.subr.mxu0 0.0
      %580 = vmatpush1.msra.mxu0 %v299
      %581 = vmatprep.subr.mxu0 0.0
      %582 = vmatpush1.msra.mxu0 %v300
      %583 = vmatprep.subr.mxu0 0.0
      %584 = vmatpush1.msra.mxu0 %v301
      %585 = vmatprep.subr.mxu0 0.0
      %586 = vmatpush1.msra.mxu0 %v302
      %587 = vmatprep.subr.mxu0 0.0
      %588 = vmatpush1.msra.mxu0 %v303
      %589 = vmatprep.subr.mxu0 0.0
      %590 = vmatpush1.msra.mxu0 %v304
      %591 = vmatprep.subr.mxu0 0.0
      %592 = vmatpush1.msra.mxu0 %v305
      %593 = vmatprep.subr.mxu0 0.0
      %594 = vmatpush1.msra.mxu0 %v306
      %595 = vmatprep.subr.mxu0 0.0
      %596 = vmatpush1.msra.mxu0 %v307
      %597 = vmatprep.subr.mxu0 0.0
      %598 = vmatpush1.msra.mxu0 %v308
      %599 = vmatprep.subr.mxu0 0.0
      %600 = vmatpush1.msra.mxu0 %v309
      %601 = vmatprep.subr.mxu0 0.0
      %602 = vmatpush1.msra.mxu0 %v310
      %603 = vmatprep.subr.mxu0 0.0
      %604 = vmatpush1.msra.mxu0 %v311
      %605 = vmatprep.subr.mxu0 0.0
      %606 = vmatpush1.msra.mxu0 %v312
      %607 = vmatprep.subr.mxu0 0.0
      %608 = vmatpush1.msra.mxu0 %v313
      %609 = vmatprep.subr.mxu0 0.0
      %610 = vmatpush1.msra.mxu0 %v314
      %611 = vmatprep.subr.mxu0 0.0
      %612 = vmatpush1.msra.mxu0 %v315
      %613 = vmatprep.subr.mxu0 0.0
      %614 = vmatpush1.msra.mxu0 %v316
      %615 = vmatprep.subr.mxu0 0.0
      %616 = vmatpush1.msra.mxu0 %v317
      %617 = vmatprep.mubr.f32.mxu0 %v182
      %618 = vmatmul.mubr.f32.gmra.mrb[0].mxu0 %v181
      %v619 = vpop.f32.mrb[0].mxu0
      %v620 = vadd.f32 %v530, %v619
      %v621 = vpop.f32.mrb[0].mxu0
      %622 = vmatprep.mubr.f32.mxu0 %v191
      %623 = vmatmul.mubr.f32.gmra.mrb[0].mxu0 %v190
      %v624 = vpop.f32.mrb[0].mxu0
      %v625 = vadd.f32 %v535, %v624
      %v626 = vpop.f32.mrb[0].mxu0
      %627 = vmatprep.mubr.f32.mxu0 %v200
      %628 = vmatmul.mubr.f32.gmra.mrb[0].mxu0 %v199
      %v629 = vpop.f32.mrb[0].mxu0
      %v630 = vadd.f32 %v540, %v629
      %v631 = vpop.f32.mrb[0].mxu0
      %632 = vmatprep.mubr.f32.mxu0 %v209
      %633 = vmatmul.mubr.f32.gmra.mrb[0].mxu0 %v208
      %v634 = vpop.f32.mrb[0].mxu0
      %v635 = vadd.f32 %v545, %v634
      %v636 = vpop.f32.mrb[0].mxu0
      %637 = vmatprep.mubr.f32.mxu0 %v218
      %638 = vmatmul.mubr.f32.gmra.mrb[0].mxu0 %v217
      %v639 = vpop.f32.mrb[0].mxu0
      %v640 = vadd.f32 %v550, %v639
      %v641 = vpop.f32.mrb[0].mxu0
      %642 = vdwg.mxu0
      %643 = vmatprep.subr.mxu0 0.0
      %644 = vmatpush1.msra.mxu0 %v318
      %645 = vmatprep.subr.mxu0 0.0
      %646 = vmatpush1.msra.mxu0 %v319
      %647 = vmatprep.subr.mxu0 0.0
      %648 = vmatpush1.msra.mxu0 %v320
      %649 = vmatprep.subr.mxu0 0.0
      %650 = vmatpush1.msra.mxu0 %v321
      %651 = vmatprep.subr.mxu0 0.0
      %652 = vmatpush1.msra.mxu0 %v322
      %653 = vmatprep.subr.mxu0 0.0
      %654 = vmatpush1.msra.mxu0 %v323
      %655 = vmatprep.subr.mxu0 0.0
      %656 = vmatpush1.msra.mxu0 %v324
      %657 = vmatprep.subr.mxu0 0.0
      %658 = vmatpush1.msra.mxu0 %v325
      %659 = vmatprep.subr.mxu0 0.0
      %660 = vmatpush1.msra.mxu0 %v326
      %661 = vmatprep.subr.mxu0 0.0
      %662 = vmatpush1.msra.mxu0 %v327
      %663 = vmatprep.subr.mxu0 0.0
      %664 = vmatpush1.msra.mxu0 %v328
      %665 = vmatprep.subr.mxu0 0.0
      %666 = vmatpush1.msra.mxu0 %v329
      %667 = vmatprep.subr.mxu0 0.0
      %668 = vmatpush1.msra.mxu0 %v330
      %669 = vmatprep.subr.mxu0 0.0
      %670 = vmatpush1.msra.mxu0 %v331
      %671 = vmatprep.subr.mxu0 0.0
      %672 = vmatpush1.msra.mxu0 %v332
      %673 = vmatprep.subr.mxu0 0.0
      %674 = vmatpush1.msra.mxu0 %v333
      %675 = vmatprep.subr.mxu0 0.0
      %676 = vmatpush1.msra.mxu0 %v334
      %677 = vmatprep.subr.mxu0 0.0
      %678 = vmatpush1.msra.mxu0 %v335
      %679 = vmatprep.subr.mxu0 0.0
      %680 = vmatpush1.msra.mxu0 %v336
      %681 = vmatprep.subr.mxu0 0.0
      %682 = vmatpush1.msra.mxu0 %v337
      %683 = vmatprep.subr.mxu0 0.0
      %684 = vmatpush1.msra.mxu0 %v338
      %685 = vmatprep.subr.mxu0 0.0
      %686 = vmatpush1.msra.mxu0 %v339
      %687 = vmatprep.subr.mxu0 0.0
      %688 = vmatpush1.msra.mxu0 %v340
      %689 = vmatprep.subr.mxu0 0.0
      %690 = vmatpush1.msra.mxu0 %v341
      %691 = vmatprep.subr.mxu0 0.0
      %692 = vmatpush1.msra.mxu0 %v342
      %693 = vmatprep.subr.mxu0 0.0
      %694 = vmatpush1.msra.mxu0 %v343
      %695 = vmatprep.subr.mxu0 0.0
      %696 = vmatpush1.msra.mxu0 %v344
      %697 = vmatprep.subr.mxu0 0.0
      %698 = vmatpush1.msra.mxu0 %v345
      %699 = vmatprep.subr.mxu0 0.0
      %700 = vmatpush1.msra.mxu0 %v346
      %701 = vmatprep.subr.mxu0 0.0
      %702 = vmatpush1.msra.mxu0 %v347
      %703 = vmatprep.subr.mxu0 0.0
      %704 = vmatpush1.msra.mxu0 %v348
      %705 = vmatprep.subr.mxu0 0.0
      %706 = vmatpush1.msra.mxu0 %v349
      %707 = vmatprep.mubr.f32.mxu0 %v184
      %708 = vmatmul.mubr.f32.gmra.mrb[0].mxu0 %v183
      %v709 = vpop.f32.mrb[0].mxu0
      %v710 = vadd.f32 %v620, %v709
      %v711 = vpop.f32.mrb[0].mxu0
      %712 = vmatprep.mubr.f32.mxu0 %v193
      %713 = vmatmul.mubr.f32.gmra.mrb[0].mxu0 %v192
      %v714 = vpop.f32.mrb[0].mxu0
      %v715 = vadd.f32 %v625, %v714
      %v716 = vpop.f32.mrb[0].mxu0
      %717 = vmatprep.mubr.f32.mxu0 %v202
      %718 = vmatmul.mubr.f32.gmra.mrb[0].mxu0 %v201
      %v719 = vpop.f32.mrb[0].mxu0
      %v720 = vadd.f32 %v630, %v719
      %v721 = vpop.f32.mrb[0].mxu0
      %722 = vmatprep.mubr.f32.mxu0 %v211
      %723 = vmatmul.mubr.f32.gmra.mrb[0].mxu0 %v210
      %v724 = vpop.f32.mrb[0].mxu0
      %v725 = vadd.f32 %v635, %v724
      %v726 = vpop.f32.mrb[0].mxu0
      %727 = vmatprep.mubr.f32.mxu0 %v220
      %728 = vmatmul.mubr.f32.gmra.mrb[0].mxu0 %v219
      %v729 = vpop.f32.mrb[0].mxu0
      %v730 = vadd.f32 %v640, %v729
      %v731 = vpop.f32.mrb[0].mxu0
      %732 = vdwg.mxu0
      %733 = vmatprep.subr.mxu0 0.0
      %734 = vmatpush1.msra.mxu0 %v350
      %735 = vmatprep.subr.mxu0 0.0
      %736 = vmatpush1.msra.mxu0 %v351
      %737 = vmatprep.subr.mxu0 0.0
      %738 = vmatpush1.msra.mxu0 %v352
      %739 = vmatprep.subr.mxu0 0.0
      %740 = vmatpush1.msra.mxu0 %v353
      %741 = vmatprep.subr.mxu0 0.0
      %742 = vmatpush1.msra.mxu0 %v354
      %743 = vmatprep.subr.mxu0 0.0
      %744 = vmatpush1.msra.mxu0 %v355
      %745 = vmatprep.subr.mxu0 0.0
      %746 = vmatpush1.msra.mxu0 %v356
      %747 = vmatprep.subr.mxu0 0.0
      %748 = vmatpush1.msra.mxu0 %v357
      %749 = vmatprep.subr.mxu0 0.0
      %750 = vmatpush1.msra.mxu0 %v358
      %751 = vmatprep.subr.mxu0 0.0
      %752 = vmatpush1.msra.mxu0 %v359
      %753 = vmatprep.subr.mxu0 0.0
      %754 = vmatpush1.msra.mxu0 %v360
      %755 = vmatprep.subr.mxu0 0.0
      %756 = vmatpush1.msra.mxu0 %v361
      %757 = vmatprep.subr.mxu0 0.0
      %758 = vmatpush1.msra.mxu0 %v362
      %759 = vmatprep.subr.mxu0 0.0
      %760 = vmatpush1.msra.mxu0 %v363
      %761 = vmatprep.subr.mxu0 0.0
      %762 = vmatpush1.msra.mxu0 %v364
      %763 = vmatprep.subr.mxu0 0.0
      %764 = vmatpush1.msra.mxu0 %v365
      %765 = vmatprep.subr.mxu0 0.0
      %766 = vmatpush1.msra.mxu0 0.0
      %767 = vmatprep.subr.mxu0 0.0
      %768 = vmatpush1.msra.mxu0 0.0
      %769 = vmatprep.subr.mxu0 0.0
      %770 = vmatpush1.msra.mxu0 0.0
      %771 = vmatprep.subr.mxu0 0.0
      %772 = vmatpush1.msra.mxu0 0.0
      %773 = vmatprep.subr.mxu0 0.0
      %774 = vmatpush1.msra.mxu0 0.0
      %775 = vmatprep.subr.mxu0 0.0
      %776 = vmatpush1.msra.mxu0 0.0
      %777 = vmatprep.subr.mxu0 0.0
      %778 = vmatpush1.msra.mxu0 0.0
      %779 = vmatprep.subr.mxu0 0.0
      %780 = vmatpush1.msra.mxu0 0.0
      %781 = vmatprep.subr.mxu0 0.0
      %782 = vmatpush1.msra.mxu0 0.0
      %783 = vmatprep.subr.mxu0 0.0
      %784 = vmatpush1.msra.mxu0 0.0
      %785 = vmatprep.subr.mxu0 0.0
      %786 = vmatpush1.msra.mxu0 0.0
      %787 = vmatprep.subr.mxu0 0.0
      %788 = vmatpush1.msra.mxu0 0.0
      %789 = vmatprep.subr.mxu0 0.0
      %790 = vmatpush1.msra.mxu0 0.0
      %791 = vmatprep.subr.mxu0 0.0
      %792 = vmatpush1.msra.mxu0 0.0
      %793 = vmatprep.subr.mxu0 0.0
      %794 = vmatpush1.msra.mxu0 0.0
      %795 = vmatprep.subr.mxu0 0.0
      %796 = vmatpush1.msra.mxu0 0.0
      %797 = vmatprep.mubr.f32.mxu0 0.0
      %798 = vmatmul.mubr.f32.gmra.mrb[0].mxu0 %v185
      %v799 = vpop.f32.mrb[0].mxu0
      %v800 = vadd.f32 %v710, %v799
      %v801 = vpop.f32.mrb[0].mxu0
      %802 = vmatprep.mubr.f32.mxu0 0.0
      %803 = vmatmul.mubr.f32.gmra.mrb[0].mxu0 %v194
      %v804 = vpop.f32.mrb[0].mxu0
      %v805 = vadd.f32 %v715, %v804
      %v806 = vpop.f32.mrb[0].mxu0
      %807 = vmatprep.mubr.f32.mxu0 0.0
      %808 = vmatmul.mubr.f32.gmra.mrb[0].mxu0 %v203
      %v809 = vpop.f32.mrb[0].mxu0
      %v810 = vadd.f32 %v720, %v809
      %v811 = vpop.f32.mrb[0].mxu0
      %812 = vmatprep.mubr.f32.mxu0 0.0
      %813 = vmatmul.mubr.f32.gmra.mrb[0].mxu0 %v212
      %v814 = vpop.f32.mrb[0].mxu0
      %v815 = vadd.f32 %v725, %v814
      %v816 = vpop.f32.mrb[0].mxu0
      %817 = vmatprep.mubr.f32.mxu0 0.0
      %818 = vmatmul.mubr.f32.gmra.mrb[0].mxu0 %v221
      %v819 = vpop.f32.mrb[0].mxu0
      %v820 = vadd.f32 %v730, %v819
      %v821 = vpop.f32.mrb[0].mxu0
      %822 = vdwg.mxu0
      %v823 = vmax.f32 %v800, 0.0
      %v824 = vmax.f32 %v805, 0.0
      %v825 = vmax.f32 %v810, 0.0
      %v826 = vmax.f32 %v815, 0.0
      %v827 = vmax.f32 %v820, 0.0
      %vm828 = vcmask 523264
      %829 = vst.msk [vmem:[%s175] sm:$0xff] %vm828, %v823
      %830 = vst.msk [vmem:[%s175 + $0x8] sm:$0xff] %vm828, %v824
      %831 = vst.msk [vmem:[%s175 + $0x10] sm:$0xff] %vm828, %v825
      %832 = vst.msk [vmem:[%s175 + $0x18] sm:$0xff] %vm828, %v826
      %833 = vst.msk [vmem:[%s175 + $0x20] sm:$0xff] %vm828, %v827
      %s834 = smul.u32 5, %s14
      %p835 = scmp.lt.s32.totalorder %s834, 24
      %s836 = scalar_select %p835, %s834, 24
      %s837 = smul.addr %s836, 8
      %s838 = scalar_lea.vmem %s3, %s837
      // Predicated region
      $region33: #{encoder_like_dqn_forward.6} parent=31 // pred_check
        %p839 = pneg %p100
      $region34: #{encoder_like_dqn_forward.6} parent=31 // pred_check_branch
        %841 = sbr.rel (%p839) target = $region36
      $region35: #{encoder_like_dqn_forward.6} parent=31 // pred_region
        %s842 = smul.u32 5, %s14
      $region36: #{encoder_like_dqn_forward.6} parent=31 // pred_fallthru
        _
    $region32: #{encoder_like_dqn_forward.6} parent=5 // pred_fallthru
      _
    %p843 = scmp.le.s32.totalorder 2, %s9
    // Predicated region
    $region37: #{encoder_like_dqn_forward.6} parent=5 // pred_check
      %p844 = pneg %p843
    $region38: #{encoder_like_dqn_forward.6} parent=5 // pred_check_branch
      %846 = sbr.rel (%p844) target = $region40
    $region39: #{encoder_like_dqn_forward.6} parent=5 // pred_region
      %s847 = ssub.s32 %s9, 2
      // Predicated region
      $region41: #{encoder_like_dqn_forward.6} parent=39 // pred_check
        %p848 = pneg %p106
      $region42: #{encoder_like_dqn_forward.6} parent=39 // pred_check_branch
        %850 = sbr.rel (%p848) target = $region44
      $region43: #{encoder_like_dqn_forward.6} parent=39 // pred_region
        %s851 = smul.u32 5, %s15
        %p852 = scmp.lt.s32.totalorder %s851, 24
        %s853 = scalar_select %p852, %s851, 24
        %s854 = smul.addr %s853, 8
        %s855 = scalar_lea.vmem %s3, %s854
      $region44: #{encoder_like_dqn_forward.6} parent=39 // pred_fallthru
        _
    $region40: #{encoder_like_dqn_forward.6} parent=5 // pred_fallthru
      _
  $region6: #{encoder_like_dqn_forward.6} parent=0 // loop_footer
    %s13 = sadd.s32 1, %s9
  $region7: #{encoder_like_dqn_forward.6} parent=0 // loop_footer_branch
    %8 = sbr.rel target = $region3
  $region8: #{encoder_like_dqn_forward.6} parent=0 // loop_exit
    _

// kernel: encoder_like_dqn_forward.7
$region0: #{encoder_like_dqn_forward.7}
  #allocation0 [shape = 'u32[]', space=smem, size = 0x4, offset = 0x4, fixed_abs, tag = 'smem constant byte address 0x4 - core index']
  #allocation1 [shape = 'u32[144,128]{1,0:T(1,128)}', space=vmem, size = 0x12000, scoped, tag = 'internal scratch']
  #allocation2 [shape = 'f32[2,512]{1,0:T(2,128)}', space=vmem, size = 0x1000, scoped, tag = 'scratch operand']
  %s0 = inlined_call_operand.vmem [shape: f32[2,6400], index: 0, kind: input, shape index: {}]
  %s1 = inlined_call_operand.vmem [shape: bf16[6400,512], index: 1, kind: input, shape index: {}]
  %s2 = inlined_call_operand.vmem [shape: f32[1,512], index: 2, kind: input, shape index: {}]
  %s3 = inlined_call_operand.vmem [shape: f32[512,64], index: 3, kind: input, shape index: {}]
  %s4 = inlined_call_operand.vmem [shape: f32[1,64], index: 4, kind: input, shape index: {}]
  %s5 = inlined_call_operand.hbm [shape: f32[2,64], index: 5, kind: output, shape index: {}]
  %s6 = sld [smem:[#allocation0]]
  $region61: #{encoder_like_dqn_forward.7} parent=0
    _
  %s8 = ssub.s32 1, %s6
  %s9 = scalar_select 0, %s8, %s6
  $region1: #{encoder_like_dqn_forward.7} parent=0
    #allocation3 [shape = 'u8[1024]{0}', space=vmem, size = 0x400, scoped, tag = 'output window, operand 0, single buffered']
    #allocation4 [shape = 's32[2]{0}', space=sflag, size = 0x8, scoped, tag = 'scoped memory for encoder_like_dqn_forward.7']
    %10 = vsyncpa [#allocation4], 0
    loop: start=0, step=1, limit=4
    $region2: #{encoder_like_dqn_forward.7} parent=1 // loop_pre_header
      _
    $region3: #{encoder_like_dqn_forward.7} parent=1 // loop_header
      %s12 = sphi 0, %s16
      %p13 = scmp.ge.s32.totalorder %s12, 4
      %s22 = sphi 0, %s24
      %s25 = sphi 0, %s22
      %s26 = sphi 0, %s25
      %s42 = sphi 0, %s26
      %s48 = sphi 0, %s50
      %s51 = sphi 0, %s48
      %s52 = sphi 0, %s51
      %s68 = sphi 0, %s52
      %s72 = sphi 0, %s72
      %s74 = sphi 0, %s72
      %s75 = sphi 0, %s74
      %s89 = sphi 0, %s75
      %s93 = sphi 0, %s93
      %s95 = sphi 0, %s93
      %s96 = sphi 0, %s95
      %s110 = sphi 0, %s96
      %s114 = sphi 0, %s114
      %s116 = sphi 0, %s114
      %s117 = sphi 0, %s116
      %s131 = sphi 0, %s117
      %s135 = sphi 0, %s135
      %s137 = sphi 0, %s135
      %s138 = sphi 0, %s137
      %s152 = sphi 0, %s138
    $region4: #{encoder_like_dqn_forward.7} parent=1 // loop_header_branch
      %15 = sbr.rel (%p13) target = $region8
    $region5: #{encoder_like_dqn_forward.7} parent=1 // loop_body
      %s17 = ssub.s32 %s12, 1
      %s18 = ssub.s32 %s12, 2
      %s19 = sadd.s32 %s12, 1
      %s20 = ssub.s32 %s12, %s19
      %p21 = scmp.eq.s32.totalorder %s20, 0
      %s23 = sadd.s32 %s22, 1
      %s24 = scalar_select %p21, %s22, %s23
      %p27 = pneg %p21
      %p28 = scmp.eq.s32.totalorder %s12, 1
      %p29 = por %p27, %p28
      %p30 = scmp.ne.s32.totalorder %s22, %s25
      %p31 = scmp.eq.s32.totalorder %s12, 0
      %p32 = por %p30, %p31
      %p33 = scmp.ne.s32.totalorder %s22, %s25
      %p34 = scmp.eq.s32.totalorder %s17, 1
      %p35 = por %p33, %p34
      %p36 = scmp.ne.s32.totalorder %s25, %s26
      %p37 = scmp.eq.s32.totalorder %s17, 0
      %p38 = por %p36, %p37
      %p39 = scmp.ne.s32.totalorder %s25, %s26
      %p40 = scmp.eq.s32.totalorder %s18, 1
      %p41 = por %p39, %p40
      %p43 = scmp.ne.s32.totalorder %s26, %s42
      %p44 = scmp.eq.s32.totalorder %s18, 0
      %p45 = por %p43, %p44
      %s46 = ssub.s32 %s12, %s19
      %p47 = scmp.eq.s32.totalorder %s46, 0
      %s49 = sadd.s32 %s48, 1
      %s50 = scalar_select %p47, %s48, %s49
      %p53 = pneg %p47
      %p54 = scmp.eq.s32.totalorder %s12, 1
      %p55 = por %p53, %p54
      %p56 = scmp.ne.s32.totalorder %s48, %s51
      %p57 = scmp.eq.s32.totalorder %s12, 0
      %p58 = por %p56, %p57
      %p59 = scmp.ne.s32.totalorder %s48, %s51
      %p60 = scmp.eq.s32.totalorder %s17, 1
      %p61 = por %p59, %p60
      %p62 = scmp.ne.s32.totalorder %s51, %s52
      %p63 = scmp.eq.s32.totalorder %s17, 0
      %p64 = por %p62, %p63
      %p65 = scmp.ne.s32.totalorder %s51, %s52
      %p66 = scmp.eq.s32.totalorder %s18, 1
      %p67 = por %p65, %p66
      %p69 = scmp.ne.s32.totalorder %s52, %s68
      %p70 = scmp.eq.s32.totalorder %s18, 0
      %p71 = por %p69, %p70
      %s73 = sadd.s32 %s72, 1
      %p76 = scmp.eq.s32.totalorder %s12, 1
      %p77 = scmp.ne.s32.totalorder %s72, %s74
      %p78 = scmp.eq.s32.totalorder %s12, 0
      %p79 = por %p77, %p78
      %p80 = scmp.ne.s32.totalorder %s72, %s74
      %p81 = scmp.eq.s32.totalorder %s17, 1
      %p82 = por %p80, %p81
      %p83 = scmp.ne.s32.totalorder %s74, %s75
      %p84 = scmp.eq.s32.totalorder %s17, 0
      %p85 = por %p83, %p84
      %p86 = scmp.ne.s32.totalorder %s74, %s75
      %p87 = scmp.eq.s32.totalorder %s18, 1
      %p88 = por %p86, %p87
      %p90 = scmp.ne.s32.totalorder %s75, %s89
      %p91 = scmp.eq.s32.totalorder %s18, 0
      %p92 = por %p90, %p91
      %s94 = sadd.s32 %s93, 1
      %p97 = scmp.eq.s32.totalorder %s12, 1
      %p98 = scmp.ne.s32.totalorder %s93, %s95
      %p99 = scmp.eq.s32.totalorder %s12, 0
      %p100 = por %p98, %p99
      %p101 = scmp.ne.s32.totalorder %s93, %s95
      %p102 = scmp.eq.s32.totalorder %s17, 1
      %p103 = por %p101, %p102
      %p104 = scmp.ne.s32.totalorder %s95, %s96
      %p105 = scmp.eq.s32.totalorder %s17, 0
      %p106 = por %p104, %p105
      %p107 = scmp.ne.s32.totalorder %s95, %s96
      %p108 = scmp.eq.s32.totalorder %s18, 1
      %p109 = por %p107, %p108
      %p111 = scmp.ne.s32.totalorder %s96, %s110
      %p112 = scmp.eq.s32.totalorder %s18, 0
      %p113 = por %p111, %p112
      %s115 = sadd.s32 %s114, 1
      %p118 = scmp.eq.s32.totalorder %s12, 1
      %p119 = scmp.ne.s32.totalorder %s114, %s116
      %p120 = scmp.eq.s32.totalorder %s12, 0
      %p121 = por %p119, %p120
      %p122 = scmp.ne.s32.totalorder %s114, %s116
      %p123 = scmp.eq.s32.totalorder %s17, 1
      %p124 = por %p122, %p123
      %p125 = scmp.ne.s32.totalorder %s116, %s117
      %p126 = scmp.eq.s32.totalorder %s17, 0
      %p127 = por %p125, %p126
      %p128 = scmp.ne.s32.totalorder %s116, %s117
      %p129 = scmp.eq.s32.totalorder %s18, 1
      %p130 = por %p128, %p129
      %p132 = scmp.ne.s32.totalorder %s117, %s131
      %p133 = scmp.eq.s32.totalorder %s18, 0
      %p134 = por %p132, %p133
      %s136 = sadd.s32 %s135, 1
      %p139 = scmp.eq.s32.totalorder %s12, 1
      %p140 = scmp.ne.s32.totalorder %s135, %s137
      %p141 = scmp.eq.s32.totalorder %s12, 0
      %p142 = por %p140, %p141
      %p143 = scmp.ne.s32.totalorder %s135, %s137
      %p144 = scmp.eq.s32.totalorder %s17, 1
      %p145 = por %p143, %p144
      %p146 = scmp.ne.s32.totalorder %s137, %s138
      %p147 = scmp.eq.s32.totalorder %s17, 0
      %p148 = por %p146, %p147
      %p149 = scmp.ne.s32.totalorder %s137, %s138
      %p150 = scmp.eq.s32.totalorder %s18, 1
      %p151 = por %p149, %p150
      %p153 = scmp.ne.s32.totalorder %s138, %s152
      %p154 = scmp.eq.s32.totalorder %s18, 0
      %p155 = por %p153, %p154
      %p156 = scmp.le.s32.totalorder 1, %s12
      %p157 = scmp.lt.s32.totalorder %s12, 3
      %p158 = pnand %p156, %p157
      %p159 = pneg %p158
      // Predicated region
      $region9: #{encoder_like_dqn_forward.7} parent=5 // pred_check
        _
      $region10: #{encoder_like_dqn_forward.7} parent=5 // pred_check_branch
        %161 = sbr.rel (%p158) target = $region12
      $region11: #{encoder_like_dqn_forward.7} parent=5 // pred_region
        %s162 = ssub.s32 %s12, 1
        // Predicated region
        $region13: #{encoder_like_dqn_forward.7} parent=11 // pred_check
          %p163 = pneg %p85
        $region14: #{encoder_like_dqn_forward.7} parent=11 // pred_check_branch
          %165 = sbr.rel (%p163) target = $region16
        $region15: #{encoder_like_dqn_forward.7} parent=11 // pred_region
          _
        $region16: #{encoder_like_dqn_forward.7} parent=11 // pred_fallthru
          _
        // Predicated region
        $region17: #{encoder_like_dqn_forward.7} parent=11 // pred_check
          %p166 = pneg %p106
        $region18: #{encoder_like_dqn_forward.7} parent=11 // pred_check_branch
          %168 = sbr.rel (%p166) target = $region20
        $region19: #{encoder_like_dqn_forward.7} parent=11 // pred_region
          _
        $region20: #{encoder_like_dqn_forward.7} parent=11 // pred_fallthru
          _
        // Predicated region
        $region21: #{encoder_like_dqn_forward.7} parent=11 // pred_check
          %p169 = pneg %p127
        $region22: #{encoder_like_dqn_forward.7} parent=11 // pred_check_branch
          %171 = sbr.rel (%p169) target = $region24
        $region23: #{encoder_like_dqn_forward.7} parent=11 // pred_region
          _
        $region24: #{encoder_like_dqn_forward.7} parent=11 // pred_fallthru
          _
      $region12: #{encoder_like_dqn_forward.7} parent=5 // pred_fallthru
        _
      %p172 = scmp.lt.s32.totalorder %s12, 2
      // Predicated region
      $region25: #{encoder_like_dqn_forward.7} parent=5 // pred_check
        %p173 = pneg %p172
      $region26: #{encoder_like_dqn_forward.7} parent=5 // pred_check_branch
        %175 = sbr.rel (%p173) target = $region28
      $region27: #{encoder_like_dqn_forward.7} parent=5 // pred_region
        // Predicated region
        $region29: #{encoder_like_dqn_forward.7} parent=27 // pred_check
          %p176 = pneg %p32
        $region30: #{encoder_like_dqn_forward.7} parent=27 // pred_check_branch
          %178 = sbr.rel (%p176) target = $region32
        $region31: #{encoder_like_dqn_forward.7} parent=27 // pred_region
          %s179 = smul.u32 25, %s12
          %p180 = scmp.lt.s32.totalorder %s179, 49
          %s181 = scalar_select %p180, %s179, 49
          %s182 = smul.addr %s181, 2
          %s183 = scalar_lea.vmem %s0, %s182
          %s184 = smul.u32 25, %s12
        $region32: #{encoder_like_dqn_forward.7} parent=27 // pred_fallthru
          _
        // Predicated region
        $region33: #{encoder_like_dqn_forward.7} parent=27 // pred_check
          %p185 = pneg %p58
        $region34: #{encoder_like_dqn_forward.7} parent=27 // pred_check_branch
          %187 = sbr.rel (%p185) target = $region36
        $region35: #{encoder_like_dqn_forward.7} parent=27 // pred_region
          %s188 = smul.u32 400, %s12
          %p189 = scmp.lt.s32.totalorder %s188, 799
          %s190 = scalar_select %p189, %s188, 799
          %s191 = smul.addr %s190, 4
          %s192 = smul.addr %s191, 4
          %s193 = scalar_lea.vmem %s1, %s192
          %s194 = smul.u32 400, %s12
        $region36: #{encoder_like_dqn_forward.7} parent=27 // pred_fallthru
          _
      $region28: #{encoder_like_dqn_forward.7} parent=5 // pred_fallthru
        _
      %p195 = scmp.le.s32.totalorder 1, %s12
      %p196 = scmp.lt.s32.totalorder %s12, 3
      %p197 = pnand %p195, %p196
      %p198 = pneg %p197
      // Predicated region
      $region37: #{encoder_like_dqn_forward.7} parent=5 // pred_check
        _
      $region38: #{encoder_like_dqn_forward.7} parent=5 // pred_check_branch
        %200 = sbr.rel (%p197) target = $region40
      $region39: #{encoder_like_dqn_forward.7} parent=5 // pred_region
        %s201 = ssub.s32 %s12, 1
        %s202 = smul.u32 25, %s17
        %p203 = scmp.lt.s32.totalorder %s202, 49
        %s204 = scalar_select %p203, %s202, 49
        %s205 = smul.addr %s204, 2
        %s206 = scalar_lea.vmem %s0, %s205
        %p207 = pneg %p38
        %p208 = pneg %p35
        %s209 = smul.u32 400, %s17
        %p210 = scmp.lt.s32.totalorder %s209, 799
        %s211 = scalar_select %p210, %s209, 799
        %s212 = smul.addr %s211, 4
        %s213 = smul.addr %s212, 4
        %s214 = scalar_lea.vmem %s1, %s213
        %p215 = pneg %p64
        %p216 = pneg %p61
        %p217 = pneg %p85
        %p218 = pneg %p82
        %p219 = pneg %p106
        %p220 = pneg %p103
        %p221 = pneg %p127
        %p222 = pneg %p124
        %p223 = pneg %p148
        %p224 = pneg %p145
        %s225 = smul.u32 25, %s17
        %p226 = scmp.lt.s32.totalorder %s225, 49
        %s227 = scalar_select %p226, %s225, 49
        %s228 = smul.addr %s227, 2
        %s229 = scalar_lea.vmem %s0, %s228
        %s230 = smul.u32 25, %s17
        %s231 = smul.u32 400, %s17
        %p232 = scmp.lt.s32.totalorder %s231, 799
        %s233 = scalar_select %p232, %s231, 799
        %s234 = smul.addr %s233, 4
        %s235 = smul.addr %s234, 4
        %s236 = scalar_lea.vmem %s1, %s235
        %s237 = smul.u32 400, %s17
        %p239 = scmp.eq.s32.totalorder %s17, 0
        // Predicated region
        $region41: #{encoder_like_dqn_forward.7} parent=39 // pred_check
          %p240 = pneg %p239
        $region42: #{encoder_like_dqn_forward.7} parent=39 // pred_check_branch
          %242 = sbr.rel (%p240) target = $region44
        $region43: #{encoder_like_dqn_forward.7} parent=39 // pred_region
          %243 = vst [vmem:[#allocation2] sm:$0xff] 0.0
        $region44: #{encoder_like_dqn_forward.7} parent=39 // pred_fallthru
          _
        %v244 = vld [vmem:[#allocation2] sm:$0xff]
        %v245 = vld [vmem:[%s229] sm:$0xff]
        %v246 = vld [vmem:[%s229 + $0x8] sm:$0xff]
        %v247 = vld [vmem:[%s229 + $0x10] sm:$0xff]
        %v248 = vld [vmem:[%s229 + $0x18] sm:$0xff]
        %v249 = vld [vmem:[%s229 + $0x20] sm:$0xff]
        %v250 = vld [vmem:[%s229 + $0x28] sm:$0xff]
        %v251 = vld [vmem:[%s229 + $0x30] sm:$0x3]
        %v259 = vcombine.high %v245, %v245
        %v261 = vunpack.c.l.s4 1983009808
        %v262 = vunpack.c.0.s8 %v261
        %v263 = vlaneseq
        %v264 = vshrl.u32 %v263, 7
        %v265 = vsub.s32 %v262, %v264
        %v266 = vrot.slane %v245, %v265
        %v268 = vunpack.c.l.s4 1983009808
        %v269 = vunpack.c.0.s8 %v268
        %v270 = vlaneseq
        %v271 = vshrl.u32 %v270, 7
        %v272 = vsub.s32 %v269, %v271
        %v273 = vrot.slane %v259, %v272
        %v274 = vcombine.high %v266, %v266
        %v275 = vcombine.high %v273, %v273
        %v276 = vcombine.high %v246, %v246
        %v278 = vunpack.c.l.s4 1983009808
        %v279 = vunpack.c.0.s8 %v278
        %v280 = vlaneseq
        %v281 = vshrl.u32 %v280, 7
        %v282 = vsub.s32 %v279, %v281
        %v283 = vrot.slane %v246, %v282
        %v285 = vunpack.c.l.s4 1983009808
        %v286 = vunpack.c.0.s8 %v285
        %v287 = vlaneseq
        %v288 = vshrl.u32 %v287, 7
        %v289 = vsub.s32 %v286, %v288
        %v290 = vrot.slane %v276, %v289
        %v291 = vcombine.high %v283, %v283
        %v292 = vcombine.high %v290, %v290
        %v293 = vcombine.high %v247, %v247
        %v295 = vunpack.c.l.s4 1983009808
        %v296 = vunpack.c.0.s8 %v295
        %v297 = vlaneseq
        %v298 = vshrl.u32 %v297, 7
        %v299 = vsub.s32 %v296, %v298
        %v300 = vrot.slane %v247, %v299
        %v302 = vunpack.c.l.s4 1983009808
        %v303 = vunpack.c.0.s8 %v302
        %v304 = vlaneseq
        %v305 = vshrl.u32 %v304, 7
        %v306 = vsub.s32 %v303, %v305
        %v307 = vrot.slane %v293, %v306
        %v308 = vcombine.high %v300, %v300
        %v309 = vcombine.high %v307, %v307
        %v310 = vcombine.high %v248, %v248
        %v312 = vunpack.c.l.s4 1983009808
        %v313 = vunpack.c.0.s8 %v312
        %v314 = vlaneseq
        %v315 = vshrl.u32 %v314, 7
        %v316 = vsub.s32 %v313, %v315
        %v317 = vrot.slane %v248, %v316
        %v319 = vunpack.c.l.s4 1983009808
        %v320 = vunpack.c.0.s8 %v319
        %v321 = vlaneseq
        %v322 = vshrl.u32 %v321, 7
        %v323 = vsub.s32 %v320, %v322
        %v324 = vrot.slane %v310, %v323
        %v325 = vcombine.high %v317, %v317
        %v326 = vcombine.high %v324, %v324
        %v327 = vcombine.high %v249, %v249
        %v329 = vunpack.c.l.s4 1983009808
        %v330 = vunpack.c.0.s8 %v329
        %v331 = vlaneseq
        %v332 = vshrl.u32 %v331, 7
        %v333 = vsub.s32 %v330, %v332
        %v334 = vrot.slane %v249, %v333
        %v336 = vunpack.c.l.s4 1983009808
        %v337 = vunpack.c.0.s8 %v336
        %v338 = vlaneseq
        %v339 = vshrl.u32 %v338, 7
        %v340 = vsub.s32 %v337, %v339
        %v341 = vrot.slane %v327, %v340
        %v342 = vcombine.high %v334, %v334
        %v343 = vcombine.high %v341, %v341
        %v344 = vcombine.high %v250, %v250
        %v346 = vunpack.c.l.s4 1983009808
        %v347 = vunpack.c.0.s8 %v346
        %v348 = vlaneseq
        %v349 = vshrl.u32 %v348, 7
        %v350 = vsub.s32 %v347, %v349
        %v351 = vrot.slane %v250, %v350
        %v353 = vunpack.c.l.s4 1983009808
        %v354 = vunpack.c.0.s8 %v353
        %v355 = vlaneseq
        %v356 = vshrl.u32 %v355, 7
        %v357 = vsub.s32 %v354, %v356
        %v358 = vrot.slane %v344, %v357
        %v359 = vcombine.high %v351, %v351
        %v360 = vcombine.high %v358, %v358
        %v362 = vunpack.c.l.s4 1983009808
        %v363 = vunpack.c.0.s8 %v362
        %v364 = vlaneseq
        %v365 = vshrl.u32 %v364, 7
        %v366 = vsub.s32 %v363, %v365
        %v367 = vrot.slane %v251, %v366
        %v393 = vpack.c.bf16 %v266, %v266
        %v394 = vpack.c.bf16 %v274, %v274
        %v395 = vpack.c.bf16 %v273, %v273
        %v396 = vpack.c.bf16 %v275, %v275
        %v397 = vpack.c.bf16 %v283, %v283
        %v398 = vpack.c.bf16 %v291, %v291
        %v399 = vpack.c.bf16 %v290, %v290
        %v400 = vpack.c.bf16 %v292, %v292
        %v401 = vpack.c.bf16 %v300, %v300
        %v402 = vpack.c.bf16 %v308, %v308
        %v403 = vpack.c.bf16 %v307, %v307
        %v404 = vpack.c.bf16 %v309, %v309
        %v405 = vpack.c.bf16 %v317, %v317
        %v406 = vpack.c.bf16 %v325, %v325
        %v407 = vpack.c.bf16 %v324, %v324
        %v408 = vpack.c.bf16 %v326, %v326
        %v409 = vpack.c.bf16 %v334, %v334
        %v410 = vpack.c.bf16 %v342, %v342
        %v411 = vpack.c.bf16 %v341, %v341
        %v412 = vpack.c.bf16 %v343, %v343
        %v413 = vpack.c.bf16 %v351, %v351
        %v414 = vpack.c.bf16 %v359, %v359
        %v415 = vpack.c.bf16 %v358, %v358
        %v416 = vpack.c.bf16 %v360, %v360
        %v417 = vpack.c.bf16 %v367, %v367
        %v418 = vld [vmem:[%s236] sm:$0xff]
        %v419 = vld [vmem:[%s236 + $0x8] sm:$0xff]
        %v420 = vld [vmem:[%s236 + $0x10] sm:$0xff]
        %v421 = vld [vmem:[%s236 + $0x18] sm:$0xff]
        %v422 = vld [vmem:[%s236 + $0x20] sm:$0xff]
        %v423 = vld [vmem:[%s236 + $0x28] sm:$0xff]
        %v424 = vld [vmem:[%s236 + $0x30] sm:$0xff]
        %v425 = vld [vmem:[%s236 + $0x38] sm:$0xff]
        %v426 = vld [vmem:[%s236 + $0x40] sm:$0xff]
        %v427 = vld [vmem:[%s236 + $0x48] sm:$0xff]
        %v428 = vld [vmem:[%s236 + $0x50] sm:$0xff]
        %v429 = vld [vmem:[%s236 + $0x58] sm:$0xff]
        %v430 = vld [vmem:[%s236 + $0x60] sm:$0xff]
        %v431 = vld [vmem:[%s236 + $0x68] sm:$0xff]
        %v432 = vld [vmem:[%s236 + $0x70] sm:$0xff]
        %v433 = vld [vmem:[%s236 + $0x78] sm:$0xff]
        %v434 = vld [vmem:[%s236 + $0x80] sm:$0xff]
        %v435 = vld [vmem:[%s236 + $0x88] sm:$0xff]
        %v436 = vld [vmem:[%s236 + $0x90] sm:$0xff]
        %v437 = vld [vmem:[%s236 + $0x98] sm:$0xff]
        %v438 = vld [vmem:[%s236 + $0xa0] sm:$0xff]
        %v439 = vld [vmem:[%s236 + $0xa8] sm:$0xff]
        %v440 = vld [vmem:[%s236 + $0xb0] sm:$0xff]
        %v441 = vld [vmem:[%s236 + $0xb8] sm:$0xff]
        %v442 = vld [vmem:[%s236 + $0xc0] sm:$0xff]
        %v443 = vld [vmem:[%s236 + $0xc8] sm:$0xff]
        %v444 = vld [vmem:[%s236 + $0xd0] sm:$0xff]
        %v445 = vld [vmem:[%s236 + $0xd8] sm:$0xff]
        %v446 = vld [vmem:[%s236 + $0xe0] sm:$0xff]
        %v447 = vld [vmem:[%s236 + $0xe8] sm:$0xff]
        %v448 = vld [vmem:[%s236 + $0xf0] sm:$0xff]
        %v449 = vld [vmem:[%s236 + $0xf8] sm:$0xff]
        %v450 = vld [vmem:[%s236 + $0x100] sm:$0xff]
        %v451 = vld [vmem:[%s236 + $0x108] sm:$0xff]
        %v452 = vld [vmem:[%s236 + $0x110] sm:$0xff]
        %v453 = vld [vmem:[%s236 + $0x118] sm:$0xff]
        %v454 = vld [vmem:[%s236 + $0x120] sm:$0xff]
        %v455 = vld [vmem:[%s236 + $0x128] sm:$0xff]
        %v456 = vld [vmem:[%s236 + $0x130] sm:$0xff]
        %v457 = vld [vmem:[%s236 + $0x138] sm:$0xff]
        %v458 = vld [vmem:[%s236 + $0x140] sm:$0xff]
        %v459 = vld [vmem:[%s236 + $0x148] sm:$0xff]
        %v460 = vld [vmem:[%s236 + $0x150] sm:$0xff]
        %v461 = vld [vmem:[%s236 + $0x158] sm:$0xff]
        %v462 = vld [vmem:[%s236 + $0x160] sm:$0xff]
        %v463 = vld [vmem:[%s236 + $0x168] sm:$0xff]
        %v464 = vld [vmem:[%s236 + $0x170] sm:$0xff]
        %v465 = vld [vmem:[%s236 + $0x178] sm:$0xff]
        %v466 = vld [vmem:[%s236 + $0x180] sm:$0xff]
        %v467 = vld [vmem:[%s236 + $0x188] sm:$0xff]
        %v468 = vld [vmem:[%s236 + $0x190] sm:$0xff]
        %v469 = vld [vmem:[%s236 + $0x198] sm:$0xff]
        %v470 = vld [vmem:[%s236 + $0x1a0] sm:$0xff]
        %v471 = vld [vmem:[%s236 + $0x1a8] sm:$0xff]
        %v472 = vld [vmem:[%s236 + $0x1b0] sm:$0xff]
        %v473 = vld [vmem:[%s236 + $0x1b8] sm:$0xff]
        %v474 = vld [vmem:[%s236 + $0x1c0] sm:$0xff]
        %v475 = vld [vmem:[%s236 + $0x1c8] sm:$0xff]
        %v476 = vld [vmem:[%s236 + $0x1d0] sm:$0xff]
        %v477 = vld [vmem:[%s236 + $0x1d8] sm:$0xff]
        %v478 = vld [vmem:[%s236 + $0x1e0] sm:$0xff]
        %v479 = vld [vmem:[%s236 + $0x1e8] sm:$0xff]
        %v480 = vld [vmem:[%s236 + $0x1f0] sm:$0xff]
        %v481 = vld [vmem:[%s236 + $0x1f8] sm:$0xff]
        %v482 = vld [vmem:[%s236 + $0x200] sm:$0xff]
        %v483 = vld [vmem:[%s236 + $0x208] sm:$0xff]
        %v484 = vld [vmem:[%s236 + $0x210] sm:$0xff]
        %v485 = vld [vmem:[%s236 + $0x218] sm:$0xff]
        %v486 = vld [vmem:[%s236 + $0x220] sm:$0xff]
        %v487 = vld [vmem:[%s236 + $0x228] sm:$0xff]
        %v488 = vld [vmem:[%s236 + $0x230] sm:$0xff]
        %v489 = vld [vmem:[%s236 + $0x238] sm:$0xff]
        %v490 = vld [vmem:[%s236 + $0x240] sm:$0xff]
        %v491 = vld [vmem:[%s236 + $0x248] sm:$0xff]
        %v492 = vld [vmem:[%s236 + $0x250] sm:$0xff]
        %v493 = vld [vmem:[%s236 + $0x258] sm:$0xff]
        %v494 = vld [vmem:[%s236 + $0x260] sm:$0xff]
        %v495 = vld [vmem:[%s236 + $0x268] sm:$0xff]
        %v496 = vld [vmem:[%s236 + $0x270] sm:$0xff]
        %v497 = vld [vmem:[%s236 + $0x278] sm:$0xff]
        %v498 = vld [vmem:[%s236 + $0x280] sm:$0xff]
        %v499 = vld [vmem:[%s236 + $0x288] sm:$0xff]
        %v500 = vld [vmem:[%s236 + $0x290] sm:$0xff]
        %v501 = vld [vmem:[%s236 + $0x298] sm:$0xff]
        %v502 = vld [vmem:[%s236 + $0x2a0] sm:$0xff]
        %v503 = vld [vmem:[%s236 + $0x2a8] sm:$0xff]
        %v504 = vld [vmem:[%s236 + $0x2b0] sm:$0xff]
        %v505 = vld [vmem:[%s236 + $0x2b8] sm:$0xff]
        %v506 = vld [vmem:[%s236 + $0x2c0] sm:$0xff]
        %v507 = vld [vmem:[%s236 + $0x2c8] sm:$0xff]
        %v508 = vld [vmem:[%s236 + $0x2d0] sm:$0xff]
        %v509 = vld [vmem:[%s236 + $0x2d8] sm:$0xff]
        %v510 = vld [vmem:[%s236 + $0x2e0] sm:$0xff]
        %v511 = vld [vmem:[%s236 + $0x2e8] sm:$0xff]
        %v512 = vld [vmem:[%s236 + $0x2f0] sm:$0xff]
        %v513 = vld [vmem:[%s236 + $0x2f8] sm:$0xff]
        %v514 = vld [vmem:[%s236 + $0x300] sm:$0xff]
        %v515 = vld [vmem:[%s236 + $0x308] sm:$0xff]
        %v516 = vld [vmem:[%s236 + $0x310] sm:$0xff]
        %v517 = vld [vmem:[%s236 + $0x318] sm:$0xff]
        %v518 = vld [vmem:[%s236 + $0x320] sm:$0xff]
        %v519 = vld [vmem:[%s236 + $0x328] sm:$0xff]
        %v520 = vld [vmem:[%s236 + $0x330] sm:$0xff]
        %v521 = vld [vmem:[%s236 + $0x338] sm:$0xff]
        %v522 = vld [vmem:[%s236 + $0x340] sm:$0xff]
        %v523 = vld [vmem:[%s236 + $0x348] sm:$0xff]
        %v524 = vld [vmem:[%s236 + $0x350] sm:$0xff]
        %v525 = vld [vmem:[%s236 + $0x358] sm:$0xff]
        %v526 = vld [vmem:[%s236 + $0x360] sm:$0xff]
        %v527 = vld [vmem:[%s236 + $0x368] sm:$0xff]
        %v528 = vld [vmem:[%s236 + $0x370] sm:$0xff]
        %v529 = vld [vmem:[%s236 + $0x378] sm:$0xff]
        %v530 = vld [vmem:[%s236 + $0x380] sm:$0xff]
        %v531 = vld [vmem:[%s236 + $0x388] sm:$0xff]
        %v532 = vld [vmem:[%s236 + $0x390] sm:$0xff]
        %v533 = vld [vmem:[%s236 + $0x398] sm:$0xff]
        %v534 = vld [vmem:[%s236 + $0x3a0] sm:$0xff]
        %v535 = vld [vmem:[%s236 + $0x3a8] sm:$0xff]
        %v536 = vld [vmem:[%s236 + $0x3b0] sm:$0xff]
        %v537 = vld [vmem:[%s236 + $0x3b8] sm:$0xff]
        %v538 = vld [vmem:[%s236 + $0x3c0] sm:$0xff]
        %v539 = vld [vmem:[%s236 + $0x3c8] sm:$0xff]
        %v540 = vld [vmem:[%s236 + $0x3d0] sm:$0xff]
        %v541 = vld [vmem:[%s236 + $0x3d8] sm:$0xff]
        %v542 = vld [vmem:[%s236 + $0x3e0] sm:$0xff]
        %v543 = vld [vmem:[%s236 + $0x3e8] sm:$0xff]
        %v544 = vld [vmem:[%s236 + $0x3f0] sm:$0xff]
        %v545 = vld [vmem:[%s236 + $0x3f8] sm:$0xff]
        %v546 = vld [vmem:[%s236 + $0x400] sm:$0xff]
        %v547 = vld [vmem:[%s236 + $0x408] sm:$0xff]
        %v548 = vld [vmem:[%s236 + $0x410] sm:$0xff]
        %v549 = vld [vmem:[%s236 + $0x418] sm:$0xff]
        %v550 = vld [vmem:[%s236 + $0x420] sm:$0xff]
        %v551 = vld [vmem:[%s236 + $0x428] sm:$0xff]
        %v552 = vld [vmem:[%s236 + $0x430] sm:$0xff]
        %v553 = vld [vmem:[%s236 + $0x438] sm:$0xff]
        %v554 = vld [vmem:[%s236 + $0x440] sm:$0xff]
        %v555 = vld [vmem:[%s236 + $0x448] sm:$0xff]
        %v556 = vld [vmem:[%s236 + $0x450] sm:$0xff]
        %v557 = vld [vmem:[%s236 + $0x458] sm:$0xff]
        %v558 = vld [vmem:[%s236 + $0x460] sm:$0xff]
        %v559 = vld [vmem:[%s236 + $0x468] sm:$0xff]
        %v560 = vld [vmem:[%s236 + $0x470] sm:$0xff]
        %v561 = vld [vmem:[%s236 + $0x478] sm:$0xff]
        %v562 = vld [vmem:[%s236 + $0x480] sm:$0xff]
        %v563 = vld [vmem:[%s236 + $0x488] sm:$0xff]
        %v564 = vld [vmem:[%s236 + $0x490] sm:$0xff]
        %v565 = vld [vmem:[%s236 + $0x498] sm:$0xff]
        %v566 = vld [vmem:[%s236 + $0x4a0] sm:$0xff]
        %v567 = vld [vmem:[%s236 + $0x4a8] sm:$0xff]
        %v568 = vld [vmem:[%s236 + $0x4b0] sm:$0xff]
        %v569 = vld [vmem:[%s236 + $0x4b8] sm:$0xff]
        %v570 = vld [vmem:[%s236 + $0x4c0] sm:$0xff]
        %v571 = vld [vmem:[%s236 + $0x4c8] sm:$0xff]
        %v572 = vld [vmem:[%s236 + $0x4d0] sm:$0xff]
        %v573 = vld [vmem:[%s236 + $0x4d8] sm:$0xff]
        %v574 = vld [vmem:[%s236 + $0x4e0] sm:$0xff]
        %v575 = vld [vmem:[%s236 + $0x4e8] sm:$0xff]
        %v576 = vld [vmem:[%s236 + $0x4f0] sm:$0xff]
        %v577 = vld [vmem:[%s236 + $0x4f8] sm:$0xff]
        %v578 = vld [vmem:[%s236 + $0x500] sm:$0xff]
        %v579 = vld [vmem:[%s236 + $0x508] sm:$0xff]
        %v580 = vld [vmem:[%s236 + $0x510] sm:$0xff]
        %v581 = vld [vmem:[%s236 + $0x518] sm:$0xff]
        %v582 = vld [vmem:[%s236 + $0x520] sm:$0xff]
        %v583 = vld [vmem:[%s236 + $0x528] sm:$0xff]
        %v584 = vld [vmem:[%s236 + $0x530] sm:$0xff]
        %v585 = vld [vmem:[%s236 + $0x538] sm:$0xff]
        %v586 = vld [vmem:[%s236 + $0x540] sm:$0xff]
        %v587 = vld [vmem:[%s236 + $0x548] sm:$0xff]
        %v588 = vld [vmem:[%s236 + $0x550] sm:$0xff]
        %v589 = vld [vmem:[%s236 + $0x558] sm:$0xff]
        %v590 = vld [vmem:[%s236 + $0x560] sm:$0xff]
        %v591 = vld [vmem:[%s236 + $0x568] sm:$0xff]
        %v592 = vld [vmem:[%s236 + $0x570] sm:$0xff]
        %v593 = vld [vmem:[%s236 + $0x578] sm:$0xff]
        %v594 = vld [vmem:[%s236 + $0x580] sm:$0xff]
        %v595 = vld [vmem:[%s236 + $0x588] sm:$0xff]
        %v596 = vld [vmem:[%s236 + $0x590] sm:$0xff]
        %v597 = vld [vmem:[%s236 + $0x598] sm:$0xff]
        %v598 = vld [vmem:[%s236 + $0x5a0] sm:$0xff]
        %v599 = vld [vmem:[%s236 + $0x5a8] sm:$0xff]
        %v600 = vld [vmem:[%s236 + $0x5b0] sm:$0xff]
        %v601 = vld [vmem:[%s236 + $0x5b8] sm:$0xff]
        %v602 = vld [vmem:[%s236 + $0x5c0] sm:$0xff]
        %v603 = vld [vmem:[%s236 + $0x5c8] sm:$0xff]
        %v604 = vld [vmem:[%s236 + $0x5d0] sm:$0xff]
        %v605 = vld [vmem:[%s236 + $0x5d8] sm:$0xff]
        %v606 = vld [vmem:[%s236 + $0x5e0] sm:$0xff]
        %v607 = vld [vmem:[%s236 + $0x5e8] sm:$0xff]
        %v608 = vld [vmem:[%s236 + $0x5f0] sm:$0xff]
        %v609 = vld [vmem:[%s236 + $0x5f8] sm:$0xff]
        %v610 = vld [vmem:[%s236 + $0x600] sm:$0xff]
        %v611 = vld [vmem:[%s236 + $0x608] sm:$0xff]
        %v612 = vld [vmem:[%s236 + $0x610] sm:$0xff]
        %v613 = vld [vmem:[%s236 + $0x618] sm:$0xff]
        %v614 = vld [vmem:[%s236 + $0x620] sm:$0xff]
        %v615 = vld [vmem:[%s236 + $0x628] sm:$0xff]
        %v616 = vld [vmem:[%s236 + $0x630] sm:$0xff]
        %v617 = vld [vmem:[%s236 + $0x638] sm:$0xff]
        %v618 = vld [vmem:[%s236 + $0x640] sm:$0xff]
        %v619 = vld [vmem:[%s236 + $0x648] sm:$0xff]
        %v620 = vld [vmem:[%s236 + $0x650] sm:$0xff]
        %v621 = vld [vmem:[%s236 + $0x658] sm:$0xff]
        %v622 = vld [vmem:[%s236 + $0x660] sm:$0xff]
        %v623 = vld [vmem:[%s236 + $0x668] sm:$0xff]
        %v624 = vld [vmem:[%s236 + $0x670] sm:$0xff]
        %v625 = vld [vmem:[%s236 + $0x678] sm:$0xff]
        %v626 = vld [vmem:[%s236 + $0x680] sm:$0xff]
        %v627 = vld [vmem:[%s236 + $0x688] sm:$0xff]
        %v628 = vld [vmem:[%s236 + $0x690] sm:$0xff]
        %v629 = vld [vmem:[%s236 + $0x698] sm:$0xff]
        %v630 = vld [vmem:[%s236 + $0x6a0] sm:$0xff]
        %v631 = vld [vmem:[%s236 + $0x6a8] sm:$0xff]
        %v632 = vld [vmem:[%s236 + $0x6b0] sm:$0xff]
        %v633 = vld [vmem:[%s236 + $0x6b8] sm:$0xff]
        %v634 = vld [vmem:[%s236 + $0x6c0] sm:$0xff]
        %v635 = vld [vmem:[%s236 + $0x6c8] sm:$0xff]
        %v636 = vld [vmem:[%s236 + $0x6d0] sm:$0xff]
        %v637 = vld [vmem:[%s236 + $0x6d8] sm:$0xff]
        %v638 = vld [vmem:[%s236 + $0x6e0] sm:$0xff]
        %v639 = vld [vmem:[%s236 + $0x6e8] sm:$0xff]
        %v640 = vld [vmem:[%s236 + $0x6f0] sm:$0xff]
        %v641 = vld [vmem:[%s236 + $0x6f8] sm:$0xff]
        %v642 = vld [vmem:[%s236 + $0x700] sm:$0xff]
        %v643 = vld [vmem:[%s236 + $0x708] sm:$0xff]
        %v644 = vld [vmem:[%s236 + $0x710] sm:$0xff]
        %v645 = vld [vmem:[%s236 + $0x718] sm:$0xff]
        %v646 = vld [vmem:[%s236 + $0x720] sm:$0xff]
        %v647 = vld [vmem:[%s236 + $0x728] sm:$0xff]
        %v648 = vld [vmem:[%s236 + $0x730] sm:$0xff]
        %v649 = vld [vmem:[%s236 + $0x738] sm:$0xff]
        %v650 = vld [vmem:[%s236 + $0x740] sm:$0xff]
        %v651 = vld [vmem:[%s236 + $0x748] sm:$0xff]
        %v652 = vld [vmem:[%s236 + $0x750] sm:$0xff]
        %v653 = vld [vmem:[%s236 + $0x758] sm:$0xff]
        %v654 = vld [vmem:[%s236 + $0x760] sm:$0xff]
        %v655 = vld [vmem:[%s236 + $0x768] sm:$0xff]
        %v656 = vld [vmem:[%s236 + $0x770] sm:$0xff]
        %v657 = vld [vmem:[%s236 + $0x778] sm:$0xff]
        %v658 = vld [vmem:[%s236 + $0x780] sm:$0xff]
        %v659 = vld [vmem:[%s236 + $0x788] sm:$0xff]
        %v660 = vld [vmem:[%s236 + $0x790] sm:$0xff]
        %v661 = vld [vmem:[%s236 + $0x798] sm:$0xff]
        %v662 = vld [vmem:[%s236 + $0x7a0] sm:$0xff]
        %v663 = vld [vmem:[%s236 + $0x7a8] sm:$0xff]
        %v664 = vld [vmem:[%s236 + $0x7b0] sm:$0xff]
        %v665 = vld [vmem:[%s236 + $0x7b8] sm:$0xff]
        %v666 = vld [vmem:[%s236 + $0x7c0] sm:$0xff]
        %v667 = vld [vmem:[%s236 + $0x7c8] sm:$0xff]
        %v668 = vld [vmem:[%s236 + $0x7d0] sm:$0xff]
        %v669 = vld [vmem:[%s236 + $0x7d8] sm:$0xff]
        %v670 = vld [vmem:[%s236 + $0x7e0] sm:$0xff]
        %v671 = vld [vmem:[%s236 + $0x7e8] sm:$0xff]
        %v672 = vld [vmem:[%s236 + $0x7f0] sm:$0xff]
        %v673 = vld [vmem:[%s236 + $0x7f8] sm:$0xff]
        %v674 = vld [vmem:[%s236 + $0x800] sm:$0xff]
        %v675 = vld [vmem:[%s236 + $0x808] sm:$0xff]
        %v676 = vld [vmem:[%s236 + $0x810] sm:$0xff]
        %v677 = vld [vmem:[%s236 + $0x818] sm:$0xff]
        %v678 = vld [vmem:[%s236 + $0x820] sm:$0xff]
        %v679 = vld [vmem:[%s236 + $0x828] sm:$0xff]
        %v680 = vld [vmem:[%s236 + $0x830] sm:$0xff]
        %v681 = vld [vmem:[%s236 + $0x838] sm:$0xff]
        %v682 = vld [vmem:[%s236 + $0x840] sm:$0xff]
        %v683 = vld [vmem:[%s236 + $0x848] sm:$0xff]
        %v684 = vld [vmem:[%s236 + $0x850] sm:$0xff]
        %v685 = vld [vmem:[%s236 + $0x858] sm:$0xff]
        %v686 = vld [vmem:[%s236 + $0x860] sm:$0xff]
        %v687 = vld [vmem:[%s236 + $0x868] sm:$0xff]
        %v688 = vld [vmem:[%s236 + $0x870] sm:$0xff]
        %v689 = vld [vmem:[%s236 + $0x878] sm:$0xff]
        %v690 = vld [vmem:[%s236 + $0x880] sm:$0xff]
        %v691 = vld [vmem:[%s236 + $0x888] sm:$0xff]
        %v692 = vld [vmem:[%s236 + $0x890] sm:$0xff]
        %v693 = vld [vmem:[%s236 + $0x898] sm:$0xff]
        %v694 = vld [vmem:[%s236 + $0x8a0] sm:$0xff]
        %v695 = vld [vmem:[%s236 + $0x8a8] sm:$0xff]
        %v696 = vld [vmem:[%s236 + $0x8b0] sm:$0xff]
        %v697 = vld [vmem:[%s236 + $0x8b8] sm:$0xff]
        %v698 = vld [vmem:[%s236 + $0x8c0] sm:$0xff]
        %v699 = vld [vmem:[%s236 + $0x8c8] sm:$0xff]
        %v700 = vld [vmem:[%s236 + $0x8d0] sm:$0xff]
        %v701 = vld [vmem:[%s236 + $0x8d8] sm:$0xff]
        %v702 = vld [vmem:[%s236 + $0x8e0] sm:$0xff]
        %v703 = vld [vmem:[%s236 + $0x8e8] sm:$0xff]
        %v704 = vld [vmem:[%s236 + $0x8f0] sm:$0xff]
        %v705 = vld [vmem:[%s236 + $0x8f8] sm:$0xff]
        %v706 = vld [vmem:[%s236 + $0x900] sm:$0xff]
        %v707 = vld [vmem:[%s236 + $0x908] sm:$0xff]
        %v708 = vld [vmem:[%s236 + $0x910] sm:$0xff]
        %v709 = vld [vmem:[%s236 + $0x918] sm:$0xff]
        %v710 = vld [vmem:[%s236 + $0x920] sm:$0xff]
        %v711 = vld [vmem:[%s236 + $0x928] sm:$0xff]
        %v712 = vld [vmem:[%s236 + $0x930] sm:$0xff]
        %v713 = vld [vmem:[%s236 + $0x938] sm:$0xff]
        %v714 = vld [vmem:[%s236 + $0x940] sm:$0xff]
        %v715 = vld [vmem:[%s236 + $0x948] sm:$0xff]
        %v716 = vld [vmem:[%s236 + $0x950] sm:$0xff]
        %v717 = vld [vmem:[%s236 + $0x958] sm:$0xff]
        %v718 = vld [vmem:[%s236 + $0x960] sm:$0xff]
        %v719 = vld [vmem:[%s236 + $0x968] sm:$0xff]
        %v720 = vld [vmem:[%s236 + $0x970] sm:$0xff]
        %v721 = vld [vmem:[%s236 + $0x978] sm:$0xff]
        %v722 = vld [vmem:[%s236 + $0x980] sm:$0xff]
        %v723 = vld [vmem:[%s236 + $0x988] sm:$0xff]
        %v724 = vld [vmem:[%s236 + $0x990] sm:$0xff]
        %v725 = vld [vmem:[%s236 + $0x998] sm:$0xff]
        %v726 = vld [vmem:[%s236 + $0x9a0] sm:$0xff]
        %v727 = vld [vmem:[%s236 + $0x9a8] sm:$0xff]
        %v728 = vld [vmem:[%s236 + $0x9b0] sm:$0xff]
        %v729 = vld [vmem:[%s236 + $0x9b8] sm:$0xff]
        %v730 = vld [vmem:[%s236 + $0x9c0] sm:$0xff]
        %v731 = vld [vmem:[%s236 + $0x9c8] sm:$0xff]
        %v732 = vld [vmem:[%s236 + $0x9d0] sm:$0xff]
        %v733 = vld [vmem:[%s236 + $0x9d8] sm:$0xff]
        %v734 = vld [vmem:[%s236 + $0x9e0] sm:$0xff]
        %v735 = vld [vmem:[%s236 + $0x9e8] sm:$0xff]
        %v736 = vld [vmem:[%s236 + $0x9f0] sm:$0xff]
        %v737 = vld [vmem:[%s236 + $0x9f8] sm:$0xff]
        %v738 = vld [vmem:[%s236 + $0xa00] sm:$0xff]
        %v739 = vld [vmem:[%s236 + $0xa08] sm:$0xff]
        %v740 = vld [vmem:[%s236 + $0xa10] sm:$0xff]
        %v741 = vld [vmem:[%s236 + $0xa18] sm:$0xff]
        %v742 = vld [vmem:[%s236 + $0xa20] sm:$0xff]
        %v743 = vld [vmem:[%s236 + $0xa28] sm:$0xff]
        %v744 = vld [vmem:[%s236 + $0xa30] sm:$0xff]
        %v745 = vld [vmem:[%s236 + $0xa38] sm:$0xff]
        %v746 = vld [vmem:[%s236 + $0xa40] sm:$0xff]
        %v747 = vld [vmem:[%s236 + $0xa48] sm:$0xff]
        %v748 = vld [vmem:[%s236 + $0xa50] sm:$0xff]
        %v749 = vld [vmem:[%s236 + $0xa58] sm:$0xff]
        %v750 = vld [vmem:[%s236 + $0xa60] sm:$0xff]
        %v751 = vld [vmem:[%s236 + $0xa68] sm:$0xff]
        %v752 = vld [vmem:[%s236 + $0xa70] sm:$0xff]
        %v753 = vld [vmem:[%s236 + $0xa78] sm:$0xff]
        %v754 = vld [vmem:[%s236 + $0xa80] sm:$0xff]
        %v755 = vld [vmem:[%s236 + $0xa88] sm:$0xff]
        %v756 = vld [vmem:[%s236 + $0xa90] sm:$0xff]
        %v757 = vld [vmem:[%s236 + $0xa98] sm:$0xff]
        %v758 = vld [vmem:[%s236 + $0xaa0] sm:$0xff]
        %v759 = vld [vmem:[%s236 + $0xaa8] sm:$0xff]
        %v760 = vld [vmem:[%s236 + $0xab0] sm:$0xff]
        %v761 = vld [vmem:[%s236 + $0xab8] sm:$0xff]
        %v762 = vld [vmem:[%s236 + $0xac0] sm:$0xff]
        %v763 = vld [vmem:[%s236 + $0xac8] sm:$0xff]
        %v764 = vld [vmem:[%s236 + $0xad0] sm:$0xff]
        %v765 = vld [vmem:[%s236 + $0xad8] sm:$0xff]
        %v766 = vld [vmem:[%s236 + $0xae0] sm:$0xff]
        %v767 = vld [vmem:[%s236 + $0xae8] sm:$0xff]
        %v768 = vld [vmem:[%s236 + $0xaf0] sm:$0xff]
        %v769 = vld [vmem:[%s236 + $0xaf8] sm:$0xff]
        %v770 = vld [vmem:[%s236 + $0xb00] sm:$0xff]
        %v771 = vld [vmem:[%s236 + $0xb08] sm:$0xff]
        %v772 = vld [vmem:[%s236 + $0xb10] sm:$0xff]
        %v773 = vld [vmem:[%s236 + $0xb18] sm:$0xff]
        %v774 = vld [vmem:[%s236 + $0xb20] sm:$0xff]
        %v775 = vld [vmem:[%s236 + $0xb28] sm:$0xff]
        %v776 = vld [vmem:[%s236 + $0xb30] sm:$0xff]
        %v777 = vld [vmem:[%s236 + $0xb38] sm:$0xff]
        %v778 = vld [vmem:[%s236 + $0xb40] sm:$0xff]
        %v779 = vld [vmem:[%s236 + $0xb48] sm:$0xff]
        %v780 = vld [vmem:[%s236 + $0xb50] sm:$0xff]
        %v781 = vld [vmem:[%s236 + $0xb58] sm:$0xff]
        %v782 = vld [vmem:[%s236 + $0xb60] sm:$0xff]
        %v783 = vld [vmem:[%s236 + $0xb68] sm:$0xff]
        %v784 = vld [vmem:[%s236 + $0xb70] sm:$0xff]
        %v785 = vld [vmem:[%s236 + $0xb78] sm:$0xff]
        %v786 = vld [vmem:[%s236 + $0xb80] sm:$0xff]
        %v787 = vld [vmem:[%s236 + $0xb88] sm:$0xff]
        %v788 = vld [vmem:[%s236 + $0xb90] sm:$0xff]
        %v789 = vld [vmem:[%s236 + $0xb98] sm:$0xff]
        %v790 = vld [vmem:[%s236 + $0xba0] sm:$0xff]
        %v791 = vld [vmem:[%s236 + $0xba8] sm:$0xff]
        %v792 = vld [vmem:[%s236 + $0xbb0] sm:$0xff]
        %v793 = vld [vmem:[%s236 + $0xbb8] sm:$0xff]
        %v794 = vld [vmem:[%s236 + $0xbc0] sm:$0xff]
        %v795 = vld [vmem:[%s236 + $0xbc8] sm:$0xff]
        %v796 = vld [vmem:[%s236 + $0xbd0] sm:$0xff]
        %v797 = vld [vmem:[%s236 + $0xbd8] sm:$0xff]
        %v798 = vld [vmem:[%s236 + $0xbe0] sm:$0xff]
        %v799 = vld [vmem:[%s236 + $0xbe8] sm:$0xff]
        %v800 = vld [vmem:[%s236 + $0xbf0] sm:$0xff]
        %v801 = vld [vmem:[%s236 + $0xbf8] sm:$0xff]
        %v802 = vld [vmem:[%s236 + $0xc00] sm:$0xff]
        %v803 = vld [vmem:[%s236 + $0xc08] sm:$0xff]
        %v804 = vld [vmem:[%s236 + $0xc10] sm:$0xff]
        %v805 = vld [vmem:[%s236 + $0xc18] sm:$0xff]
        %v806 = vld [vmem:[%s236 + $0xc20] sm:$0xff]
        %v807 = vld [vmem:[%s236 + $0xc28] sm:$0xff]
        %v808 = vld [vmem:[%s236 + $0xc30] sm:$0xff]
        %v809 = vld [vmem:[%s236 + $0xc38] sm:$0xff]
        %v810 = vld [vmem:[%s236 + $0xc40] sm:$0xff]
        %v811 = vld [vmem:[%s236 + $0xc48] sm:$0xff]
        %v812 = vld [vmem:[%s236 + $0xc50] sm:$0xff]
        %v813 = vld [vmem:[%s236 + $0xc58] sm:$0xff]
        %v814 = vld [vmem:[%s236 + $0xc60] sm:$0xff]
        %v815 = vld [vmem:[%s236 + $0xc68] sm:$0xff]
        %v816 = vld [vmem:[%s236 + $0xc70] sm:$0xff]
        %v817 = vld [vmem:[%s236 + $0xc78] sm:$0xff]
        %v818 = vld [vmem:[%s236 + $0xc80] sm:$0xff]
        %v819 = vld [vmem:[%s236 + $0xc88] sm:$0xff]
        %v820 = vld [vmem:[%s236 + $0xc90] sm:$0xff]
        %v821 = vld [vmem:[%s236 + $0xc98] sm:$0xff]
        %v822 = vld [vmem:[%s236 + $0xca0] sm:$0xff]
        %v823 = vld [vmem:[%s236 + $0xca8] sm:$0xff]
        %v824 = vld [vmem:[%s236 + $0xcb0] sm:$0xff]
        %v825 = vld [vmem:[%s236 + $0xcb8] sm:$0xff]
        %v826 = vld [vmem:[%s236 + $0xcc0] sm:$0xff]
        %v827 = vld [vmem:[%s236 + $0xcc8] sm:$0xff]
        %v828 = vld [vmem:[%s236 + $0xcd0] sm:$0xff]
        %v829 = vld [vmem:[%s236 + $0xcd8] sm:$0xff]
        %v830 = vld [vmem:[%s236 + $0xce0] sm:$0xff]
        %v831 = vld [vmem:[%s236 + $0xce8] sm:$0xff]
        %v832 = vld [vmem:[%s236 + $0xcf0] sm:$0xff]
        %v833 = vld [vmem:[%s236 + $0xcf8] sm:$0xff]
        %v834 = vld [vmem:[%s236 + $0xd00] sm:$0xff]
        %v835 = vld [vmem:[%s236 + $0xd08] sm:$0xff]
        %v836 = vld [vmem:[%s236 + $0xd10] sm:$0xff]
        %v837 = vld [vmem:[%s236 + $0xd18] sm:$0xff]
        %v838 = vld [vmem:[%s236 + $0xd20] sm:$0xff]
        %v839 = vld [vmem:[%s236 + $0xd28] sm:$0xff]
        %v840 = vld [vmem:[%s236 + $0xd30] sm:$0xff]
        %v841 = vld [vmem:[%s236 + $0xd38] sm:$0xff]
        %v842 = vld [vmem:[%s236 + $0xd40] sm:$0xff]
        %v843 = vld [vmem:[%s236 + $0xd48] sm:$0xff]
        %v844 = vld [vmem:[%s236 + $0xd50] sm:$0xff]
        %v845 = vld [vmem:[%s236 + $0xd58] sm:$0xff]
        %v846 = vld [vmem:[%s236 + $0xd60] sm:$0xff]
        %v847 = vld [vmem:[%s236 + $0xd68] sm:$0xff]
        %v848 = vld [vmem:[%s236 + $0xd70] sm:$0xff]
        %v849 = vld [vmem:[%s236 + $0xd78] sm:$0xff]
        %v850 = vld [vmem:[%s236 + $0xd80] sm:$0xff]
        %v851 = vld [vmem:[%s236 + $0xd88] sm:$0xff]
        %v852 = vld [vmem:[%s236 + $0xd90] sm:$0xff]
        %v853 = vld [vmem:[%s236 + $0xd98] sm:$0xff]
        %v854 = vld [vmem:[%s236 + $0xda0] sm:$0xff]
        %v855 = vld [vmem:[%s236 + $0xda8] sm:$0xff]
        %v856 = vld [vmem:[%s236 + $0xdb0] sm:$0xff]
        %v857 = vld [vmem:[%s236 + $0xdb8] sm:$0xff]
        %v858 = vld [vmem:[%s236 + $0xdc0] sm:$0xff]
        %v859 = vld [vmem:[%s236 + $0xdc8] sm:$0xff]
        %v860 = vld [vmem:[%s236 + $0xdd0] sm:$0xff]
        %v861 = vld [vmem:[%s236 + $0xdd8] sm:$0xff]
        %v862 = vld [vmem:[%s236 + $0xde0] sm:$0xff]
        %v863 = vld [vmem:[%s236 + $0xde8] sm:$0xff]
        %v864 = vld [vmem:[%s236 + $0xdf0] sm:$0xff]
        %v865 = vld [vmem:[%s236 + $0xdf8] sm:$0xff]
        %v866 = vld [vmem:[%s236 + $0xe00] sm:$0xff]
        %v867 = vld [vmem:[%s236 + $0xe08] sm:$0xff]
        %v868 = vld [vmem:[%s236 + $0xe10] sm:$0xff]
        %v869 = vld [vmem:[%s236 + $0xe18] sm:$0xff]
        %v870 = vld [vmem:[%s236 + $0xe20] sm:$0xff]
        %v871 = vld [vmem:[%s236 + $0xe28] sm:$0xff]
        %v872 = vld [vmem:[%s236 + $0xe30] sm:$0xff]
        %v873 = vld [vmem:[%s236 + $0xe38] sm:$0xff]
        %v874 = vld [vmem:[%s236 + $0xe40] sm:$0xff]
        %v875 = vld [vmem:[%s236 + $0xe48] sm:$0xff]
        %v876 = vld [vmem:[%s236 + $0xe50] sm:$0xff]
        %v877 = vld [vmem:[%s236 + $0xe58] sm:$0xff]
        %v878 = vld [vmem:[%s236 + $0xe60] sm:$0xff]
        %v879 = vld [vmem:[%s236 + $0xe68] sm:$0xff]
        %v880 = vld [vmem:[%s236 + $0xe70] sm:$0xff]
        %v881 = vld [vmem:[%s236 + $0xe78] sm:$0xff]
        %v882 = vld [vmem:[%s236 + $0xe80] sm:$0xff]
        %v883 = vld [vmem:[%s236 + $0xe88] sm:$0xff]
        %v884 = vld [vmem:[%s236 + $0xe90] sm:$0xff]
        %v885 = vld [vmem:[%s236 + $0xe98] sm:$0xff]
        %v886 = vld [vmem:[%s236 + $0xea0] sm:$0xff]
        %v887 = vld [vmem:[%s236 + $0xea8] sm:$0xff]
        %v888 = vld [vmem:[%s236 + $0xeb0] sm:$0xff]
        %v889 = vld [vmem:[%s236 + $0xeb8] sm:$0xff]
        %v890 = vld [vmem:[%s236 + $0xec0] sm:$0xff]
        %v891 = vld [vmem:[%s236 + $0xec8] sm:$0xff]
        %v892 = vld [vmem:[%s236 + $0xed0] sm:$0xff]
        %v893 = vld [vmem:[%s236 + $0xed8] sm:$0xff]
        %v894 = vld [vmem:[%s236 + $0xee0] sm:$0xff]
        %v895 = vld [vmem:[%s236 + $0xee8] sm:$0xff]
        %v896 = vld [vmem:[%s236 + $0xef0] sm:$0xff]
        %v897 = vld [vmem:[%s236 + $0xef8] sm:$0xff]
        %v898 = vld [vmem:[%s236 + $0xf00] sm:$0xff]
        %v899 = vld [vmem:[%s236 + $0xf08] sm:$0xff]
        %v900 = vld [vmem:[%s236 + $0xf10] sm:$0xff]
        %v901 = vld [vmem:[%s236 + $0xf18] sm:$0xff]
        %v902 = vld [vmem:[%s236 + $0xf20] sm:$0xff]
        %v903 = vld [vmem:[%s236 + $0xf28] sm:$0xff]
        %v904 = vld [vmem:[%s236 + $0xf30] sm:$0xff]
        %v905 = vld [vmem:[%s236 + $0xf38] sm:$0xff]
        %v906 = vld [vmem:[%s236 + $0xf40] sm:$0xff]
        %v907 = vld [vmem:[%s236 + $0xf48] sm:$0xff]
        %v908 = vld [vmem:[%s236 + $0xf50] sm:$0xff]
        %v909 = vld [vmem:[%s236 + $0xf58] sm:$0xff]
        %v910 = vld [vmem:[%s236 + $0xf60] sm:$0xff]
        %v911 = vld [vmem:[%s236 + $0xf68] sm:$0xff]
        %v912 = vld [vmem:[%s236 + $0xf70] sm:$0xff]
        %v913 = vld [vmem:[%s236 + $0xf78] sm:$0xff]
        %v914 = vld [vmem:[%s236 + $0xf80] sm:$0xff]
        %v915 = vld [vmem:[%s236 + $0xf88] sm:$0xff]
        %v916 = vld [vmem:[%s236 + $0xf90] sm:$0xff]
        %v917 = vld [vmem:[%s236 + $0xf98] sm:$0xff]
        %v918 = vld [vmem:[%s236 + $0xfa0] sm:$0xff]
        %v919 = vld [vmem:[%s236 + $0xfa8] sm:$0xff]
        %v920 = vld [vmem:[%s236 + $0xfb0] sm:$0xff]
        %v921 = vld [vmem:[%s236 + $0xfb8] sm:$0xff]
        %v922 = vld [vmem:[%s236 + $0xfc0] sm:$0xff]
        %v923 = vld [vmem:[%s236 + $0xfc8] sm:$0xff]
        %v924 = vld [vmem:[%s236 + $0xfd0] sm:$0xff]
        %v925 = vld [vmem:[%s236 + $0xfd8] sm:$0xff]
        %v926 = vld [vmem:[%s236 + $0xfe0] sm:$0xff]
        %v927 = vld [vmem:[%s236 + $0xfe8] sm:$0xff]
        %v928 = vld [vmem:[%s236 + $0xff0] sm:$0xff]
        %v929 = vld [vmem:[%s236 + $0xff8] sm:$0xff]
        %v930 = vld [vmem:[%s236 + $0x1000] sm:$0xff]
        %v931 = vld [vmem:[%s236 + $0x1008] sm:$0xff]
        %v932 = vld [vmem:[%s236 + $0x1010] sm:$0xff]
        %v933 = vld [vmem:[%s236 + $0x1018] sm:$0xff]
        %v934 = vld [vmem:[%s236 + $0x1020] sm:$0xff]
        %v935 = vld [vmem:[%s236 + $0x1028] sm:$0xff]
        %v936 = vld [vmem:[%s236 + $0x1030] sm:$0xff]
        %v937 = vld [vmem:[%s236 + $0x1038] sm:$0xff]
        %v938 = vld [vmem:[%s236 + $0x1040] sm:$0xff]
        %v939 = vld [vmem:[%s236 + $0x1048] sm:$0xff]
        %v940 = vld [vmem:[%s236 + $0x1050] sm:$0xff]
        %v941 = vld [vmem:[%s236 + $0x1058] sm:$0xff]
        %v942 = vld [vmem:[%s236 + $0x1060] sm:$0xff]
        %v943 = vld [vmem:[%s236 + $0x1068] sm:$0xff]
        %v944 = vld [vmem:[%s236 + $0x1070] sm:$0xff]
        %v945 = vld [vmem:[%s236 + $0x1078] sm:$0xff]
        %v946 = vld [vmem:[%s236 + $0x1080] sm:$0xff]
        %v947 = vld [vmem:[%s236 + $0x1088] sm:$0xff]
        %v948 = vld [vmem:[%s236 + $0x1090] sm:$0xff]
        %v949 = vld [vmem:[%s236 + $0x1098] sm:$0xff]
        %v950 = vld [vmem:[%s236 + $0x10a0] sm:$0xff]
        %v951 = vld [vmem:[%s236 + $0x10a8] sm:$0xff]
        %v952 = vld [vmem:[%s236 + $0x10b0] sm:$0xff]
        %v953 = vld [vmem:[%s236 + $0x10b8] sm:$0xff]
        %v954 = vld [vmem:[%s236 + $0x10c0] sm:$0xff]
        %v955 = vld [vmem:[%s236 + $0x10c8] sm:$0xff]
        %v956 = vld [vmem:[%s236 + $0x10d0] sm:$0xff]
        %v957 = vld [vmem:[%s236 + $0x10d8] sm:$0xff]
        %v958 = vld [vmem:[%s236 + $0x10e0] sm:$0xff]
        %v959 = vld [vmem:[%s236 + $0x10e8] sm:$0xff]
        %v960 = vld [vmem:[%s236 + $0x10f0] sm:$0xff]
        %v961 = vld [vmem:[%s236 + $0x10f8] sm:$0xff]
        %v962 = vld [vmem:[%s236 + $0x1100] sm:$0xff]
        %v963 = vld [vmem:[%s236 + $0x1108] sm:$0xff]
        %v964 = vld [vmem:[%s236 + $0x1110] sm:$0xff]
        %v965 = vld [vmem:[%s236 + $0x1118] sm:$0xff]
        %v966 = vld [vmem:[%s236 + $0x1120] sm:$0xff]
        %v967 = vld [vmem:[%s236 + $0x1128] sm:$0xff]
        %v968 = vld [vmem:[%s236 + $0x1130] sm:$0xff]
        %v969 = vld [vmem:[%s236 + $0x1138] sm:$0xff]
        %v970 = vld [vmem:[%s236 + $0x1140] sm:$0xff]
        %v971 = vld [vmem:[%s236 + $0x1148] sm:$0xff]
        %v972 = vld [vmem:[%s236 + $0x1150] sm:$0xff]
        %v973 = vld [vmem:[%s236 + $0x1158] sm:$0xff]
        %v974 = vld [vmem:[%s236 + $0x1160] sm:$0xff]
        %v975 = vld [vmem:[%s236 + $0x1168] sm:$0xff]
        %v976 = vld [vmem:[%s236 + $0x1170] sm:$0xff]
        %v977 = vld [vmem:[%s236 + $0x1178] sm:$0xff]
        %v978 = vld [vmem:[%s236 + $0x1180] sm:$0xff]
        %v979 = vld [vmem:[%s236 + $0x1188] sm:$0xff]
        %v980 = vld [vmem:[%s236 + $0x1190] sm:$0xff]
        %v981 = vld [vmem:[%s236 + $0x1198] sm:$0xff]
        %v982 = vld [vmem:[%s236 + $0x11a0] sm:$0xff]
        %v983 = vld [vmem:[%s236 + $0x11a8] sm:$0xff]
        %v984 = vld [vmem:[%s236 + $0x11b0] sm:$0xff]
        %v985 = vld [vmem:[%s236 + $0x11b8] sm:$0xff]
        %v986 = vld [vmem:[%s236 + $0x11c0] sm:$0xff]
        %v987 = vld [vmem:[%s236 + $0x11c8] sm:$0xff]
        %v988 = vld [vmem:[%s236 + $0x11d0] sm:$0xff]
        %v989 = vld [vmem:[%s236 + $0x11d8] sm:$0xff]
        %v990 = vld [vmem:[%s236 + $0x11e0] sm:$0xff]
        %v991 = vld [vmem:[%s236 + $0x11e8] sm:$0xff]
        %v992 = vld [vmem:[%s236 + $0x11f0] sm:$0xff]
        %v993 = vld [vmem:[%s236 + $0x11f8] sm:$0xff]
        %v994 = vld [vmem:[%s236 + $0x1200] sm:$0xff]
        %v995 = vld [vmem:[%s236 + $0x1208] sm:$0xff]
        %v996 = vld [vmem:[%s236 + $0x1210] sm:$0xff]
        %v997 = vld [vmem:[%s236 + $0x1218] sm:$0xff]
        %v998 = vld [vmem:[%s236 + $0x1220] sm:$0xff]
        %v999 = vld [vmem:[%s236 + $0x1228] sm:$0xff]
        %v1000 = vld [vmem:[%s236 + $0x1230] sm:$0xff]
        %v1001 = vld [vmem:[%s236 + $0x1238] sm:$0xff]
        %v1002 = vld [vmem:[%s236 + $0x1240] sm:$0xff]
        %v1003 = vld [vmem:[%s236 + $0x1248] sm:$0xff]
        %v1004 = vld [vmem:[%s236 + $0x1250] sm:$0xff]
        %v1005 = vld [vmem:[%s236 + $0x1258] sm:$0xff]
        %v1006 = vld [vmem:[%s236 + $0x1260] sm:$0xff]
        %v1007 = vld [vmem:[%s236 + $0x1268] sm:$0xff]
        %v1008 = vld [vmem:[%s236 + $0x1270] sm:$0xff]
        %v1009 = vld [vmem:[%s236 + $0x1278] sm:$0xff]
        %v1010 = vld [vmem:[%s236 + $0x1280] sm:$0xff]
        %v1011 = vld [vmem:[%s236 + $0x1288] sm:$0xff]
        %v1012 = vld [vmem:[%s236 + $0x1290] sm:$0xff]
        %v1013 = vld [vmem:[%s236 + $0x1298] sm:$0xff]
        %v1014 = vld [vmem:[%s236 + $0x12a0] sm:$0xff]
        %v1015 = vld [vmem:[%s236 + $0x12a8] sm:$0xff]
        %v1016 = vld [vmem:[%s236 + $0x12b0] sm:$0xff]
        %v1017 = vld [vmem:[%s236 + $0x12b8] sm:$0xff]
        %v1018 = vld [vmem:[%s236 + $0x12c0] sm:$0xff]
        %v1019 = vld [vmem:[%s236 + $0x12c8] sm:$0xff]
        %v1020 = vld [vmem:[%s236 + $0x12d0] sm:$0xff]
        %v1021 = vld [vmem:[%s236 + $0x12d8] sm:$0xff]
        %v1022 = vld [vmem:[%s236 + $0x12e0] sm:$0xff]
        %v1023 = vld [vmem:[%s236 + $0x12e8] sm:$0xff]
        %v1024 = vld [vmem:[%s236 + $0x12f0] sm:$0xff]
        %v1025 = vld [vmem:[%s236 + $0x12f8] sm:$0xff]
        %v1026 = vld [vmem:[%s236 + $0x1300] sm:$0xff]
        %v1027 = vld [vmem:[%s236 + $0x1308] sm:$0xff]
        %v1028 = vld [vmem:[%s236 + $0x1310] sm:$0xff]
        %v1029 = vld [vmem:[%s236 + $0x1318] sm:$0xff]
        %v1030 = vld [vmem:[%s236 + $0x1320] sm:$0xff]
        %v1031 = vld [vmem:[%s236 + $0x1328] sm:$0xff]
        %v1032 = vld [vmem:[%s236 + $0x1330] sm:$0xff]
        %v1033 = vld [vmem:[%s236 + $0x1338] sm:$0xff]
        %v1034 = vld [vmem:[%s236 + $0x1340] sm:$0xff]
        %v1035 = vld [vmem:[%s236 + $0x1348] sm:$0xff]
        %v1036 = vld [vmem:[%s236 + $0x1350] sm:$0xff]
        %v1037 = vld [vmem:[%s236 + $0x1358] sm:$0xff]
        %v1038 = vld [vmem:[%s236 + $0x1360] sm:$0xff]
        %v1039 = vld [vmem:[%s236 + $0x1368] sm:$0xff]
        %v1040 = vld [vmem:[%s236 + $0x1370] sm:$0xff]
        %v1041 = vld [vmem:[%s236 + $0x1378] sm:$0xff]
        %v1042 = vld [vmem:[%s236 + $0x1380] sm:$0xff]
        %v1043 = vld [vmem:[%s236 + $0x1388] sm:$0xff]
        %v1044 = vld [vmem:[%s236 + $0x1390] sm:$0xff]
        %v1045 = vld [vmem:[%s236 + $0x1398] sm:$0xff]
        %v1046 = vld [vmem:[%s236 + $0x13a0] sm:$0xff]
        %v1047 = vld [vmem:[%s236 + $0x13a8] sm:$0xff]
        %v1048 = vld [vmem:[%s236 + $0x13b0] sm:$0xff]
        %v1049 = vld [vmem:[%s236 + $0x13b8] sm:$0xff]
        %v1050 = vld [vmem:[%s236 + $0x13c0] sm:$0xff]
        %v1051 = vld [vmem:[%s236 + $0x13c8] sm:$0xff]
        %v1052 = vld [vmem:[%s236 + $0x13d0] sm:$0xff]
        %v1053 = vld [vmem:[%s236 + $0x13d8] sm:$0xff]
        %v1054 = vld [vmem:[%s236 + $0x13e0] sm:$0xff]
        %v1055 = vld [vmem:[%s236 + $0x13e8] sm:$0xff]
        %v1056 = vld [vmem:[%s236 + $0x13f0] sm:$0xff]
        %v1057 = vld [vmem:[%s236 + $0x13f8] sm:$0xff]
        %v1058 = vld [vmem:[%s236 + $0x1400] sm:$0xff]
        %v1059 = vld [vmem:[%s236 + $0x1408] sm:$0xff]
        %v1060 = vld [vmem:[%s236 + $0x1410] sm:$0xff]
        %v1061 = vld [vmem:[%s236 + $0x1418] sm:$0xff]
        %v1062 = vld [vmem:[%s236 + $0x1420] sm:$0xff]
        %v1063 = vld [vmem:[%s236 + $0x1428] sm:$0xff]
        %v1064 = vld [vmem:[%s236 + $0x1430] sm:$0xff]
        %v1065 = vld [vmem:[%s236 + $0x1438] sm:$0xff]
        %v1066 = vld [vmem:[%s236 + $0x1440] sm:$0xff]
        %v1067 = vld [vmem:[%s236 + $0x1448] sm:$0xff]
        %v1068 = vld [vmem:[%s236 + $0x1450] sm:$0xff]
        %v1069 = vld [vmem:[%s236 + $0x1458] sm:$0xff]
        %v1070 = vld [vmem:[%s236 + $0x1460] sm:$0xff]
        %v1071 = vld [vmem:[%s236 + $0x1468] sm:$0xff]
        %v1072 = vld [vmem:[%s236 + $0x1470] sm:$0xff]
        %v1073 = vld [vmem:[%s236 + $0x1478] sm:$0xff]
        %v1074 = vld [vmem:[%s236 + $0x1480] sm:$0xff]
        %v1075 = vld [vmem:[%s236 + $0x1488] sm:$0xff]
        %v1076 = vld [vmem:[%s236 + $0x1490] sm:$0xff]
        %v1077 = vld [vmem:[%s236 + $0x1498] sm:$0xff]
        %v1078 = vld [vmem:[%s236 + $0x14a0] sm:$0xff]
        %v1079 = vld [vmem:[%s236 + $0x14a8] sm:$0xff]
        %v1080 = vld [vmem:[%s236 + $0x14b0] sm:$0xff]
        %v1081 = vld [vmem:[%s236 + $0x14b8] sm:$0xff]
        %v1082 = vld [vmem:[%s236 + $0x14c0] sm:$0xff]
        %v1083 = vld [vmem:[%s236 + $0x14c8] sm:$0xff]
        %v1084 = vld [vmem:[%s236 + $0x14d0] sm:$0xff]
        %v1085 = vld [vmem:[%s236 + $0x14d8] sm:$0xff]
        %v1086 = vld [vmem:[%s236 + $0x14e0] sm:$0xff]
        %v1087 = vld [vmem:[%s236 + $0x14e8] sm:$0xff]
        %v1088 = vld [vmem:[%s236 + $0x14f0] sm:$0xff]
        %v1089 = vld [vmem:[%s236 + $0x14f8] sm:$0xff]
        %v1090 = vld [vmem:[%s236 + $0x1500] sm:$0xff]
        %v1091 = vld [vmem:[%s236 + $0x1508] sm:$0xff]
        %v1092 = vld [vmem:[%s236 + $0x1510] sm:$0xff]
        %v1093 = vld [vmem:[%s236 + $0x1518] sm:$0xff]
        %v1094 = vld [vmem:[%s236 + $0x1520] sm:$0xff]
        %v1095 = vld [vmem:[%s236 + $0x1528] sm:$0xff]
        %v1096 = vld [vmem:[%s236 + $0x1530] sm:$0xff]
        %v1097 = vld [vmem:[%s236 + $0x1538] sm:$0xff]
        %v1098 = vld [vmem:[%s236 + $0x1540] sm:$0xff]
        %v1099 = vld [vmem:[%s236 + $0x1548] sm:$0xff]
        %v1100 = vld [vmem:[%s236 + $0x1550] sm:$0xff]
        %v1101 = vld [vmem:[%s236 + $0x1558] sm:$0xff]
        %v1102 = vld [vmem:[%s236 + $0x1560] sm:$0xff]
        %v1103 = vld [vmem:[%s236 + $0x1568] sm:$0xff]
        %v1104 = vld [vmem:[%s236 + $0x1570] sm:$0xff]
        %v1105 = vld [vmem:[%s236 + $0x1578] sm:$0xff]
        %v1106 = vld [vmem:[%s236 + $0x1580] sm:$0xff]
        %v1107 = vld [vmem:[%s236 + $0x1588] sm:$0xff]
        %v1108 = vld [vmem:[%s236 + $0x1590] sm:$0xff]
        %v1109 = vld [vmem:[%s236 + $0x1598] sm:$0xff]
        %v1110 = vld [vmem:[%s236 + $0x15a0] sm:$0xff]
        %v1111 = vld [vmem:[%s236 + $0x15a8] sm:$0xff]
        %v1112 = vld [vmem:[%s236 + $0x15b0] sm:$0xff]
        %v1113 = vld [vmem:[%s236 + $0x15b8] sm:$0xff]
        %v1114 = vld [vmem:[%s236 + $0x15c0] sm:$0xff]
        %v1115 = vld [vmem:[%s236 + $0x15c8] sm:$0xff]
        %v1116 = vld [vmem:[%s236 + $0x15d0] sm:$0xff]
        %v1117 = vld [vmem:[%s236 + $0x15d8] sm:$0xff]
        %v1118 = vld [vmem:[%s236 + $0x15e0] sm:$0xff]
        %v1119 = vld [vmem:[%s236 + $0x15e8] sm:$0xff]
        %v1120 = vld [vmem:[%s236 + $0x15f0] sm:$0xff]
        %v1121 = vld [vmem:[%s236 + $0x15f8] sm:$0xff]
        %v1122 = vld [vmem:[%s236 + $0x1600] sm:$0xff]
        %v1123 = vld [vmem:[%s236 + $0x1608] sm:$0xff]
        %v1124 = vld [vmem:[%s236 + $0x1610] sm:$0xff]
        %v1125 = vld [vmem:[%s236 + $0x1618] sm:$0xff]
        %v1126 = vld [vmem:[%s236 + $0x1620] sm:$0xff]
        %v1127 = vld [vmem:[%s236 + $0x1628] sm:$0xff]
        %v1128 = vld [vmem:[%s236 + $0x1630] sm:$0xff]
        %v1129 = vld [vmem:[%s236 + $0x1638] sm:$0xff]
        %v1130 = vld [vmem:[%s236 + $0x1640] sm:$0xff]
        %v1131 = vld [vmem:[%s236 + $0x1648] sm:$0xff]
        %v1132 = vld [vmem:[%s236 + $0x1650] sm:$0xff]
        %v1133 = vld [vmem:[%s236 + $0x1658] sm:$0xff]
        %v1134 = vld [vmem:[%s236 + $0x1660] sm:$0xff]
        %v1135 = vld [vmem:[%s236 + $0x1668] sm:$0xff]
        %v1136 = vld [vmem:[%s236 + $0x1670] sm:$0xff]
        %v1137 = vld [vmem:[%s236 + $0x1678] sm:$0xff]
        %v1138 = vld [vmem:[%s236 + $0x1680] sm:$0xff]
        %v1139 = vld [vmem:[%s236 + $0x1688] sm:$0xff]
        %v1140 = vld [vmem:[%s236 + $0x1690] sm:$0xff]
        %v1141 = vld [vmem:[%s236 + $0x1698] sm:$0xff]
        %v1142 = vld [vmem:[%s236 + $0x16a0] sm:$0xff]
        %v1143 = vld [vmem:[%s236 + $0x16a8] sm:$0xff]
        %v1144 = vld [vmem:[%s236 + $0x16b0] sm:$0xff]
        %v1145 = vld [vmem:[%s236 + $0x16b8] sm:$0xff]
        %v1146 = vld [vmem:[%s236 + $0x16c0] sm:$0xff]
        %v1147 = vld [vmem:[%s236 + $0x16c8] sm:$0xff]
        %v1148 = vld [vmem:[%s236 + $0x16d0] sm:$0xff]
        %v1149 = vld [vmem:[%s236 + $0x16d8] sm:$0xff]
        %v1150 = vld [vmem:[%s236 + $0x16e0] sm:$0xff]
        %v1151 = vld [vmem:[%s236 + $0x16e8] sm:$0xff]
        %v1152 = vld [vmem:[%s236 + $0x16f0] sm:$0xff]
        %v1153 = vld [vmem:[%s236 + $0x16f8] sm:$0xff]
        %v1154 = vld [vmem:[%s236 + $0x1700] sm:$0xff]
        %v1155 = vld [vmem:[%s236 + $0x1708] sm:$0xff]
        %v1156 = vld [vmem:[%s236 + $0x1710] sm:$0xff]
        %v1157 = vld [vmem:[%s236 + $0x1718] sm:$0xff]
        %v1158 = vld [vmem:[%s236 + $0x1720] sm:$0xff]
        %v1159 = vld [vmem:[%s236 + $0x1728] sm:$0xff]
        %v1160 = vld [vmem:[%s236 + $0x1730] sm:$0xff]
        %v1161 = vld [vmem:[%s236 + $0x1738] sm:$0xff]
        %v1162 = vld [vmem:[%s236 + $0x1740] sm:$0xff]
        %v1163 = vld [vmem:[%s236 + $0x1748] sm:$0xff]
        %v1164 = vld [vmem:[%s236 + $0x1750] sm:$0xff]
        %v1165 = vld [vmem:[%s236 + $0x1758] sm:$0xff]
        %v1166 = vld [vmem:[%s236 + $0x1760] sm:$0xff]
        %v1167 = vld [vmem:[%s236 + $0x1768] sm:$0xff]
        %v1168 = vld [vmem:[%s236 + $0x1770] sm:$0xff]
        %v1169 = vld [vmem:[%s236 + $0x1778] sm:$0xff]
        %v1170 = vld [vmem:[%s236 + $0x1780] sm:$0xff]
        %v1171 = vld [vmem:[%s236 + $0x1788] sm:$0xff]
        %v1172 = vld [vmem:[%s236 + $0x1790] sm:$0xff]
        %v1173 = vld [vmem:[%s236 + $0x1798] sm:$0xff]
        %v1174 = vld [vmem:[%s236 + $0x17a0] sm:$0xff]
        %v1175 = vld [vmem:[%s236 + $0x17a8] sm:$0xff]
        %v1176 = vld [vmem:[%s236 + $0x17b0] sm:$0xff]
        %v1177 = vld [vmem:[%s236 + $0x17b8] sm:$0xff]
        %v1178 = vld [vmem:[%s236 + $0x17c0] sm:$0xff]
        %v1179 = vld [vmem:[%s236 + $0x17c8] sm:$0xff]
        %v1180 = vld [vmem:[%s236 + $0x17d0] sm:$0xff]
        %v1181 = vld [vmem:[%s236 + $0x17d8] sm:$0xff]
        %v1182 = vld [vmem:[%s236 + $0x17e0] sm:$0xff]
        %v1183 = vld [vmem:[%s236 + $0x17e8] sm:$0xff]
        %v1184 = vld [vmem:[%s236 + $0x17f0] sm:$0xff]
        %v1185 = vld [vmem:[%s236 + $0x17f8] sm:$0xff]
        %v1186 = vld [vmem:[%s236 + $0x1800] sm:$0xff]
        %v1187 = vld [vmem:[%s236 + $0x1808] sm:$0xff]
        %v1188 = vld [vmem:[%s236 + $0x1810] sm:$0xff]
        %v1189 = vld [vmem:[%s236 + $0x1818] sm:$0xff]
        %v1190 = vld [vmem:[%s236 + $0x1820] sm:$0xff]
        %v1191 = vld [vmem:[%s236 + $0x1828] sm:$0xff]
        %v1192 = vld [vmem:[%s236 + $0x1830] sm:$0xff]
        %v1193 = vld [vmem:[%s236 + $0x1838] sm:$0xff]
        %v1194 = vld [vmem:[%s236 + $0x1840] sm:$0xff]
        %v1195 = vld [vmem:[%s236 + $0x1848] sm:$0xff]
        %v1196 = vld [vmem:[%s236 + $0x1850] sm:$0xff]
        %v1197 = vld [vmem:[%s236 + $0x1858] sm:$0xff]
        %v1198 = vld [vmem:[%s236 + $0x1860] sm:$0xff]
        %v1199 = vld [vmem:[%s236 + $0x1868] sm:$0xff]
        %v1200 = vld [vmem:[%s236 + $0x1870] sm:$0xff]
        %v1201 = vld [vmem:[%s236 + $0x1878] sm:$0xff]
        %v1202 = vld [vmem:[%s236 + $0x1880] sm:$0xff]
        %v1203 = vld [vmem:[%s236 + $0x1888] sm:$0xff]
        %v1204 = vld [vmem:[%s236 + $0x1890] sm:$0xff]
        %v1205 = vld [vmem:[%s236 + $0x1898] sm:$0xff]
        %v1206 = vld [vmem:[%s236 + $0x18a0] sm:$0xff]
        %v1207 = vld [vmem:[%s236 + $0x18a8] sm:$0xff]
        %v1208 = vld [vmem:[%s236 + $0x18b0] sm:$0xff]
        %v1209 = vld [vmem:[%s236 + $0x18b8] sm:$0xff]
        %v1210 = vld [vmem:[%s236 + $0x18c0] sm:$0xff]
        %v1211 = vld [vmem:[%s236 + $0x18c8] sm:$0xff]
        %v1212 = vld [vmem:[%s236 + $0x18d0] sm:$0xff]
        %v1213 = vld [vmem:[%s236 + $0x18d8] sm:$0xff]
        %v1214 = vld [vmem:[%s236 + $0x18e0] sm:$0xff]
        %v1215 = vld [vmem:[%s236 + $0x18e8] sm:$0xff]
        %v1216 = vld [vmem:[%s236 + $0x18f0] sm:$0xff]
        %v1217 = vld [vmem:[%s236 + $0x18f8] sm:$0xff]
        %v2018 = vunpack.c.l.b16 %v418
        %v2019 = vunpack.c.h.b16 %v418
        %v2020 = vunpack.c.l.b16 %v419
        %v2021 = vunpack.c.h.b16 %v419
        %v2022 = vunpack.c.l.b16 %v420
        %v2023 = vunpack.c.h.b16 %v420
        %v2024 = vunpack.c.l.b16 %v421
        %v2025 = vunpack.c.h.b16 %v421
        %v2026 = vunpack.c.l.b16 %v422
        %v2027 = vunpack.c.h.b16 %v422
        %v2028 = vunpack.c.l.b16 %v423
        %v2029 = vunpack.c.h.b16 %v423
        %v2030 = vunpack.c.l.b16 %v424
        %v2031 = vunpack.c.h.b16 %v424
        %v2032 = vunpack.c.l.b16 %v425
        %v2033 = vunpack.c.h.b16 %v425
        %v2034 = vunpack.c.l.b16 %v426
        %v2035 = vunpack.c.h.b16 %v426
        %v2036 = vunpack.c.l.b16 %v427
        %v2037 = vunpack.c.h.b16 %v427
        %v2038 = vunpack.c.l.b16 %v428
        %v2039 = vunpack.c.h.b16 %v428
        %v2040 = vunpack.c.l.b16 %v429
        %v2041 = vunpack.c.h.b16 %v429
        %v2042 = vunpack.c.l.b16 %v430
        %v2043 = vunpack.c.h.b16 %v430
        %v2044 = vunpack.c.l.b16 %v431
        %v2045 = vunpack.c.h.b16 %v431
        %v2046 = vunpack.c.l.b16 %v432
        %v2047 = vunpack.c.h.b16 %v432
        %v2048 = vunpack.c.l.b16 %v433
        %v2049 = vunpack.c.h.b16 %v433
        %v2050 = vunpack.c.l.b16 %v434
        %v2051 = vunpack.c.h.b16 %v434
        %v2052 = vunpack.c.l.b16 %v435
        %v2053 = vunpack.c.h.b16 %v435
        %v2054 = vunpack.c.l.b16 %v436
        %v2055 = vunpack.c.h.b16 %v436
        %v2056 = vunpack.c.l.b16 %v437
        %v2057 = vunpack.c.h.b16 %v437
        %v2058 = vunpack.c.l.b16 %v438
        %v2059 = vunpack.c.h.b16 %v438
        %v2060 = vunpack.c.l.b16 %v439
        %v2061 = vunpack.c.h.b16 %v439
        %v2062 = vunpack.c.l.b16 %v440
        %v2063 = vunpack.c.h.b16 %v440
        %v2064 = vunpack.c.l.b16 %v441
        %v2065 = vunpack.c.h.b16 %v441
        %v2066 = vunpack.c.l.b16 %v442
        %v2067 = vunpack.c.h.b16 %v442
        %v2068 = vunpack.c.l.b16 %v443
        %v2069 = vunpack.c.h.b16 %v443
        %v2070 = vunpack.c.l.b16 %v444
        %v2071 = vunpack.c.h.b16 %v444
        %v2072 = vunpack.c.l.b16 %v445
        %v2073 = vunpack.c.h.b16 %v445
        %v2074 = vunpack.c.l.b16 %v446
        %v2075 = vunpack.c.h.b16 %v446
        %v2076 = vunpack.c.l.b16 %v447
        %v2077 = vunpack.c.h.b16 %v447
        %v2078 = vunpack.c.l.b16 %v448
        %v2079 = vunpack.c.h.b16 %v448
        %v2080 = vunpack.c.l.b16 %v449
        %v2081 = vunpack.c.h.b16 %v449
        %v2082 = vunpack.c.l.b16 %v450
        %v2083 = vunpack.c.h.b16 %v450
        %v2084 = vunpack.c.l.b16 %v451
        %v2085 = vunpack.c.h.b16 %v451
        %v2086 = vunpack.c.l.b16 %v452
        %v2087 = vunpack.c.h.b16 %v452
        %v2088 = vunpack.c.l.b16 %v453
        %v2089 = vunpack.c.h.b16 %v453
        %v2090 = vunpack.c.l.b16 %v454
        %v2091 = vunpack.c.h.b16 %v454
        %v2092 = vunpack.c.l.b16 %v455
        %v2093 = vunpack.c.h.b16 %v455
        %v2094 = vunpack.c.l.b16 %v456
        %v2095 = vunpack.c.h.b16 %v456
        %v2096 = vunpack.c.l.b16 %v457
        %v2097 = vunpack.c.h.b16 %v457
        %v2098 = vunpack.c.l.b16 %v458
        %v2099 = vunpack.c.h.b16 %v458
        %v2100 = vunpack.c.l.b16 %v459
        %v2101 = vunpack.c.h.b16 %v459
        %v2102 = vunpack.c.l.b16 %v460
        %v2103 = vunpack.c.h.b16 %v460
        %v2104 = vunpack.c.l.b16 %v461
        %v2105 = vunpack.c.h.b16 %v461
        %v2106 = vunpack.c.l.b16 %v462
        %v2107 = vunpack.c.h.b16 %v462
        %v2108 = vunpack.c.l.b16 %v463
        %v2109 = vunpack.c.h.b16 %v463
        %v2110 = vunpack.c.l.b16 %v464
        %v2111 = vunpack.c.h.b16 %v464
        %v2112 = vunpack.c.l.b16 %v465
        %v2113 = vunpack.c.h.b16 %v465
        %v2114 = vunpack.c.l.b16 %v466
        %v2115 = vunpack.c.h.b16 %v466
        %v2116 = vunpack.c.l.b16 %v467
        %v2117 = vunpack.c.h.b16 %v467
        %v2118 = vunpack.c.l.b16 %v468
        %v2119 = vunpack.c.h.b16 %v468
        %v2120 = vunpack.c.l.b16 %v469
        %v2121 = vunpack.c.h.b16 %v469
        %v2122 = vunpack.c.l.b16 %v470
        %v2123 = vunpack.c.h.b16 %v470
        %v2124 = vunpack.c.l.b16 %v471
        %v2125 = vunpack.c.h.b16 %v471
        %v2126 = vunpack.c.l.b16 %v472
        %v2127 = vunpack.c.h.b16 %v472
        %v2128 = vunpack.c.l.b16 %v473
        %v2129 = vunpack.c.h.b16 %v473
        %v2130 = vunpack.c.l.b16 %v474
        %v2131 = vunpack.c.h.b16 %v474
        %v2132 = vunpack.c.l.b16 %v475
        %v2133 = vunpack.c.h.b16 %v475
        %v2134 = vunpack.c.l.b16 %v476
        %v2135 = vunpack.c.h.b16 %v476
        %v2136 = vunpack.c.l.b16 %v477
        %v2137 = vunpack.c.h.b16 %v477
        %v2138 = vunpack.c.l.b16 %v478
        %v2139 = vunpack.c.h.b16 %v478
        %v2140 = vunpack.c.l.b16 %v479
        %v2141 = vunpack.c.h.b16 %v479
        %v2142 = vunpack.c.l.b16 %v480
        %v2143 = vunpack.c.h.b16 %v480
        %v2144 = vunpack.c.l.b16 %v481
        %v2145 = vunpack.c.h.b16 %v481
        %v2146 = vunpack.c.l.b16 %v482
        %v2147 = vunpack.c.h.b16 %v482
        %v2148 = vunpack.c.l.b16 %v483
        %v2149 = vunpack.c.h.b16 %v483
        %v2150 = vunpack.c.l.b16 %v484
        %v2151 = vunpack.c.h.b16 %v484
        %v2152 = vunpack.c.l.b16 %v485
        %v2153 = vunpack.c.h.b16 %v485
        %v2154 = vunpack.c.l.b16 %v486
        %v2155 = vunpack.c.h.b16 %v486
        %v2156 = vunpack.c.l.b16 %v487
        %v2157 = vunpack.c.h.b16 %v487
        %v2158 = vunpack.c.l.b16 %v488
        %v2159 = vunpack.c.h.b16 %v488
        %v2160 = vunpack.c.l.b16 %v489
        %v2161 = vunpack.c.h.b16 %v489
        %v2162 = vunpack.c.l.b16 %v490
        %v2163 = vunpack.c.h.b16 %v490
        %v2164 = vunpack.c.l.b16 %v491
        %v2165 = vunpack.c.h.b16 %v491
        %v2166 = vunpack.c.l.b16 %v492
        %v2167 = vunpack.c.h.b16 %v492
        %v2168 = vunpack.c.l.b16 %v493
        %v2169 = vunpack.c.h.b16 %v493
        %v2170 = vunpack.c.l.b16 %v494
        %v2171 = vunpack.c.h.b16 %v494
        %v2172 = vunpack.c.l.b16 %v495
        %v2173 = vunpack.c.h.b16 %v495
        %v2174 = vunpack.c.l.b16 %v496
        %v2175 = vunpack.c.h.b16 %v496
        %v2176 = vunpack.c.l.b16 %v497
        %v2177 = vunpack.c.h.b16 %v497
        %v2178 = vunpack.c.l.b16 %v498
        %v2179 = vunpack.c.h.b16 %v498
        %v2180 = vunpack.c.l.b16 %v499
        %v2181 = vunpack.c.h.b16 %v499
        %v2182 = vunpack.c.l.b16 %v500
        %v2183 = vunpack.c.h.b16 %v500
        %v2184 = vunpack.c.l.b16 %v501
        %v2185 = vunpack.c.h.b16 %v501
        %v2186 = vunpack.c.l.b16 %v502
        %v2187 = vunpack.c.h.b16 %v502
        %v2188 = vunpack.c.l.b16 %v503
        %v2189 = vunpack.c.h.b16 %v503
        %v2190 = vunpack.c.l.b16 %v504
        %v2191 = vunpack.c.h.b16 %v504
        %v2192 = vunpack.c.l.b16 %v505
        %v2193 = vunpack.c.h.b16 %v505
        %v2194 = vunpack.c.l.b16 %v506
        %v2195 = vunpack.c.h.b16 %v506
        %v2196 = vunpack.c.l.b16 %v507
        %v2197 = vunpack.c.h.b16 %v507
        %v2198 = vunpack.c.l.b16 %v508
        %v2199 = vunpack.c.h.b16 %v508
        %v2200 = vunpack.c.l.b16 %v509
        %v2201 = vunpack.c.h.b16 %v509
        %v2202 = vunpack.c.l.b16 %v510
        %v2203 = vunpack.c.h.b16 %v510
        %v2204 = vunpack.c.l.b16 %v511
        %v2205 = vunpack.c.h.b16 %v511
        %v2206 = vunpack.c.l.b16 %v512
        %v2207 = vunpack.c.h.b16 %v512
        %v2208 = vunpack.c.l.b16 %v513
        %v2209 = vunpack.c.h.b16 %v513
        %v2210 = vunpack.c.l.b16 %v514
        %v2211 = vunpack.c.h.b16 %v514
        %v2212 = vunpack.c.l.b16 %v515
        %v2213 = vunpack.c.h.b16 %v515
        %v2214 = vunpack.c.l.b16 %v516
        %v2215 = vunpack.c.h.b16 %v516
        %v2216 = vunpack.c.l.b16 %v517
        %v2217 = vunpack.c.h.b16 %v517
        %v2218 = vunpack.c.l.b16 %v518
        %v2219 = vunpack.c.h.b16 %v518
        %v2220 = vunpack.c.l.b16 %v519
        %v2221 = vunpack.c.h.b16 %v519
        %v2222 = vunpack.c.l.b16 %v520
        %v2223 = vunpack.c.h.b16 %v520
        %v2224 = vunpack.c.l.b16 %v521
        %v2225 = vunpack.c.h.b16 %v521
        %v2226 = vunpack.c.l.b16 %v522
        %v2227 = vunpack.c.h.b16 %v522
        %v2228 = vunpack.c.l.b16 %v523
        %v2229 = vunpack.c.h.b16 %v523
        %v2230 = vunpack.c.l.b16 %v524
        %v2231 = vunpack.c.h.b16 %v524
        %v2232 = vunpack.c.l.b16 %v525
        %v2233 = vunpack.c.h.b16 %v525
        %v2234 = vunpack.c.l.b16 %v526
        %v2235 = vunpack.c.h.b16 %v526
        %v2236 = vunpack.c.l.b16 %v527
        %v2237 = vunpack.c.h.b16 %v527
        %v2238 = vunpack.c.l.b16 %v528
        %v2239 = vunpack.c.h.b16 %v528
        %v2240 = vunpack.c.l.b16 %v529
        %v2241 = vunpack.c.h.b16 %v529
        %v2242 = vunpack.c.l.b16 %v530
        %v2243 = vunpack.c.h.b16 %v530
        %v2244 = vunpack.c.l.b16 %v531
        %v2245 = vunpack.c.h.b16 %v531
        %v2246 = vunpack.c.l.b16 %v532
        %v2247 = vunpack.c.h.b16 %v532
        %v2248 = vunpack.c.l.b16 %v533
        %v2249 = vunpack.c.h.b16 %v533
        %v2250 = vunpack.c.l.b16 %v534
        %v2251 = vunpack.c.h.b16 %v534
        %v2252 = vunpack.c.l.b16 %v535
        %v2253 = vunpack.c.h.b16 %v535
        %v2254 = vunpack.c.l.b16 %v536
        %v2255 = vunpack.c.h.b16 %v536
        %v2256 = vunpack.c.l.b16 %v537
        %v2257 = vunpack.c.h.b16 %v537
        %v2258 = vunpack.c.l.b16 %v538
        %v2259 = vunpack.c.h.b16 %v538
        %v2260 = vunpack.c.l.b16 %v539
        %v2261 = vunpack.c.h.b16 %v539
        %v2262 = vunpack.c.l.b16 %v540
        %v2263 = vunpack.c.h.b16 %v540
        %v2264 = vunpack.c.l.b16 %v541
        %v2265 = vunpack.c.h.b16 %v541
        %v2266 = vunpack.c.l.b16 %v542
        %v2267 = vunpack.c.h.b16 %v542
        %v2268 = vunpack.c.l.b16 %v543
        %v2269 = vunpack.c.h.b16 %v543
        %v2270 = vunpack.c.l.b16 %v544
        %v2271 = vunpack.c.h.b16 %v544
        %v2272 = vunpack.c.l.b16 %v545
        %v2273 = vunpack.c.h.b16 %v545
        %v2274 = vunpack.c.l.b16 %v546
        %v2275 = vunpack.c.h.b16 %v546
        %v2276 = vunpack.c.l.b16 %v547
        %v2277 = vunpack.c.h.b16 %v547
        %v2278 = vunpack.c.l.b16 %v548
        %v2279 = vunpack.c.h.b16 %v548
        %v2280 = vunpack.c.l.b16 %v549
        %v2281 = vunpack.c.h.b16 %v549
        %v2282 = vunpack.c.l.b16 %v550
        %v2283 = vunpack.c.h.b16 %v550
        %v2284 = vunpack.c.l.b16 %v551
        %v2285 = vunpack.c.h.b16 %v551
        %v2286 = vunpack.c.l.b16 %v552
        %v2287 = vunpack.c.h.b16 %v552
        %v2288 = vunpack.c.l.b16 %v553
        %v2289 = vunpack.c.h.b16 %v553
        %v2290 = vunpack.c.l.b16 %v554
        %v2291 = vunpack.c.h.b16 %v554
        %v2292 = vunpack.c.l.b16 %v555
        %v2293 = vunpack.c.h.b16 %v555
        %v2294 = vunpack.c.l.b16 %v556
        %v2295 = vunpack.c.h.b16 %v556
        %v2296 = vunpack.c.l.b16 %v557
        %v2297 = vunpack.c.h.b16 %v557
        %v2298 = vunpack.c.l.b16 %v558
        %v2299 = vunpack.c.h.b16 %v558
        %v2300 = vunpack.c.l.b16 %v559
        %v2301 = vunpack.c.h.b16 %v559
        %v2302 = vunpack.c.l.b16 %v560
        %v2303 = vunpack.c.h.b16 %v560
        %v2304 = vunpack.c.l.b16 %v561
        %v2305 = vunpack.c.h.b16 %v561
        %v2306 = vunpack.c.l.b16 %v562
        %v2307 = vunpack.c.h.b16 %v562
        %v2308 = vunpack.c.l.b16 %v563
        %v2309 = vunpack.c.h.b16 %v563
        %v2310 = vunpack.c.l.b16 %v564
        %v2311 = vunpack.c.h.b16 %v564
        %v2312 = vunpack.c.l.b16 %v565
        %v2313 = vunpack.c.h.b16 %v565
        %v2314 = vunpack.c.l.b16 %v566
        %v2315 = vunpack.c.h.b16 %v566
        %v2316 = vunpack.c.l.b16 %v567
        %v2317 = vunpack.c.h.b16 %v567
        %v2318 = vunpack.c.l.b16 %v568
        %v2319 = vunpack.c.h.b16 %v568
        %v2320 = vunpack.c.l.b16 %v569
        %v2321 = vunpack.c.h.b16 %v569
        %v2322 = vunpack.c.l.b16 %v570
        %v2323 = vunpack.c.h.b16 %v570
        %v2324 = vunpack.c.l.b16 %v571
        %v2325 = vunpack.c.h.b16 %v571
        %v2326 = vunpack.c.l.b16 %v572
        %v2327 = vunpack.c.h.b16 %v572
        %v2328 = vunpack.c.l.b16 %v573
        %v2329 = vunpack.c.h.b16 %v573
        %v2330 = vunpack.c.l.b16 %v574
        %v2331 = vunpack.c.h.b16 %v574
        %v2332 = vunpack.c.l.b16 %v575
        %v2333 = vunpack.c.h.b16 %v575
        %v2334 = vunpack.c.l.b16 %v576
        %v2335 = vunpack.c.h.b16 %v576
        %v2336 = vunpack.c.l.b16 %v577
        %v2337 = vunpack.c.h.b16 %v577
        %v2338 = vunpack.c.l.b16 %v578
        %v2339 = vunpack.c.h.b16 %v578
        %v2340 = vunpack.c.l.b16 %v579
        %v2341 = vunpack.c.h.b16 %v579
        %v2342 = vunpack.c.l.b16 %v580
        %v2343 = vunpack.c.h.b16 %v580
        %v2344 = vunpack.c.l.b16 %v581
        %v2345 = vunpack.c.h.b16 %v581
        %v2346 = vunpack.c.l.b16 %v582
        %v2347 = vunpack.c.h.b16 %v582
        %v2348 = vunpack.c.l.b16 %v583
        %v2349 = vunpack.c.h.b16 %v583
        %v2350 = vunpack.c.l.b16 %v584
        %v2351 = vunpack.c.h.b16 %v584
        %v2352 = vunpack.c.l.b16 %v585
        %v2353 = vunpack.c.h.b16 %v585
        %v2354 = vunpack.c.l.b16 %v586
        %v2355 = vunpack.c.h.b16 %v586
        %v2356 = vunpack.c.l.b16 %v587
        %v2357 = vunpack.c.h.b16 %v587
        %v2358 = vunpack.c.l.b16 %v588
        %v2359 = vunpack.c.h.b16 %v588
        %v2360 = vunpack.c.l.b16 %v589
        %v2361 = vunpack.c.h.b16 %v589
        %v2362 = vunpack.c.l.b16 %v590
        %v2363 = vunpack.c.h.b16 %v590
        %v2364 = vunpack.c.l.b16 %v591
        %v2365 = vunpack.c.h.b16 %v591
        %v2366 = vunpack.c.l.b16 %v592
        %v2367 = vunpack.c.h.b16 %v592
        %v2368 = vunpack.c.l.b16 %v593
        %v2369 = vunpack.c.h.b16 %v593
        %v2370 = vunpack.c.l.b16 %v594
        %v2371 = vunpack.c.h.b16 %v594
        %v2372 = vunpack.c.l.b16 %v595
        %v2373 = vunpack.c.h.b16 %v595
        %v2374 = vunpack.c.l.b16 %v596
        %v2375 = vunpack.c.h.b16 %v596
        %v2376 = vunpack.c.l.b16 %v597
        %v2377 = vunpack.c.h.b16 %v597
        %v2378 = vunpack.c.l.b16 %v598
        %v2379 = vunpack.c.h.b16 %v598
        %v2380 = vunpack.c.l.b16 %v599
        %v2381 = vunpack.c.h.b16 %v599
        %v2382 = vunpack.c.l.b16 %v600
        %v2383 = vunpack.c.h.b16 %v600
        %v2384 = vunpack.c.l.b16 %v601
        %v2385 = vunpack.c.h.b16 %v601
        %v2386 = vunpack.c.l.b16 %v602
        %v2387 = vunpack.c.h.b16 %v602
        %v2388 = vunpack.c.l.b16 %v603
        %v2389 = vunpack.c.h.b16 %v603
        %v2390 = vunpack.c.l.b16 %v604
        %v2391 = vunpack.c.h.b16 %v604
        %v2392 = vunpack.c.l.b16 %v605
        %v2393 = vunpack.c.h.b16 %v605
        %v2394 = vunpack.c.l.b16 %v606
        %v2395 = vunpack.c.h.b16 %v606
        %v2396 = vunpack.c.l.b16 %v607
        %v2397 = vunpack.c.h.b16 %v607
        %v2398 = vunpack.c.l.b16 %v608
        %v2399 = vunpack.c.h.b16 %v608
        %v2400 = vunpack.c.l.b16 %v609
        %v2401 = vunpack.c.h.b16 %v609
        %v2402 = vunpack.c.l.b16 %v610
        %v2403 = vunpack.c.h.b16 %v610
        %v2404 = vunpack.c.l.b16 %v611
        %v2405 = vunpack.c.h.b16 %v611
        %v2406 = vunpack.c.l.b16 %v612
        %v2407 = vunpack.c.h.b16 %v612
        %v2408 = vunpack.c.l.b16 %v613
        %v2409 = vunpack.c.h.b16 %v613
        %v2410 = vunpack.c.l.b16 %v614
        %v2411 = vunpack.c.h.b16 %v614
        %v2412 = vunpack.c.l.b16 %v615
        %v2413 = vunpack.c.h.b16 %v615
        %v2414 = vunpack.c.l.b16 %v616
        %v2415 = vunpack.c.h.b16 %v616
        %v2416 = vunpack.c.l.b16 %v617
        %v2417 = vunpack.c.h.b16 %v617
        %v2418 = vunpack.c.l.b16 %v618
        %v2419 = vunpack.c.h.b16 %v618
        %v2420 = vunpack.c.l.b16 %v619
        %v2421 = vunpack.c.h.b16 %v619
        %v2422 = vunpack.c.l.b16 %v620
        %v2423 = vunpack.c.h.b16 %v620
        %v2424 = vunpack.c.l.b16 %v621
        %v2425 = vunpack.c.h.b16 %v621
        %v2426 = vunpack.c.l.b16 %v622
        %v2427 = vunpack.c.h.b16 %v622
        %v2428 = vunpack.c.l.b16 %v623
        %v2429 = vunpack.c.h.b16 %v623
        %v2430 = vunpack.c.l.b16 %v624
        %v2431 = vunpack.c.h.b16 %v624
        %v2432 = vunpack.c.l.b16 %v625
        %v2433 = vunpack.c.h.b16 %v625
        %v2434 = vunpack.c.l.b16 %v626
        %v2435 = vunpack.c.h.b16 %v626
        %v2436 = vunpack.c.l.b16 %v627
        %v2437 = vunpack.c.h.b16 %v627
        %v2438 = vunpack.c.l.b16 %v628
        %v2439 = vunpack.c.h.b16 %v628
        %v2440 = vunpack.c.l.b16 %v629
        %v2441 = vunpack.c.h.b16 %v629
        %v2442 = vunpack.c.l.b16 %v630
        %v2443 = vunpack.c.h.b16 %v630
        %v2444 = vunpack.c.l.b16 %v631
        %v2445 = vunpack.c.h.b16 %v631
        %v2446 = vunpack.c.l.b16 %v632
        %v2447 = vunpack.c.h.b16 %v632
        %v2448 = vunpack.c.l.b16 %v633
        %v2449 = vunpack.c.h.b16 %v633
        %v2450 = vunpack.c.l.b16 %v634
        %v2451 = vunpack.c.h.b16 %v634
        %v2452 = vunpack.c.l.b16 %v635
        %v2453 = vunpack.c.h.b16 %v635
        %v2454 = vunpack.c.l.b16 %v636
        %v2455 = vunpack.c.h.b16 %v636
        %v2456 = vunpack.c.l.b16 %v637
        %v2457 = vunpack.c.h.b16 %v637
        %v2458 = vunpack.c.l.b16 %v638
        %v2459 = vunpack.c.h.b16 %v638
        %v2460 = vunpack.c.l.b16 %v639
        %v2461 = vunpack.c.h.b16 %v639
        %v2462 = vunpack.c.l.b16 %v640
        %v2463 = vunpack.c.h.b16 %v640
        %v2464 = vunpack.c.l.b16 %v641
        %v2465 = vunpack.c.h.b16 %v641
        %v2466 = vunpack.c.l.b16 %v642
        %v2467 = vunpack.c.h.b16 %v642
        %v2468 = vunpack.c.l.b16 %v643
        %v2469 = vunpack.c.h.b16 %v643
        %v2470 = vunpack.c.l.b16 %v644
        %v2471 = vunpack.c.h.b16 %v644
        %v2472 = vunpack.c.l.b16 %v645
        %v2473 = vunpack.c.h.b16 %v645
        %v2474 = vunpack.c.l.b16 %v646
        %v2475 = vunpack.c.h.b16 %v646
        %v2476 = vunpack.c.l.b16 %v647
        %v2477 = vunpack.c.h.b16 %v647
        %v2478 = vunpack.c.l.b16 %v648
        %v2479 = vunpack.c.h.b16 %v648
        %v2480 = vunpack.c.l.b16 %v649
        %v2481 = vunpack.c.h.b16 %v649
        %v2482 = vunpack.c.l.b16 %v650
        %v2483 = vunpack.c.h.b16 %v650
        %v2484 = vunpack.c.l.b16 %v651
        %v2485 = vunpack.c.h.b16 %v651
        %v2486 = vunpack.c.l.b16 %v652
        %v2487 = vunpack.c.h.b16 %v652
        %v2488 = vunpack.c.l.b16 %v653
        %v2489 = vunpack.c.h.b16 %v653
        %v2490 = vunpack.c.l.b16 %v654
        %v2491 = vunpack.c.h.b16 %v654
        %v2492 = vunpack.c.l.b16 %v655
        %v2493 = vunpack.c.h.b16 %v655
        %v2494 = vunpack.c.l.b16 %v656
        %v2495 = vunpack.c.h.b16 %v656
        %v2496 = vunpack.c.l.b16 %v657
        %v2497 = vunpack.c.h.b16 %v657
        %v2498 = vunpack.c.l.b16 %v658
        %v2499 = vunpack.c.h.b16 %v658
        %v2500 = vunpack.c.l.b16 %v659
        %v2501 = vunpack.c.h.b16 %v659
        %v2502 = vunpack.c.l.b16 %v660
        %v2503 = vunpack.c.h.b16 %v660
        %v2504 = vunpack.c.l.b16 %v661
        %v2505 = vunpack.c.h.b16 %v661
        %v2506 = vunpack.c.l.b16 %v662
        %v2507 = vunpack.c.h.b16 %v662
        %v2508 = vunpack.c.l.b16 %v663
        %v2509 = vunpack.c.h.b16 %v663
        %v2510 = vunpack.c.l.b16 %v664
        %v2511 = vunpack.c.h.b16 %v664
        %v2512 = vunpack.c.l.b16 %v665
        %v2513 = vunpack.c.h.b16 %v665
        %v2514 = vunpack.c.l.b16 %v666
        %v2515 = vunpack.c.h.b16 %v666
        %v2516 = vunpack.c.l.b16 %v667
        %v2517 = vunpack.c.h.b16 %v667
        %v2518 = vunpack.c.l.b16 %v668
        %v2519 = vunpack.c.h.b16 %v668
        %v2520 = vunpack.c.l.b16 %v669
        %v2521 = vunpack.c.h.b16 %v669
        %v2522 = vunpack.c.l.b16 %v670
        %v2523 = vunpack.c.h.b16 %v670
        %v2524 = vunpack.c.l.b16 %v671
        %v2525 = vunpack.c.h.b16 %v671
        %v2526 = vunpack.c.l.b16 %v672
        %v2527 = vunpack.c.h.b16 %v672
        %v2528 = vunpack.c.l.b16 %v673
        %v2529 = vunpack.c.h.b16 %v673
        %v2530 = vunpack.c.l.b16 %v674
        %v2531 = vunpack.c.h.b16 %v674
        %v2532 = vunpack.c.l.b16 %v675
        %v2533 = vunpack.c.h.b16 %v675
        %v2534 = vunpack.c.l.b16 %v676
        %v2535 = vunpack.c.h.b16 %v676
        %v2536 = vunpack.c.l.b16 %v677
        %v2537 = vunpack.c.h.b16 %v677
        %v2538 = vunpack.c.l.b16 %v678
        %v2539 = vunpack.c.h.b16 %v678
        %v2540 = vunpack.c.l.b16 %v679
        %v2541 = vunpack.c.h.b16 %v679
        %v2542 = vunpack.c.l.b16 %v680
        %v2543 = vunpack.c.h.b16 %v680
        %v2544 = vunpack.c.l.b16 %v681
        %v2545 = vunpack.c.h.b16 %v681
        %v2546 = vunpack.c.l.b16 %v682
        %v2547 = vunpack.c.h.b16 %v682
        %v2548 = vunpack.c.l.b16 %v683
        %v2549 = vunpack.c.h.b16 %v683
        %v2550 = vunpack.c.l.b16 %v684
        %v2551 = vunpack.c.h.b16 %v684
        %v2552 = vunpack.c.l.b16 %v685
        %v2553 = vunpack.c.h.b16 %v685
        %v2554 = vunpack.c.l.b16 %v686
        %v2555 = vunpack.c.h.b16 %v686
        %v2556 = vunpack.c.l.b16 %v687
        %v2557 = vunpack.c.h.b16 %v687
        %v2558 = vunpack.c.l.b16 %v688
        %v2559 = vunpack.c.h.b16 %v688
        %v2560 = vunpack.c.l.b16 %v689
        %v2561 = vunpack.c.h.b16 %v689
        %v2562 = vunpack.c.l.b16 %v690
        %v2563 = vunpack.c.h.b16 %v690
        %v2564 = vunpack.c.l.b16 %v691
        %v2565 = vunpack.c.h.b16 %v691
        %v2566 = vunpack.c.l.b16 %v692
        %v2567 = vunpack.c.h.b16 %v692
        %v2568 = vunpack.c.l.b16 %v693
        %v2569 = vunpack.c.h.b16 %v693
        %v2570 = vunpack.c.l.b16 %v694
        %v2571 = vunpack.c.h.b16 %v694
        %v2572 = vunpack.c.l.b16 %v695
        %v2573 = vunpack.c.h.b16 %v695
        %v2574 = vunpack.c.l.b16 %v696
        %v2575 = vunpack.c.h.b16 %v696
        %v2576 = vunpack.c.l.b16 %v697
        %v2577 = vunpack.c.h.b16 %v697
        %v2578 = vunpack.c.l.b16 %v698
        %v2579 = vunpack.c.h.b16 %v698
        %v2580 = vunpack.c.l.b16 %v699
        %v2581 = vunpack.c.h.b16 %v699
        %v2582 = vunpack.c.l.b16 %v700
        %v2583 = vunpack.c.h.b16 %v700
        %v2584 = vunpack.c.l.b16 %v701
        %v2585 = vunpack.c.h.b16 %v701
        %v2586 = vunpack.c.l.b16 %v702
        %v2587 = vunpack.c.h.b16 %v702
        %v2588 = vunpack.c.l.b16 %v703
        %v2589 = vunpack.c.h.b16 %v703
        %v2590 = vunpack.c.l.b16 %v704
        %v2591 = vunpack.c.h.b16 %v704
        %v2592 = vunpack.c.l.b16 %v705
        %v2593 = vunpack.c.h.b16 %v705
        %v2594 = vunpack.c.l.b16 %v706
        %v2595 = vunpack.c.h.b16 %v706
        %v2596 = vunpack.c.l.b16 %v707
        %v2597 = vunpack.c.h.b16 %v707
        %v2598 = vunpack.c.l.b16 %v708
        %v2599 = vunpack.c.h.b16 %v708
        %v2600 = vunpack.c.l.b16 %v709
        %v2601 = vunpack.c.h.b16 %v709
        %v2602 = vunpack.c.l.b16 %v710
        %v2603 = vunpack.c.h.b16 %v710
        %v2604 = vunpack.c.l.b16 %v711
        %v2605 = vunpack.c.h.b16 %v711
        %v2606 = vunpack.c.l.b16 %v712
        %v2607 = vunpack.c.h.b16 %v712
        %v2608 = vunpack.c.l.b16 %v713
        %v2609 = vunpack.c.h.b16 %v713
        %v2610 = vunpack.c.l.b16 %v714
        %v2611 = vunpack.c.h.b16 %v714
        %v2612 = vunpack.c.l.b16 %v715
        %v2613 = vunpack.c.h.b16 %v715
        %v2614 = vunpack.c.l.b16 %v716
        %v2615 = vunpack.c.h.b16 %v716
        %v2616 = vunpack.c.l.b16 %v717
        %v2617 = vunpack.c.h.b16 %v717
        %v2618 = vunpack.c.l.b16 %v718
        %v2619 = vunpack.c.h.b16 %v718
        %v2620 = vunpack.c.l.b16 %v719
        %v2621 = vunpack.c.h.b16 %v719
        %v2622 = vunpack.c.l.b16 %v720
        %v2623 = vunpack.c.h.b16 %v720
        %v2624 = vunpack.c.l.b16 %v721
        %v2625 = vunpack.c.h.b16 %v721
        %v2626 = vunpack.c.l.b16 %v722
        %v2627 = vunpack.c.h.b16 %v722
        %v2628 = vunpack.c.l.b16 %v723
        %v2629 = vunpack.c.h.b16 %v723
        %v2630 = vunpack.c.l.b16 %v724
        %v2631 = vunpack.c.h.b16 %v724
        %v2632 = vunpack.c.l.b16 %v725
        %v2633 = vunpack.c.h.b16 %v725
        %v2634 = vunpack.c.l.b16 %v726
        %v2635 = vunpack.c.h.b16 %v726
        %v2636 = vunpack.c.l.b16 %v727
        %v2637 = vunpack.c.h.b16 %v727
        %v2638 = vunpack.c.l.b16 %v728
        %v2639 = vunpack.c.h.b16 %v728
        %v2640 = vunpack.c.l.b16 %v729
        %v2641 = vunpack.c.h.b16 %v729
        %v2642 = vunpack.c.l.b16 %v730
        %v2643 = vunpack.c.h.b16 %v730
        %v2644 = vunpack.c.l.b16 %v731
        %v2645 = vunpack.c.h.b16 %v731
        %v2646 = vunpack.c.l.b16 %v732
        %v2647 = vunpack.c.h.b16 %v732
        %v2648 = vunpack.c.l.b16 %v733
        %v2649 = vunpack.c.h.b16 %v733
        %v2650 = vunpack.c.l.b16 %v734
        %v2651 = vunpack.c.h.b16 %v734
        %v2652 = vunpack.c.l.b16 %v735
        %v2653 = vunpack.c.h.b16 %v735
        %v2654 = vunpack.c.l.b16 %v736
        %v2655 = vunpack.c.h.b16 %v736
        %v2656 = vunpack.c.l.b16 %v737
        %v2657 = vunpack.c.h.b16 %v737
        %v2658 = vunpack.c.l.b16 %v738
        %v2659 = vunpack.c.h.b16 %v738
        %v2660 = vunpack.c.l.b16 %v739
        %v2661 = vunpack.c.h.b16 %v739
        %v2662 = vunpack.c.l.b16 %v740
        %v2663 = vunpack.c.h.b16 %v740
        %v2664 = vunpack.c.l.b16 %v741
        %v2665 = vunpack.c.h.b16 %v741
        %v2666 = vunpack.c.l.b16 %v742
        %v2667 = vunpack.c.h.b16 %v742
        %v2668 = vunpack.c.l.b16 %v743
        %v2669 = vunpack.c.h.b16 %v743
        %v2670 = vunpack.c.l.b16 %v744
        %v2671 = vunpack.c.h.b16 %v744
        %v2672 = vunpack.c.l.b16 %v745
        %v2673 = vunpack.c.h.b16 %v745
        %v2674 = vunpack.c.l.b16 %v746
        %v2675 = vunpack.c.h.b16 %v746
        %v2676 = vunpack.c.l.b16 %v747
        %v2677 = vunpack.c.h.b16 %v747
        %v2678 = vunpack.c.l.b16 %v748
        %v2679 = vunpack.c.h.b16 %v748
        %v2680 = vunpack.c.l.b16 %v749
        %v2681 = vunpack.c.h.b16 %v749
        %v2682 = vunpack.c.l.b16 %v750
        %v2683 = vunpack.c.h.b16 %v750
        %v2684 = vunpack.c.l.b16 %v751
        %v2685 = vunpack.c.h.b16 %v751
        %v2686 = vunpack.c.l.b16 %v752
        %v2687 = vunpack.c.h.b16 %v752
        %v2688 = vunpack.c.l.b16 %v753
        %v2689 = vunpack.c.h.b16 %v753
        %v2690 = vunpack.c.l.b16 %v754
        %v2691 = vunpack.c.h.b16 %v754
        %v2692 = vunpack.c.l.b16 %v755
        %v2693 = vunpack.c.h.b16 %v755
        %v2694 = vunpack.c.l.b16 %v756
        %v2695 = vunpack.c.h.b16 %v756
        %v2696 = vunpack.c.l.b16 %v757
        %v2697 = vunpack.c.h.b16 %v757
        %v2698 = vunpack.c.l.b16 %v758
        %v2699 = vunpack.c.h.b16 %v758
        %v2700 = vunpack.c.l.b16 %v759
        %v2701 = vunpack.c.h.b16 %v759
        %v2702 = vunpack.c.l.b16 %v760
        %v2703 = vunpack.c.h.b16 %v760
        %v2704 = vunpack.c.l.b16 %v761
        %v2705 = vunpack.c.h.b16 %v761
        %v2706 = vunpack.c.l.b16 %v762
        %v2707 = vunpack.c.h.b16 %v762
        %v2708 = vunpack.c.l.b16 %v763
        %v2709 = vunpack.c.h.b16 %v763
        %v2710 = vunpack.c.l.b16 %v764
        %v2711 = vunpack.c.h.b16 %v764
        %v2712 = vunpack.c.l.b16 %v765
        %v2713 = vunpack.c.h.b16 %v765
        %v2714 = vunpack.c.l.b16 %v766
        %v2715 = vunpack.c.h.b16 %v766
        %v2716 = vunpack.c.l.b16 %v767
        %v2717 = vunpack.c.h.b16 %v767
        %v2718 = vunpack.c.l.b16 %v768
        %v2719 = vunpack.c.h.b16 %v768
        %v2720 = vunpack.c.l.b16 %v769
        %v2721 = vunpack.c.h.b16 %v769
        %v2722 = vunpack.c.l.b16 %v770
        %v2723 = vunpack.c.h.b16 %v770
        %v2724 = vunpack.c.l.b16 %v771
        %v2725 = vunpack.c.h.b16 %v771
        %v2726 = vunpack.c.l.b16 %v772
        %v2727 = vunpack.c.h.b16 %v772
        %v2728 = vunpack.c.l.b16 %v773
        %v2729 = vunpack.c.h.b16 %v773
        %v2730 = vunpack.c.l.b16 %v774
        %v2731 = vunpack.c.h.b16 %v774
        %v2732 = vunpack.c.l.b16 %v775
        %v2733 = vunpack.c.h.b16 %v775
        %v2734 = vunpack.c.l.b16 %v776
        %v2735 = vunpack.c.h.b16 %v776
        %v2736 = vunpack.c.l.b16 %v777
        %v2737 = vunpack.c.h.b16 %v777
        %v2738 = vunpack.c.l.b16 %v778
        %v2739 = vunpack.c.h.b16 %v778
        %v2740 = vunpack.c.l.b16 %v779
        %v2741 = vunpack.c.h.b16 %v779
        %v2742 = vunpack.c.l.b16 %v780
        %v2743 = vunpack.c.h.b16 %v780
        %v2744 = vunpack.c.l.b16 %v781
        %v2745 = vunpack.c.h.b16 %v781
        %v2746 = vunpack.c.l.b16 %v782
        %v2747 = vunpack.c.h.b16 %v782
        %v2748 = vunpack.c.l.b16 %v783
        %v2749 = vunpack.c.h.b16 %v783
        %v2750 = vunpack.c.l.b16 %v784
        %v2751 = vunpack.c.h.b16 %v784
        %v2752 = vunpack.c.l.b16 %v785
        %v2753 = vunpack.c.h.b16 %v785
        %v2754 = vunpack.c.l.b16 %v786
        %v2755 = vunpack.c.h.b16 %v786
        %v2756 = vunpack.c.l.b16 %v787
        %v2757 = vunpack.c.h.b16 %v787
        %v2758 = vunpack.c.l.b16 %v788
        %v2759 = vunpack.c.h.b16 %v788
        %v2760 = vunpack.c.l.b16 %v789
        %v2761 = vunpack.c.h.b16 %v789
        %v2762 = vunpack.c.l.b16 %v790
        %v2763 = vunpack.c.h.b16 %v790
        %v2764 = vunpack.c.l.b16 %v791
        %v2765 = vunpack.c.h.b16 %v791
        %v2766 = vunpack.c.l.b16 %v792
        %v2767 = vunpack.c.h.b16 %v792
        %v2768 = vunpack.c.l.b16 %v793
        %v2769 = vunpack.c.h.b16 %v793
        %v2770 = vunpack.c.l.b16 %v794
        %v2771 = vunpack.c.h.b16 %v794
        %v2772 = vunpack.c.l.b16 %v795
        %v2773 = vunpack.c.h.b16 %v795
        %v2774 = vunpack.c.l.b16 %v796
        %v2775 = vunpack.c.h.b16 %v796
        %v2776 = vunpack.c.l.b16 %v797
        %v2777 = vunpack.c.h.b16 %v797
        %v2778 = vunpack.c.l.b16 %v798
        %v2779 = vunpack.c.h.b16 %v798
        %v2780 = vunpack.c.l.b16 %v799
        %v2781 = vunpack.c.h.b16 %v799
        %v2782 = vunpack.c.l.b16 %v800
        %v2783 = vunpack.c.h.b16 %v800
        %v2784 = vunpack.c.l.b16 %v801
        %v2785 = vunpack.c.h.b16 %v801
        %v2786 = vunpack.c.l.b16 %v802
        %v2787 = vunpack.c.h.b16 %v802
        %v2788 = vunpack.c.l.b16 %v803
        %v2789 = vunpack.c.h.b16 %v803
        %v2790 = vunpack.c.l.b16 %v804
        %v2791 = vunpack.c.h.b16 %v804
        %v2792 = vunpack.c.l.b16 %v805
        %v2793 = vunpack.c.h.b16 %v805
        %v2794 = vunpack.c.l.b16 %v806
        %v2795 = vunpack.c.h.b16 %v806
        %v2796 = vunpack.c.l.b16 %v807
        %v2797 = vunpack.c.h.b16 %v807
        %v2798 = vunpack.c.l.b16 %v808
        %v2799 = vunpack.c.h.b16 %v808
        %v2800 = vunpack.c.l.b16 %v809
        %v2801 = vunpack.c.h.b16 %v809
        %v2802 = vunpack.c.l.b16 %v810
        %v2803 = vunpack.c.h.b16 %v810
        %v2804 = vunpack.c.l.b16 %v811
        %v2805 = vunpack.c.h.b16 %v811
        %v2806 = vunpack.c.l.b16 %v812
        %v2807 = vunpack.c.h.b16 %v812
        %v2808 = vunpack.c.l.b16 %v813
        %v2809 = vunpack.c.h.b16 %v813
        %v2810 = vunpack.c.l.b16 %v814
        %v2811 = vunpack.c.h.b16 %v814
        %v2812 = vunpack.c.l.b16 %v815
        %v2813 = vunpack.c.h.b16 %v815
        %v2814 = vunpack.c.l.b16 %v816
        %v2815 = vunpack.c.h.b16 %v816
        %v2816 = vunpack.c.l.b16 %v817
        %v2817 = vunpack.c.h.b16 %v817
        %v2818 = vunpack.c.l.b16 %v818
        %v2819 = vunpack.c.h.b16 %v818
        %v2820 = vunpack.c.l.b16 %v819
        %v2821 = vunpack.c.h.b16 %v819
        %v2822 = vunpack.c.l.b16 %v820
        %v2823 = vunpack.c.h.b16 %v820
        %v2824 = vunpack.c.l.b16 %v821
        %v2825 = vunpack.c.h.b16 %v821
        %v2826 = vunpack.c.l.b16 %v822
        %v2827 = vunpack.c.h.b16 %v822
        %v2828 = vunpack.c.l.b16 %v823
        %v2829 = vunpack.c.h.b16 %v823
        %v2830 = vunpack.c.l.b16 %v824
        %v2831 = vunpack.c.h.b16 %v824
        %v2832 = vunpack.c.l.b16 %v825
        %v2833 = vunpack.c.h.b16 %v825
        %v2834 = vunpack.c.l.b16 %v826
        %v2835 = vunpack.c.h.b16 %v826
        %v2836 = vunpack.c.l.b16 %v827
        %v2837 = vunpack.c.h.b16 %v827
        %v2838 = vunpack.c.l.b16 %v828
        %v2839 = vunpack.c.h.b16 %v828
        %v2840 = vunpack.c.l.b16 %v829
        %v2841 = vunpack.c.h.b16 %v829
        %v2842 = vunpack.c.l.b16 %v830
        %v2843 = vunpack.c.h.b16 %v830
        %v2844 = vunpack.c.l.b16 %v831
        %v2845 = vunpack.c.h.b16 %v831
        %v2846 = vunpack.c.l.b16 %v832
        %v2847 = vunpack.c.h.b16 %v832
        %v2848 = vunpack.c.l.b16 %v833
        %v2849 = vunpack.c.h.b16 %v833
        %v2850 = vunpack.c.l.b16 %v834
        %v2851 = vunpack.c.h.b16 %v834
        %v2852 = vunpack.c.l.b16 %v835
        %v2853 = vunpack.c.h.b16 %v835
        %v2854 = vunpack.c.l.b16 %v836
        %v2855 = vunpack.c.h.b16 %v836
        %v2856 = vunpack.c.l.b16 %v837
        %v2857 = vunpack.c.h.b16 %v837
        %v2858 = vunpack.c.l.b16 %v838
        %v2859 = vunpack.c.h.b16 %v838
        %v2860 = vunpack.c.l.b16 %v839
        %v2861 = vunpack.c.h.b16 %v839
        %v2862 = vunpack.c.l.b16 %v840
        %v2863 = vunpack.c.h.b16 %v840
        %v2864 = vunpack.c.l.b16 %v841
        %v2865 = vunpack.c.h.b16 %v841
        %v2866 = vunpack.c.l.b16 %v842
        %v2867 = vunpack.c.h.b16 %v842
        %v2868 = vunpack.c.l.b16 %v843
        %v2869 = vunpack.c.h.b16 %v843
        %v2870 = vunpack.c.l.b16 %v844
        %v2871 = vunpack.c.h.b16 %v844
        %v2872 = vunpack.c.l.b16 %v845
        %v2873 = vunpack.c.h.b16 %v845
        %v2874 = vunpack.c.l.b16 %v846
        %v2875 = vunpack.c.h.b16 %v846
        %v2876 = vunpack.c.l.b16 %v847
        %v2877 = vunpack.c.h.b16 %v847
        %v2878 = vunpack.c.l.b16 %v848
        %v2879 = vunpack.c.h.b16 %v848
        %v2880 = vunpack.c.l.b16 %v849
        %v2881 = vunpack.c.h.b16 %v849
        %v2882 = vunpack.c.l.b16 %v850
        %v2883 = vunpack.c.h.b16 %v850
        %v2884 = vunpack.c.l.b16 %v851
        %v2885 = vunpack.c.h.b16 %v851
        %v2886 = vunpack.c.l.b16 %v852
        %v2887 = vunpack.c.h.b16 %v852
        %v2888 = vunpack.c.l.b16 %v853
        %v2889 = vunpack.c.h.b16 %v853
        %v2890 = vunpack.c.l.b16 %v854
        %v2891 = vunpack.c.h.b16 %v854
        %v2892 = vunpack.c.l.b16 %v855
        %v2893 = vunpack.c.h.b16 %v855
        %v2894 = vunpack.c.l.b16 %v856
        %v2895 = vunpack.c.h.b16 %v856
        %v2896 = vunpack.c.l.b16 %v857
        %v2897 = vunpack.c.h.b16 %v857
        %v2898 = vunpack.c.l.b16 %v858
        %v2899 = vunpack.c.h.b16 %v858
        %v2900 = vunpack.c.l.b16 %v859
        %v2901 = vunpack.c.h.b16 %v859
        %v2902 = vunpack.c.l.b16 %v860
        %v2903 = vunpack.c.h.b16 %v860
        %v2904 = vunpack.c.l.b16 %v861
        %v2905 = vunpack.c.h.b16 %v861
        %v2906 = vunpack.c.l.b16 %v862
        %v2907 = vunpack.c.h.b16 %v862
        %v2908 = vunpack.c.l.b16 %v863
        %v2909 = vunpack.c.h.b16 %v863
        %v2910 = vunpack.c.l.b16 %v864
        %v2911 = vunpack.c.h.b16 %v864
        %v2912 = vunpack.c.l.b16 %v865
        %v2913 = vunpack.c.h.b16 %v865
        %v2914 = vunpack.c.l.b16 %v866
        %v2915 = vunpack.c.h.b16 %v866
        %v2916 = vunpack.c.l.b16 %v867
        %v2917 = vunpack.c.h.b16 %v867
        %v2918 = vunpack.c.l.b16 %v868
        %v2919 = vunpack.c.h.b16 %v868
        %v2920 = vunpack.c.l.b16 %v869
        %v2921 = vunpack.c.h.b16 %v869
        %v2922 = vunpack.c.l.b16 %v870
        %v2923 = vunpack.c.h.b16 %v870
        %v2924 = vunpack.c.l.b16 %v871
        %v2925 = vunpack.c.h.b16 %v871
        %v2926 = vunpack.c.l.b16 %v872
        %v2927 = vunpack.c.h.b16 %v872
        %v2928 = vunpack.c.l.b16 %v873
        %v2929 = vunpack.c.h.b16 %v873
        %v2930 = vunpack.c.l.b16 %v874
        %v2931 = vunpack.c.h.b16 %v874
        %v2932 = vunpack.c.l.b16 %v875
        %v2933 = vunpack.c.h.b16 %v875
        %v2934 = vunpack.c.l.b16 %v876
        %v2935 = vunpack.c.h.b16 %v876
        %v2936 = vunpack.c.l.b16 %v877
        %v2937 = vunpack.c.h.b16 %v877
        %v2938 = vunpack.c.l.b16 %v878
        %v2939 = vunpack.c.h.b16 %v878
        %v2940 = vunpack.c.l.b16 %v879
        %v2941 = vunpack.c.h.b16 %v879
        %v2942 = vunpack.c.l.b16 %v880
        %v2943 = vunpack.c.h.b16 %v880
        %v2944 = vunpack.c.l.b16 %v881
        %v2945 = vunpack.c.h.b16 %v881
        %v2946 = vunpack.c.l.b16 %v882
        %v2947 = vunpack.c.h.b16 %v882
        %v2948 = vunpack.c.l.b16 %v883
        %v2949 = vunpack.c.h.b16 %v883
        %v2950 = vunpack.c.l.b16 %v884
        %v2951 = vunpack.c.h.b16 %v884
        %v2952 = vunpack.c.l.b16 %v885
        %v2953 = vunpack.c.h.b16 %v885
        %v2954 = vunpack.c.l.b16 %v886
        %v2955 = vunpack.c.h.b16 %v886
        %v2956 = vunpack.c.l.b16 %v887
        %v2957 = vunpack.c.h.b16 %v887
        %v2958 = vunpack.c.l.b16 %v888
        %v2959 = vunpack.c.h.b16 %v888
        %v2960 = vunpack.c.l.b16 %v889
        %v2961 = vunpack.c.h.b16 %v889
        %v2962 = vunpack.c.l.b16 %v890
        %v2963 = vunpack.c.h.b16 %v890
        %v2964 = vunpack.c.l.b16 %v891
        %v2965 = vunpack.c.h.b16 %v891
        %v2966 = vunpack.c.l.b16 %v892
        %v2967 = vunpack.c.h.b16 %v892
        %v2968 = vunpack.c.l.b16 %v893
        %v2969 = vunpack.c.h.b16 %v893
        %v2970 = vunpack.c.l.b16 %v894
        %v2971 = vunpack.c.h.b16 %v894
        %v2972 = vunpack.c.l.b16 %v895
        %v2973 = vunpack.c.h.b16 %v895
        %v2974 = vunpack.c.l.b16 %v896
        %v2975 = vunpack.c.h.b16 %v896
        %v2976 = vunpack.c.l.b16 %v897
        %v2977 = vunpack.c.h.b16 %v897
        %v2978 = vunpack.c.l.b16 %v898
        %v2979 = vunpack.c.h.b16 %v898
        %v2980 = vunpack.c.l.b16 %v899
        %v2981 = vunpack.c.h.b16 %v899
        %v2982 = vunpack.c.l.b16 %v900
        %v2983 = vunpack.c.h.b16 %v900
        %v2984 = vunpack.c.l.b16 %v901
        %v2985 = vunpack.c.h.b16 %v901
        %v2986 = vunpack.c.l.b16 %v902
        %v2987 = vunpack.c.h.b16 %v902
        %v2988 = vunpack.c.l.b16 %v903
        %v2989 = vunpack.c.h.b16 %v903
        %v2990 = vunpack.c.l.b16 %v904
        %v2991 = vunpack.c.h.b16 %v904
        %v2992 = vunpack.c.l.b16 %v905
        %v2993 = vunpack.c.h.b16 %v905
        %v2994 = vunpack.c.l.b16 %v906
        %v2995 = vunpack.c.h.b16 %v906
        %v2996 = vunpack.c.l.b16 %v907
        %v2997 = vunpack.c.h.b16 %v907
        %v2998 = vunpack.c.l.b16 %v908
        %v2999 = vunpack.c.h.b16 %v908
        %v3000 = vunpack.c.l.b16 %v909
        %v3001 = vunpack.c.h.b16 %v909
        %v3002 = vunpack.c.l.b16 %v910
        %v3003 = vunpack.c.h.b16 %v910
        %v3004 = vunpack.c.l.b16 %v911
        %v3005 = vunpack.c.h.b16 %v911
        %v3006 = vunpack.c.l.b16 %v912
        %v3007 = vunpack.c.h.b16 %v912
        %v3008 = vunpack.c.l.b16 %v913
        %v3009 = vunpack.c.h.b16 %v913
        %v3010 = vunpack.c.l.b16 %v914
        %v3011 = vunpack.c.h.b16 %v914
        %v3012 = vunpack.c.l.b16 %v915
        %v3013 = vunpack.c.h.b16 %v915
        %v3014 = vunpack.c.l.b16 %v916
        %v3015 = vunpack.c.h.b16 %v916
        %v3016 = vunpack.c.l.b16 %v917
        %v3017 = vunpack.c.h.b16 %v917
        %v3018 = vunpack.c.l.b16 %v918
        %v3019 = vunpack.c.h.b16 %v918
        %v3020 = vunpack.c.l.b16 %v919
        %v3021 = vunpack.c.h.b16 %v919
        %v3022 = vunpack.c.l.b16 %v920
        %v3023 = vunpack.c.h.b16 %v920
        %v3024 = vunpack.c.l.b16 %v921
        %v3025 = vunpack.c.h.b16 %v921
        %v3026 = vunpack.c.l.b16 %v922
        %v3027 = vunpack.c.h.b16 %v922
        %v3028 = vunpack.c.l.b16 %v923
        %v3029 = vunpack.c.h.b16 %v923
        %v3030 = vunpack.c.l.b16 %v924
        %v3031 = vunpack.c.h.b16 %v924
        %v3032 = vunpack.c.l.b16 %v925
        %v3033 = vunpack.c.h.b16 %v925
        %v3034 = vunpack.c.l.b16 %v926
        %v3035 = vunpack.c.h.b16 %v926
        %v3036 = vunpack.c.l.b16 %v927
        %v3037 = vunpack.c.h.b16 %v927
        %v3038 = vunpack.c.l.b16 %v928
        %v3039 = vunpack.c.h.b16 %v928
        %v3040 = vunpack.c.l.b16 %v929
        %v3041 = vunpack.c.h.b16 %v929
        %v3042 = vunpack.c.l.b16 %v930
        %v3043 = vunpack.c.h.b16 %v930
        %v3044 = vunpack.c.l.b16 %v931
        %v3045 = vunpack.c.h.b16 %v931
        %v3046 = vunpack.c.l.b16 %v932
        %v3047 = vunpack.c.h.b16 %v932
        %v3048 = vunpack.c.l.b16 %v933
        %v3049 = vunpack.c.h.b16 %v933
        %v3050 = vunpack.c.l.b16 %v934
        %v3051 = vunpack.c.h.b16 %v934
        %v3052 = vunpack.c.l.b16 %v935
        %v3053 = vunpack.c.h.b16 %v935
        %v3054 = vunpack.c.l.b16 %v936
        %v3055 = vunpack.c.h.b16 %v936
        %v3056 = vunpack.c.l.b16 %v937
        %v3057 = vunpack.c.h.b16 %v937
        %v3058 = vunpack.c.l.b16 %v938
        %v3059 = vunpack.c.h.b16 %v938
        %v3060 = vunpack.c.l.b16 %v939
        %v3061 = vunpack.c.h.b16 %v939
        %v3062 = vunpack.c.l.b16 %v940
        %v3063 = vunpack.c.h.b16 %v940
        %v3064 = vunpack.c.l.b16 %v941
        %v3065 = vunpack.c.h.b16 %v941
        %v3066 = vunpack.c.l.b16 %v942
        %v3067 = vunpack.c.h.b16 %v942
        %v3068 = vunpack.c.l.b16 %v943
        %v3069 = vunpack.c.h.b16 %v943
        %v3070 = vunpack.c.l.b16 %v944
        %v3071 = vunpack.c.h.b16 %v944
        %v3072 = vunpack.c.l.b16 %v945
        %v3073 = vunpack.c.h.b16 %v945
        %v3074 = vunpack.c.l.b16 %v946
        %v3075 = vunpack.c.h.b16 %v946
        %v3076 = vunpack.c.l.b16 %v947
        %v3077 = vunpack.c.h.b16 %v947
        %v3078 = vunpack.c.l.b16 %v948
        %v3079 = vunpack.c.h.b16 %v948
        %v3080 = vunpack.c.l.b16 %v949
        %v3081 = vunpack.c.h.b16 %v949
        %v3082 = vunpack.c.l.b16 %v950
        %v3083 = vunpack.c.h.b16 %v950
        %v3084 = vunpack.c.l.b16 %v951
        %v3085 = vunpack.c.h.b16 %v951
        %v3086 = vunpack.c.l.b16 %v952
        %v3087 = vunpack.c.h.b16 %v952
        %v3088 = vunpack.c.l.b16 %v953
        %v3089 = vunpack.c.h.b16 %v953
        %v3090 = vunpack.c.l.b16 %v954
        %v3091 = vunpack.c.h.b16 %v954
        %v3092 = vunpack.c.l.b16 %v955
        %v3093 = vunpack.c.h.b16 %v955
        %v3094 = vunpack.c.l.b16 %v956
        %v3095 = vunpack.c.h.b16 %v956
        %v3096 = vunpack.c.l.b16 %v957
        %v3097 = vunpack.c.h.b16 %v957
        %v3098 = vunpack.c.l.b16 %v958
        %v3099 = vunpack.c.h.b16 %v958
        %v3100 = vunpack.c.l.b16 %v959
        %v3101 = vunpack.c.h.b16 %v959
        %v3102 = vunpack.c.l.b16 %v960
        %v3103 = vunpack.c.h.b16 %v960
        %v3104 = vunpack.c.l.b16 %v961
        %v3105 = vunpack.c.h.b16 %v961
        %v3106 = vunpack.c.l.b16 %v962
        %v3107 = vunpack.c.h.b16 %v962
        %v3108 = vunpack.c.l.b16 %v963
        %v3109 = vunpack.c.h.b16 %v963
        %v3110 = vunpack.c.l.b16 %v964
        %v3111 = vunpack.c.h.b16 %v964
        %v3112 = vunpack.c.l.b16 %v965
        %v3113 = vunpack.c.h.b16 %v965
        %v3114 = vunpack.c.l.b16 %v966
        %v3115 = vunpack.c.h.b16 %v966
        %v3116 = vunpack.c.l.b16 %v967
        %v3117 = vunpack.c.h.b16 %v967
        %v3118 = vunpack.c.l.b16 %v968
        %v3119 = vunpack.c.h.b16 %v968
        %v3120 = vunpack.c.l.b16 %v969
        %v3121 = vunpack.c.h.b16 %v969
        %v3122 = vunpack.c.l.b16 %v970
        %v3123 = vunpack.c.h.b16 %v970
        %v3124 = vunpack.c.l.b16 %v971
        %v3125 = vunpack.c.h.b16 %v971
        %v3126 = vunpack.c.l.b16 %v972
        %v3127 = vunpack.c.h.b16 %v972
        %v3128 = vunpack.c.l.b16 %v973
        %v3129 = vunpack.c.h.b16 %v973
        %v3130 = vunpack.c.l.b16 %v974
        %v3131 = vunpack.c.h.b16 %v974
        %v3132 = vunpack.c.l.b16 %v975
        %v3133 = vunpack.c.h.b16 %v975
        %v3134 = vunpack.c.l.b16 %v976
        %v3135 = vunpack.c.h.b16 %v976
        %v3136 = vunpack.c.l.b16 %v977
        %v3137 = vunpack.c.h.b16 %v977
        %v3138 = vunpack.c.l.b16 %v978
        %v3139 = vunpack.c.h.b16 %v978
        %v3140 = vunpack.c.l.b16 %v979
        %v3141 = vunpack.c.h.b16 %v979
        %v3142 = vunpack.c.l.b16 %v980
        %v3143 = vunpack.c.h.b16 %v980
        %v3144 = vunpack.c.l.b16 %v981
        %v3145 = vunpack.c.h.b16 %v981
        %v3146 = vunpack.c.l.b16 %v982
        %v3147 = vunpack.c.h.b16 %v982
        %v3148 = vunpack.c.l.b16 %v983
        %v3149 = vunpack.c.h.b16 %v983
        %v3150 = vunpack.c.l.b16 %v984
        %v3151 = vunpack.c.h.b16 %v984
        %v3152 = vunpack.c.l.b16 %v985
        %v3153 = vunpack.c.h.b16 %v985
        %v3154 = vunpack.c.l.b16 %v986
        %v3155 = vunpack.c.h.b16 %v986
        %v3156 = vunpack.c.l.b16 %v987
        %v3157 = vunpack.c.h.b16 %v987
        %v3158 = vunpack.c.l.b16 %v988
        %v3159 = vunpack.c.h.b16 %v988
        %v3160 = vunpack.c.l.b16 %v989
        %v3161 = vunpack.c.h.b16 %v989
        %v3162 = vunpack.c.l.b16 %v990
        %v3163 = vunpack.c.h.b16 %v990
        %v3164 = vunpack.c.l.b16 %v991
        %v3165 = vunpack.c.h.b16 %v991
        %v3166 = vunpack.c.l.b16 %v992
        %v3167 = vunpack.c.h.b16 %v992
        %v3168 = vunpack.c.l.b16 %v993
        %v3169 = vunpack.c.h.b16 %v993
        %v3170 = vunpack.c.l.b16 %v994
        %v3171 = vunpack.c.h.b16 %v994
        %v3172 = vunpack.c.l.b16 %v995
        %v3173 = vunpack.c.h.b16 %v995
        %v3174 = vunpack.c.l.b16 %v996
        %v3175 = vunpack.c.h.b16 %v996
        %v3176 = vunpack.c.l.b16 %v997
        %v3177 = vunpack.c.h.b16 %v997
        %v3178 = vunpack.c.l.b16 %v998
        %v3179 = vunpack.c.h.b16 %v998
        %v3180 = vunpack.c.l.b16 %v999
        %v3181 = vunpack.c.h.b16 %v999
        %v3182 = vunpack.c.l.b16 %v1000
        %v3183 = vunpack.c.h.b16 %v1000
        %v3184 = vunpack.c.l.b16 %v1001
        %v3185 = vunpack.c.h.b16 %v1001
        %v3186 = vunpack.c.l.b16 %v1002
        %v3187 = vunpack.c.h.b16 %v1002
        %v3188 = vunpack.c.l.b16 %v1003
        %v3189 = vunpack.c.h.b16 %v1003
        %v3190 = vunpack.c.l.b16 %v1004
        %v3191 = vunpack.c.h.b16 %v1004
        %v3192 = vunpack.c.l.b16 %v1005
        %v3193 = vunpack.c.h.b16 %v1005
        %v3194 = vunpack.c.l.b16 %v1006
        %v3195 = vunpack.c.h.b16 %v1006
        %v3196 = vunpack.c.l.b16 %v1007
        %v3197 = vunpack.c.h.b16 %v1007
        %v3198 = vunpack.c.l.b16 %v1008
        %v3199 = vunpack.c.h.b16 %v1008
        %v3200 = vunpack.c.l.b16 %v1009
        %v3201 = vunpack.c.h.b16 %v1009
        %v3202 = vunpack.c.l.b16 %v1010
        %v3203 = vunpack.c.h.b16 %v1010
        %v3204 = vunpack.c.l.b16 %v1011
        %v3205 = vunpack.c.h.b16 %v1011
        %v3206 = vunpack.c.l.b16 %v1012
        %v3207 = vunpack.c.h.b16 %v1012
        %v3208 = vunpack.c.l.b16 %v1013
        %v3209 = vunpack.c.h.b16 %v1013
        %v3210 = vunpack.c.l.b16 %v1014
        %v3211 = vunpack.c.h.b16 %v1014
        %v3212 = vunpack.c.l.b16 %v1015
        %v3213 = vunpack.c.h.b16 %v1015
        %v3214 = vunpack.c.l.b16 %v1016
        %v3215 = vunpack.c.h.b16 %v1016
        %v3216 = vunpack.c.l.b16 %v1017
        %v3217 = vunpack.c.h.b16 %v1017
        %v3218 = vunpack.c.l.b16 %v1018
        %v3219 = vunpack.c.h.b16 %v1018
        %v3220 = vunpack.c.l.b16 %v1019
        %v3221 = vunpack.c.h.b16 %v1019
        %v3222 = vunpack.c.l.b16 %v1020
        %v3223 = vunpack.c.h.b16 %v1020
        %v3224 = vunpack.c.l.b16 %v1021
        %v3225 = vunpack.c.h.b16 %v1021
        %v3226 = vunpack.c.l.b16 %v1022
        %v3227 = vunpack.c.h.b16 %v1022
        %v3228 = vunpack.c.l.b16 %v1023
        %v3229 = vunpack.c.h.b16 %v1023
        %v3230 = vunpack.c.l.b16 %v1024
        %v3231 = vunpack.c.h.b16 %v1024
        %v3232 = vunpack.c.l.b16 %v1025
        %v3233 = vunpack.c.h.b16 %v1025
        %v3234 = vunpack.c.l.b16 %v1026
        %v3235 = vunpack.c.h.b16 %v1026
        %v3236 = vunpack.c.l.b16 %v1027
        %v3237 = vunpack.c.h.b16 %v1027
        %v3238 = vunpack.c.l.b16 %v1028
        %v3239 = vunpack.c.h.b16 %v1028
        %v3240 = vunpack.c.l.b16 %v1029
        %v3241 = vunpack.c.h.b16 %v1029
        %v3242 = vunpack.c.l.b16 %v1030
        %v3243 = vunpack.c.h.b16 %v1030
        %v3244 = vunpack.c.l.b16 %v1031
        %v3245 = vunpack.c.h.b16 %v1031
        %v3246 = vunpack.c.l.b16 %v1032
        %v3247 = vunpack.c.h.b16 %v1032
        %v3248 = vunpack.c.l.b16 %v1033
        %v3249 = vunpack.c.h.b16 %v1033
        %v3250 = vunpack.c.l.b16 %v1034
        %v3251 = vunpack.c.h.b16 %v1034
        %v3252 = vunpack.c.l.b16 %v1035
        %v3253 = vunpack.c.h.b16 %v1035
        %v3254 = vunpack.c.l.b16 %v1036
        %v3255 = vunpack.c.h.b16 %v1036
        %v3256 = vunpack.c.l.b16 %v1037
        %v3257 = vunpack.c.h.b16 %v1037
        %v3258 = vunpack.c.l.b16 %v1038
        %v3259 = vunpack.c.h.b16 %v1038
        %v3260 = vunpack.c.l.b16 %v1039
        %v3261 = vunpack.c.h.b16 %v1039
        %v3262 = vunpack.c.l.b16 %v1040
        %v3263 = vunpack.c.h.b16 %v1040
        %v3264 = vunpack.c.l.b16 %v1041
        %v3265 = vunpack.c.h.b16 %v1041
        %v3266 = vunpack.c.l.b16 %v1042
        %v3267 = vunpack.c.h.b16 %v1042
        %v3268 = vunpack.c.l.b16 %v1043
        %v3269 = vunpack.c.h.b16 %v1043
        %v3270 = vunpack.c.l.b16 %v1044
        %v3271 = vunpack.c.h.b16 %v1044
        %v3272 = vunpack.c.l.b16 %v1045
        %v3273 = vunpack.c.h.b16 %v1045
        %v3274 = vunpack.c.l.b16 %v1046
        %v3275 = vunpack.c.h.b16 %v1046
        %v3276 = vunpack.c.l.b16 %v1047
        %v3277 = vunpack.c.h.b16 %v1047
        %v3278 = vunpack.c.l.b16 %v1048
        %v3279 = vunpack.c.h.b16 %v1048
        %v3280 = vunpack.c.l.b16 %v1049
        %v3281 = vunpack.c.h.b16 %v1049
        %v3282 = vunpack.c.l.b16 %v1050
        %v3283 = vunpack.c.h.b16 %v1050
        %v3284 = vunpack.c.l.b16 %v1051
        %v3285 = vunpack.c.h.b16 %v1051
        %v3286 = vunpack.c.l.b16 %v1052
        %v3287 = vunpack.c.h.b16 %v1052
        %v3288 = vunpack.c.l.b16 %v1053
        %v3289 = vunpack.c.h.b16 %v1053
        %v3290 = vunpack.c.l.b16 %v1054
        %v3291 = vunpack.c.h.b16 %v1054
        %v3292 = vunpack.c.l.b16 %v1055
        %v3293 = vunpack.c.h.b16 %v1055
        %v3294 = vunpack.c.l.b16 %v1056
        %v3295 = vunpack.c.h.b16 %v1056
        %v3296 = vunpack.c.l.b16 %v1057
        %v3297 = vunpack.c.h.b16 %v1057
        %v3298 = vunpack.c.l.b16 %v1058
        %v3299 = vunpack.c.h.b16 %v1058
        %v3300 = vunpack.c.l.b16 %v1059
        %v3301 = vunpack.c.h.b16 %v1059
        %v3302 = vunpack.c.l.b16 %v1060
        %v3303 = vunpack.c.h.b16 %v1060
        %v3304 = vunpack.c.l.b16 %v1061
        %v3305 = vunpack.c.h.b16 %v1061
        %v3306 = vunpack.c.l.b16 %v1062
        %v3307 = vunpack.c.h.b16 %v1062
        %v3308 = vunpack.c.l.b16 %v1063
        %v3309 = vunpack.c.h.b16 %v1063
        %v3310 = vunpack.c.l.b16 %v1064
        %v3311 = vunpack.c.h.b16 %v1064
        %v3312 = vunpack.c.l.b16 %v1065
        %v3313 = vunpack.c.h.b16 %v1065
        %v3314 = vunpack.c.l.b16 %v1066
        %v3315 = vunpack.c.h.b16 %v1066
        %v3316 = vunpack.c.l.b16 %v1067
        %v3317 = vunpack.c.h.b16 %v1067
        %v3318 = vunpack.c.l.b16 %v1068
        %v3319 = vunpack.c.h.b16 %v1068
        %v3320 = vunpack.c.l.b16 %v1069
        %v3321 = vunpack.c.h.b16 %v1069
        %v3322 = vunpack.c.l.b16 %v1070
        %v3323 = vunpack.c.h.b16 %v1070
        %v3324 = vunpack.c.l.b16 %v1071
        %v3325 = vunpack.c.h.b16 %v1071
        %v3326 = vunpack.c.l.b16 %v1072
        %v3327 = vunpack.c.h.b16 %v1072
        %v3328 = vunpack.c.l.b16 %v1073
        %v3329 = vunpack.c.h.b16 %v1073
        %v3330 = vunpack.c.l.b16 %v1074
        %v3331 = vunpack.c.h.b16 %v1074
        %v3332 = vunpack.c.l.b16 %v1075
        %v3333 = vunpack.c.h.b16 %v1075
        %v3334 = vunpack.c.l.b16 %v1076
        %v3335 = vunpack.c.h.b16 %v1076
        %v3336 = vunpack.c.l.b16 %v1077
        %v3337 = vunpack.c.h.b16 %v1077
        %v3338 = vunpack.c.l.b16 %v1078
        %v3339 = vunpack.c.h.b16 %v1078
        %v3340 = vunpack.c.l.b16 %v1079
        %v3341 = vunpack.c.h.b16 %v1079
        %v3342 = vunpack.c.l.b16 %v1080
        %v3343 = vunpack.c.h.b16 %v1080
        %v3344 = vunpack.c.l.b16 %v1081
        %v3345 = vunpack.c.h.b16 %v1081
        %v3346 = vunpack.c.l.b16 %v1082
        %v3347 = vunpack.c.h.b16 %v1082
        %v3348 = vunpack.c.l.b16 %v1083
        %v3349 = vunpack.c.h.b16 %v1083
        %v3350 = vunpack.c.l.b16 %v1084
        %v3351 = vunpack.c.h.b16 %v1084
        %v3352 = vunpack.c.l.b16 %v1085
        %v3353 = vunpack.c.h.b16 %v1085
        %v3354 = vunpack.c.l.b16 %v1086
        %v3355 = vunpack.c.h.b16 %v1086
        %v3356 = vunpack.c.l.b16 %v1087
        %v3357 = vunpack.c.h.b16 %v1087
        %v3358 = vunpack.c.l.b16 %v1088
        %v3359 = vunpack.c.h.b16 %v1088
        %v3360 = vunpack.c.l.b16 %v1089
        %v3361 = vunpack.c.h.b16 %v1089
        %v3362 = vunpack.c.l.b16 %v1090
        %v3363 = vunpack.c.h.b16 %v1090
        %v3364 = vunpack.c.l.b16 %v1091
        %v3365 = vunpack.c.h.b16 %v1091
        %v3366 = vunpack.c.l.b16 %v1092
        %v3367 = vunpack.c.h.b16 %v1092
        %v3368 = vunpack.c.l.b16 %v1093
        %v3369 = vunpack.c.h.b16 %v1093
        %v3370 = vunpack.c.l.b16 %v1094
        %v3371 = vunpack.c.h.b16 %v1094
        %v3372 = vunpack.c.l.b16 %v1095
        %v3373 = vunpack.c.h.b16 %v1095
        %v3374 = vunpack.c.l.b16 %v1096
        %v3375 = vunpack.c.h.b16 %v1096
        %v3376 = vunpack.c.l.b16 %v1097
        %v3377 = vunpack.c.h.b16 %v1097
        %v3378 = vunpack.c.l.b16 %v1098
        %v3379 = vunpack.c.h.b16 %v1098
        %v3380 = vunpack.c.l.b16 %v1099
        %v3381 = vunpack.c.h.b16 %v1099
        %v3382 = vunpack.c.l.b16 %v1100
        %v3383 = vunpack.c.h.b16 %v1100
        %v3384 = vunpack.c.l.b16 %v1101
        %v3385 = vunpack.c.h.b16 %v1101
        %v3386 = vunpack.c.l.b16 %v1102
        %v3387 = vunpack.c.h.b16 %v1102
        %v3388 = vunpack.c.l.b16 %v1103
        %v3389 = vunpack.c.h.b16 %v1103
        %v3390 = vunpack.c.l.b16 %v1104
        %v3391 = vunpack.c.h.b16 %v1104
        %v3392 = vunpack.c.l.b16 %v1105
        %v3393 = vunpack.c.h.b16 %v1105
        %v3394 = vunpack.c.l.b16 %v1106
        %v3395 = vunpack.c.h.b16 %v1106
        %v3396 = vunpack.c.l.b16 %v1107
        %v3397 = vunpack.c.h.b16 %v1107
        %v3398 = vunpack.c.l.b16 %v1108
        %v3399 = vunpack.c.h.b16 %v1108
        %v3400 = vunpack.c.l.b16 %v1109
        %v3401 = vunpack.c.h.b16 %v1109
        %v3402 = vunpack.c.l.b16 %v1110
        %v3403 = vunpack.c.h.b16 %v1110
        %v3404 = vunpack.c.l.b16 %v1111
        %v3405 = vunpack.c.h.b16 %v1111
        %v3406 = vunpack.c.l.b16 %v1112
        %v3407 = vunpack.c.h.b16 %v1112
        %v3408 = vunpack.c.l.b16 %v1113
        %v3409 = vunpack.c.h.b16 %v1113
        %v3410 = vunpack.c.l.b16 %v1114
        %v3411 = vunpack.c.h.b16 %v1114
        %v3412 = vunpack.c.l.b16 %v1115
        %v3413 = vunpack.c.h.b16 %v1115
        %v3414 = vunpack.c.l.b16 %v1116
        %v3415 = vunpack.c.h.b16 %v1116
        %v3416 = vunpack.c.l.b16 %v1117
        %v3417 = vunpack.c.h.b16 %v1117
        %v3418 = vunpack.c.l.b16 %v1118
        %v3419 = vunpack.c.h.b16 %v1118
        %v3420 = vunpack.c.l.b16 %v1119
        %v3421 = vunpack.c.h.b16 %v1119
        %v3422 = vunpack.c.l.b16 %v1120
        %v3423 = vunpack.c.h.b16 %v1120
        %v3424 = vunpack.c.l.b16 %v1121
        %v3425 = vunpack.c.h.b16 %v1121
        %v3426 = vunpack.c.l.b16 %v1122
        %v3427 = vunpack.c.h.b16 %v1122
        %v3428 = vunpack.c.l.b16 %v1123
        %v3429 = vunpack.c.h.b16 %v1123
        %v3430 = vunpack.c.l.b16 %v1124
        %v3431 = vunpack.c.h.b16 %v1124
        %v3432 = vunpack.c.l.b16 %v1125
        %v3433 = vunpack.c.h.b16 %v1125
        %v3434 = vunpack.c.l.b16 %v1126
        %v3435 = vunpack.c.h.b16 %v1126
        %v3436 = vunpack.c.l.b16 %v1127
        %v3437 = vunpack.c.h.b16 %v1127
        %v3438 = vunpack.c.l.b16 %v1128
        %v3439 = vunpack.c.h.b16 %v1128
        %v3440 = vunpack.c.l.b16 %v1129
        %v3441 = vunpack.c.h.b16 %v1129
        %v3442 = vunpack.c.l.b16 %v1130
        %v3443 = vunpack.c.h.b16 %v1130
        %v3444 = vunpack.c.l.b16 %v1131
        %v3445 = vunpack.c.h.b16 %v1131
        %v3446 = vunpack.c.l.b16 %v1132
        %v3447 = vunpack.c.h.b16 %v1132
        %v3448 = vunpack.c.l.b16 %v1133
        %v3449 = vunpack.c.h.b16 %v1133
        %v3450 = vunpack.c.l.b16 %v1134
        %v3451 = vunpack.c.h.b16 %v1134
        %v3452 = vunpack.c.l.b16 %v1135
        %v3453 = vunpack.c.h.b16 %v1135
        %v3454 = vunpack.c.l.b16 %v1136
        %v3455 = vunpack.c.h.b16 %v1136
        %v3456 = vunpack.c.l.b16 %v1137
        %v3457 = vunpack.c.h.b16 %v1137
        %v3458 = vunpack.c.l.b16 %v1138
        %v3459 = vunpack.c.h.b16 %v1138
        %v3460 = vunpack.c.l.b16 %v1139
        %v3461 = vunpack.c.h.b16 %v1139
        %v3462 = vunpack.c.l.b16 %v1140
        %v3463 = vunpack.c.h.b16 %v1140
        %v3464 = vunpack.c.l.b16 %v1141
        %v3465 = vunpack.c.h.b16 %v1141
        %v3466 = vunpack.c.l.b16 %v1142
        %v3467 = vunpack.c.h.b16 %v1142
        %v3468 = vunpack.c.l.b16 %v1143
        %v3469 = vunpack.c.h.b16 %v1143
        %v3470 = vunpack.c.l.b16 %v1144
        %v3471 = vunpack.c.h.b16 %v1144
        %v3472 = vunpack.c.l.b16 %v1145
        %v3473 = vunpack.c.h.b16 %v1145
        %v3474 = vunpack.c.l.b16 %v1146
        %v3475 = vunpack.c.h.b16 %v1146
        %v3476 = vunpack.c.l.b16 %v1147
        %v3477 = vunpack.c.h.b16 %v1147
        %v3478 = vunpack.c.l.b16 %v1148
        %v3479 = vunpack.c.h.b16 %v1148
        %v3480 = vunpack.c.l.b16 %v1149
        %v3481 = vunpack.c.h.b16 %v1149
        %v3482 = vunpack.c.l.b16 %v1150
        %v3483 = vunpack.c.h.b16 %v1150
        %v3484 = vunpack.c.l.b16 %v1151
        %v3485 = vunpack.c.h.b16 %v1151
        %v3486 = vunpack.c.l.b16 %v1152
        %v3487 = vunpack.c.h.b16 %v1152
        %v3488 = vunpack.c.l.b16 %v1153
        %v3489 = vunpack.c.h.b16 %v1153
        %v3490 = vunpack.c.l.b16 %v1154
        %v3491 = vunpack.c.h.b16 %v1154
        %v3492 = vunpack.c.l.b16 %v1155
        %v3493 = vunpack.c.h.b16 %v1155
        %v3494 = vunpack.c.l.b16 %v1156
        %v3495 = vunpack.c.h.b16 %v1156
        %v3496 = vunpack.c.l.b16 %v1157
        %v3497 = vunpack.c.h.b16 %v1157
        %v3498 = vunpack.c.l.b16 %v1158
        %v3499 = vunpack.c.h.b16 %v1158
        %v3500 = vunpack.c.l.b16 %v1159
        %v3501 = vunpack.c.h.b16 %v1159
        %v3502 = vunpack.c.l.b16 %v1160
        %v3503 = vunpack.c.h.b16 %v1160
        %v3504 = vunpack.c.l.b16 %v1161
        %v3505 = vunpack.c.h.b16 %v1161
        %v3506 = vunpack.c.l.b16 %v1162
        %v3507 = vunpack.c.h.b16 %v1162
        %v3508 = vunpack.c.l.b16 %v1163
        %v3509 = vunpack.c.h.b16 %v1163
        %v3510 = vunpack.c.l.b16 %v1164
        %v3511 = vunpack.c.h.b16 %v1164
        %v3512 = vunpack.c.l.b16 %v1165
        %v3513 = vunpack.c.h.b16 %v1165
        %v3514 = vunpack.c.l.b16 %v1166
        %v3515 = vunpack.c.h.b16 %v1166
        %v3516 = vunpack.c.l.b16 %v1167
        %v3517 = vunpack.c.h.b16 %v1167
        %v3518 = vunpack.c.l.b16 %v1168
        %v3519 = vunpack.c.h.b16 %v1168
        %v3520 = vunpack.c.l.b16 %v1169
        %v3521 = vunpack.c.h.b16 %v1169
        %v3522 = vunpack.c.l.b16 %v1170
        %v3523 = vunpack.c.h.b16 %v1170
        %v3524 = vunpack.c.l.b16 %v1171
        %v3525 = vunpack.c.h.b16 %v1171
        %v3526 = vunpack.c.l.b16 %v1172
        %v3527 = vunpack.c.h.b16 %v1172
        %v3528 = vunpack.c.l.b16 %v1173
        %v3529 = vunpack.c.h.b16 %v1173
        %v3530 = vunpack.c.l.b16 %v1174
        %v3531 = vunpack.c.h.b16 %v1174
        %v3532 = vunpack.c.l.b16 %v1175
        %v3533 = vunpack.c.h.b16 %v1175
        %v3534 = vunpack.c.l.b16 %v1176
        %v3535 = vunpack.c.h.b16 %v1176
        %v3536 = vunpack.c.l.b16 %v1177
        %v3537 = vunpack.c.h.b16 %v1177
        %v3538 = vunpack.c.l.b16 %v1178
        %v3539 = vunpack.c.h.b16 %v1178
        %v3540 = vunpack.c.l.b16 %v1179
        %v3541 = vunpack.c.h.b16 %v1179
        %v3542 = vunpack.c.l.b16 %v1180
        %v3543 = vunpack.c.h.b16 %v1180
        %v3544 = vunpack.c.l.b16 %v1181
        %v3545 = vunpack.c.h.b16 %v1181
        %v3546 = vunpack.c.l.b16 %v1182
        %v3547 = vunpack.c.h.b16 %v1182
        %v3548 = vunpack.c.l.b16 %v1183
        %v3549 = vunpack.c.h.b16 %v1183
        %v3550 = vunpack.c.l.b16 %v1184
        %v3551 = vunpack.c.h.b16 %v1184
        %v3552 = vunpack.c.l.b16 %v1185
        %v3553 = vunpack.c.h.b16 %v1185
        %v3554 = vunpack.c.l.b16 %v1186
        %v3555 = vunpack.c.h.b16 %v1186
        %v3556 = vunpack.c.l.b16 %v1187
        %v3557 = vunpack.c.h.b16 %v1187
        %v3558 = vunpack.c.l.b16 %v1188
        %v3559 = vunpack.c.h.b16 %v1188
        %v3560 = vunpack.c.l.b16 %v1189
        %v3561 = vunpack.c.h.b16 %v1189
        %v3562 = vunpack.c.l.b16 %v1190
        %v3563 = vunpack.c.h.b16 %v1190
        %v3564 = vunpack.c.l.b16 %v1191
        %v3565 = vunpack.c.h.b16 %v1191
        %v3566 = vunpack.c.l.b16 %v1192
        %v3567 = vunpack.c.h.b16 %v1192
        %v3568 = vunpack.c.l.b16 %v1193
        %v3569 = vunpack.c.h.b16 %v1193
        %v3570 = vunpack.c.l.b16 %v1194
        %v3571 = vunpack.c.h.b16 %v1194
        %v3572 = vunpack.c.l.b16 %v1195
        %v3573 = vunpack.c.h.b16 %v1195
        %v3574 = vunpack.c.l.b16 %v1196
        %v3575 = vunpack.c.h.b16 %v1196
        %v3576 = vunpack.c.l.b16 %v1197
        %v3577 = vunpack.c.h.b16 %v1197
        %v3578 = vunpack.c.l.b16 %v1198
        %v3579 = vunpack.c.h.b16 %v1198
        %v3580 = vunpack.c.l.b16 %v1199
        %v3581 = vunpack.c.h.b16 %v1199
        %v3582 = vunpack.c.l.b16 %v1200
        %v3583 = vunpack.c.h.b16 %v1200
        %v3584 = vunpack.c.l.b16 %v1201
        %v3585 = vunpack.c.h.b16 %v1201
        %v3586 = vunpack.c.l.b16 %v1202
        %v3587 = vunpack.c.h.b16 %v1202
        %v3588 = vunpack.c.l.b16 %v1203
        %v3589 = vunpack.c.h.b16 %v1203
        %v3590 = vunpack.c.l.b16 %v1204
        %v3591 = vunpack.c.h.b16 %v1204
        %v3592 = vunpack.c.l.b16 %v1205
        %v3593 = vunpack.c.h.b16 %v1205
        %v3594 = vunpack.c.l.b16 %v1206
        %v3595 = vunpack.c.h.b16 %v1206
        %v3596 = vunpack.c.l.b16 %v1207
        %v3597 = vunpack.c.h.b16 %v1207
        %v3598 = vunpack.c.l.b16 %v1208
        %v3599 = vunpack.c.h.b16 %v1208
        %v3600 = vunpack.c.l.b16 %v1209
        %v3601 = vunpack.c.h.b16 %v1209
        %v3602 = vunpack.c.l.b16 %v1210
        %v3603 = vunpack.c.h.b16 %v1210
        %v3604 = vunpack.c.l.b16 %v1211
        %v3605 = vunpack.c.h.b16 %v1211
        %v3606 = vunpack.c.l.b16 %v1212
        %v3607 = vunpack.c.h.b16 %v1212
        %v3608 = vunpack.c.l.b16 %v1213
        %v3609 = vunpack.c.h.b16 %v1213
        %v3610 = vunpack.c.l.b16 %v1214
        %v3611 = vunpack.c.h.b16 %v1214
        %v3612 = vunpack.c.l.b16 %v1215
        %v3613 = vunpack.c.h.b16 %v1215
        %v3614 = vunpack.c.l.b16 %v1216
        %v3615 = vunpack.c.h.b16 %v1216
        %v3616 = vunpack.c.l.b16 %v1217
        %v3617 = vunpack.c.h.b16 %v1217
        %v3618 = vpack.c.b16 %v2022, %v2018
        %v3619 = vpack.c.b16 %v2023, %v2019
        %v3620 = vpack.c.b16 %v2024, %v2020
        %v3621 = vpack.c.b16 %v2025, %v2021
        %v3622 = vpack.c.b16 %v2030, %v2026
        %v3623 = vpack.c.b16 %v2031, %v2027
        %v3624 = vpack.c.b16 %v2032, %v2028
        %v3625 = vpack.c.b16 %v2033, %v2029
        %v3626 = vpack.c.b16 %v2038, %v2034
        %v3627 = vpack.c.b16 %v2039, %v2035
        %v3628 = vpack.c.b16 %v2040, %v2036
        %v3629 = vpack.c.b16 %v2041, %v2037
        %v3630 = vpack.c.b16 %v2046, %v2042
        %v3631 = vpack.c.b16 %v2047, %v2043
        %v3632 = vpack.c.b16 %v2048, %v2044
        %v3633 = vpack.c.b16 %v2049, %v2045
        %v3634 = vpack.c.b16 %v2054, %v2050
        %v3635 = vpack.c.b16 %v2055, %v2051
        %v3636 = vpack.c.b16 %v2056, %v2052
        %v3637 = vpack.c.b16 %v2057, %v2053
        %v3638 = vpack.c.b16 %v2062, %v2058
        %v3639 = vpack.c.b16 %v2063, %v2059
        %v3640 = vpack.c.b16 %v2064, %v2060
        %v3641 = vpack.c.b16 %v2065, %v2061
        %v3642 = vpack.c.b16 %v2070, %v2066
        %v3643 = vpack.c.b16 %v2071, %v2067
        %v3644 = vpack.c.b16 %v2072, %v2068
        %v3645 = vpack.c.b16 %v2073, %v2069
        %v3646 = vpack.c.b16 %v2078, %v2074
        %v3647 = vpack.c.b16 %v2079, %v2075
        %v3648 = vpack.c.b16 %v2080, %v2076
        %v3649 = vpack.c.b16 %v2081, %v2077
        %v3650 = vpack.c.b16 %v2086, %v2082
        %v3651 = vpack.c.b16 %v2087, %v2083
        %v3652 = vpack.c.b16 %v2088, %v2084
        %v3653 = vpack.c.b16 %v2089, %v2085
        %v3654 = vpack.c.b16 %v2094, %v2090
        %v3655 = vpack.c.b16 %v2095, %v2091
        %v3656 = vpack.c.b16 %v2096, %v2092
        %v3657 = vpack.c.b16 %v2097, %v2093
        %v3658 = vpack.c.b16 %v2102, %v2098
        %v3659 = vpack.c.b16 %v2103, %v2099
        %v3660 = vpack.c.b16 %v2104, %v2100
        %v3661 = vpack.c.b16 %v2105, %v2101
        %v3662 = vpack.c.b16 %v2110, %v2106
        %v3663 = vpack.c.b16 %v2111, %v2107
        %v3664 = vpack.c.b16 %v2112, %v2108
        %v3665 = vpack.c.b16 %v2113, %v2109
        %v3666 = vpack.c.b16 %v2118, %v2114
        %v3667 = vpack.c.b16 %v2119, %v2115
        %v3668 = vpack.c.b16 %v2120, %v2116
        %v3669 = vpack.c.b16 %v2121, %v2117
        %v3670 = vpack.c.b16 %v2126, %v2122
        %v3671 = vpack.c.b16 %v2127, %v2123
        %v3672 = vpack.c.b16 %v2128, %v2124
        %v3673 = vpack.c.b16 %v2129, %v2125
        %v3674 = vpack.c.b16 %v2134, %v2130
        %v3675 = vpack.c.b16 %v2135, %v2131
        %v3676 = vpack.c.b16 %v2136, %v2132
        %v3677 = vpack.c.b16 %v2137, %v2133
        %v3678 = vpack.c.b16 %v2142, %v2138
        %v3679 = vpack.c.b16 %v2143, %v2139
        %v3680 = vpack.c.b16 %v2144, %v2140
        %v3681 = vpack.c.b16 %v2145, %v2141
        %v3682 = vpack.c.b16 %v2150, %v2146
        %v3683 = vpack.c.b16 %v2151, %v2147
        %v3684 = vpack.c.b16 %v2152, %v2148
        %v3685 = vpack.c.b16 %v2153, %v2149
        %v3686 = vpack.c.b16 %v2158, %v2154
        %v3687 = vpack.c.b16 %v2159, %v2155
        %v3688 = vpack.c.b16 %v2160, %v2156
        %v3689 = vpack.c.b16 %v2161, %v2157
        %v3690 = vpack.c.b16 %v2166, %v2162
        %v3691 = vpack.c.b16 %v2167, %v2163
        %v3692 = vpack.c.b16 %v2168, %v2164
        %v3693 = vpack.c.b16 %v2169, %v2165
        %v3694 = vpack.c.b16 %v2174, %v2170
        %v3695 = vpack.c.b16 %v2175, %v2171
        %v3696 = vpack.c.b16 %v2176, %v2172
        %v3697 = vpack.c.b16 %v2177, %v2173
        %v3698 = vpack.c.b16 %v2182, %v2178
        %v3699 = vpack.c.b16 %v2183, %v2179
        %v3700 = vpack.c.b16 %v2184, %v2180
        %v3701 = vpack.c.b16 %v2185, %v2181
        %v3702 = vpack.c.b16 %v2190, %v2186
        %v3703 = vpack.c.b16 %v2191, %v2187
        %v3704 = vpack.c.b16 %v2192, %v2188
        %v3705 = vpack.c.b16 %v2193, %v2189
        %v3706 = vpack.c.b16 %v2198, %v2194
        %v3707 = vpack.c.b16 %v2199, %v2195
        %v3708 = vpack.c.b16 %v2200, %v2196
        %v3709 = vpack.c.b16 %v2201, %v2197
        %v3710 = vpack.c.b16 %v2206, %v2202
        %v3711 = vpack.c.b16 %v2207, %v2203
        %v3712 = vpack.c.b16 %v2208, %v2204
        %v3713 = vpack.c.b16 %v2209, %v2205
        %v3714 = vpack.c.b16 %v2214, %v2210
        %v3715 = vpack.c.b16 %v2215, %v2211
        %v3716 = vpack.c.b16 %v2216, %v2212
        %v3717 = vpack.c.b16 %v2217, %v2213
        %v3718 = vpack.c.b16 %v2222, %v2218
        %v3719 = vpack.c.b16 %v2223, %v2219
        %v3720 = vpack.c.b16 %v2224, %v2220
        %v3721 = vpack.c.b16 %v2225, %v2221
        %v3722 = vpack.c.b16 %v2230, %v2226
        %v3723 = vpack.c.b16 %v2231, %v2227
        %v3724 = vpack.c.b16 %v2232, %v2228
        %v3725 = vpack.c.b16 %v2233, %v2229
        %v3726 = vpack.c.b16 %v2238, %v2234
        %v3727 = vpack.c.b16 %v2239, %v2235
        %v3728 = vpack.c.b16 %v2240, %v2236
        %v3729 = vpack.c.b16 %v2241, %v2237
        %v3730 = vpack.c.b16 %v2246, %v2242
        %v3731 = vpack.c.b16 %v2247, %v2243
        %v3732 = vpack.c.b16 %v2248, %v2244
        %v3733 = vpack.c.b16 %v2249, %v2245
        %v3734 = vpack.c.b16 %v2254, %v2250
        %v3735 = vpack.c.b16 %v2255, %v2251
        %v3736 = vpack.c.b16 %v2256, %v2252
        %v3737 = vpack.c.b16 %v2257, %v2253
        %v3738 = vpack.c.b16 %v2262, %v2258
        %v3739 = vpack.c.b16 %v2263, %v2259
        %v3740 = vpack.c.b16 %v2264, %v2260
        %v3741 = vpack.c.b16 %v2265, %v2261
        %v3742 = vpack.c.b16 %v2270, %v2266
        %v3743 = vpack.c.b16 %v2271, %v2267
        %v3744 = vpack.c.b16 %v2272, %v2268
        %v3745 = vpack.c.b16 %v2273, %v2269
        %v3746 = vpack.c.b16 %v2278, %v2274
        %v3747 = vpack.c.b16 %v2279, %v2275
        %v3748 = vpack.c.b16 %v2280, %v2276
        %v3749 = vpack.c.b16 %v2281, %v2277
        %v3750 = vpack.c.b16 %v2286, %v2282
        %v3751 = vpack.c.b16 %v2287, %v2283
        %v3752 = vpack.c.b16 %v2288, %v2284
        %v3753 = vpack.c.b16 %v2289, %v2285
        %v3754 = vpack.c.b16 %v2294, %v2290
        %v3755 = vpack.c.b16 %v2295, %v2291
        %v3756 = vpack.c.b16 %v2296, %v2292
        %v3757 = vpack.c.b16 %v2297, %v2293
        %v3758 = vpack.c.b16 %v2302, %v2298
        %v3759 = vpack.c.b16 %v2303, %v2299
        %v3760 = vpack.c.b16 %v2304, %v2300
        %v3761 = vpack.c.b16 %v2305, %v2301
        %v3762 = vpack.c.b16 %v2310, %v2306
        %v3763 = vpack.c.b16 %v2311, %v2307
        %v3764 = vpack.c.b16 %v2312, %v2308
        %v3765 = vpack.c.b16 %v2313, %v2309
        %v3766 = vpack.c.b16 %v2318, %v2314
        %v3767 = vpack.c.b16 %v2319, %v2315
        %v3768 = vpack.c.b16 %v2320, %v2316
        %v3769 = vpack.c.b16 %v2321, %v2317
        %v3770 = vpack.c.b16 %v2326, %v2322
        %v3771 = vpack.c.b16 %v2327, %v2323
        %v3772 = vpack.c.b16 %v2328, %v2324
        %v3773 = vpack.c.b16 %v2329, %v2325
        %v3774 = vpack.c.b16 %v2334, %v2330
        %v3775 = vpack.c.b16 %v2335, %v2331
        %v3776 = vpack.c.b16 %v2336, %v2332
        %v3777 = vpack.c.b16 %v2337, %v2333
        %v3778 = vpack.c.b16 %v2342, %v2338
        %v3779 = vpack.c.b16 %v2343, %v2339
        %v3780 = vpack.c.b16 %v2344, %v2340
        %v3781 = vpack.c.b16 %v2345, %v2341
        %v3782 = vpack.c.b16 %v2350, %v2346
        %v3783 = vpack.c.b16 %v2351, %v2347
        %v3784 = vpack.c.b16 %v2352, %v2348
        %v3785 = vpack.c.b16 %v2353, %v2349
        %v3786 = vpack.c.b16 %v2358, %v2354
        %v3787 = vpack.c.b16 %v2359, %v2355
        %v3788 = vpack.c.b16 %v2360, %v2356
        %v3789 = vpack.c.b16 %v2361, %v2357
        %v3790 = vpack.c.b16 %v2366, %v2362
        %v3791 = vpack.c.b16 %v2367, %v2363
        %v3792 = vpack.c.b16 %v2368, %v2364
        %v3793 = vpack.c.b16 %v2369, %v2365
        %v3794 = vpack.c.b16 %v2374, %v2370
        %v3795 = vpack.c.b16 %v2375, %v2371
        %v3796 = vpack.c.b16 %v2376, %v2372
        %v3797 = vpack.c.b16 %v2377, %v2373
        %v3798 = vpack.c.b16 %v2382, %v2378
        %v3799 = vpack.c.b16 %v2383, %v2379
        %v3800 = vpack.c.b16 %v2384, %v2380
        %v3801 = vpack.c.b16 %v2385, %v2381
        %v3802 = vpack.c.b16 %v2390, %v2386
        %v3803 = vpack.c.b16 %v2391, %v2387
        %v3804 = vpack.c.b16 %v2392, %v2388
        %v3805 = vpack.c.b16 %v2393, %v2389
        %v3806 = vpack.c.b16 %v2398, %v2394
        %v3807 = vpack.c.b16 %v2399, %v2395
        %v3808 = vpack.c.b16 %v2400, %v2396
        %v3809 = vpack.c.b16 %v2401, %v2397
        %v3810 = vpack.c.b16 %v2406, %v2402
        %v3811 = vpack.c.b16 %v2407, %v2403
        %v3812 = vpack.c.b16 %v2408, %v2404
        %v3813 = vpack.c.b16 %v2409, %v2405
        %v3814 = vpack.c.b16 %v2414, %v2410
        %v3815 = vpack.c.b16 %v2415, %v2411
        %v3816 = vpack.c.b16 %v2416, %v2412
        %v3817 = vpack.c.b16 %v2417, %v2413
        %v3818 = vpack.c.b16 %v2422, %v2418
        %v3819 = vpack.c.b16 %v2423, %v2419
        %v3820 = vpack.c.b16 %v2424, %v2420
        %v3821 = vpack.c.b16 %v2425, %v2421
        %v3822 = vpack.c.b16 %v2430, %v2426
        %v3823 = vpack.c.b16 %v2431, %v2427
        %v3824 = vpack.c.b16 %v2432, %v2428
        %v3825 = vpack.c.b16 %v2433, %v2429
        %v3826 = vpack.c.b16 %v2438, %v2434
        %v3827 = vpack.c.b16 %v2439, %v2435
        %v3828 = vpack.c.b16 %v2440, %v2436
        %v3829 = vpack.c.b16 %v2441, %v2437
        %v3830 = vpack.c.b16 %v2446, %v2442
        %v3831 = vpack.c.b16 %v2447, %v2443
        %v3832 = vpack.c.b16 %v2448, %v2444
        %v3833 = vpack.c.b16 %v2449, %v2445
        %v3834 = vpack.c.b16 %v2454, %v2450
        %v3835 = vpack.c.b16 %v2455, %v2451
        %v3836 = vpack.c.b16 %v2456, %v2452
        %v3837 = vpack.c.b16 %v2457, %v2453
        %v3838 = vpack.c.b16 %v2462, %v2458
        %v3839 = vpack.c.b16 %v2463, %v2459
        %v3840 = vpack.c.b16 %v2464, %v2460
        %v3841 = vpack.c.b16 %v2465, %v2461
        %v3842 = vpack.c.b16 %v2470, %v2466
        %v3843 = vpack.c.b16 %v2471, %v2467
        %v3844 = vpack.c.b16 %v2472, %v2468
        %v3845 = vpack.c.b16 %v2473, %v2469
        %v3846 = vpack.c.b16 %v2478, %v2474
        %v3847 = vpack.c.b16 %v2479, %v2475
        %v3848 = vpack.c.b16 %v2480, %v2476
        %v3849 = vpack.c.b16 %v2481, %v2477
        %v3850 = vpack.c.b16 %v2486, %v2482
        %v3851 = vpack.c.b16 %v2487, %v2483
        %v3852 = vpack.c.b16 %v2488, %v2484
        %v3853 = vpack.c.b16 %v2489, %v2485
        %v3854 = vpack.c.b16 %v2494, %v2490
        %v3855 = vpack.c.b16 %v2495, %v2491
        %v3856 = vpack.c.b16 %v2496, %v2492
        %v3857 = vpack.c.b16 %v2497, %v2493
        %v3858 = vpack.c.b16 %v2502, %v2498
        %v3859 = vpack.c.b16 %v2503, %v2499
        %v3860 = vpack.c.b16 %v2504, %v2500
        %v3861 = vpack.c.b16 %v2505, %v2501
        %v3862 = vpack.c.b16 %v2510, %v2506
        %v3863 = vpack.c.b16 %v2511, %v2507
        %v3864 = vpack.c.b16 %v2512, %v2508
        %v3865 = vpack.c.b16 %v2513, %v2509
        %v3866 = vpack.c.b16 %v2518, %v2514
        %v3867 = vpack.c.b16 %v2519, %v2515
        %v3868 = vpack.c.b16 %v2520, %v2516
        %v3869 = vpack.c.b16 %v2521, %v2517
        %v3870 = vpack.c.b16 %v2526, %v2522
        %v3871 = vpack.c.b16 %v2527, %v2523
        %v3872 = vpack.c.b16 %v2528, %v2524
        %v3873 = vpack.c.b16 %v2529, %v2525
        %v3874 = vpack.c.b16 %v2534, %v2530
        %v3875 = vpack.c.b16 %v2535, %v2531
        %v3876 = vpack.c.b16 %v2536, %v2532
        %v3877 = vpack.c.b16 %v2537, %v2533
        %v3878 = vpack.c.b16 %v2542, %v2538
        %v3879 = vpack.c.b16 %v2543, %v2539
        %v3880 = vpack.c.b16 %v2544, %v2540
        %v3881 = vpack.c.b16 %v2545, %v2541
        %v3882 = vpack.c.b16 %v2550, %v2546
        %v3883 = vpack.c.b16 %v2551, %v2547
        %v3884 = vpack.c.b16 %v2552, %v2548
        %v3885 = vpack.c.b16 %v2553, %v2549
        %v3886 = vpack.c.b16 %v2558, %v2554
        %v3887 = vpack.c.b16 %v2559, %v2555
        %v3888 = vpack.c.b16 %v2560, %v2556
        %v3889 = vpack.c.b16 %v2561, %v2557
        %v3890 = vpack.c.b16 %v2566, %v2562
        %v3891 = vpack.c.b16 %v2567, %v2563
        %v3892 = vpack.c.b16 %v2568, %v2564
        %v3893 = vpack.c.b16 %v2569, %v2565
        %v3894 = vpack.c.b16 %v2574, %v2570
        %v3895 = vpack.c.b16 %v2575, %v2571
        %v3896 = vpack.c.b16 %v2576, %v2572
        %v3897 = vpack.c.b16 %v2577, %v2573
        %v3898 = vpack.c.b16 %v2582, %v2578
        %v3899 = vpack.c.b16 %v2583, %v2579
        %v3900 = vpack.c.b16 %v2584, %v2580
        %v3901 = vpack.c.b16 %v2585, %v2581
        %v3902 = vpack.c.b16 %v2590, %v2586
        %v3903 = vpack.c.b16 %v2591, %v2587
        %v3904 = vpack.c.b16 %v2592, %v2588
        %v3905 = vpack.c.b16 %v2593, %v2589
        %v3906 = vpack.c.b16 %v2598, %v2594
        %v3907 = vpack.c.b16 %v2599, %v2595
        %v3908 = vpack.c.b16 %v2600, %v2596
        %v3909 = vpack.c.b16 %v2601, %v2597
        %v3910 = vpack.c.b16 %v2606, %v2602
        %v3911 = vpack.c.b16 %v2607, %v2603
        %v3912 = vpack.c.b16 %v2608, %v2604
        %v3913 = vpack.c.b16 %v2609, %v2605
        %v3914 = vpack.c.b16 %v2614, %v2610
        %v3915 = vpack.c.b16 %v2615, %v2611
        %v3916 = vpack.c.b16 %v2616, %v2612
        %v3917 = vpack.c.b16 %v2617, %v2613
        %v3918 = vpack.c.b16 %v2622, %v2618
        %v3919 = vpack.c.b16 %v2623, %v2619
        %v3920 = vpack.c.b16 %v2624, %v2620
        %v3921 = vpack.c.b16 %v2625, %v2621
        %v3922 = vpack.c.b16 %v2630, %v2626
        %v3923 = vpack.c.b16 %v2631, %v2627
        %v3924 = vpack.c.b16 %v2632, %v2628
        %v3925 = vpack.c.b16 %v2633, %v2629
        %v3926 = vpack.c.b16 %v2638, %v2634
        %v3927 = vpack.c.b16 %v2639, %v2635
        %v3928 = vpack.c.b16 %v2640, %v2636
        %v3929 = vpack.c.b16 %v2641, %v2637
        %v3930 = vpack.c.b16 %v2646, %v2642
        %v3931 = vpack.c.b16 %v2647, %v2643
        %v3932 = vpack.c.b16 %v2648, %v2644
        %v3933 = vpack.c.b16 %v2649, %v2645
        %v3934 = vpack.c.b16 %v2654, %v2650
        %v3935 = vpack.c.b16 %v2655, %v2651
        %v3936 = vpack.c.b16 %v2656, %v2652
        %v3937 = vpack.c.b16 %v2657, %v2653
        %v3938 = vpack.c.b16 %v2662, %v2658
        %v3939 = vpack.c.b16 %v2663, %v2659
        %v3940 = vpack.c.b16 %v2664, %v2660
        %v3941 = vpack.c.b16 %v2665, %v2661
        %v3942 = vpack.c.b16 %v2670, %v2666
        %v3943 = vpack.c.b16 %v2671, %v2667
        %v3944 = vpack.c.b16 %v2672, %v2668
        %v3945 = vpack.c.b16 %v2673, %v2669
        %v3946 = vpack.c.b16 %v2678, %v2674
        %v3947 = vpack.c.b16 %v2679, %v2675
        %v3948 = vpack.c.b16 %v2680, %v2676
        %v3949 = vpack.c.b16 %v2681, %v2677
        %v3950 = vpack.c.b16 %v2686, %v2682
        %v3951 = vpack.c.b16 %v2687, %v2683
        %v3952 = vpack.c.b16 %v2688, %v2684
        %v3953 = vpack.c.b16 %v2689, %v2685
        %v3954 = vpack.c.b16 %v2694, %v2690
        %v3955 = vpack.c.b16 %v2695, %v2691
        %v3956 = vpack.c.b16 %v2696, %v2692
        %v3957 = vpack.c.b16 %v2697, %v2693
        %v3958 = vpack.c.b16 %v2702, %v2698
        %v3959 = vpack.c.b16 %v2703, %v2699
        %v3960 = vpack.c.b16 %v2704, %v2700
        %v3961 = vpack.c.b16 %v2705, %v2701
        %v3962 = vpack.c.b16 %v2710, %v2706
        %v3963 = vpack.c.b16 %v2711, %v2707
        %v3964 = vpack.c.b16 %v2712, %v2708
        %v3965 = vpack.c.b16 %v2713, %v2709
        %v3966 = vpack.c.b16 %v2718, %v2714
        %v3967 = vpack.c.b16 %v2719, %v2715
        %v3968 = vpack.c.b16 %v2720, %v2716
        %v3969 = vpack.c.b16 %v2721, %v2717
        %v3970 = vpack.c.b16 %v2726, %v2722
        %v3971 = vpack.c.b16 %v2727, %v2723
        %v3972 = vpack.c.b16 %v2728, %v2724
        %v3973 = vpack.c.b16 %v2729, %v2725
        %v3974 = vpack.c.b16 %v2734, %v2730
        %v3975 = vpack.c.b16 %v2735, %v2731
        %v3976 = vpack.c.b16 %v2736, %v2732
        %v3977 = vpack.c.b16 %v2737, %v2733
        %v3978 = vpack.c.b16 %v2742, %v2738
        %v3979 = vpack.c.b16 %v2743, %v2739
        %v3980 = vpack.c.b16 %v2744, %v2740
        %v3981 = vpack.c.b16 %v2745, %v2741
        %v3982 = vpack.c.b16 %v2750, %v2746
        %v3983 = vpack.c.b16 %v2751, %v2747
        %v3984 = vpack.c.b16 %v2752, %v2748
        %v3985 = vpack.c.b16 %v2753, %v2749
        %v3986 = vpack.c.b16 %v2758, %v2754
        %v3987 = vpack.c.b16 %v2759, %v2755
        %v3988 = vpack.c.b16 %v2760, %v2756
        %v3989 = vpack.c.b16 %v2761, %v2757
        %v3990 = vpack.c.b16 %v2766, %v2762
        %v3991 = vpack.c.b16 %v2767, %v2763
        %v3992 = vpack.c.b16 %v2768, %v2764
        %v3993 = vpack.c.b16 %v2769, %v2765
        %v3994 = vpack.c.b16 %v2774, %v2770
        %v3995 = vpack.c.b16 %v2775, %v2771
        %v3996 = vpack.c.b16 %v2776, %v2772
        %v3997 = vpack.c.b16 %v2777, %v2773
        %v3998 = vpack.c.b16 %v2782, %v2778
        %v3999 = vpack.c.b16 %v2783, %v2779
        %v4000 = vpack.c.b16 %v2784, %v2780
        %v4001 = vpack.c.b16 %v2785, %v2781
        %v4002 = vpack.c.b16 %v2790, %v2786
        %v4003 = vpack.c.b16 %v2791, %v2787
        %v4004 = vpack.c.b16 %v2792, %v2788
        %v4005 = vpack.c.b16 %v2793, %v2789
        %v4006 = vpack.c.b16 %v2798, %v2794
        %v4007 = vpack.c.b16 %v2799, %v2795
        %v4008 = vpack.c.b16 %v2800, %v2796
        %v4009 = vpack.c.b16 %v2801, %v2797
        %v4010 = vpack.c.b16 %v2806, %v2802
        %v4011 = vpack.c.b16 %v2807, %v2803
        %v4012 = vpack.c.b16 %v2808, %v2804
        %v4013 = vpack.c.b16 %v2809, %v2805
        %v4014 = vpack.c.b16 %v2814, %v2810
        %v4015 = vpack.c.b16 %v2815, %v2811
        %v4016 = vpack.c.b16 %v2816, %v2812
        %v4017 = vpack.c.b16 %v2817, %v2813
        %v4018 = vpack.c.b16 %v2822, %v2818
        %v4019 = vpack.c.b16 %v2823, %v2819
        %v4020 = vpack.c.b16 %v2824, %v2820
        %v4021 = vpack.c.b16 %v2825, %v2821
        %v4022 = vpack.c.b16 %v2830, %v2826
        %v4023 = vpack.c.b16 %v2831, %v2827
        %v4024 = vpack.c.b16 %v2832, %v2828
        %v4025 = vpack.c.b16 %v2833, %v2829
        %v4026 = vpack.c.b16 %v2838, %v2834
        %v4027 = vpack.c.b16 %v2839, %v2835
        %v4028 = vpack.c.b16 %v2840, %v2836
        %v4029 = vpack.c.b16 %v2841, %v2837
        %v4030 = vpack.c.b16 %v2846, %v2842
        %v4031 = vpack.c.b16 %v2847, %v2843
        %v4032 = vpack.c.b16 %v2848, %v2844
        %v4033 = vpack.c.b16 %v2849, %v2845
        %v4034 = vpack.c.b16 %v2854, %v2850
        %v4035 = vpack.c.b16 %v2855, %v2851
        %v4036 = vpack.c.b16 %v2856, %v2852
        %v4037 = vpack.c.b16 %v2857, %v2853
        %v4038 = vpack.c.b16 %v2862, %v2858
        %v4039 = vpack.c.b16 %v2863, %v2859
        %v4040 = vpack.c.b16 %v2864, %v2860
        %v4041 = vpack.c.b16 %v2865, %v2861
        %v4042 = vpack.c.b16 %v2870, %v2866
        %v4043 = vpack.c.b16 %v2871, %v2867
        %v4044 = vpack.c.b16 %v2872, %v2868
        %v4045 = vpack.c.b16 %v2873, %v2869
        %v4046 = vpack.c.b16 %v2878, %v2874
        %v4047 = vpack.c.b16 %v2879, %v2875
        %v4048 = vpack.c.b16 %v2880, %v2876
        %v4049 = vpack.c.b16 %v2881, %v2877
        %v4050 = vpack.c.b16 %v2886, %v2882
        %v4051 = vpack.c.b16 %v2887, %v2883
        %v4052 = vpack.c.b16 %v2888, %v2884
        %v4053 = vpack.c.b16 %v2889, %v2885
        %v4054 = vpack.c.b16 %v2894, %v2890
        %v4055 = vpack.c.b16 %v2895, %v2891
        %v4056 = vpack.c.b16 %v2896, %v2892
        %v4057 = vpack.c.b16 %v2897, %v2893
        %v4058 = vpack.c.b16 %v2902, %v2898
        %v4059 = vpack.c.b16 %v2903, %v2899
        %v4060 = vpack.c.b16 %v2904, %v2900
        %v4061 = vpack.c.b16 %v2905, %v2901
        %v4062 = vpack.c.b16 %v2910, %v2906
        %v4063 = vpack.c.b16 %v2911, %v2907
        %v4064 = vpack.c.b16 %v2912, %v2908
        %v4065 = vpack.c.b16 %v2913, %v2909
        %v4066 = vpack.c.b16 %v2918, %v2914
        %v4067 = vpack.c.b16 %v2919, %v2915
        %v4068 = vpack.c.b16 %v2920, %v2916
        %v4069 = vpack.c.b16 %v2921, %v2917
        %v4070 = vpack.c.b16 %v2926, %v2922
        %v4071 = vpack.c.b16 %v2927, %v2923
        %v4072 = vpack.c.b16 %v2928, %v2924
        %v4073 = vpack.c.b16 %v2929, %v2925
        %v4074 = vpack.c.b16 %v2934, %v2930
        %v4075 = vpack.c.b16 %v2935, %v2931
        %v4076 = vpack.c.b16 %v2936, %v2932
        %v4077 = vpack.c.b16 %v2937, %v2933
        %v4078 = vpack.c.b16 %v2942, %v2938
        %v4079 = vpack.c.b16 %v2943, %v2939
        %v4080 = vpack.c.b16 %v2944, %v2940
        %v4081 = vpack.c.b16 %v2945, %v2941
        %v4082 = vpack.c.b16 %v2950, %v2946
        %v4083 = vpack.c.b16 %v2951, %v2947
        %v4084 = vpack.c.b16 %v2952, %v2948
        %v4085 = vpack.c.b16 %v2953, %v2949
        %v4086 = vpack.c.b16 %v2958, %v2954
        %v4087 = vpack.c.b16 %v2959, %v2955
        %v4088 = vpack.c.b16 %v2960, %v2956
        %v4089 = vpack.c.b16 %v2961, %v2957
        %v4090 = vpack.c.b16 %v2966, %v2962
        %v4091 = vpack.c.b16 %v2967, %v2963
        %v4092 = vpack.c.b16 %v2968, %v2964
        %v4093 = vpack.c.b16 %v2969, %v2965
        %v4094 = vpack.c.b16 %v2974, %v2970
        %v4095 = vpack.c.b16 %v2975, %v2971
        %v4096 = vpack.c.b16 %v2976, %v2972
        %v4097 = vpack.c.b16 %v2977, %v2973
        %v4098 = vpack.c.b16 %v2982, %v2978
        %v4099 = vpack.c.b16 %v2983, %v2979
        %v4100 = vpack.c.b16 %v2984, %v2980
        %v4101 = vpack.c.b16 %v2985, %v2981
        %v4102 = vpack.c.b16 %v2990, %v2986
        %v4103 = vpack.c.b16 %v2991, %v2987
        %v4104 = vpack.c.b16 %v2992, %v2988
        %v4105 = vpack.c.b16 %v2993, %v2989
        %v4106 = vpack.c.b16 %v2998, %v2994
        %v4107 = vpack.c.b16 %v2999, %v2995
        %v4108 = vpack.c.b16 %v3000, %v2996
        %v4109 = vpack.c.b16 %v3001, %v2997
        %v4110 = vpack.c.b16 %v3006, %v3002
        %v4111 = vpack.c.b16 %v3007, %v3003
        %v4112 = vpack.c.b16 %v3008, %v3004
        %v4113 = vpack.c.b16 %v3009, %v3005
        %v4114 = vpack.c.b16 %v3014, %v3010
        %v4115 = vpack.c.b16 %v3015, %v3011
        %v4116 = vpack.c.b16 %v3016, %v3012
        %v4117 = vpack.c.b16 %v3017, %v3013
        %v4118 = vpack.c.b16 %v3022, %v3018
        %v4119 = vpack.c.b16 %v3023, %v3019
        %v4120 = vpack.c.b16 %v3024, %v3020
        %v4121 = vpack.c.b16 %v3025, %v3021
        %v4122 = vpack.c.b16 %v3030, %v3026
        %v4123 = vpack.c.b16 %v3031, %v3027
        %v4124 = vpack.c.b16 %v3032, %v3028
        %v4125 = vpack.c.b16 %v3033, %v3029
        %v4126 = vpack.c.b16 %v3038, %v3034
        %v4127 = vpack.c.b16 %v3039, %v3035
        %v4128 = vpack.c.b16 %v3040, %v3036
        %v4129 = vpack.c.b16 %v3041, %v3037
        %v4130 = vpack.c.b16 %v3046, %v3042
        %v4131 = vpack.c.b16 %v3047, %v3043
        %v4132 = vpack.c.b16 %v3048, %v3044
        %v4133 = vpack.c.b16 %v3049, %v3045
        %v4134 = vpack.c.b16 %v3054, %v3050
        %v4135 = vpack.c.b16 %v3055, %v3051
        %v4136 = vpack.c.b16 %v3056, %v3052
        %v4137 = vpack.c.b16 %v3057, %v3053
        %v4138 = vpack.c.b16 %v3062, %v3058
        %v4139 = vpack.c.b16 %v3063, %v3059
        %v4140 = vpack.c.b16 %v3064, %v3060
        %v4141 = vpack.c.b16 %v3065, %v3061
        %v4142 = vpack.c.b16 %v3070, %v3066
        %v4143 = vpack.c.b16 %v3071, %v3067
        %v4144 = vpack.c.b16 %v3072, %v3068
        %v4145 = vpack.c.b16 %v3073, %v3069
        %v4146 = vpack.c.b16 %v3078, %v3074
        %v4147 = vpack.c.b16 %v3079, %v3075
        %v4148 = vpack.c.b16 %v3080, %v3076
        %v4149 = vpack.c.b16 %v3081, %v3077
        %v4150 = vpack.c.b16 %v3086, %v3082
        %v4151 = vpack.c.b16 %v3087, %v3083
        %v4152 = vpack.c.b16 %v3088, %v3084
        %v4153 = vpack.c.b16 %v3089, %v3085
        %v4154 = vpack.c.b16 %v3094, %v3090
        %v4155 = vpack.c.b16 %v3095, %v3091
        %v4156 = vpack.c.b16 %v3096, %v3092
        %v4157 = vpack.c.b16 %v3097, %v3093
        %v4158 = vpack.c.b16 %v3102, %v3098
        %v4159 = vpack.c.b16 %v3103, %v3099
        %v4160 = vpack.c.b16 %v3104, %v3100
        %v4161 = vpack.c.b16 %v3105, %v3101
        %v4162 = vpack.c.b16 %v3110, %v3106
        %v4163 = vpack.c.b16 %v3111, %v3107
        %v4164 = vpack.c.b16 %v3112, %v3108
        %v4165 = vpack.c.b16 %v3113, %v3109
        %v4166 = vpack.c.b16 %v3118, %v3114
        %v4167 = vpack.c.b16 %v3119, %v3115
        %v4168 = vpack.c.b16 %v3120, %v3116
        %v4169 = vpack.c.b16 %v3121, %v3117
        %v4170 = vpack.c.b16 %v3126, %v3122
        %v4171 = vpack.c.b16 %v3127, %v3123
        %v4172 = vpack.c.b16 %v3128, %v3124
        %v4173 = vpack.c.b16 %v3129, %v3125
        %v4174 = vpack.c.b16 %v3134, %v3130
        %v4175 = vpack.c.b16 %v3135, %v3131
        %v4176 = vpack.c.b16 %v3136, %v3132
        %v4177 = vpack.c.b16 %v3137, %v3133
        %v4178 = vpack.c.b16 %v3142, %v3138
        %v4179 = vpack.c.b16 %v3143, %v3139
        %v4180 = vpack.c.b16 %v3144, %v3140
        %v4181 = vpack.c.b16 %v3145, %v3141
        %v4182 = vpack.c.b16 %v3150, %v3146
        %v4183 = vpack.c.b16 %v3151, %v3147
        %v4184 = vpack.c.b16 %v3152, %v3148
        %v4185 = vpack.c.b16 %v3153, %v3149
        %v4186 = vpack.c.b16 %v3158, %v3154
        %v4187 = vpack.c.b16 %v3159, %v3155
        %v4188 = vpack.c.b16 %v3160, %v3156
        %v4189 = vpack.c.b16 %v3161, %v3157
        %v4190 = vpack.c.b16 %v3166, %v3162
        %v4191 = vpack.c.b16 %v3167, %v3163
        %v4192 = vpack.c.b16 %v3168, %v3164
        %v4193 = vpack.c.b16 %v3169, %v3165
        %v4194 = vpack.c.b16 %v3174, %v3170
        %v4195 = vpack.c.b16 %v3175, %v3171
        %v4196 = vpack.c.b16 %v3176, %v3172
        %v4197 = vpack.c.b16 %v3177, %v3173
        %v4198 = vpack.c.b16 %v3182, %v3178
        %v4199 = vpack.c.b16 %v3183, %v3179
        %v4200 = vpack.c.b16 %v3184, %v3180
        %v4201 = vpack.c.b16 %v3185, %v3181
        %v4202 = vpack.c.b16 %v3190, %v3186
        %v4203 = vpack.c.b16 %v3191, %v3187
        %v4204 = vpack.c.b16 %v3192, %v3188
        %v4205 = vpack.c.b16 %v3193, %v3189
        %v4206 = vpack.c.b16 %v3198, %v3194
        %v4207 = vpack.c.b16 %v3199, %v3195
        %v4208 = vpack.c.b16 %v3200, %v3196
        %v4209 = vpack.c.b16 %v3201, %v3197
        %v4210 = vpack.c.b16 %v3206, %v3202
        %v4211 = vpack.c.b16 %v3207, %v3203
        %v4212 = vpack.c.b16 %v3208, %v3204
        %v4213 = vpack.c.b16 %v3209, %v3205
        %v4214 = vpack.c.b16 %v3214, %v3210
        %v4215 = vpack.c.b16 %v3215, %v3211
        %v4216 = vpack.c.b16 %v3216, %v3212
        %v4217 = vpack.c.b16 %v3217, %v3213
        %v4218 = vpack.c.b16 %v3222, %v3218
        %v4219 = vpack.c.b16 %v3223, %v3219
        %v4220 = vpack.c.b16 %v3224, %v3220
        %v4221 = vpack.c.b16 %v3225, %v3221
        %v4222 = vpack.c.b16 %v3230, %v3226
        %v4223 = vpack.c.b16 %v3231, %v3227
        %v4224 = vpack.c.b16 %v3232, %v3228
        %v4225 = vpack.c.b16 %v3233, %v3229
        %v4226 = vpack.c.b16 %v3238, %v3234
        %v4227 = vpack.c.b16 %v3239, %v3235
        %v4228 = vpack.c.b16 %v3240, %v3236
        %v4229 = vpack.c.b16 %v3241, %v3237
        %v4230 = vpack.c.b16 %v3246, %v3242
        %v4231 = vpack.c.b16 %v3247, %v3243
        %v4232 = vpack.c.b16 %v3248, %v3244
        %v4233 = vpack.c.b16 %v3249, %v3245
        %v4234 = vpack.c.b16 %v3254, %v3250
        %v4235 = vpack.c.b16 %v3255, %v3251
        %v4236 = vpack.c.b16 %v3256, %v3252
        %v4237 = vpack.c.b16 %v3257, %v3253
        %v4238 = vpack.c.b16 %v3262, %v3258
        %v4239 = vpack.c.b16 %v3263, %v3259
        %v4240 = vpack.c.b16 %v3264, %v3260
        %v4241 = vpack.c.b16 %v3265, %v3261
        %v4242 = vpack.c.b16 %v3270, %v3266
        %v4243 = vpack.c.b16 %v3271, %v3267
        %v4244 = vpack.c.b16 %v3272, %v3268
        %v4245 = vpack.c.b16 %v3273, %v3269
        %v4246 = vpack.c.b16 %v3278, %v3274
        %v4247 = vpack.c.b16 %v3279, %v3275
        %v4248 = vpack.c.b16 %v3280, %v3276
        %v4249 = vpack.c.b16 %v3281, %v3277
        %v4250 = vpack.c.b16 %v3286, %v3282
        %v4251 = vpack.c.b16 %v3287, %v3283
        %v4252 = vpack.c.b16 %v3288, %v3284
        %v4253 = vpack.c.b16 %v3289, %v3285
        %v4254 = vpack.c.b16 %v3294, %v3290
        %v4255 = vpack.c.b16 %v3295, %v3291
        %v4256 = vpack.c.b16 %v3296, %v3292
        %v4257 = vpack.c.b16 %v3297, %v3293
        %v4258 = vpack.c.b16 %v3302, %v3298
        %v4259 = vpack.c.b16 %v3303, %v3299
        %v4260 = vpack.c.b16 %v3304, %v3300
        %v4261 = vpack.c.b16 %v3305, %v3301
        %v4262 = vpack.c.b16 %v3310, %v3306
        %v4263 = vpack.c.b16 %v3311, %v3307
        %v4264 = vpack.c.b16 %v3312, %v3308
        %v4265 = vpack.c.b16 %v3313, %v3309
        %v4266 = vpack.c.b16 %v3318, %v3314
        %v4267 = vpack.c.b16 %v3319, %v3315
        %v4268 = vpack.c.b16 %v3320, %v3316
        %v4269 = vpack.c.b16 %v3321, %v3317
        %v4270 = vpack.c.b16 %v3326, %v3322
        %v4271 = vpack.c.b16 %v3327, %v3323
        %v4272 = vpack.c.b16 %v3328, %v3324
        %v4273 = vpack.c.b16 %v3329, %v3325
        %v4274 = vpack.c.b16 %v3334, %v3330
        %v4275 = vpack.c.b16 %v3335, %v3331
        %v4276 = vpack.c.b16 %v3336, %v3332
        %v4277 = vpack.c.b16 %v3337, %v3333
        %v4278 = vpack.c.b16 %v3342, %v3338
        %v4279 = vpack.c.b16 %v3343, %v3339
        %v4280 = vpack.c.b16 %v3344, %v3340
        %v4281 = vpack.c.b16 %v3345, %v3341
        %v4282 = vpack.c.b16 %v3350, %v3346
        %v4283 = vpack.c.b16 %v3351, %v3347
        %v4284 = vpack.c.b16 %v3352, %v3348
        %v4285 = vpack.c.b16 %v3353, %v3349
        %v4286 = vpack.c.b16 %v3358, %v3354
        %v4287 = vpack.c.b16 %v3359, %v3355
        %v4288 = vpack.c.b16 %v3360, %v3356
        %v4289 = vpack.c.b16 %v3361, %v3357
        %v4290 = vpack.c.b16 %v3366, %v3362
        %v4291 = vpack.c.b16 %v3367, %v3363
        %v4292 = vpack.c.b16 %v3368, %v3364
        %v4293 = vpack.c.b16 %v3369, %v3365
        %v4294 = vpack.c.b16 %v3374, %v3370
        %v4295 = vpack.c.b16 %v3375, %v3371
        %v4296 = vpack.c.b16 %v3376, %v3372
        %v4297 = vpack.c.b16 %v3377, %v3373
        %v4298 = vpack.c.b16 %v3382, %v3378
        %v4299 = vpack.c.b16 %v3383, %v3379
        %v4300 = vpack.c.b16 %v3384, %v3380
        %v4301 = vpack.c.b16 %v3385, %v3381
        %v4302 = vpack.c.b16 %v3390, %v3386
        %v4303 = vpack.c.b16 %v3391, %v3387
        %v4304 = vpack.c.b16 %v3392, %v3388
        %v4305 = vpack.c.b16 %v3393, %v3389
        %v4306 = vpack.c.b16 %v3398, %v3394
        %v4307 = vpack.c.b16 %v3399, %v3395
        %v4308 = vpack.c.b16 %v3400, %v3396
        %v4309 = vpack.c.b16 %v3401, %v3397
        %v4310 = vpack.c.b16 %v3406, %v3402
        %v4311 = vpack.c.b16 %v3407, %v3403
        %v4312 = vpack.c.b16 %v3408, %v3404
        %v4313 = vpack.c.b16 %v3409, %v3405
        %v4314 = vpack.c.b16 %v3414, %v3410
        %v4315 = vpack.c.b16 %v3415, %v3411
        %v4316 = vpack.c.b16 %v3416, %v3412
        %v4317 = vpack.c.b16 %v3417, %v3413
        %v4318 = vpack.c.b16 %v3422, %v3418
        %v4319 = vpack.c.b16 %v3423, %v3419
        %v4320 = vpack.c.b16 %v3424, %v3420
        %v4321 = vpack.c.b16 %v3425, %v3421
        %v4322 = vpack.c.b16 %v3430, %v3426
        %v4323 = vpack.c.b16 %v3431, %v3427
        %v4324 = vpack.c.b16 %v3432, %v3428
        %v4325 = vpack.c.b16 %v3433, %v3429
        %v4326 = vpack.c.b16 %v3438, %v3434
        %v4327 = vpack.c.b16 %v3439, %v3435
        %v4328 = vpack.c.b16 %v3440, %v3436
        %v4329 = vpack.c.b16 %v3441, %v3437
        %v4330 = vpack.c.b16 %v3446, %v3442
        %v4331 = vpack.c.b16 %v3447, %v3443
        %v4332 = vpack.c.b16 %v3448, %v3444
        %v4333 = vpack.c.b16 %v3449, %v3445
        %v4334 = vpack.c.b16 %v3454, %v3450
        %v4335 = vpack.c.b16 %v3455, %v3451
        %v4336 = vpack.c.b16 %v3456, %v3452
        %v4337 = vpack.c.b16 %v3457, %v3453
        %v4338 = vpack.c.b16 %v3462, %v3458
        %v4339 = vpack.c.b16 %v3463, %v3459
        %v4340 = vpack.c.b16 %v3464, %v3460
        %v4341 = vpack.c.b16 %v3465, %v3461
        %v4342 = vpack.c.b16 %v3470, %v3466
        %v4343 = vpack.c.b16 %v3471, %v3467
        %v4344 = vpack.c.b16 %v3472, %v3468
        %v4345 = vpack.c.b16 %v3473, %v3469
        %v4346 = vpack.c.b16 %v3478, %v3474
        %v4347 = vpack.c.b16 %v3479, %v3475
        %v4348 = vpack.c.b16 %v3480, %v3476
        %v4349 = vpack.c.b16 %v3481, %v3477
        %v4350 = vpack.c.b16 %v3486, %v3482
        %v4351 = vpack.c.b16 %v3487, %v3483
        %v4352 = vpack.c.b16 %v3488, %v3484
        %v4353 = vpack.c.b16 %v3489, %v3485
        %v4354 = vpack.c.b16 %v3494, %v3490
        %v4355 = vpack.c.b16 %v3495, %v3491
        %v4356 = vpack.c.b16 %v3496, %v3492
        %v4357 = vpack.c.b16 %v3497, %v3493
        %v4358 = vpack.c.b16 %v3502, %v3498
        %v4359 = vpack.c.b16 %v3503, %v3499
        %v4360 = vpack.c.b16 %v3504, %v3500
        %v4361 = vpack.c.b16 %v3505, %v3501
        %v4362 = vpack.c.b16 %v3510, %v3506
        %v4363 = vpack.c.b16 %v3511, %v3507
        %v4364 = vpack.c.b16 %v3512, %v3508
        %v4365 = vpack.c.b16 %v3513, %v3509
        %v4366 = vpack.c.b16 %v3518, %v3514
        %v4367 = vpack.c.b16 %v3519, %v3515
        %v4368 = vpack.c.b16 %v3520, %v3516
        %v4369 = vpack.c.b16 %v3521, %v3517
        %v4370 = vpack.c.b16 %v3526, %v3522
        %v4371 = vpack.c.b16 %v3527, %v3523
        %v4372 = vpack.c.b16 %v3528, %v3524
        %v4373 = vpack.c.b16 %v3529, %v3525
        %v4374 = vpack.c.b16 %v3534, %v3530
        %v4375 = vpack.c.b16 %v3535, %v3531
        %v4376 = vpack.c.b16 %v3536, %v3532
        %v4377 = vpack.c.b16 %v3537, %v3533
        %v4378 = vpack.c.b16 %v3542, %v3538
        %v4379 = vpack.c.b16 %v3543, %v3539
        %v4380 = vpack.c.b16 %v3544, %v3540
        %v4381 = vpack.c.b16 %v3545, %v3541
        %v4382 = vpack.c.b16 %v3550, %v3546
        %v4383 = vpack.c.b16 %v3551, %v3547
        %v4384 = vpack.c.b16 %v3552, %v3548
        %v4385 = vpack.c.b16 %v3553, %v3549
        %v4386 = vpack.c.b16 %v3558, %v3554
        %v4387 = vpack.c.b16 %v3559, %v3555
        %v4388 = vpack.c.b16 %v3560, %v3556
        %v4389 = vpack.c.b16 %v3561, %v3557
        %v4390 = vpack.c.b16 %v3566, %v3562
        %v4391 = vpack.c.b16 %v3567, %v3563
        %v4392 = vpack.c.b16 %v3568, %v3564
        %v4393 = vpack.c.b16 %v3569, %v3565
        %v4394 = vpack.c.b16 %v3574, %v3570
        %v4395 = vpack.c.b16 %v3575, %v3571
        %v4396 = vpack.c.b16 %v3576, %v3572
        %v4397 = vpack.c.b16 %v3577, %v3573
        %v4398 = vpack.c.b16 %v3582, %v3578
        %v4399 = vpack.c.b16 %v3583, %v3579
        %v4400 = vpack.c.b16 %v3584, %v3580
        %v4401 = vpack.c.b16 %v3585, %v3581
        %v4402 = vpack.c.b16 %v3590, %v3586
        %v4403 = vpack.c.b16 %v3591, %v3587
        %v4404 = vpack.c.b16 %v3592, %v3588
        %v4405 = vpack.c.b16 %v3593, %v3589
        %v4406 = vpack.c.b16 %v3598, %v3594
        %v4407 = vpack.c.b16 %v3599, %v3595
        %v4408 = vpack.c.b16 %v3600, %v3596
        %v4409 = vpack.c.b16 %v3601, %v3597
        %v4410 = vpack.c.b16 %v3606, %v3602
        %v4411 = vpack.c.b16 %v3607, %v3603
        %v4412 = vpack.c.b16 %v3608, %v3604
        %v4413 = vpack.c.b16 %v3609, %v3605
        %v4414 = vpack.c.b16 %v3614, %v3610
        %v4415 = vpack.c.b16 %v3615, %v3611
        %v4416 = vpack.c.b16 %v3616, %v3612
        %v4417 = vpack.c.b16 %v3617, %v3613
        %5218 = vmatprep.subr.bf16.mxu0 %v3619
        %5219 = vmatpush1.bf16.msra.mxu0 %v3618
        %5220 = vmatprep.subr.bf16.mxu0 %v3623
        %5221 = vmatpush1.bf16.msra.mxu0 %v3622
        %5222 = vmatprep.subr.bf16.mxu0 %v3627
        %5223 = vmatpush1.bf16.msra.mxu0 %v3626
        %5224 = vmatprep.subr.bf16.mxu0 %v3631
        %5225 = vmatpush1.bf16.msra.mxu0 %v3630
        %5226 = vmatprep.subr.bf16.mxu0 %v3635
        %5227 = vmatpush1.bf16.msra.mxu0 %v3634
        %5228 = vmatprep.subr.bf16.mxu0 %v3639
        %5229 = vmatpush1.bf16.msra.mxu0 %v3638
        %5230 = vmatprep.subr.bf16.mxu0 %v3643
        %5231 = vmatpush1.bf16.msra.mxu0 %v3642
        %5232 = vmatprep.subr.bf16.mxu0 %v3647
        %5233 = vmatpush1.bf16.msra.mxu0 %v3646
        %5234 = vmatprep.subr.bf16.mxu0 %v3651
        %5235 = vmatpush1.bf16.msra.mxu0 %v3650
        %5236 = vmatprep.subr.bf16.mxu0 %v3655
        %5237 = vmatpush1.bf16.msra.mxu0 %v3654
        %5238 = vmatprep.subr.bf16.mxu0 %v3659
        %5239 = vmatpush1.bf16.msra.mxu0 %v3658
        %5240 = vmatprep.subr.bf16.mxu0 %v3663
        %5241 = vmatpush1.bf16.msra.mxu0 %v3662
        %5242 = vmatprep.subr.bf16.mxu0 %v3667
        %5243 = vmatpush1.bf16.msra.mxu0 %v3666
        %5244 = vmatprep.subr.bf16.mxu0 %v3671
        %5245 = vmatpush1.bf16.msra.mxu0 %v3670
        %5246 = vmatprep.subr.bf16.mxu0 %v3675
        %5247 = vmatpush1.bf16.msra.mxu0 %v3674
        %5248 = vmatprep.subr.bf16.mxu0 %v3679
        %5249 = vmatpush1.bf16.msra.mxu0 %v3678
        %5250 = vmatprep.mubr.bf16.mxu0 %v394
        %5251 = vmatmul.mubr.bf16.gmra.mrb[0].mxu0 %v393
        %v5252 = vpop.f32.mrb[0].mxu0
        %v5253 = vadd.f32 0.0, %v5252
        %v5254 = vpop.f32.mrb[0].mxu0
        %v5255 = vadd.f32 0.0, %v5254
        %v5256 = vpop.f32.mrb[0].mxu0
        %v5257 = vpop.f32.mrb[0].mxu0
        %5258 = vdwg.mxu0
        %5259 = vmatprep.subr.bf16.mxu0 %v3683
        %5260 = vmatpush1.bf16.msra.mxu0 %v3682
        %5261 = vmatprep.subr.bf16.mxu0 %v3687
        %5262 = vmatpush1.bf16.msra.mxu0 %v3686
        %5263 = vmatprep.subr.bf16.mxu0 %v3691
        %5264 = vmatpush1.bf16.msra.mxu0 %v3690
        %5265 = vmatprep.subr.bf16.mxu0 %v3695
        %5266 = vmatpush1.bf16.msra.mxu0 %v3694
        %5267 = vmatprep.subr.bf16.mxu0 %v3699
        %5268 = vmatpush1.bf16.msra.mxu0 %v3698
        %5269 = vmatprep.subr.bf16.mxu0 %v3703
        %5270 = vmatpush1.bf16.msra.mxu0 %v3702
        %5271 = vmatprep.subr.bf16.mxu0 %v3707
        %5272 = vmatpush1.bf16.msra.mxu0 %v3706
        %5273 = vmatprep.subr.bf16.mxu0 %v3711
        %5274 = vmatpush1.bf16.msra.mxu0 %v3710
        %5275 = vmatprep.subr.bf16.mxu0 %v3715
        %5276 = vmatpush1.bf16.msra.mxu0 %v3714
        %5277 = vmatprep.subr.bf16.mxu0 %v3719
        %5278 = vmatpush1.bf16.msra.mxu0 %v3718
        %5279 = vmatprep.subr.bf16.mxu0 %v3723
        %5280 = vmatpush1.bf16.msra.mxu0 %v3722
        %5281 = vmatprep.subr.bf16.mxu0 %v3727
        %5282 = vmatpush1.bf16.msra.mxu0 %v3726
        %5283 = vmatprep.subr.bf16.mxu0 %v3731
        %5284 = vmatpush1.bf16.msra.mxu0 %v3730
        %5285 = vmatprep.subr.bf16.mxu0 %v3735
        %5286 = vmatpush1.bf16.msra.mxu0 %v3734
        %5287 = vmatprep.subr.bf16.mxu0 %v3739
        %5288 = vmatpush1.bf16.msra.mxu0 %v3738
        %5289 = vmatprep.subr.bf16.mxu0 %v3743
        %5290 = vmatpush1.bf16.msra.mxu0 %v3742
        %5291 = vmatprep.mubr.bf16.mxu0 %v396
        %5292 = vmatmul.mubr.bf16.gmra.mrb[0].mxu0 %v395
        %v5293 = vpop.f32.mrb[0].mxu0
        %v5294 = vadd.f32 %v5253, %v5293
        %v5295 = vpop.f32.mrb[0].mxu0
        %v5296 = vadd.f32 %v5255, %v5295
        %v5297 = vpop.f32.mrb[0].mxu0
        %v5298 = vpop.f32.mrb[0].mxu0
        %5299 = vdwg.mxu0
        %5300 = vmatprep.subr.bf16.mxu0 %v3747
        %5301 = vmatpush1.bf16.msra.mxu0 %v3746
        %5302 = vmatprep.subr.bf16.mxu0 %v3751
        %5303 = vmatpush1.bf16.msra.mxu0 %v3750
        %5304 = vmatprep.subr.bf16.mxu0 %v3755
        %5305 = vmatpush1.bf16.msra.mxu0 %v3754
        %5306 = vmatprep.subr.bf16.mxu0 %v3759
        %5307 = vmatpush1.bf16.msra.mxu0 %v3758
        %5308 = vmatprep.subr.bf16.mxu0 %v3763
        %5309 = vmatpush1.bf16.msra.mxu0 %v3762
        %5310 = vmatprep.subr.bf16.mxu0 %v3767
        %5311 = vmatpush1.bf16.msra.mxu0 %v3766
        %5312 = vmatprep.subr.bf16.mxu0 %v3771
        %5313 = vmatpush1.bf16.msra.mxu0 %v3770
        %5314 = vmatprep.subr.bf16.mxu0 %v3775
        %5315 = vmatpush1.bf16.msra.mxu0 %v3774
        %5316 = vmatprep.subr.bf16.mxu0 %v3779
        %5317 = vmatpush1.bf16.msra.mxu0 %v3778
        %5318 = vmatprep.subr.bf16.mxu0 %v3783
        %5319 = vmatpush1.bf16.msra.mxu0 %v3782
        %5320 = vmatprep.subr.bf16.mxu0 %v3787
        %5321 = vmatpush1.bf16.msra.mxu0 %v3786
        %5322 = vmatprep.subr.bf16.mxu0 %v3791
        %5323 = vmatpush1.bf16.msra.mxu0 %v3790
        %5324 = vmatprep.subr.bf16.mxu0 %v3795
        %5325 = vmatpush1.bf16.msra.mxu0 %v3794
        %5326 = vmatprep.subr.bf16.mxu0 %v3799
        %5327 = vmatpush1.bf16.msra.mxu0 %v3798
        %5328 = vmatprep.subr.bf16.mxu0 %v3803
        %5329 = vmatpush1.bf16.msra.mxu0 %v3802
        %5330 = vmatprep.subr.bf16.mxu0 %v3807
        %5331 = vmatpush1.bf16.msra.mxu0 %v3806
        %5332 = vmatprep.mubr.bf16.mxu0 %v398
        %5333 = vmatmul.mubr.bf16.gmra.mrb[0].mxu0 %v397
        %v5334 = vpop.f32.mrb[0].mxu0
        %v5335 = vadd.f32 %v5294, %v5334
        %v5336 = vpop.f32.mrb[0].mxu0
        %v5337 = vadd.f32 %v5296, %v5336
        %v5338 = vpop.f32.mrb[0].mxu0
        %v5339 = vpop.f32.mrb[0].mxu0
        %5340 = vdwg.mxu0
        %5341 = vmatprep.subr.bf16.mxu0 %v3811
        %5342 = vmatpush1.bf16.msra.mxu0 %v3810
        %5343 = vmatprep.subr.bf16.mxu0 %v3815
        %5344 = vmatpush1.bf16.msra.mxu0 %v3814
        %5345 = vmatprep.subr.bf16.mxu0 %v3819
        %5346 = vmatpush1.bf16.msra.mxu0 %v3818
        %5347 = vmatprep.subr.bf16.mxu0 %v3823
        %5348 = vmatpush1.bf16.msra.mxu0 %v3822
        %5349 = vmatprep.subr.bf16.mxu0 %v3827
        %5350 = vmatpush1.bf16.msra.mxu0 %v3826
        %5351 = vmatprep.subr.bf16.mxu0 %v3831
        %5352 = vmatpush1.bf16.msra.mxu0 %v3830
        %5353 = vmatprep.subr.bf16.mxu0 %v3835
        %5354 = vmatpush1.bf16.msra.mxu0 %v3834
        %5355 = vmatprep.subr.bf16.mxu0 %v3839
        %5356 = vmatpush1.bf16.msra.mxu0 %v3838
        %5357 = vmatprep.subr.bf16.mxu0 %v3843
        %5358 = vmatpush1.bf16.msra.mxu0 %v3842
        %5359 = vmatprep.subr.bf16.mxu0 %v3847
        %5360 = vmatpush1.bf16.msra.mxu0 %v3846
        %5361 = vmatprep.subr.bf16.mxu0 %v3851
        %5362 = vmatpush1.bf16.msra.mxu0 %v3850
        %5363 = vmatprep.subr.bf16.mxu0 %v3855
        %5364 = vmatpush1.bf16.msra.mxu0 %v3854
        %5365 = vmatprep.subr.bf16.mxu0 %v3859
        %5366 = vmatpush1.bf16.msra.mxu0 %v3858
        %5367 = vmatprep.subr.bf16.mxu0 %v3863
        %5368 = vmatpush1.bf16.msra.mxu0 %v3862
        %5369 = vmatprep.subr.bf16.mxu0 %v3867
        %5370 = vmatpush1.bf16.msra.mxu0 %v3866
        %5371 = vmatprep.subr.bf16.mxu0 %v3871
        %5372 = vmatpush1.bf16.msra.mxu0 %v3870
        %5373 = vmatprep.mubr.bf16.mxu0 %v400
        %5374 = vmatmul.mubr.bf16.gmra.mrb[0].mxu0 %v399
        %v5375 = vpop.f32.mrb[0].mxu0
        %v5376 = vadd.f32 %v5335, %v5375
        %v5377 = vpop.f32.mrb[0].mxu0
        %v5378 = vadd.f32 %v5337, %v5377
        %v5379 = vpop.f32.mrb[0].mxu0
        %v5380 = vpop.f32.mrb[0].mxu0
        %5381 = vdwg.mxu0
        %5382 = vmatprep.subr.bf16.mxu0 %v3875
        %5383 = vmatpush1.bf16.msra.mxu0 %v3874
        %5384 = vmatprep.subr.bf16.mxu0 %v3879
        %5385 = vmatpush1.bf16.msra.mxu0 %v3878
        %5386 = vmatprep.subr.bf16.mxu0 %v3883
        %5387 = vmatpush1.bf16.msra.mxu0 %v3882
        %5388 = vmatprep.subr.bf16.mxu0 %v3887
        %5389 = vmatpush1.bf16.msra.mxu0 %v3886
        %5390 = vmatprep.subr.bf16.mxu0 %v3891
        %5391 = vmatpush1.bf16.msra.mxu0 %v3890
        %5392 = vmatprep.subr.bf16.mxu0 %v3895
        %5393 = vmatpush1.bf16.msra.mxu0 %v3894
        %5394 = vmatprep.subr.bf16.mxu0 %v3899
        %5395 = vmatpush1.bf16.msra.mxu0 %v3898
        %5396 = vmatprep.subr.bf16.mxu0 %v3903
        %5397 = vmatpush1.bf16.msra.mxu0 %v3902
        %5398 = vmatprep.subr.bf16.mxu0 %v3907
        %5399 = vmatpush1.bf16.msra.mxu0 %v3906
        %5400 = vmatprep.subr.bf16.mxu0 %v3911
        %5401 = vmatpush1.bf16.msra.mxu0 %v3910
        %5402 = vmatprep.subr.bf16.mxu0 %v3915
        %5403 = vmatpush1.bf16.msra.mxu0 %v3914
        %5404 = vmatprep.subr.bf16.mxu0 %v3919
        %5405 = vmatpush1.bf16.msra.mxu0 %v3918
        %5406 = vmatprep.subr.bf16.mxu0 %v3923
        %5407 = vmatpush1.bf16.msra.mxu0 %v3922
        %5408 = vmatprep.subr.bf16.mxu0 %v3927
        %5409 = vmatpush1.bf16.msra.mxu0 %v3926
        %5410 = vmatprep.subr.bf16.mxu0 %v3931
        %5411 = vmatpush1.bf16.msra.mxu0 %v3930
        %5412 = vmatprep.subr.bf16.mxu0 %v3935
        %5413 = vmatpush1.bf16.msra.mxu0 %v3934
        %5414 = vmatprep.mubr.bf16.mxu0 %v402
        %5415 = vmatmul.mubr.bf16.gmra.mrb[0].mxu0 %v401
        %v5416 = vpop.f32.mrb[0].mxu0
        %v5417 = vadd.f32 %v5376, %v5416
        %v5418 = vpop.f32.mrb[0].mxu0
        %v5419 = vadd.f32 %v5378, %v5418
        %v5420 = vpop.f32.mrb[0].mxu0
        %v5421 = vpop.f32.mrb[0].mxu0
        %5422 = vdwg.mxu0
        %5423 = vmatprep.subr.bf16.mxu0 %v3939
        %5424 = vmatpush1.bf16.msra.mxu0 %v3938
        %5425 = vmatprep.subr.bf16.mxu0 %v3943
        %5426 = vmatpush1.bf16.msra.mxu0 %v3942
        %5427 = vmatprep.subr.bf16.mxu0 %v3947
        %5428 = vmatpush1.bf16.msra.mxu0 %v3946
        %5429 = vmatprep.subr.bf16.mxu0 %v3951
        %5430 = vmatpush1.bf16.msra.mxu0 %v3950
        %5431 = vmatprep.subr.bf16.mxu0 %v3955
        %5432 = vmatpush1.bf16.msra.mxu0 %v3954
        %5433 = vmatprep.subr.bf16.mxu0 %v3959
        %5434 = vmatpush1.bf16.msra.mxu0 %v3958
        %5435 = vmatprep.subr.bf16.mxu0 %v3963
        %5436 = vmatpush1.bf16.msra.mxu0 %v3962
        %5437 = vmatprep.subr.bf16.mxu0 %v3967
        %5438 = vmatpush1.bf16.msra.mxu0 %v3966
        %5439 = vmatprep.subr.bf16.mxu0 %v3971
        %5440 = vmatpush1.bf16.msra.mxu0 %v3970
        %5441 = vmatprep.subr.bf16.mxu0 %v3975
        %5442 = vmatpush1.bf16.msra.mxu0 %v3974
        %5443 = vmatprep.subr.bf16.mxu0 %v3979
        %5444 = vmatpush1.bf16.msra.mxu0 %v3978
        %5445 = vmatprep.subr.bf16.mxu0 %v3983
        %5446 = vmatpush1.bf16.msra.mxu0 %v3982
        %5447 = vmatprep.subr.bf16.mxu0 %v3987
        %5448 = vmatpush1.bf16.msra.mxu0 %v3986
        %5449 = vmatprep.subr.bf16.mxu0 %v3991
        %5450 = vmatpush1.bf16.msra.mxu0 %v3990
        %5451 = vmatprep.subr.bf16.mxu0 %v3995
        %5452 = vmatpush1.bf16.msra.mxu0 %v3994
        %5453 = vmatprep.subr.bf16.mxu0 %v3999
        %5454 = vmatpush1.bf16.msra.mxu0 %v3998
        %5455 = vmatprep.mubr.bf16.mxu0 %v404
        %5456 = vmatmul.mubr.bf16.gmra.mrb[0].mxu0 %v403
        %v5457 = vpop.f32.mrb[0].mxu0
        %v5458 = vadd.f32 %v5417, %v5457
        %v5459 = vpop.f32.mrb[0].mxu0
        %v5460 = vadd.f32 %v5419, %v5459
        %v5461 = vpop.f32.mrb[0].mxu0
        %v5462 = vpop.f32.mrb[0].mxu0
        %5463 = vdwg.mxu0
        %5464 = vmatprep.subr.bf16.mxu0 %v4003
        %5465 = vmatpush1.bf16.msra.mxu0 %v4002
        %5466 = vmatprep.subr.bf16.mxu0 %v4007
        %5467 = vmatpush1.bf16.msra.mxu0 %v4006
        %5468 = vmatprep.subr.bf16.mxu0 %v4011
        %5469 = vmatpush1.bf16.msra.mxu0 %v4010
        %5470 = vmatprep.subr.bf16.mxu0 %v4015
        %5471 = vmatpush1.bf16.msra.mxu0 %v4014
        %5472 = vmatprep.subr.bf16.mxu0 %v4019
        %5473 = vmatpush1.bf16.msra.mxu0 %v4018
        %5474 = vmatprep.subr.bf16.mxu0 %v4023
        %5475 = vmatpush1.bf16.msra.mxu0 %v4022
        %5476 = vmatprep.subr.bf16.mxu0 %v4027
        %5477 = vmatpush1.bf16.msra.mxu0 %v4026
        %5478 = vmatprep.subr.bf16.mxu0 %v4031
        %5479 = vmatpush1.bf16.msra.mxu0 %v4030
        %5480 = vmatprep.subr.bf16.mxu0 %v4035
        %5481 = vmatpush1.bf16.msra.mxu0 %v4034
        %5482 = vmatprep.subr.bf16.mxu0 %v4039
        %5483 = vmatpush1.bf16.msra.mxu0 %v4038
        %5484 = vmatprep.subr.bf16.mxu0 %v4043
        %5485 = vmatpush1.bf16.msra.mxu0 %v4042
        %5486 = vmatprep.subr.bf16.mxu0 %v4047
        %5487 = vmatpush1.bf16.msra.mxu0 %v4046
        %5488 = vmatprep.subr.bf16.mxu0 %v4051
        %5489 = vmatpush1.bf16.msra.mxu0 %v4050
        %5490 = vmatprep.subr.bf16.mxu0 %v4055
        %5491 = vmatpush1.bf16.msra.mxu0 %v4054
        %5492 = vmatprep.subr.bf16.mxu0 %v4059
        %5493 = vmatpush1.bf16.msra.mxu0 %v4058
        %5494 = vmatprep.subr.bf16.mxu0 %v4063
        %5495 = vmatpush1.bf16.msra.mxu0 %v4062
        %5496 = vmatprep.mubr.bf16.mxu0 %v406
        %5497 = vmatmul.mubr.bf16.gmra.mrb[0].mxu0 %v405
        %v5498 = vpop.f32.mrb[0].mxu0
        %v5499 = vadd.f32 %v5458, %v5498
        %v5500 = vpop.f32.mrb[0].mxu0
        %v5501 = vadd.f32 %v5460, %v5500
        %v5502 = vpop.f32.mrb[0].mxu0
        %v5503 = vpop.f32.mrb[0].mxu0
        %5504 = vdwg.mxu0
        %5505 = vmatprep.subr.bf16.mxu0 %v4067
        %5506 = vmatpush1.bf16.msra.mxu0 %v4066
        %5507 = vmatprep.subr.bf16.mxu0 %v4071
        %5508 = vmatpush1.bf16.msra.mxu0 %v4070
        %5509 = vmatprep.subr.bf16.mxu0 %v4075
        %5510 = vmatpush1.bf16.msra.mxu0 %v4074
        %5511 = vmatprep.subr.bf16.mxu0 %v4079
        %5512 = vmatpush1.bf16.msra.mxu0 %v4078
        %5513 = vmatprep.subr.bf16.mxu0 %v4083
        %5514 = vmatpush1.bf16.msra.mxu0 %v4082
        %5515 = vmatprep.subr.bf16.mxu0 %v4087
        %5516 = vmatpush1.bf16.msra.mxu0 %v4086
        %5517 = vmatprep.subr.bf16.mxu0 %v4091
        %5518 = vmatpush1.bf16.msra.mxu0 %v4090
        %5519 = vmatprep.subr.bf16.mxu0 %v4095
        %5520 = vmatpush1.bf16.msra.mxu0 %v4094
        %5521 = vmatprep.subr.bf16.mxu0 %v4099
        %5522 = vmatpush1.bf16.msra.mxu0 %v4098
        %5523 = vmatprep.subr.bf16.mxu0 %v4103
        %5524 = vmatpush1.bf16.msra.mxu0 %v4102
        %5525 = vmatprep.subr.bf16.mxu0 %v4107
        %5526 = vmatpush1.bf16.msra.mxu0 %v4106
        %5527 = vmatprep.subr.bf16.mxu0 %v4111
        %5528 = vmatpush1.bf16.msra.mxu0 %v4110
        %5529 = vmatprep.subr.bf16.mxu0 %v4115
        %5530 = vmatpush1.bf16.msra.mxu0 %v4114
        %5531 = vmatprep.subr.bf16.mxu0 %v4119
        %5532 = vmatpush1.bf16.msra.mxu0 %v4118
        %5533 = vmatprep.subr.bf16.mxu0 %v4123
        %5534 = vmatpush1.bf16.msra.mxu0 %v4122
        %5535 = vmatprep.subr.bf16.mxu0 %v4127
        %5536 = vmatpush1.bf16.msra.mxu0 %v4126
        %5537 = vmatprep.mubr.bf16.mxu0 %v408
        %5538 = vmatmul.mubr.bf16.gmra.mrb[0].mxu0 %v407
        %v5539 = vpop.f32.mrb[0].mxu0
        %v5540 = vadd.f32 %v5499, %v5539
        %v5541 = vpop.f32.mrb[0].mxu0
        %v5542 = vadd.f32 %v5501, %v5541
        %v5543 = vpop.f32.mrb[0].mxu0
        %v5544 = vpop.f32.mrb[0].mxu0
        %5545 = vdwg.mxu0
        %5546 = vmatprep.subr.bf16.mxu0 %v4131
        %5547 = vmatpush1.bf16.msra.mxu0 %v4130
        %5548 = vmatprep.subr.bf16.mxu0 %v4135
        %5549 = vmatpush1.bf16.msra.mxu0 %v4134
        %5550 = vmatprep.subr.bf16.mxu0 %v4139
        %5551 = vmatpush1.bf16.msra.mxu0 %v4138
        %5552 = vmatprep.subr.bf16.mxu0 %v4143
        %5553 = vmatpush1.bf16.msra.mxu0 %v4142
        %5554 = vmatprep.subr.bf16.mxu0 %v4147
        %5555 = vmatpush1.bf16.msra.mxu0 %v4146
        %5556 = vmatprep.subr.bf16.mxu0 %v4151
        %5557 = vmatpush1.bf16.msra.mxu0 %v4150
        %5558 = vmatprep.subr.bf16.mxu0 %v4155
        %5559 = vmatpush1.bf16.msra.mxu0 %v4154
        %5560 = vmatprep.subr.bf16.mxu0 %v4159
        %5561 = vmatpush1.bf16.msra.mxu0 %v4158
        %5562 = vmatprep.subr.bf16.mxu0 %v4163
        %5563 = vmatpush1.bf16.msra.mxu0 %v4162
        %5564 = vmatprep.subr.bf16.mxu0 %v4167
        %5565 = vmatpush1.bf16.msra.mxu0 %v4166
        %5566 = vmatprep.subr.bf16.mxu0 %v4171
        %5567 = vmatpush1.bf16.msra.mxu0 %v4170
        %5568 = vmatprep.subr.bf16.mxu0 %v4175
        %5569 = vmatpush1.bf16.msra.mxu0 %v4174
        %5570 = vmatprep.subr.bf16.mxu0 %v4179
        %5571 = vmatpush1.bf16.msra.mxu0 %v4178
        %5572 = vmatprep.subr.bf16.mxu0 %v4183
        %5573 = vmatpush1.bf16.msra.mxu0 %v4182
        %5574 = vmatprep.subr.bf16.mxu0 %v4187
        %5575 = vmatpush1.bf16.msra.mxu0 %v4186
        %5576 = vmatprep.subr.bf16.mxu0 %v4191
        %5577 = vmatpush1.bf16.msra.mxu0 %v4190
        %5578 = vmatprep.mubr.bf16.mxu0 %v410
        %5579 = vmatmul.mubr.bf16.gmra.mrb[0].mxu0 %v409
        %v5580 = vpop.f32.mrb[0].mxu0
        %v5581 = vadd.f32 %v5540, %v5580
        %v5582 = vpop.f32.mrb[0].mxu0
        %v5583 = vadd.f32 %v5542, %v5582
        %v5584 = vpop.f32.mrb[0].mxu0
        %v5585 = vpop.f32.mrb[0].mxu0
        %5586 = vdwg.mxu0
        %5587 = vmatprep.subr.bf16.mxu0 %v4195
        %5588 = vmatpush1.bf16.msra.mxu0 %v4194
        %5589 = vmatprep.subr.bf16.mxu0 %v4199
        %5590 = vmatpush1.bf16.msra.mxu0 %v4198
        %5591 = vmatprep.subr.bf16.mxu0 %v4203
        %5592 = vmatpush1.bf16.msra.mxu0 %v4202
        %5593 = vmatprep.subr.bf16.mxu0 %v4207
        %5594 = vmatpush1.bf16.msra.mxu0 %v4206
        %5595 = vmatprep.subr.bf16.mxu0 %v4211
        %5596 = vmatpush1.bf16.msra.mxu0 %v4210
        %5597 = vmatprep.subr.bf16.mxu0 %v4215
        %5598 = vmatpush1.bf16.msra.mxu0 %v4214
        %5599 = vmatprep.subr.bf16.mxu0 %v4219
        %5600 = vmatpush1.bf16.msra.mxu0 %v4218
        %5601 = vmatprep.subr.bf16.mxu0 %v4223
        %5602 = vmatpush1.bf16.msra.mxu0 %v4222
        %5603 = vmatprep.subr.bf16.mxu0 %v4227
        %5604 = vmatpush1.bf16.msra.mxu0 %v4226
        %5605 = vmatprep.subr.bf16.mxu0 %v4231
        %5606 = vmatpush1.bf16.msra.mxu0 %v4230
        %5607 = vmatprep.subr.bf16.mxu0 %v4235
        %5608 = vmatpush1.bf16.msra.mxu0 %v4234
        %5609 = vmatprep.subr.bf16.mxu0 %v4239
        %5610 = vmatpush1.bf16.msra.mxu0 %v4238
        %5611 = vmatprep.subr.bf16.mxu0 %v4243
        %5612 = vmatpush1.bf16.msra.mxu0 %v4242
        %5613 = vmatprep.subr.bf16.mxu0 %v4247
        %5614 = vmatpush1.bf16.msra.mxu0 %v4246
        %5615 = vmatprep.subr.bf16.mxu0 %v4251
        %5616 = vmatpush1.bf16.msra.mxu0 %v4250
        %5617 = vmatprep.subr.bf16.mxu0 %v4255
        %5618 = vmatpush1.bf16.msra.mxu0 %v4254
        %5619 = vmatprep.mubr.bf16.mxu0 %v412
        %5620 = vmatmul.mubr.bf16.gmra.mrb[0].mxu0 %v411
        %v5621 = vpop.f32.mrb[0].mxu0
        %v5622 = vadd.f32 %v5581, %v5621
        %v5623 = vpop.f32.mrb[0].mxu0
        %v5624 = vadd.f32 %v5583, %v5623
        %v5625 = vpop.f32.mrb[0].mxu0
        %v5626 = vpop.f32.mrb[0].mxu0
        %5627 = vdwg.mxu0
        %5628 = vmatprep.subr.bf16.mxu0 %v4259
        %5629 = vmatpush1.bf16.msra.mxu0 %v4258
        %5630 = vmatprep.subr.bf16.mxu0 %v4263
        %5631 = vmatpush1.bf16.msra.mxu0 %v4262
        %5632 = vmatprep.subr.bf16.mxu0 %v4267
        %5633 = vmatpush1.bf16.msra.mxu0 %v4266
        %5634 = vmatprep.subr.bf16.mxu0 %v4271
        %5635 = vmatpush1.bf16.msra.mxu0 %v4270
        %5636 = vmatprep.subr.bf16.mxu0 %v4275
        %5637 = vmatpush1.bf16.msra.mxu0 %v4274
        %5638 = vmatprep.subr.bf16.mxu0 %v4279
        %5639 = vmatpush1.bf16.msra.mxu0 %v4278
        %5640 = vmatprep.subr.bf16.mxu0 %v4283
        %5641 = vmatpush1.bf16.msra.mxu0 %v4282
        %5642 = vmatprep.subr.bf16.mxu0 %v4287
        %5643 = vmatpush1.bf16.msra.mxu0 %v4286
        %5644 = vmatprep.subr.bf16.mxu0 %v4291
        %5645 = vmatpush1.bf16.msra.mxu0 %v4290
        %5646 = vmatprep.subr.bf16.mxu0 %v4295
        %5647 = vmatpush1.bf16.msra.mxu0 %v4294
        %5648 = vmatprep.subr.bf16.mxu0 %v4299
        %5649 = vmatpush1.bf16.msra.mxu0 %v4298
        %5650 = vmatprep.subr.bf16.mxu0 %v4303
        %5651 = vmatpush1.bf16.msra.mxu0 %v4302
        %5652 = vmatprep.subr.bf16.mxu0 %v4307
        %5653 = vmatpush1.bf16.msra.mxu0 %v4306
        %5654 = vmatprep.subr.bf16.mxu0 %v4311
        %5655 = vmatpush1.bf16.msra.mxu0 %v4310
        %5656 = vmatprep.subr.bf16.mxu0 %v4315
        %5657 = vmatpush1.bf16.msra.mxu0 %v4314
        %5658 = vmatprep.subr.bf16.mxu0 %v4319
        %5659 = vmatpush1.bf16.msra.mxu0 %v4318
        %5660 = vmatprep.mubr.bf16.mxu0 %v414
        %5661 = vmatmul.mubr.bf16.gmra.mrb[0].mxu0 %v413
        %v5662 = vpop.f32.mrb[0].mxu0
        %v5663 = vadd.f32 %v5622, %v5662
        %v5664 = vpop.f32.mrb[0].mxu0
        %v5665 = vadd.f32 %v5624, %v5664
        %v5666 = vpop.f32.mrb[0].mxu0
        %v5667 = vpop.f32.mrb[0].mxu0
        %5668 = vdwg.mxu0
        %5669 = vmatprep.subr.bf16.mxu0 %v4323
        %5670 = vmatpush1.bf16.msra.mxu0 %v4322
        %5671 = vmatprep.subr.bf16.mxu0 %v4327
        %5672 = vmatpush1.bf16.msra.mxu0 %v4326
        %5673 = vmatprep.subr.bf16.mxu0 %v4331
        %5674 = vmatpush1.bf16.msra.mxu0 %v4330
        %5675 = vmatprep.subr.bf16.mxu0 %v4335
        %5676 = vmatpush1.bf16.msra.mxu0 %v4334
        %5677 = vmatprep.subr.bf16.mxu0 %v4339
        %5678 = vmatpush1.bf16.msra.mxu0 %v4338
        %5679 = vmatprep.subr.bf16.mxu0 %v4343
        %5680 = vmatpush1.bf16.msra.mxu0 %v4342
        %5681 = vmatprep.subr.bf16.mxu0 %v4347
        %5682 = vmatpush1.bf16.msra.mxu0 %v4346
        %5683 = vmatprep.subr.bf16.mxu0 %v4351
        %5684 = vmatpush1.bf16.msra.mxu0 %v4350
        %5685 = vmatprep.subr.bf16.mxu0 %v4355
        %5686 = vmatpush1.bf16.msra.mxu0 %v4354
        %5687 = vmatprep.subr.bf16.mxu0 %v4359
        %5688 = vmatpush1.bf16.msra.mxu0 %v4358
        %5689 = vmatprep.subr.bf16.mxu0 %v4363
        %5690 = vmatpush1.bf16.msra.mxu0 %v4362
        %5691 = vmatprep.subr.bf16.mxu0 %v4367
        %5692 = vmatpush1.bf16.msra.mxu0 %v4366
        %5693 = vmatprep.subr.bf16.mxu0 %v4371
        %5694 = vmatpush1.bf16.msra.mxu0 %v4370
        %5695 = vmatprep.subr.bf16.mxu0 %v4375
        %5696 = vmatpush1.bf16.msra.mxu0 %v4374
        %5697 = vmatprep.subr.bf16.mxu0 %v4379
        %5698 = vmatpush1.bf16.msra.mxu0 %v4378
        %5699 = vmatprep.subr.bf16.mxu0 %v4383
        %5700 = vmatpush1.bf16.msra.mxu0 %v4382
        %5701 = vmatprep.mubr.bf16.mxu0 %v416
        %5702 = vmatmul.mubr.bf16.gmra.mrb[0].mxu0 %v415
        %v5703 = vpop.f32.mrb[0].mxu0
        %v5704 = vadd.f32 %v5663, %v5703
        %v5705 = vpop.f32.mrb[0].mxu0
        %v5706 = vadd.f32 %v5665, %v5705
        %v5707 = vpop.f32.mrb[0].mxu0
        %v5708 = vpop.f32.mrb[0].mxu0
        %5709 = vdwg.mxu0
        %5710 = vmatprep.subr.bf16.mxu0 %v4387
        %5711 = vmatpush1.bf16.msra.mxu0 %v4386
        %5712 = vmatprep.subr.bf16.mxu0 %v4391
        %5713 = vmatpush1.bf16.msra.mxu0 %v4390
        %5714 = vmatprep.subr.bf16.mxu0 %v4395
        %5715 = vmatpush1.bf16.msra.mxu0 %v4394
        %5716 = vmatprep.subr.bf16.mxu0 %v4399
        %5717 = vmatpush1.bf16.msra.mxu0 %v4398
        %5718 = vmatprep.subr.bf16.mxu0 %v4403
        %5719 = vmatpush1.bf16.msra.mxu0 %v4402
        %5720 = vmatprep.subr.bf16.mxu0 %v4407
        %5721 = vmatpush1.bf16.msra.mxu0 %v4406
        %5722 = vmatprep.subr.bf16.mxu0 %v4411
        %5723 = vmatpush1.bf16.msra.mxu0 %v4410
        %5724 = vmatprep.subr.bf16.mxu0 %v4415
        %5725 = vmatpush1.bf16.msra.mxu0 %v4414
        %5726 = vmatprep.subr.bf16.mxu0 0
        %5727 = vmatpush1.bf16.msra.mxu0 0
        %5728 = vmatprep.subr.bf16.mxu0 0
        %5729 = vmatpush1.bf16.msra.mxu0 0
        %5730 = vmatprep.subr.bf16.mxu0 0
        %5731 = vmatpush1.bf16.msra.mxu0 0
        %5732 = vmatprep.subr.bf16.mxu0 0
        %5733 = vmatpush1.bf16.msra.mxu0 0
        %5734 = vmatprep.subr.bf16.mxu0 0
        %5735 = vmatpush1.bf16.msra.mxu0 0
        %5736 = vmatprep.subr.bf16.mxu0 0
        %5737 = vmatpush1.bf16.msra.mxu0 0
        %5738 = vmatprep.subr.bf16.mxu0 0
        %5739 = vmatpush1.bf16.msra.mxu0 0
        %5740 = vmatprep.subr.bf16.mxu0 0
        %5741 = vmatpush1.bf16.msra.mxu0 0
        %5742 = vmatprep.mubr.bf16.mxu0 0
        %5743 = vmatmul.mubr.bf16.gmra.mrb[0].mxu0 %v417
        %v5744 = vpop.f32.mrb[0].mxu0
        %v5745 = vadd.f32 %v5704, %v5744
        %v5746 = vpop.f32.mrb[0].mxu0
        %v5747 = vadd.f32 %v5706, %v5746
        %v5748 = vpop.f32.mrb[0].mxu0
        %v5749 = vpop.f32.mrb[0].mxu0
        %5750 = vdwg.mxu0
        %5751 = vmatprep.subr.bf16.mxu0 %v3621
        %5752 = vmatpush1.bf16.msra.mxu0 %v3620
        %5753 = vmatprep.subr.bf16.mxu0 %v3625
        %5754 = vmatpush1.bf16.msra.mxu0 %v3624
        %5755 = vmatprep.subr.bf16.mxu0 %v3629
        %5756 = vmatpush1.bf16.msra.mxu0 %v3628
        %5757 = vmatprep.subr.bf16.mxu0 %v3633
        %5758 = vmatpush1.bf16.msra.mxu0 %v3632
        %5759 = vmatprep.subr.bf16.mxu0 %v3637
        %5760 = vmatpush1.bf16.msra.mxu0 %v3636
        %5761 = vmatprep.subr.bf16.mxu0 %v3641
        %5762 = vmatpush1.bf16.msra.mxu0 %v3640
        %5763 = vmatprep.subr.bf16.mxu0 %v3645
        %5764 = vmatpush1.bf16.msra.mxu0 %v3644
        %5765 = vmatprep.subr.bf16.mxu0 %v3649
        %5766 = vmatpush1.bf16.msra.mxu0 %v3648
        %5767 = vmatprep.subr.bf16.mxu0 %v3653
        %5768 = vmatpush1.bf16.msra.mxu0 %v3652
        %5769 = vmatprep.subr.bf16.mxu0 %v3657
        %5770 = vmatpush1.bf16.msra.mxu0 %v3656
        %5771 = vmatprep.subr.bf16.mxu0 %v3661
        %5772 = vmatpush1.bf16.msra.mxu0 %v3660
        %5773 = vmatprep.subr.bf16.mxu0 %v3665
        %5774 = vmatpush1.bf16.msra.mxu0 %v3664
        %5775 = vmatprep.subr.bf16.mxu0 %v3669
        %5776 = vmatpush1.bf16.msra.mxu0 %v3668
        %5777 = vmatprep.subr.bf16.mxu0 %v3673
        %5778 = vmatpush1.bf16.msra.mxu0 %v3672
        %5779 = vmatprep.subr.bf16.mxu0 %v3677
        %5780 = vmatpush1.bf16.msra.mxu0 %v3676
        %5781 = vmatprep.subr.bf16.mxu0 %v3681
        %5782 = vmatpush1.bf16.msra.mxu0 %v3680
        %5783 = vmatprep.mubr.bf16.mxu0 %v394
        %5784 = vmatmul.mubr.bf16.gmra.mrb[0].mxu0 %v393
        %v5785 = vpop.f32.mrb[0].mxu0
        %v5786 = vadd.f32 0.0, %v5785
        %v5787 = vpop.f32.mrb[0].mxu0
        %v5788 = vadd.f32 0.0, %v5787
        %v5789 = vpop.f32.mrb[0].mxu0
        %v5790 = vpop.f32.mrb[0].mxu0
        %5791 = vdwg.mxu0
        %5792 = vmatprep.subr.bf16.mxu0 %v3685
        %5793 = vmatpush1.bf16.msra.mxu0 %v3684
        %5794 = vmatprep.subr.bf16.mxu0 %v3689
        %5795 = vmatpush1.bf16.msra.mxu0 %v3688
        %5796 = vmatprep.subr.bf16.mxu0 %v3693
        %5797 = vmatpush1.bf16.msra.mxu0 %v3692
        %5798 = vmatprep.subr.bf16.mxu0 %v3697
        %5799 = vmatpush1.bf16.msra.mxu0 %v3696
        %5800 = vmatprep.subr.bf16.mxu0 %v3701
        %5801 = vmatpush1.bf16.msra.mxu0 %v3700
        %5802 = vmatprep.subr.bf16.mxu0 %v3705
        %5803 = vmatpush1.bf16.msra.mxu0 %v3704
        %5804 = vmatprep.subr.bf16.mxu0 %v3709
        %5805 = vmatpush1.bf16.msra.mxu0 %v3708
        %5806 = vmatprep.subr.bf16.mxu0 %v3713
        %5807 = vmatpush1.bf16.msra.mxu0 %v3712
        %5808 = vmatprep.subr.bf16.mxu0 %v3717
        %5809 = vmatpush1.bf16.msra.mxu0 %v3716
        %5810 = vmatprep.subr.bf16.mxu0 %v3721
        %5811 = vmatpush1.bf16.msra.mxu0 %v3720
        %5812 = vmatprep.subr.bf16.mxu0 %v3725
        %5813 = vmatpush1.bf16.msra.mxu0 %v3724
        %5814 = vmatprep.subr.bf16.mxu0 %v3729
        %5815 = vmatpush1.bf16.msra.mxu0 %v3728
        %5816 = vmatprep.subr.bf16.mxu0 %v3733
        %5817 = vmatpush1.bf16.msra.mxu0 %v3732
        %5818 = vmatprep.subr.bf16.mxu0 %v3737
        %5819 = vmatpush1.bf16.msra.mxu0 %v3736
        %5820 = vmatprep.subr.bf16.mxu0 %v3741
        %5821 = vmatpush1.bf16.msra.mxu0 %v3740
        %5822 = vmatprep.subr.bf16.mxu0 %v3745
        %5823 = vmatpush1.bf16.msra.mxu0 %v3744
        %5824 = vmatprep.mubr.bf16.mxu0 %v396
        %5825 = vmatmul.mubr.bf16.gmra.mrb[0].mxu0 %v395
        %v5826 = vpop.f32.mrb[0].mxu0
        %v5827 = vadd.f32 %v5786, %v5826
        %v5828 = vpop.f32.mrb[0].mxu0
        %v5829 = vadd.f32 %v5788, %v5828
        %v5830 = vpop.f32.mrb[0].mxu0
        %v5831 = vpop.f32.mrb[0].mxu0
        %5832 = vdwg.mxu0
        %5833 = vmatprep.subr.bf16.mxu0 %v3749
        %5834 = vmatpush1.bf16.msra.mxu0 %v3748
        %5835 = vmatprep.subr.bf16.mxu0 %v3753
        %5836 = vmatpush1.bf16.msra.mxu0 %v3752
        %5837 = vmatprep.subr.bf16.mxu0 %v3757
        %5838 = vmatpush1.bf16.msra.mxu0 %v3756
        %5839 = vmatprep.subr.bf16.mxu0 %v3761
        %5840 = vmatpush1.bf16.msra.mxu0 %v3760
        %5841 = vmatprep.subr.bf16.mxu0 %v3765
        %5842 = vmatpush1.bf16.msra.mxu0 %v3764
        %5843 = vmatprep.subr.bf16.mxu0 %v3769
        %5844 = vmatpush1.bf16.msra.mxu0 %v3768
        %5845 = vmatprep.subr.bf16.mxu0 %v3773
        %5846 = vmatpush1.bf16.msra.mxu0 %v3772
        %5847 = vmatprep.subr.bf16.mxu0 %v3777
        %5848 = vmatpush1.bf16.msra.mxu0 %v3776
        %5849 = vmatprep.subr.bf16.mxu0 %v3781
        %5850 = vmatpush1.bf16.msra.mxu0 %v3780
        %5851 = vmatprep.subr.bf16.mxu0 %v3785
        %5852 = vmatpush1.bf16.msra.mxu0 %v3784
        %5853 = vmatprep.subr.bf16.mxu0 %v3789
        %5854 = vmatpush1.bf16.msra.mxu0 %v3788
        %5855 = vmatprep.subr.bf16.mxu0 %v3793
        %5856 = vmatpush1.bf16.msra.mxu0 %v3792
        %5857 = vmatprep.subr.bf16.mxu0 %v3797
        %5858 = vmatpush1.bf16.msra.mxu0 %v3796
        %5859 = vmatprep.subr.bf16.mxu0 %v3801
        %5860 = vmatpush1.bf16.msra.mxu0 %v3800
        %5861 = vmatprep.subr.bf16.mxu0 %v3805
        %5862 = vmatpush1.bf16.msra.mxu0 %v3804
        %5863 = vmatprep.subr.bf16.mxu0 %v3809
        %5864 = vmatpush1.bf16.msra.mxu0 %v3808
        %5865 = vmatprep.mubr.bf16.mxu0 %v398
        %5866 = vmatmul.mubr.bf16.gmra.mrb[0].mxu0 %v397
        %v5867 = vpop.f32.mrb[0].mxu0
        %v5868 = vadd.f32 %v5827, %v5867
        %v5869 = vpop.f32.mrb[0].mxu0
        %v5870 = vadd.f32 %v5829, %v5869
        %v5871 = vpop.f32.mrb[0].mxu0
        %v5872 = vpop.f32.mrb[0].mxu0
        %5873 = vdwg.mxu0
        %5874 = vmatprep.subr.bf16.mxu0 %v3813
        %5875 = vmatpush1.bf16.msra.mxu0 %v3812
        %5876 = vmatprep.subr.bf16.mxu0 %v3817
        %5877 = vmatpush1.bf16.msra.mxu0 %v3816
        %5878 = vmatprep.subr.bf16.mxu0 %v3821
        %5879 = vmatpush1.bf16.msra.mxu0 %v3820
        %5880 = vmatprep.subr.bf16.mxu0 %v3825
        %5881 = vmatpush1.bf16.msra.mxu0 %v3824
        %5882 = vmatprep.subr.bf16.mxu0 %v3829
        %5883 = vmatpush1.bf16.msra.mxu0 %v3828
        %5884 = vmatprep.subr.bf16.mxu0 %v3833
        %5885 = vmatpush1.bf16.msra.mxu0 %v3832
        %5886 = vmatprep.subr.bf16.mxu0 %v3837
        %5887 = vmatpush1.bf16.msra.mxu0 %v3836
        %5888 = vmatprep.subr.bf16.mxu0 %v3841
        %5889 = vmatpush1.bf16.msra.mxu0 %v3840
        %5890 = vmatprep.subr.bf16.mxu0 %v3845
        %5891 = vmatpush1.bf16.msra.mxu0 %v3844
        %5892 = vmatprep.subr.bf16.mxu0 %v3849
        %5893 = vmatpush1.bf16.msra.mxu0 %v3848
        %5894 = vmatprep.subr.bf16.mxu0 %v3853
        %5895 = vmatpush1.bf16.msra.mxu0 %v3852
        %5896 = vmatprep.subr.bf16.mxu0 %v3857
        %5897 = vmatpush1.bf16.msra.mxu0 %v3856
        %5898 = vmatprep.subr.bf16.mxu0 %v3861
        %5899 = vmatpush1.bf16.msra.mxu0 %v3860
        %5900 = vmatprep.subr.bf16.mxu0 %v3865
        %5901 = vmatpush1.bf16.msra.mxu0 %v3864
        %5902 = vmatprep.subr.bf16.mxu0 %v3869
        %5903 = vmatpush1.bf16.msra.mxu0 %v3868
        %5904 = vmatprep.subr.bf16.mxu0 %v3873
        %5905 = vmatpush1.bf16.msra.mxu0 %v3872
        %5906 = vmatprep.mubr.bf16.mxu0 %v400
        %5907 = vmatmul.mubr.bf16.gmra.mrb[0].mxu0 %v399
        %v5908 = vpop.f32.mrb[0].mxu0
        %v5909 = vadd.f32 %v5868, %v5908
        %v5910 = vpop.f32.mrb[0].mxu0
        %v5911 = vadd.f32 %v5870, %v5910
        %v5912 = vpop.f32.mrb[0].mxu0
        %v5913 = vpop.f32.mrb[0].mxu0
        %5914 = vdwg.mxu0
        %5915 = vmatprep.subr.bf16.mxu0 %v3877
        %5916 = vmatpush1.bf16.msra.mxu0 %v3876
        %5917 = vmatprep.subr.bf16.mxu0 %v3881
        %5918 = vmatpush1.bf16.msra.mxu0 %v3880
        %5919 = vmatprep.subr.bf16.mxu0 %v3885
        %5920 = vmatpush1.bf16.msra.mxu0 %v3884
        %5921 = vmatprep.subr.bf16.mxu0 %v3889
        %5922 = vmatpush1.bf16.msra.mxu0 %v3888
        %5923 = vmatprep.subr.bf16.mxu0 %v3893
        %5924 = vmatpush1.bf16.msra.mxu0 %v3892
        %5925 = vmatprep.subr.bf16.mxu0 %v3897
        %5926 = vmatpush1.bf16.msra.mxu0 %v3896
        %5927 = vmatprep.subr.bf16.mxu0 %v3901
        %5928 = vmatpush1.bf16.msra.mxu0 %v3900
        %5929 = vmatprep.subr.bf16.mxu0 %v3905
        %5930 = vmatpush1.bf16.msra.mxu0 %v3904
        %5931 = vmatprep.subr.bf16.mxu0 %v3909
        %5932 = vmatpush1.bf16.msra.mxu0 %v3908
        %5933 = vmatprep.subr.bf16.mxu0 %v3913
        %5934 = vmatpush1.bf16.msra.mxu0 %v3912
        %5935 = vmatprep.subr.bf16.mxu0 %v3917
        %5936 = vmatpush1.bf16.msra.mxu0 %v3916
        %5937 = vmatprep.subr.bf16.mxu0 %v3921
        %5938 = vmatpush1.bf16.msra.mxu0 %v3920
        %5939 = vmatprep.subr.bf16.mxu0 %v3925
        %5940 = vmatpush1.bf16.msra.mxu0 %v3924
        %5941 = vmatprep.subr.bf16.mxu0 %v3929
        %5942 = vmatpush1.bf16.msra.mxu0 %v3928
        %5943 = vmatprep.subr.bf16.mxu0 %v3933
        %5944 = vmatpush1.bf16.msra.mxu0 %v3932
        %5945 = vmatprep.subr.bf16.mxu0 %v3937
        %5946 = vmatpush1.bf16.msra.mxu0 %v3936
        %5947 = vmatprep.mubr.bf16.mxu0 %v402
        %5948 = vmatmul.mubr.bf16.gmra.mrb[0].mxu0 %v401
        %v5949 = vpop.f32.mrb[0].mxu0
        %v5950 = vadd.f32 %v5909, %v5949
        %v5951 = vpop.f32.mrb[0].mxu0
        %v5952 = vadd.f32 %v5911, %v5951
        %v5953 = vpop.f32.mrb[0].mxu0
        %v5954 = vpop.f32.mrb[0].mxu0
        %5955 = vdwg.mxu0
        %5956 = vmatprep.subr.bf16.mxu0 %v3941
        %5957 = vmatpush1.bf16.msra.mxu0 %v3940
        %5958 = vmatprep.subr.bf16.mxu0 %v3945
        %5959 = vmatpush1.bf16.msra.mxu0 %v3944
        %5960 = vmatprep.subr.bf16.mxu0 %v3949
        %5961 = vmatpush1.bf16.msra.mxu0 %v3948
        %5962 = vmatprep.subr.bf16.mxu0 %v3953
        %5963 = vmatpush1.bf16.msra.mxu0 %v3952
        %5964 = vmatprep.subr.bf16.mxu0 %v3957
        %5965 = vmatpush1.bf16.msra.mxu0 %v3956
        %5966 = vmatprep.subr.bf16.mxu0 %v3961
        %5967 = vmatpush1.bf16.msra.mxu0 %v3960
        %5968 = vmatprep.subr.bf16.mxu0 %v3965
        %5969 = vmatpush1.bf16.msra.mxu0 %v3964
        %5970 = vmatprep.subr.bf16.mxu0 %v3969
        %5971 = vmatpush1.bf16.msra.mxu0 %v3968
        %5972 = vmatprep.subr.bf16.mxu0 %v3973
        %5973 = vmatpush1.bf16.msra.mxu0 %v3972
        %5974 = vmatprep.subr.bf16.mxu0 %v3977
        %5975 = vmatpush1.bf16.msra.mxu0 %v3976
        %5976 = vmatprep.subr.bf16.mxu0 %v3981
        %5977 = vmatpush1.bf16.msra.mxu0 %v3980
        %5978 = vmatprep.subr.bf16.mxu0 %v3985
        %5979 = vmatpush1.bf16.msra.mxu0 %v3984
        %5980 = vmatprep.subr.bf16.mxu0 %v3989
        %5981 = vmatpush1.bf16.msra.mxu0 %v3988
        %5982 = vmatprep.subr.bf16.mxu0 %v3993
        %5983 = vmatpush1.bf16.msra.mxu0 %v3992
        %5984 = vmatprep.subr.bf16.mxu0 %v3997
        %5985 = vmatpush1.bf16.msra.mxu0 %v3996
        %5986 = vmatprep.subr.bf16.mxu0 %v4001
        %5987 = vmatpush1.bf16.msra.mxu0 %v4000
        %5988 = vmatprep.mubr.bf16.mxu0 %v404
        %5989 = vmatmul.mubr.bf16.gmra.mrb[0].mxu0 %v403
        %v5990 = vpop.f32.mrb[0].mxu0
        %v5991 = vadd.f32 %v5950, %v5990
        %v5992 = vpop.f32.mrb[0].mxu0
        %v5993 = vadd.f32 %v5952, %v5992
        %v5994 = vpop.f32.mrb[0].mxu0
        %v5995 = vpop.f32.mrb[0].mxu0
        %5996 = vdwg.mxu0
        %5997 = vmatprep.subr.bf16.mxu0 %v4005
        %5998 = vmatpush1.bf16.msra.mxu0 %v4004
        %5999 = vmatprep.subr.bf16.mxu0 %v4009
        %6000 = vmatpush1.bf16.msra.mxu0 %v4008
        %6001 = vmatprep.subr.bf16.mxu0 %v4013
        %6002 = vmatpush1.bf16.msra.mxu0 %v4012
        %6003 = vmatprep.subr.bf16.mxu0 %v4017
        %6004 = vmatpush1.bf16.msra.mxu0 %v4016
        %6005 = vmatprep.subr.bf16.mxu0 %v4021
        %6006 = vmatpush1.bf16.msra.mxu0 %v4020
        %6007 = vmatprep.subr.bf16.mxu0 %v4025
        %6008 = vmatpush1.bf16.msra.mxu0 %v4024
        %6009 = vmatprep.subr.bf16.mxu0 %v4029
        %6010 = vmatpush1.bf16.msra.mxu0 %v4028
        %6011 = vmatprep.subr.bf16.mxu0 %v4033
        %6012 = vmatpush1.bf16.msra.mxu0 %v4032
        %6013 = vmatprep.subr.bf16.mxu0 %v4037
        %6014 = vmatpush1.bf16.msra.mxu0 %v4036
        %6015 = vmatprep.subr.bf16.mxu0 %v4041
        %6016 = vmatpush1.bf16.msra.mxu0 %v4040
        %6017 = vmatprep.subr.bf16.mxu0 %v4045
        %6018 = vmatpush1.bf16.msra.mxu0 %v4044
        %6019 = vmatprep.subr.bf16.mxu0 %v4049
        %6020 = vmatpush1.bf16.msra.mxu0 %v4048
        %6021 = vmatprep.subr.bf16.mxu0 %v4053
        %6022 = vmatpush1.bf16.msra.mxu0 %v4052
        %6023 = vmatprep.subr.bf16.mxu0 %v4057
        %6024 = vmatpush1.bf16.msra.mxu0 %v4056
        %6025 = vmatprep.subr.bf16.mxu0 %v4061
        %6026 = vmatpush1.bf16.msra.mxu0 %v4060
        %6027 = vmatprep.subr.bf16.mxu0 %v4065
        %6028 = vmatpush1.bf16.msra.mxu0 %v4064
        %6029 = vmatprep.mubr.bf16.mxu0 %v406
        %6030 = vmatmul.mubr.bf16.gmra.mrb[0].mxu0 %v405
        %v6031 = vpop.f32.mrb[0].mxu0
        %v6032 = vadd.f32 %v5991, %v6031
        %v6033 = vpop.f32.mrb[0].mxu0
        %v6034 = vadd.f32 %v5993, %v6033
        %v6035 = vpop.f32.mrb[0].mxu0
        %v6036 = vpop.f32.mrb[0].mxu0
        %6037 = vdwg.mxu0
        %6038 = vmatprep.subr.bf16.mxu0 %v4069
        %6039 = vmatpush1.bf16.msra.mxu0 %v4068
        %6040 = vmatprep.subr.bf16.mxu0 %v4073
        %6041 = vmatpush1.bf16.msra.mxu0 %v4072
        %6042 = vmatprep.subr.bf16.mxu0 %v4077
        %6043 = vmatpush1.bf16.msra.mxu0 %v4076
        %6044 = vmatprep.subr.bf16.mxu0 %v4081
        %6045 = vmatpush1.bf16.msra.mxu0 %v4080
        %6046 = vmatprep.subr.bf16.mxu0 %v4085
        %6047 = vmatpush1.bf16.msra.mxu0 %v4084
        %6048 = vmatprep.subr.bf16.mxu0 %v4089
        %6049 = vmatpush1.bf16.msra.mxu0 %v4088
        %6050 = vmatprep.subr.bf16.mxu0 %v4093
        %6051 = vmatpush1.bf16.msra.mxu0 %v4092
        %6052 = vmatprep.subr.bf16.mxu0 %v4097
        %6053 = vmatpush1.bf16.msra.mxu0 %v4096
        %6054 = vmatprep.subr.bf16.mxu0 %v4101
        %6055 = vmatpush1.bf16.msra.mxu0 %v4100
        %6056 = vmatprep.subr.bf16.mxu0 %v4105
        %6057 = vmatpush1.bf16.msra.mxu0 %v4104
        %6058 = vmatprep.subr.bf16.mxu0 %v4109
        %6059 = vmatpush1.bf16.msra.mxu0 %v4108
        %6060 = vmatprep.subr.bf16.mxu0 %v4113
        %6061 = vmatpush1.bf16.msra.mxu0 %v4112
        %6062 = vmatprep.subr.bf16.mxu0 %v4117
        %6063 = vmatpush1.bf16.msra.mxu0 %v4116
        %6064 = vmatprep.subr.bf16.mxu0 %v4121
        %6065 = vmatpush1.bf16.msra.mxu0 %v4120
        %6066 = vmatprep.subr.bf16.mxu0 %v4125
        %6067 = vmatpush1.bf16.msra.mxu0 %v4124
        %6068 = vmatprep.subr.bf16.mxu0 %v4129
        %6069 = vmatpush1.bf16.msra.mxu0 %v4128
        %6070 = vmatprep.mubr.bf16.mxu0 %v408
        %6071 = vmatmul.mubr.bf16.gmra.mrb[0].mxu0 %v407
        %v6072 = vpop.f32.mrb[0].mxu0
        %v6073 = vadd.f32 %v6032, %v6072
        %v6074 = vpop.f32.mrb[0].mxu0
        %v6075 = vadd.f32 %v6034, %v6074
        %v6076 = vpop.f32.mrb[0].mxu0
        %v6077 = vpop.f32.mrb[0].mxu0
        %6078 = vdwg.mxu0
        %6079 = vmatprep.subr.bf16.mxu0 %v4133
        %6080 = vmatpush1.bf16.msra.mxu0 %v4132
        %6081 = vmatprep.subr.bf16.mxu0 %v4137
        %6082 = vmatpush1.bf16.msra.mxu0 %v4136
        %6083 = vmatprep.subr.bf16.mxu0 %v4141
        %6084 = vmatpush1.bf16.msra.mxu0 %v4140
        %6085 = vmatprep.subr.bf16.mxu0 %v4145
        %6086 = vmatpush1.bf16.msra.mxu0 %v4144
        %6087 = vmatprep.subr.bf16.mxu0 %v4149
        %6088 = vmatpush1.bf16.msra.mxu0 %v4148
        %6089 = vmatprep.subr.bf16.mxu0 %v4153
        %6090 = vmatpush1.bf16.msra.mxu0 %v4152
        %6091 = vmatprep.subr.bf16.mxu0 %v4157
        %6092 = vmatpush1.bf16.msra.mxu0 %v4156
        %6093 = vmatprep.subr.bf16.mxu0 %v4161
        %6094 = vmatpush1.bf16.msra.mxu0 %v4160
        %6095 = vmatprep.subr.bf16.mxu0 %v4165
        %6096 = vmatpush1.bf16.msra.mxu0 %v4164
        %6097 = vmatprep.subr.bf16.mxu0 %v4169
        %6098 = vmatpush1.bf16.msra.mxu0 %v4168
        %6099 = vmatprep.subr.bf16.mxu0 %v4173
        %6100 = vmatpush1.bf16.msra.mxu0 %v4172
        %6101 = vmatprep.subr.bf16.mxu0 %v4177
        %6102 = vmatpush1.bf16.msra.mxu0 %v4176
        %6103 = vmatprep.subr.bf16.mxu0 %v4181
        %6104 = vmatpush1.bf16.msra.mxu0 %v4180
        %6105 = vmatprep.subr.bf16.mxu0 %v4185
        %6106 = vmatpush1.bf16.msra.mxu0 %v4184
        %6107 = vmatprep.subr.bf16.mxu0 %v4189
        %6108 = vmatpush1.bf16.msra.mxu0 %v4188
        %6109 = vmatprep.subr.bf16.mxu0 %v4193
        %6110 = vmatpush1.bf16.msra.mxu0 %v4192
        %6111 = vmatprep.mubr.bf16.mxu0 %v410
        %6112 = vmatmul.mubr.bf16.gmra.mrb[0].mxu0 %v409
        %v6113 = vpop.f32.mrb[0].mxu0
        %v6114 = vadd.f32 %v6073, %v6113
        %v6115 = vpop.f32.mrb[0].mxu0
        %v6116 = vadd.f32 %v6075, %v6115
        %v6117 = vpop.f32.mrb[0].mxu0
        %v6118 = vpop.f32.mrb[0].mxu0
        %6119 = vdwg.mxu0
        %6120 = vmatprep.subr.bf16.mxu0 %v4197
        %6121 = vmatpush1.bf16.msra.mxu0 %v4196
        %6122 = vmatprep.subr.bf16.mxu0 %v4201
        %6123 = vmatpush1.bf16.msra.mxu0 %v4200
        %6124 = vmatprep.subr.bf16.mxu0 %v4205
        %6125 = vmatpush1.bf16.msra.mxu0 %v4204
        %6126 = vmatprep.subr.bf16.mxu0 %v4209
        %6127 = vmatpush1.bf16.msra.mxu0 %v4208
        %6128 = vmatprep.subr.bf16.mxu0 %v4213
        %6129 = vmatpush1.bf16.msra.mxu0 %v4212
        %6130 = vmatprep.subr.bf16.mxu0 %v4217
        %6131 = vmatpush1.bf16.msra.mxu0 %v4216
        %6132 = vmatprep.subr.bf16.mxu0 %v4221
        %6133 = vmatpush1.bf16.msra.mxu0 %v4220
        %6134 = vmatprep.subr.bf16.mxu0 %v4225
        %6135 = vmatpush1.bf16.msra.mxu0 %v4224
        %6136 = vmatprep.subr.bf16.mxu0 %v4229
        %6137 = vmatpush1.bf16.msra.mxu0 %v4228
        %6138 = vmatprep.subr.bf16.mxu0 %v4233
        %6139 = vmatpush1.bf16.msra.mxu0 %v4232
        %6140 = vmatprep.subr.bf16.mxu0 %v4237
        %6141 = vmatpush1.bf16.msra.mxu0 %v4236
        %6142 = vmatprep.subr.bf16.mxu0 %v4241
        %6143 = vmatpush1.bf16.msra.mxu0 %v4240
        %6144 = vmatprep.subr.bf16.mxu0 %v4245
        %6145 = vmatpush1.bf16.msra.mxu0 %v4244
        %6146 = vmatprep.subr.bf16.mxu0 %v4249
        %6147 = vmatpush1.bf16.msra.mxu0 %v4248
        %6148 = vmatprep.subr.bf16.mxu0 %v4253
        %6149 = vmatpush1.bf16.msra.mxu0 %v4252
        %6150 = vmatprep.subr.bf16.mxu0 %v4257
        %6151 = vmatpush1.bf16.msra.mxu0 %v4256
        %6152 = vmatprep.mubr.bf16.mxu0 %v412
        %6153 = vmatmul.mubr.bf16.gmra.mrb[0].mxu0 %v411
        %v6154 = vpop.f32.mrb[0].mxu0
        %v6155 = vadd.f32 %v6114, %v6154
        %v6156 = vpop.f32.mrb[0].mxu0
        %v6157 = vadd.f32 %v6116, %v6156
        %v6158 = vpop.f32.mrb[0].mxu0
        %v6159 = vpop.f32.mrb[0].mxu0
        %6160 = vdwg.mxu0
        %6161 = vmatprep.subr.bf16.mxu0 %v4261
        %6162 = vmatpush1.bf16.msra.mxu0 %v4260
        %6163 = vmatprep.subr.bf16.mxu0 %v4265
        %6164 = vmatpush1.bf16.msra.mxu0 %v4264
        %6165 = vmatprep.subr.bf16.mxu0 %v4269
        %6166 = vmatpush1.bf16.msra.mxu0 %v4268
        %6167 = vmatprep.subr.bf16.mxu0 %v4273
        %6168 = vmatpush1.bf16.msra.mxu0 %v4272
        %6169 = vmatprep.subr.bf16.mxu0 %v4277
        %6170 = vmatpush1.bf16.msra.mxu0 %v4276
        %6171 = vmatprep.subr.bf16.mxu0 %v4281
        %6172 = vmatpush1.bf16.msra.mxu0 %v4280
        %6173 = vmatprep.subr.bf16.mxu0 %v4285
        %6174 = vmatpush1.bf16.msra.mxu0 %v4284
        %6175 = vmatprep.subr.bf16.mxu0 %v4289
        %6176 = vmatpush1.bf16.msra.mxu0 %v4288
        %6177 = vmatprep.subr.bf16.mxu0 %v4293
        %6178 = vmatpush1.bf16.msra.mxu0 %v4292
        %6179 = vmatprep.subr.bf16.mxu0 %v4297
        %6180 = vmatpush1.bf16.msra.mxu0 %v4296
        %6181 = vmatprep.subr.bf16.mxu0 %v4301
        %6182 = vmatpush1.bf16.msra.mxu0 %v4300
        %6183 = vmatprep.subr.bf16.mxu0 %v4305
        %6184 = vmatpush1.bf16.msra.mxu0 %v4304
        %6185 = vmatprep.subr.bf16.mxu0 %v4309
        %6186 = vmatpush1.bf16.msra.mxu0 %v4308
        %6187 = vmatprep.subr.bf16.mxu0 %v4313
        %6188 = vmatpush1.bf16.msra.mxu0 %v4312
        %6189 = vmatprep.subr.bf16.mxu0 %v4317
        %6190 = vmatpush1.bf16.msra.mxu0 %v4316
        %6191 = vmatprep.subr.bf16.mxu0 %v4321
        %6192 = vmatpush1.bf16.msra.mxu0 %v4320
        %6193 = vmatprep.mubr.bf16.mxu0 %v414
        %6194 = vmatmul.mubr.bf16.gmra.mrb[0].mxu0 %v413
        %v6195 = vpop.f32.mrb[0].mxu0
        %v6196 = vadd.f32 %v6155, %v6195
        %v6197 = vpop.f32.mrb[0].mxu0
        %v6198 = vadd.f32 %v6157, %v6197
        %v6199 = vpop.f32.mrb[0].mxu0
        %v6200 = vpop.f32.mrb[0].mxu0
        %6201 = vdwg.mxu0
        %6202 = vmatprep.subr.bf16.mxu0 %v4325
        %6203 = vmatpush1.bf16.msra.mxu0 %v4324
        %6204 = vmatprep.subr.bf16.mxu0 %v4329
        %6205 = vmatpush1.bf16.msra.mxu0 %v4328
        %6206 = vmatprep.subr.bf16.mxu0 %v4333
        %6207 = vmatpush1.bf16.msra.mxu0 %v4332
        %6208 = vmatprep.subr.bf16.mxu0 %v4337
        %6209 = vmatpush1.bf16.msra.mxu0 %v4336
        %6210 = vmatprep.subr.bf16.mxu0 %v4341
        %6211 = vmatpush1.bf16.msra.mxu0 %v4340
        %6212 = vmatprep.subr.bf16.mxu0 %v4345
        %6213 = vmatpush1.bf16.msra.mxu0 %v4344
        %6214 = vmatprep.subr.bf16.mxu0 %v4349
        %6215 = vmatpush1.bf16.msra.mxu0 %v4348
        %6216 = vmatprep.subr.bf16.mxu0 %v4353
        %6217 = vmatpush1.bf16.msra.mxu0 %v4352
        %6218 = vmatprep.subr.bf16.mxu0 %v4357
        %6219 = vmatpush1.bf16.msra.mxu0 %v4356
        %6220 = vmatprep.subr.bf16.mxu0 %v4361
        %6221 = vmatpush1.bf16.msra.mxu0 %v4360
        %6222 = vmatprep.subr.bf16.mxu0 %v4365
        %6223 = vmatpush1.bf16.msra.mxu0 %v4364
        %6224 = vmatprep.subr.bf16.mxu0 %v4369
        %6225 = vmatpush1.bf16.msra.mxu0 %v4368
        %6226 = vmatprep.subr.bf16.mxu0 %v4373
        %6227 = vmatpush1.bf16.msra.mxu0 %v4372
        %6228 = vmatprep.subr.bf16.mxu0 %v4377
        %6229 = vmatpush1.bf16.msra.mxu0 %v4376
        %6230 = vmatprep.subr.bf16.mxu0 %v4381
        %6231 = vmatpush1.bf16.msra.mxu0 %v4380
        %6232 = vmatprep.subr.bf16.mxu0 %v4385
        %6233 = vmatpush1.bf16.msra.mxu0 %v4384
        %6234 = vmatprep.mubr.bf16.mxu0 %v416
        %6235 = vmatmul.mubr.bf16.gmra.mrb[0].mxu0 %v415
        %v6236 = vpop.f32.mrb[0].mxu0
        %v6237 = vadd.f32 %v6196, %v6236
        %v6238 = vpop.f32.mrb[0].mxu0
        %v6239 = vadd.f32 %v6198, %v6238
        %v6240 = vpop.f32.mrb[0].mxu0
        %v6241 = vpop.f32.mrb[0].mxu0
        %6242 = vdwg.mxu0
        %6243 = vmatprep.subr.bf16.mxu0 %v4389
        %6244 = vmatpush1.bf16.msra.mxu0 %v4388
        %6245 = vmatprep.subr.bf16.mxu0 %v4393
        %6246 = vmatpush1.bf16.msra.mxu0 %v4392
        %6247 = vmatprep.subr.bf16.mxu0 %v4397
        %6248 = vmatpush1.bf16.msra.mxu0 %v4396
        %6249 = vmatprep.subr.bf16.mxu0 %v4401
        %6250 = vmatpush1.bf16.msra.mxu0 %v4400
        %6251 = vmatprep.subr.bf16.mxu0 %v4405
        %6252 = vmatpush1.bf16.msra.mxu0 %v4404
        %6253 = vmatprep.subr.bf16.mxu0 %v4409
        %6254 = vmatpush1.bf16.msra.mxu0 %v4408
        %6255 = vmatprep.subr.bf16.mxu0 %v4413
        %6256 = vmatpush1.bf16.msra.mxu0 %v4412
        %6257 = vmatprep.subr.bf16.mxu0 %v4417
        %6258 = vmatpush1.bf16.msra.mxu0 %v4416
        %6259 = vmatprep.subr.bf16.mxu0 0
        %6260 = vmatpush1.bf16.msra.mxu0 0
        %6261 = vmatprep.subr.bf16.mxu0 0
        %6262 = vmatpush1.bf16.msra.mxu0 0
        %6263 = vmatprep.subr.bf16.mxu0 0
        %6264 = vmatpush1.bf16.msra.mxu0 0
        %6265 = vmatprep.subr.bf16.mxu0 0
        %6266 = vmatpush1.bf16.msra.mxu0 0
        %6267 = vmatprep.subr.bf16.mxu0 0
        %6268 = vmatpush1.bf16.msra.mxu0 0
        %6269 = vmatprep.subr.bf16.mxu0 0
        %6270 = vmatpush1.bf16.msra.mxu0 0
        %6271 = vmatprep.subr.bf16.mxu0 0
        %6272 = vmatpush1.bf16.msra.mxu0 0
        %6273 = vmatprep.subr.bf16.mxu0 0
        %6274 = vmatpush1.bf16.msra.mxu0 0
        %6275 = vmatprep.mubr.bf16.mxu0 0
        %6276 = vmatmul.mubr.bf16.gmra.mrb[0].mxu0 %v417
        %v6277 = vpop.f32.mrb[0].mxu0
        %v6278 = vadd.f32 %v6237, %v6277
        %v6279 = vpop.f32.mrb[0].mxu0
        %v6280 = vadd.f32 %v6239, %v6279
        %v6281 = vpop.f32.mrb[0].mxu0
        %v6282 = vpop.f32.mrb[0].mxu0
        %6283 = vdwg.mxu0
        %v6288 = vcombine.low %v5745, %v5747
        %v6289 = vcombine.low %v6278, %v6280
        %v6291 = vunpack.c.l.s4 1983009808
        %v6292 = vunpack.c.0.s8 %v6291
        %v6293 = vlaneseq
        %v6294 = vshrl.u32 %v6293, 7
        %v6295 = vsub.s32 %v6292, %v6294
        %v6296 = vrot.slane %v6288, %v6295
        %v6298 = vunpack.c.l.s4 1983009808
        %v6299 = vunpack.c.0.s8 %v6298
        %v6300 = vlaneseq
        %v6301 = vshrl.u32 %v6300, 7
        %v6302 = vsub.s32 %v6299, %v6301
        %v6303 = vrot.slane %v6289, %v6302
        %v6304 = vcombine.low %v6296, %v6303
        %v6306 = vadd.f32 %v244, %v6304
        %6307 = vst [vmem:[#allocation2] sm:$0xff] %v6306
        %p6308 = scmp.eq.s32.totalorder %s17, 1
        // Predicated region
        $region45: #{encoder_like_dqn_forward.7} parent=39 // pred_check
          %p6309 = pneg %p6308
        $region46: #{encoder_like_dqn_forward.7} parent=39 // pred_check_branch
          %6311 = sbr.rel (%p6309) target = $region48
        $region47: #{encoder_like_dqn_forward.7} parent=39 // pred_region
          %v6312 = vld [vmem:[#allocation2] sm:$0xff]
          %v6313 = vld [vmem:[%s2] sm:$0xf]
          %v6315 = vlaneseq
          %v6316 = vshrl.u32 %v6315, 7
          %v6317 = vsub.s32 0, %v6316
          %v6318 = vrot.slane %v6313, %v6317
          %v6319 = vlaneseq
          %v6320 = vshrl.u32 %v6319, 7
          %v6321 = vsub.s32 1, %v6320
          %v6322 = vrot.slane %v6313, %v6321
          %v6323 = vlaneseq
          %v6324 = vshrl.u32 %v6323, 7
          %v6325 = vsub.s32 2, %v6324
          %v6326 = vrot.slane %v6313, %v6325
          %v6327 = vlaneseq
          %v6328 = vshrl.u32 %v6327, 7
          %v6329 = vsub.s32 3, %v6328
          %v6330 = vrot.slane %v6313, %v6329
          %v6331 = vcombine.low %v6318, %v6322
          %v6332 = vcombine.low %v6326, %v6330
          %v6334 = vunpack.c.l.s4 1983009808
          %v6335 = vunpack.c.0.s8 %v6334
          %v6336 = vlaneseq
          %v6337 = vshrl.u32 %v6336, 7
          %v6338 = vsub.s32 %v6335, %v6337
          %v6339 = vrot.slane %v6331, %v6338
          %v6341 = vunpack.c.l.s4 1983009808
          %v6342 = vunpack.c.0.s8 %v6341
          %v6343 = vlaneseq
          %v6344 = vshrl.u32 %v6343, 7
          %v6345 = vsub.s32 %v6342, %v6344
          %v6346 = vrot.slane %v6332, %v6345
          %v6347 = vcombine.low %v6339, %v6346
          %v6349 = vadd.f32 %v6312, %v6347
          %v6350 = vmax.f32 %v6349, 0.0
          %v6351 = vld [vmem:[%s3] sm:$0xff]
          %v6352 = vld [vmem:[%s3 + $0x8] sm:$0xff]
          %v6353 = vld [vmem:[%s3 + $0x10] sm:$0xff]
          %v6354 = vld [vmem:[%s3 + $0x18] sm:$0xff]
          %v6355 = vld [vmem:[%s3 + $0x20] sm:$0xff]
          %v6356 = vld [vmem:[%s3 + $0x28] sm:$0xff]
          %v6357 = vld [vmem:[%s3 + $0x30] sm:$0xff]
          %v6358 = vld [vmem:[%s3 + $0x38] sm:$0xff]
          %v6359 = vld [vmem:[%s3 + $0x40] sm:$0xff]
          %v6360 = vld [vmem:[%s3 + $0x48] sm:$0xff]
          %v6361 = vld [vmem:[%s3 + $0x50] sm:$0xff]
          %v6362 = vld [vmem:[%s3 + $0x58] sm:$0xff]
          %v6363 = vld [vmem:[%s3 + $0x60] sm:$0xff]
          %v6364 = vld [vmem:[%s3 + $0x68] sm:$0xff]
          %v6365 = vld [vmem:[%s3 + $0x70] sm:$0xff]
          %v6366 = vld [vmem:[%s3 + $0x78] sm:$0xff]
          %v6367 = vld [vmem:[%s3 + $0x80] sm:$0xff]
          %v6368 = vld [vmem:[%s3 + $0x88] sm:$0xff]
          %v6369 = vld [vmem:[%s3 + $0x90] sm:$0xff]
          %v6370 = vld [vmem:[%s3 + $0x98] sm:$0xff]
          %v6371 = vld [vmem:[%s3 + $0xa0] sm:$0xff]
          %v6372 = vld [vmem:[%s3 + $0xa8] sm:$0xff]
          %v6373 = vld [vmem:[%s3 + $0xb0] sm:$0xff]
          %v6374 = vld [vmem:[%s3 + $0xb8] sm:$0xff]
          %v6375 = vld [vmem:[%s3 + $0xc0] sm:$0xff]
          %v6376 = vld [vmem:[%s3 + $0xc8] sm:$0xff]
          %v6377 = vld [vmem:[%s3 + $0xd0] sm:$0xff]
          %v6378 = vld [vmem:[%s3 + $0xd8] sm:$0xff]
          %v6379 = vld [vmem:[%s3 + $0xe0] sm:$0xff]
          %v6380 = vld [vmem:[%s3 + $0xe8] sm:$0xff]
          %v6381 = vld [vmem:[%s3 + $0xf0] sm:$0xff]
          %v6382 = vld [vmem:[%s3 + $0xf8] sm:$0xff]
          %v6383 = vld [vmem:[%s3 + $0x100] sm:$0xff]
          %v6384 = vld [vmem:[%s3 + $0x108] sm:$0xff]
          %v6385 = vld [vmem:[%s3 + $0x110] sm:$0xff]
          %v6386 = vld [vmem:[%s3 + $0x118] sm:$0xff]
          %v6387 = vld [vmem:[%s3 + $0x120] sm:$0xff]
          %v6388 = vld [vmem:[%s3 + $0x128] sm:$0xff]
          %v6389 = vld [vmem:[%s3 + $0x130] sm:$0xff]
          %v6390 = vld [vmem:[%s3 + $0x138] sm:$0xff]
          %v6391 = vld [vmem:[%s3 + $0x140] sm:$0xff]
          %v6392 = vld [vmem:[%s3 + $0x148] sm:$0xff]
          %v6393 = vld [vmem:[%s3 + $0x150] sm:$0xff]
          %v6394 = vld [vmem:[%s3 + $0x158] sm:$0xff]
          %v6395 = vld [vmem:[%s3 + $0x160] sm:$0xff]
          %v6396 = vld [vmem:[%s3 + $0x168] sm:$0xff]
          %v6397 = vld [vmem:[%s3 + $0x170] sm:$0xff]
          %v6398 = vld [vmem:[%s3 + $0x178] sm:$0xff]
          %v6399 = vld [vmem:[%s3 + $0x180] sm:$0xff]
          %v6400 = vld [vmem:[%s3 + $0x188] sm:$0xff]
          %v6401 = vld [vmem:[%s3 + $0x190] sm:$0xff]
          %v6402 = vld [vmem:[%s3 + $0x198] sm:$0xff]
          %v6403 = vld [vmem:[%s3 + $0x1a0] sm:$0xff]
          %v6404 = vld [vmem:[%s3 + $0x1a8] sm:$0xff]
          %v6405 = vld [vmem:[%s3 + $0x1b0] sm:$0xff]
          %v6406 = vld [vmem:[%s3 + $0x1b8] sm:$0xff]
          %v6407 = vld [vmem:[%s3 + $0x1c0] sm:$0xff]
          %v6408 = vld [vmem:[%s3 + $0x1c8] sm:$0xff]
          %v6409 = vld [vmem:[%s3 + $0x1d0] sm:$0xff]
          %v6410 = vld [vmem:[%s3 + $0x1d8] sm:$0xff]
          %v6411 = vld [vmem:[%s3 + $0x1e0] sm:$0xff]
          %v6412 = vld [vmem:[%s3 + $0x1e8] sm:$0xff]
          %v6413 = vld [vmem:[%s3 + $0x1f0] sm:$0xff]
          %v6414 = vld [vmem:[%s3 + $0x1f8] sm:$0xff]
          %v6415 = vld [vmem:[%s4] sm:$0x1]
          %v6417 = vlaneseq
          %v6418 = vshrl.u32 %v6417, 7
          %v6419 = vsub.s32 0, %v6418
          %v6420 = vrot.slane %v6415, %v6419
          %v6423 = vcombine.high %v6350, %v6350
          %v6425 = vunpack.c.l.s4 1983009808
          %v6426 = vunpack.c.0.s8 %v6425
          %v6427 = vlaneseq
          %v6428 = vshrl.u32 %v6427, 7
          %v6429 = vsub.s32 %v6426, %v6428
          %v6430 = vrot.slane %v6350, %v6429
          %v6432 = vunpack.c.l.s4 1983009808
          %v6433 = vunpack.c.0.s8 %v6432
          %v6434 = vlaneseq
          %v6435 = vshrl.u32 %v6434, 7
          %v6436 = vsub.s32 %v6433, %v6435
          %v6437 = vrot.slane %v6423, %v6436
          %v6438 = vcombine.high %v6430, %v6430
          %v6439 = vcombine.high %v6437, %v6437
          %6444 = vmatprep.subr.mxu0 0.0
          %6445 = vmatpush1.msra.mxu0 %v6351
          %6446 = vmatprep.subr.mxu0 0.0
          %6447 = vmatpush1.msra.mxu0 %v6352
          %6448 = vmatprep.subr.mxu0 0.0
          %6449 = vmatpush1.msra.mxu0 %v6353
          %6450 = vmatprep.subr.mxu0 0.0
          %6451 = vmatpush1.msra.mxu0 %v6354
          %6452 = vmatprep.subr.mxu0 0.0
          %6453 = vmatpush1.msra.mxu0 %v6355
          %6454 = vmatprep.subr.mxu0 0.0
          %6455 = vmatpush1.msra.mxu0 %v6356
          %6456 = vmatprep.subr.mxu0 0.0
          %6457 = vmatpush1.msra.mxu0 %v6357
          %6458 = vmatprep.subr.mxu0 0.0
          %6459 = vmatpush1.msra.mxu0 %v6358
          %6460 = vmatprep.subr.mxu0 0.0
          %6461 = vmatpush1.msra.mxu0 %v6359
          %6462 = vmatprep.subr.mxu0 0.0
          %6463 = vmatpush1.msra.mxu0 %v6360
          %6464 = vmatprep.subr.mxu0 0.0
          %6465 = vmatpush1.msra.mxu0 %v6361
          %6466 = vmatprep.subr.mxu0 0.0
          %6467 = vmatpush1.msra.mxu0 %v6362
          %6468 = vmatprep.subr.mxu0 0.0
          %6469 = vmatpush1.msra.mxu0 %v6363
          %6470 = vmatprep.subr.mxu0 0.0
          %6471 = vmatpush1.msra.mxu0 %v6364
          %6472 = vmatprep.subr.mxu0 0.0
          %6473 = vmatpush1.msra.mxu0 %v6365
          %6474 = vmatprep.subr.mxu0 0.0
          %6475 = vmatpush1.msra.mxu0 %v6366
          %6476 = vmatprep.subr.mxu0 0.0
          %6477 = vmatpush1.msra.mxu0 %v6367
          %6478 = vmatprep.subr.mxu0 0.0
          %6479 = vmatpush1.msra.mxu0 %v6368
          %6480 = vmatprep.subr.mxu0 0.0
          %6481 = vmatpush1.msra.mxu0 %v6369
          %6482 = vmatprep.subr.mxu0 0.0
          %6483 = vmatpush1.msra.mxu0 %v6370
          %6484 = vmatprep.subr.mxu0 0.0
          %6485 = vmatpush1.msra.mxu0 %v6371
          %6486 = vmatprep.subr.mxu0 0.0
          %6487 = vmatpush1.msra.mxu0 %v6372
          %6488 = vmatprep.subr.mxu0 0.0
          %6489 = vmatpush1.msra.mxu0 %v6373
          %6490 = vmatprep.subr.mxu0 0.0
          %6491 = vmatpush1.msra.mxu0 %v6374
          %6492 = vmatprep.subr.mxu0 0.0
          %6493 = vmatpush1.msra.mxu0 %v6375
          %6494 = vmatprep.subr.mxu0 0.0
          %6495 = vmatpush1.msra.mxu0 %v6376
          %6496 = vmatprep.subr.mxu0 0.0
          %6497 = vmatpush1.msra.mxu0 %v6377
          %6498 = vmatprep.subr.mxu0 0.0
          %6499 = vmatpush1.msra.mxu0 %v6378
          %6500 = vmatprep.subr.mxu0 0.0
          %6501 = vmatpush1.msra.mxu0 %v6379
          %6502 = vmatprep.subr.mxu0 0.0
          %6503 = vmatpush1.msra.mxu0 %v6380
          %6504 = vmatprep.subr.mxu0 0.0
          %6505 = vmatpush1.msra.mxu0 %v6381
          %6506 = vmatprep.subr.mxu0 0.0
          %6507 = vmatpush1.msra.mxu0 %v6382
          %6508 = vmatprep.mubr.f32.mxu0 %v6438
          %6509 = vmatmul.mubr.f32.gmra.mrb[0].mxu0 %v6430
          %v6510 = vpop.f32.mrb[0].mxu0
          %v6511 = vadd.f32 %v6420, %v6510
          %v6512 = vpop.f32.mrb[0].mxu0
          %6513 = vdwg.mxu0
          %6514 = vmatprep.subr.mxu0 0.0
          %6515 = vmatpush1.msra.mxu0 %v6383
          %6516 = vmatprep.subr.mxu0 0.0
          %6517 = vmatpush1.msra.mxu0 %v6384
          %6518 = vmatprep.subr.mxu0 0.0
          %6519 = vmatpush1.msra.mxu0 %v6385
          %6520 = vmatprep.subr.mxu0 0.0
          %6521 = vmatpush1.msra.mxu0 %v6386
          %6522 = vmatprep.subr.mxu0 0.0
          %6523 = vmatpush1.msra.mxu0 %v6387
          %6524 = vmatprep.subr.mxu0 0.0
          %6525 = vmatpush1.msra.mxu0 %v6388
          %6526 = vmatprep.subr.mxu0 0.0
          %6527 = vmatpush1.msra.mxu0 %v6389
          %6528 = vmatprep.subr.mxu0 0.0
          %6529 = vmatpush1.msra.mxu0 %v6390
          %6530 = vmatprep.subr.mxu0 0.0
          %6531 = vmatpush1.msra.mxu0 %v6391
          %6532 = vmatprep.subr.mxu0 0.0
          %6533 = vmatpush1.msra.mxu0 %v6392
          %6534 = vmatprep.subr.mxu0 0.0
          %6535 = vmatpush1.msra.mxu0 %v6393
          %6536 = vmatprep.subr.mxu0 0.0
          %6537 = vmatpush1.msra.mxu0 %v6394
          %6538 = vmatprep.subr.mxu0 0.0
          %6539 = vmatpush1.msra.mxu0 %v6395
          %6540 = vmatprep.subr.mxu0 0.0
          %6541 = vmatpush1.msra.mxu0 %v6396
          %6542 = vmatprep.subr.mxu0 0.0
          %6543 = vmatpush1.msra.mxu0 %v6397
          %6544 = vmatprep.subr.mxu0 0.0
          %6545 = vmatpush1.msra.mxu0 %v6398
          %6546 = vmatprep.subr.mxu0 0.0
          %6547 = vmatpush1.msra.mxu0 %v6399
          %6548 = vmatprep.subr.mxu0 0.0
          %6549 = vmatpush1.msra.mxu0 %v6400
          %6550 = vmatprep.subr.mxu0 0.0
          %6551 = vmatpush1.msra.mxu0 %v6401
          %6552 = vmatprep.subr.mxu0 0.0
          %6553 = vmatpush1.msra.mxu0 %v6402
          %6554 = vmatprep.subr.mxu0 0.0
          %6555 = vmatpush1.msra.mxu0 %v6403
          %6556 = vmatprep.subr.mxu0 0.0
          %6557 = vmatpush1.msra.mxu0 %v6404
          %6558 = vmatprep.subr.mxu0 0.0
          %6559 = vmatpush1.msra.mxu0 %v6405
          %6560 = vmatprep.subr.mxu0 0.0
          %6561 = vmatpush1.msra.mxu0 %v6406
          %6562 = vmatprep.subr.mxu0 0.0
          %6563 = vmatpush1.msra.mxu0 %v6407
          %6564 = vmatprep.subr.mxu0 0.0
          %6565 = vmatpush1.msra.mxu0 %v6408
          %6566 = vmatprep.subr.mxu0 0.0
          %6567 = vmatpush1.msra.mxu0 %v6409
          %6568 = vmatprep.subr.mxu0 0.0
          %6569 = vmatpush1.msra.mxu0 %v6410
          %6570 = vmatprep.subr.mxu0 0.0
          %6571 = vmatpush1.msra.mxu0 %v6411
          %6572 = vmatprep.subr.mxu0 0.0
          %6573 = vmatpush1.msra.mxu0 %v6412
          %6574 = vmatprep.subr.mxu0 0.0
          %6575 = vmatpush1.msra.mxu0 %v6413
          %6576 = vmatprep.subr.mxu0 0.0
          %6577 = vmatpush1.msra.mxu0 %v6414
          %6578 = vmatprep.mubr.f32.mxu0 %v6439
          %6579 = vmatmul.mubr.f32.gmra.mrb[0].mxu0 %v6437
          %v6580 = vpop.f32.mrb[0].mxu0
          %v6581 = vadd.f32 %v6511, %v6580
          %v6582 = vpop.f32.mrb[0].mxu0
          %6583 = vdwg.mxu0
          %vm6584 = vcmask 517120
          %6585 = vst.msk [vmem:[#allocation3] sm:$0x3] %vm6584, %v6581
        $region48: #{encoder_like_dqn_forward.7} parent=39 // pred_fallthru
          _
        // Predicated region
        $region49: #{encoder_like_dqn_forward.7} parent=39 // pred_check
          %p6586 = pneg %p145
        $region50: #{encoder_like_dqn_forward.7} parent=39 // pred_check_branch
          %6588 = sbr.rel (%p6586) target = $region52
        $region51: #{encoder_like_dqn_forward.7} parent=39 // pred_region
          %s6590 = ssub.s32 32, 32
          %6591 = vsyncadd [#allocation4], %s6590
          %s6593 = sshll.u32 [#allocation3], 4
          %s6594 = int_to_ptr.vmem [resolvable:$true] %s6593
          %6596 = dma.vmem_to_hbm [thread:$0]  %s6594, 32, %s5, [#allocation4]
        $region52: #{encoder_like_dqn_forward.7} parent=39 // pred_fallthru
          _
        // Predicated region
        $region53: #{encoder_like_dqn_forward.7} parent=39 // pred_check
          %p6597 = pneg %p145
        $region54: #{encoder_like_dqn_forward.7} parent=39 // pred_check_branch
          %6599 = sbr.rel (%p6597) target = $region56
        $region55: #{encoder_like_dqn_forward.7} parent=39 // pred_region
          %6600 = dma.done [#allocation4], 32
        $region56: #{encoder_like_dqn_forward.7} parent=39 // pred_fallthru
          _
      $region40: #{encoder_like_dqn_forward.7} parent=5 // pred_fallthru
        _
      %p6601 = scmp.le.s32.totalorder 2, %s12
      // Predicated region
      $region57: #{encoder_like_dqn_forward.7} parent=5 // pred_check
        %p6602 = pneg %p6601
      $region58: #{encoder_like_dqn_forward.7} parent=5 // pred_check_branch
        %6604 = sbr.rel (%p6602) target = $region60
      $region59: #{encoder_like_dqn_forward.7} parent=5 // pred_region
        %s6605 = ssub.s32 %s12, 2
      $region60: #{encoder_like_dqn_forward.7} parent=5 // pred_fallthru
        _
    $region6: #{encoder_like_dqn_forward.7} parent=1 // loop_footer
      %s16 = sadd.s32 1, %s12
    $region7: #{encoder_like_dqn_forward.7} parent=1 // loop_footer_branch
      %11 = sbr.rel target = $region3
    $region8: #{encoder_like_dqn_forward.7} parent=1 // loop_exit
      _
    %6606 = vsyncpa [#allocation4], 1
    %s6607 = scalar_lea.sflag [#allocation4], 1
    %6608 = vsyncpa %s6607, 1

</llo_original>
